<compile_context>
chip_gen: v5e
topology: v5e:2x2
jax: 0.10.0
libtpu: 0.0.40
codegen_flags: <defaults>
</compile_context>

<pallas_src>
import functools

import jax
import jax.numpy as jnp
from jax.experimental import pallas as pl
from jax.experimental.pallas import tpu as pltpu

EPS = 1e-5  # nn.LayerNorm default


def _layer_norm(x, gamma, beta):
    mean = jnp.mean(x, axis=-1, keepdims=True)
    var = jnp.mean((x - mean) ** 2, axis=-1, keepdims=True)
    return (x - mean) * jax.lax.rsqrt(var + EPS) * gamma + beta


def transformer_kernel(x_ref, wq_ref, wk_ref, wv_ref, wo_ref, bo_ref,
                       qg_ref, qb_ref, kg_ref, kb_ref,
                       w1_ref, b1_ref, w2_ref, b2_ref,
                       g1_ref, be1_ref, g2_ref, be2_ref,
                       o_ref, *, num_heads):
    bB, T, E = x_ref.shape
    H = num_heads
    S = E // H
    N = bB * T
    cd = wq_ref.dtype                       # matmul compute dtype (bf16/f32)
    approx = cd == jnp.bfloat16             # approx reciprocal on fast path

    # ---- fold the whole (block_b, T) tile into the matmul M dimension ----
    x = x_ref[...].reshape(N, E)            # f32 residual stream
    xc = x.astype(cd)

    q = jnp.dot(xc, wq_ref[...], preferred_element_type=jnp.float32)
    k = jnp.dot(xc, wk_ref[...], preferred_element_type=jnp.float32)
    v = jnp.dot(xc, wv_ref[...], preferred_element_type=jnp.float32)

    # kq-norm over the head dim for all heads at once (params shared across
    # heads); fold the 1/sqrt(E) attention scale into q's affine params.
    scale = 1.0 / jnp.sqrt(jnp.float32(E))
    qn = _layer_norm(q.reshape(N, H, S), qg_ref[0] * scale, qb_ref[0] * scale)
    kn = _layer_norm(k.reshape(N, H, S), kg_ref[0], kb_ref[0])
    v3 = v.reshape(N, H, S)

    wo = wo_ref[...]                        # (E, E)
    attended = jnp.zeros((N, E), jnp.float32)
    for h in range(H):                      # static unroll over heads
        qh = qn[:, h, :].reshape(bB, T, S).astype(cd)
        kh = kn[:, h, :].reshape(bB, T, S).astype(cd)
        vh = v3[:, h, :].reshape(bB, T, S).astype(cd)
        # per-batch (T, T) scores; the batch dim rides in one batched einsum
        s = jnp.einsum('bqs,bks->bqk', qh, kh,
                       preferred_element_type=jnp.float32)
        m = jnp.max(s, axis=-1, keepdims=True)
        p = jnp.exp(s - m)
        p = p * pl.reciprocal(jnp.sum(p, axis=-1, keepdims=True),
                              approx=approx)
        ho = jnp.einsum('bqk,bks->bqs', p.astype(cd), vh,
                        preferred_element_type=jnp.float32)       # (bB, T, S)
        # no concatenate: the head dim S is the K dim of the output proj.
        attended = attended + jnp.dot(
            ho.reshape(N, S).astype(cd), wo[h * S:(h + 1) * S, :],
            preferred_element_type=jnp.float32)
    attended = attended + bo_ref[0]

    # ---- residual + LayerNorm, MLP, residual + LayerNorm (f32 VPU math) ----
    x1 = _layer_norm(x + attended, g1_ref[0], be1_ref[0])
    hidden = jnp.maximum(
        jnp.dot(x1.astype(cd), w1_ref[...],
                preferred_element_type=jnp.float32) + b1_ref[0], 0.0)
    transformed = jnp.dot(hidden.astype(cd), w2_ref[...],
                          preferred_element_type=jnp.float32) + b2_ref[0]
    out = _layer_norm(x1 + transformed, g2_ref[0], be2_ref[0])
    o_ref[...] = out.reshape(bB, T, E).astype(o_ref.dtype)


def _pick_block_b(B, T, E, expansion, target_rows=512,
                  act_budget_bytes=8 << 20):
    """Largest divisor of B whose rough f32 activation working set fits the
    budget, stopping once the matmul M dim (block_b * T) reaches target."""
    best = 1
    for d in range(1, B + 1):
        if B % d:
            continue
        rows = d * T
        approx_bytes = rows * E * 4 * (10 + 2 * expansion)
        if approx_bytes <= act_budget_bytes or d == 1:
            best = d
        else:
            break
        if rows >= target_rows:
            break
    return best


def transformer_forward(x, params, num_heads, compute_dtype=jnp.bfloat16,
                        block_b=None):
    B, T, E = x.shape
    Eh = params["w1"].shape[1]
    expansion = max(1, Eh // E)
    if block_b is None:
        block_b = _pick_block_b(B, T, E, expansion)
    assert B % block_b == 0

    cd = compute_dtype
    # matmul operands in compute dtype; biases / layernorm affines / residual
    # math stay f32.
    args = [x,
            params["wq"].astype(cd), params["wk"].astype(cd),
            params["wv"].astype(cd), params["wo"].astype(cd), params["bo"],
            params["qg"], params["qb"], params["kg"], params["kb"],
            params["w1"].astype(cd), params["b1"],
            params["w2"].astype(cd), params["b2"],
            params["g1"], params["be1"], params["g2"], params["be2"]]

    in_specs = [pl.BlockSpec((block_b, T, E), lambda b: (b, 0, 0))]
    for a in args[1:]:
        # weights / params: whole array resident in VMEM, same block each step
        in_specs.append(pl.BlockSpec(a.shape, lambda b, _n=a.ndim: (0,) * _n))
    out_specs = pl.BlockSpec((block_b, T, E), lambda b: (b, 0, 0))

    # advisory cost estimate for the XLA scheduler
    S = E // num_heads
    flops = (2 * B * T * E * E * 4                  # q/k/v/out projections
             + 2 * B * T * E * Eh * 2               # MLP
             + 2 * B * num_heads * T * T * S * 2)   # scores + p@v
    transcendentals = B * num_heads * T * T + 6 * B * T
    bytes_accessed = int(2 * x.size * 4
                         + sum(int(a.size) * a.dtype.itemsize
                               for a in args[1:]))

    kernel = functools.partial(transformer_kernel, num_heads=num_heads)
    return pl.pallas_call(
        kernel,
        out_shape=jax.ShapeDtypeStruct((B, T, E), jnp.float32),
        grid_spec=pltpu.PrefetchScalarGridSpec(
            num_scalar_prefetch=0,
            grid=(B // block_b,),
            in_specs=in_specs,
            out_specs=out_specs),
        compiler_params=pltpu.CompilerParams(
            dimension_semantics=("parallel",),
            vmem_limit_bytes=64 * 1024 * 1024),
        cost_estimate=pl.CostEstimate(
            flops=flops, transcendentals=transcendentals,
            bytes_accessed=bytes_accessed),
    )(*args)


def make_params(key, embedding_dim, num_heads, expansion=1):
    E = embedding_dim
    S = E // num_heads
    Eh = E * expansion
    ks = jax.random.split(key, 8)
    std = 0.1
    return {
        "wq": jax.random.normal(ks[0], (E, E), jnp.float32) * std,
        "wk": jax.random.normal(ks[1], (E, E), jnp.float32) * std,
        "wv": jax.random.normal(ks[2], (E, E), jnp.float32) * std,
        "wo": jax.random.normal(ks[3], (E, E), jnp.float32) * std,
        "bo": jax.random.normal(ks[4], (1, E), jnp.float32) * std,
        # kq-norm (LayerNorm over head dim), default init, shared across heads
        "qg": jnp.ones((1, S), jnp.float32),
        "qb": jnp.zeros((1, S), jnp.float32),
        "kg": jnp.ones((1, S), jnp.float32),
        "kb": jnp.zeros((1, S), jnp.float32),
        # MLP
        "w1": jax.random.normal(ks[5], (E, Eh), jnp.float32) * std,
        "b1": jax.random.normal(ks[6], (1, Eh), jnp.float32) * std,
        "w2": jax.random.normal(ks[7], (Eh, E), jnp.float32) * std,
        "b2": jnp.zeros((1, E), jnp.float32),
        # output LayerNorms, default init
        "g1": jnp.ones((1, E), jnp.float32),
        "be1": jnp.zeros((1, E), jnp.float32),
        "g2": jnp.ones((1, E), jnp.float32),
        "be2": jnp.zeros((1, E), jnp.float32),
    }


def reference_forward(x, params, num_heads):
    """Pure-JAX reference reproducing the PyTorch semantics (mask=None)."""
    def one(xb):
        T, E = xb.shape
        S = E // num_heads
        scale = 1.0 / jnp.sqrt(jnp.float32(E))
        q = xb @ params["wq"]
        k = xb @ params["wk"]
        v = xb @ params["wv"]
        outs = []
        for h in range(num_heads):
            sl = slice(h * S, (h + 1) * S)
            qh = _layer_norm(q[:, sl], params["qg"][0], params["qb"][0])
            kh = _layer_norm(k[:, sl], params["kg"][0], params["kb"][0])
            vh = v[:, sl]
            s = (qh @ kh.T) * scale
            p = jax.nn.softmax(s, axis=-1)
            outs.append(p @ vh)
        attn = jnp.concatenate(outs, axis=-1)
        attended = attn @ params["wo"] + params["bo"][0]
        x1 = _layer_norm(xb + attended, params["g1"][0], params["be1"][0])
        hidden = jax.nn.relu(x1 @ params["w1"] + params["b1"][0])
        transformed = hidden @ params["w2"] + params["b2"][0]
        return _layer_norm(x1 + transformed, params["g2"][0], params["be2"][0])
    return jax.vmap(one)(x)


if __name__ == "__main__":
    B, T, E = 4, 8, 32
    num_heads = 8

    key = jax.random.PRNGKey(0)
    kx, kp = jax.random.split(key)
    x = jax.random.normal(kx, (B, T, E), jnp.float32)
    params = make_params(kp, E, num_heads, expansion=1)

    with jax.default_matmul_precision("highest"):
        ref = reference_forward(x, params, num_heads)

    # full-precision path: tight numerical check
    out_f32 = jax.block_until_ready(
        transformer_forward(x, params, num_heads, compute_dtype=jnp.float32))
    assert out_f32.shape == (B, T, E)
    err_f32 = float(jnp.max(jnp.abs(out_f32 - ref)))
    assert err_f32 < 2e-4, err_f32

    # bf16-matmul fast path (f32 accumulation / f32 layernorm & softmax math)
    out_bf16 = jax.block_until_ready(
        transformer_forward(x, params, num_heads, compute_dtype=jnp.bfloat16))
    err_bf16 = float(jnp.max(jnp.abs(out_bf16 - ref)))
    assert err_bf16 < 1e-1, err_bf16

    print("KERNEL_OK")
</pallas_src>

<mosaic_0001>
module attributes {stable_mosaic.version = 11 : i64} {
  func.func @transformer_kernel(%arg0: i32, %arg1: memref<4x8x32xf32, #tpu.memory_space<vmem>>, %arg2: memref<32x32xf32, #tpu.memory_space<vmem>>, %arg3: memref<32x32xf32, #tpu.memory_space<vmem>>, %arg4: memref<32x32xf32, #tpu.memory_space<vmem>>, %arg5: memref<32x32xf32, #tpu.memory_space<vmem>>, %arg6: memref<1x32xf32, #tpu.memory_space<vmem>>, %arg7: memref<1x4xf32, #tpu.memory_space<vmem>>, %arg8: memref<1x4xf32, #tpu.memory_space<vmem>>, %arg9: memref<1x4xf32, #tpu.memory_space<vmem>>, %arg10: memref<1x4xf32, #tpu.memory_space<vmem>>, %arg11: memref<32x32xf32, #tpu.memory_space<vmem>>, %arg12: memref<1x32xf32, #tpu.memory_space<vmem>>, %arg13: memref<32x32xf32, #tpu.memory_space<vmem>>, %arg14: memref<1x32xf32, #tpu.memory_space<vmem>>, %arg15: memref<1x32xf32, #tpu.memory_space<vmem>>, %arg16: memref<1x32xf32, #tpu.memory_space<vmem>>, %arg17: memref<1x32xf32, #tpu.memory_space<vmem>>, %arg18: memref<1x32xf32, #tpu.memory_space<vmem>>, %arg19: memref<4x8x32xf32, #tpu.memory_space<vmem>>) attributes {dimension_semantics = [#tpu.dimension_semantics<parallel>], iteration_bounds = array<i64: 1>, scalar_prefetch = 0 : i64, scratch_operands = 0 : i64, tpu.core_type = #tpu.core_type<tc>, window_params = [{transform_indices = @transform_0, window_bounds = array<i64: 4, 8, 32>}, {pipeline_mode = #tpu.pipeline_mode<synchronous>, transform_indices = @transform_1, window_bounds = array<i64: 32, 32>}, {pipeline_mode = #tpu.pipeline_mode<synchronous>, transform_indices = @transform_2, window_bounds = array<i64: 32, 32>}, {pipeline_mode = #tpu.pipeline_mode<synchronous>, transform_indices = @transform_3, window_bounds = array<i64: 32, 32>}, {pipeline_mode = #tpu.pipeline_mode<synchronous>, transform_indices = @transform_4, window_bounds = array<i64: 32, 32>}, {pipeline_mode = #tpu.pipeline_mode<synchronous>, transform_indices = @transform_5, window_bounds = array<i64: 1, 32>}, {pipeline_mode = #tpu.pipeline_mode<synchronous>, transform_indices = @transform_6, window_bounds = array<i64: 1, 4>}, {pipeline_mode = #tpu.pipeline_mode<synchronous>, transform_indices = @transform_7, window_bounds = array<i64: 1, 4>}, {pipeline_mode = #tpu.pipeline_mode<synchronous>, transform_indices = @transform_8, window_bounds = array<i64: 1, 4>}, {pipeline_mode = #tpu.pipeline_mode<synchronous>, transform_indices = @transform_9, window_bounds = array<i64: 1, 4>}, {pipeline_mode = #tpu.pipeline_mode<synchronous>, transform_indices = @transform_10, window_bounds = array<i64: 32, 32>}, {pipeline_mode = #tpu.pipeline_mode<synchronous>, transform_indices = @transform_11, window_bounds = array<i64: 1, 32>}, {pipeline_mode = #tpu.pipeline_mode<synchronous>, transform_indices = @transform_12, window_bounds = array<i64: 32, 32>}, {pipeline_mode = #tpu.pipeline_mode<synchronous>, transform_indices = @transform_13, window_bounds = array<i64: 1, 32>}, {pipeline_mode = #tpu.pipeline_mode<synchronous>, transform_indices = @transform_14, window_bounds = array<i64: 1, 32>}, {pipeline_mode = #tpu.pipeline_mode<synchronous>, transform_indices = @transform_15, window_bounds = array<i64: 1, 32>}, {pipeline_mode = #tpu.pipeline_mode<synchronous>, transform_indices = @transform_16, window_bounds = array<i64: 1, 32>}, {pipeline_mode = #tpu.pipeline_mode<synchronous>, transform_indices = @transform_17, window_bounds = array<i64: 1, 32>}, {transform_indices = @transform_18, window_bounds = array<i64: 4, 8, 32>}]} {
    %c0 = arith.constant 0 : index
    %c0_0 = arith.constant 0 : index
    %c0_1 = arith.constant 0 : index
    %0 = vector.load %arg1[%c0, %c0_0, %c0_1] : memref<4x8x32xf32, #tpu.memory_space<vmem>>, vector<4x8x32xf32>
    %1 = vector.shape_cast %0 : vector<4x8x32xf32> to vector<32x32xf32>
    %c0_2 = arith.constant 0 : index
    %c0_3 = arith.constant 0 : index
    %2 = vector.load %arg2[%c0_2, %c0_3] : memref<32x32xf32, #tpu.memory_space<vmem>>, vector<32x32xf32>
    %cst = arith.constant dense<0.000000e+00> : vector<32x32xf32>
    %3 = tpu.matmul %1, %2, %cst {dimension_numbers = #tpu.dot_dimension_numbers<[1], [0], [0], [1], [0, 0, 1, 1], [], []>} : vector<32x32xf32>, vector<32x32xf32>, vector<32x32xf32> -> vector<32x32xf32>
    %c0_4 = arith.constant 0 : index
    %c0_5 = arith.constant 0 : index
    %4 = vector.load %arg3[%c0_4, %c0_5] : memref<32x32xf32, #tpu.memory_space<vmem>>, vector<32x32xf32>
    %cst_6 = arith.constant dense<0.000000e+00> : vector<32x32xf32>
    %5 = tpu.matmul %1, %4, %cst_6 {dimension_numbers = #tpu.dot_dimension_numbers<[1], [0], [0], [1], [0, 0, 1, 1], [], []>} : vector<32x32xf32>, vector<32x32xf32>, vector<32x32xf32> -> vector<32x32xf32>
    %c0_7 = arith.constant 0 : index
    %c0_8 = arith.constant 0 : index
    %6 = vector.load %arg4[%c0_7, %c0_8] : memref<32x32xf32, #tpu.memory_space<vmem>>, vector<32x32xf32>
    %cst_9 = arith.constant dense<0.000000e+00> : vector<32x32xf32>
    %7 = tpu.matmul %1, %6, %cst_9 {dimension_numbers = #tpu.dot_dimension_numbers<[1], [0], [0], [1], [0, 0, 1, 1], [], []>} : vector<32x32xf32>, vector<32x32xf32>, vector<32x32xf32> -> vector<32x32xf32>
    %cst_10 = arith.constant 3.200000e+01 : f32
    %8 = math.sqrt %cst_10 : f32
    %cst_11 = arith.constant 1.000000e+00 : f32
    %9 = arith.divf %cst_11, %8 : f32
    %10 = vector.shape_cast %3 : vector<32x32xf32> to vector<32x8x4xf32>
    %c0_12 = arith.constant 0 : index
    %c0_13 = arith.constant 0 : index
    %11 = vector.load %arg7[%c0_12, %c0_13] : memref<1x4xf32, #tpu.memory_space<vmem>>, vector<1x4xf32>
    %12 = vector.shape_cast %11 : vector<1x4xf32> to vector<4xf32>
    %13 = vector.broadcast %9 : f32 to vector<4xf32>
    %14 = arith.mulf %12, %13 : vector<4xf32>
    %c0_14 = arith.constant 0 : index
    %c0_15 = arith.constant 0 : index
    %15 = vector.load %arg8[%c0_14, %c0_15] : memref<1x4xf32, #tpu.memory_space<vmem>>, vector<1x4xf32>
    %16 = vector.shape_cast %15 : vector<1x4xf32> to vector<4xf32>
    %17 = vector.broadcast %9 : f32 to vector<4xf32>
    %18 = arith.mulf %16, %17 : vector<4xf32>
    %cst_16 = arith.constant dense<0.000000e+00> : vector<32x8xf32>
    %19 = vector.multi_reduction <add>, %10, %cst_16 [2] : vector<32x8x4xf32> to vector<32x8xf32>
    %20 = vector.shape_cast %19 : vector<32x8xf32> to vector<32x8x1xf32>
    %cst_17 = arith.constant 4.000000e+00 : f32
    %21 = vector.broadcast %cst_17 : f32 to vector<32x8x1xf32>
    %22 = arith.divf %20, %21 : vector<32x8x1xf32>
    %23 = vector.broadcast %22 : vector<32x8x1xf32> to vector<32x8x4xf32>
    %24 = arith.subf %10, %23 : vector<32x8x4xf32>
    %25 = arith.mulf %24, %24 : vector<32x8x4xf32>
    %cst_18 = arith.constant dense<0.000000e+00> : vector<32x8xf32>
    %26 = vector.multi_reduction <add>, %25, %cst_18 [2] : vector<32x8x4xf32> to vector<32x8xf32>
    %27 = vector.shape_cast %26 : vector<32x8xf32> to vector<32x8x1xf32>
    %cst_19 = arith.constant 4.000000e+00 : f32
    %28 = vector.broadcast %cst_19 : f32 to vector<32x8x1xf32>
    %29 = arith.divf %27, %28 : vector<32x8x1xf32>
    %30 = vector.broadcast %22 : vector<32x8x1xf32> to vector<32x8x4xf32>
    %31 = arith.subf %10, %30 : vector<32x8x4xf32>
    %cst_20 = arith.constant 9.99999974E-6 : f32
    %32 = vector.broadcast %cst_20 : f32 to vector<32x8x1xf32>
    %33 = arith.addf %29, %32 : vector<32x8x1xf32>
    %34 = math.rsqrt %33 : vector<32x8x1xf32>
    %35 = vector.broadcast %34 : vector<32x8x1xf32> to vector<32x8x4xf32>
    %36 = arith.mulf %31, %35 : vector<32x8x4xf32>
    %37 = vector.shape_cast %14 : vector<4xf32> to vector<1x1x4xf32>
    %38 = vector.broadcast %37 : vector<1x1x4xf32> to vector<32x8x4xf32>
    %39 = arith.mulf %36, %38 : vector<32x8x4xf32>
    %40 = vector.shape_cast %18 : vector<4xf32> to vector<1x1x4xf32>
    %41 = vector.broadcast %40 : vector<1x1x4xf32> to vector<32x8x4xf32>
    %42 = arith.addf %39, %41 : vector<32x8x4xf32>
    %43 = vector.shape_cast %5 : vector<32x32xf32> to vector<32x8x4xf32>
    %c0_21 = arith.constant 0 : index
    %c0_22 = arith.constant 0 : index
    %44 = vector.load %arg9[%c0_21, %c0_22] : memref<1x4xf32, #tpu.memory_space<vmem>>, vector<1x4xf32>
    %45 = vector.shape_cast %44 : vector<1x4xf32> to vector<4xf32>
    %c0_23 = arith.constant 0 : index
    %c0_24 = arith.constant 0 : index
    %46 = vector.load %arg10[%c0_23, %c0_24] : memref<1x4xf32, #tpu.memory_space<vmem>>, vector<1x4xf32>
    %47 = vector.shape_cast %46 : vector<1x4xf32> to vector<4xf32>
    %cst_25 = arith.constant dense<0.000000e+00> : vector<32x8xf32>
    %48 = vector.multi_reduction <add>, %43, %cst_25 [2] : vector<32x8x4xf32> to vector<32x8xf32>
    %49 = vector.shape_cast %48 : vector<32x8xf32> to vector<32x8x1xf32>
    %cst_26 = arith.constant 4.000000e+00 : f32
    %50 = vector.broadcast %cst_26 : f32 to vector<32x8x1xf32>
    %51 = arith.divf %49, %50 : vector<32x8x1xf32>
    %52 = vector.broadcast %51 : vector<32x8x1xf32> to vector<32x8x4xf32>
    %53 = arith.subf %43, %52 : vector<32x8x4xf32>
    %54 = arith.mulf %53, %53 : vector<32x8x4xf32>
    %cst_27 = arith.constant dense<0.000000e+00> : vector<32x8xf32>
    %55 = vector.multi_reduction <add>, %54, %cst_27 [2] : vector<32x8x4xf32> to vector<32x8xf32>
    %56 = vector.shape_cast %55 : vector<32x8xf32> to vector<32x8x1xf32>
    %cst_28 = arith.constant 4.000000e+00 : f32
    %57 = vector.broadcast %cst_28 : f32 to vector<32x8x1xf32>
    %58 = arith.divf %56, %57 : vector<32x8x1xf32>
    %59 = vector.broadcast %51 : vector<32x8x1xf32> to vector<32x8x4xf32>
    %60 = arith.subf %43, %59 : vector<32x8x4xf32>
    %cst_29 = arith.constant 9.99999974E-6 : f32
    %61 = vector.broadcast %cst_29 : f32 to vector<32x8x1xf32>
    %62 = arith.addf %58, %61 : vector<32x8x1xf32>
    %63 = math.rsqrt %62 : vector<32x8x1xf32>
    %64 = vector.broadcast %63 : vector<32x8x1xf32> to vector<32x8x4xf32>
    %65 = arith.mulf %60, %64 : vector<32x8x4xf32>
    %66 = vector.shape_cast %45 : vector<4xf32> to vector<1x1x4xf32>
    %67 = vector.broadcast %66 : vector<1x1x4xf32> to vector<32x8x4xf32>
    %68 = arith.mulf %65, %67 : vector<32x8x4xf32>
    %69 = vector.shape_cast %47 : vector<4xf32> to vector<1x1x4xf32>
    %70 = vector.broadcast %69 : vector<1x1x4xf32> to vector<32x8x4xf32>
    %71 = arith.addf %68, %70 : vector<32x8x4xf32>
    %72 = vector.shape_cast %7 : vector<32x32xf32> to vector<32x8x4xf32>
    %c0_30 = arith.constant 0 : index
    %c0_31 = arith.constant 0 : index
    %73 = vector.load %arg5[%c0_30, %c0_31] : memref<32x32xf32, #tpu.memory_space<vmem>>, vector<32x32xf32>
    %cst_32 = arith.constant 0.000000e+00 : f32
    %74 = vector.broadcast %cst_32 : f32 to vector<32x32xf32>
    %75 = vector.extract_strided_slice %42 {offsets = [0, 0, 0], sizes = [32, 1, 4], strides = [1, 1, 1]} : vector<32x8x4xf32> to vector<32x1x4xf32>
    %76 = vector.shape_cast %75 : vector<32x1x4xf32> to vector<32x4xf32>
    %77 = vector.shape_cast %76 : vector<32x4xf32> to vector<4x8x4xf32>
    %78 = vector.extract_strided_slice %71 {offsets = [0, 0, 0], sizes = [32, 1, 4], strides = [1, 1, 1]} : vector<32x8x4xf32> to vector<32x1x4xf32>
    %79 = vector.shape_cast %78 : vector<32x1x4xf32> to vector<32x4xf32>
    %80 = vector.shape_cast %79 : vector<32x4xf32> to vector<4x8x4xf32>
    %81 = vector.extract_strided_slice %72 {offsets = [0, 0, 0], sizes = [32, 1, 4], strides = [1, 1, 1]} : vector<32x8x4xf32> to vector<32x1x4xf32>
    %82 = vector.shape_cast %81 : vector<32x1x4xf32> to vector<32x4xf32>
    %83 = vector.shape_cast %82 : vector<32x4xf32> to vector<4x8x4xf32>
    "tpu.trace_start"() <{level = 10 : i32, message = "bqs,bks->bqk"}> : () -> ()
    %cst_33 = arith.constant dense<0.000000e+00> : vector<4x8x8xf32>
    %84 = tpu.matmul %77, %80, %cst_33 {dimension_numbers = #tpu.dot_dimension_numbers<[2], [2], [1], [1], [0, 0, 0, 1, 1, 1], [0], [0]>} : vector<4x8x4xf32>, vector<4x8x4xf32>, vector<4x8x8xf32> -> vector<4x8x8xf32>
    "tpu.trace_stop"() : () -> ()
    %cst_34 = arith.constant dense<0xFF800000> : vector<4x8xf32>
    %85 = vector.multi_reduction <maximumf>, %84, %cst_34 [2] : vector<4x8x8xf32> to vector<4x8xf32>
    %86 = vector.shape_cast %85 : vector<4x8xf32> to vector<4x8x1xf32>
    %87 = vector.broadcast %86 : vector<4x8x1xf32> to vector<4x8x8xf32>
    %88 = arith.subf %84, %87 : vector<4x8x8xf32>
    %89 = math.exp %88 : vector<4x8x8xf32>
    %cst_35 = arith.constant dense<0.000000e+00> : vector<4x8xf32>
    %90 = vector.multi_reduction <add>, %89, %cst_35 [2] : vector<4x8x8xf32> to vector<4x8xf32>
    %91 = vector.shape_cast %90 : vector<4x8xf32> to vector<4x8x1xf32>
    %92 = tpu.reciprocal %91 : vector<4x8x1xf32> -> vector<4x8x1xf32>
    %93 = vector.broadcast %92 : vector<4x8x1xf32> to vector<4x8x8xf32>
    %94 = arith.mulf %89, %93 : vector<4x8x8xf32>
    "tpu.trace_start"() <{level = 10 : i32, message = "bqk,bks->bqs"}> : () -> ()
    %cst_36 = arith.constant dense<0.000000e+00> : vector<4x8x4xf32>
    %95 = tpu.matmul %94, %83, %cst_36 {dimension_numbers = #tpu.dot_dimension_numbers<[2], [1], [1], [2], [0, 0, 0, 1, 1, 2], [0], [0]>} : vector<4x8x8xf32>, vector<4x8x4xf32>, vector<4x8x4xf32> -> vector<4x8x4xf32>
    "tpu.trace_stop"() : () -> ()
    %96 = vector.shape_cast %95 : vector<4x8x4xf32> to vector<32x4xf32>
    %97 = vector.extract_strided_slice %73 {offsets = [0, 0], sizes = [4, 32], strides = [1, 1]} : vector<32x32xf32> to vector<4x32xf32>
    %cst_37 = arith.constant dense<0.000000e+00> : vector<32x32xf32>
    %98 = tpu.matmul %96, %97, %cst_37 {dimension_numbers = #tpu.dot_dimension_numbers<[1], [0], [0], [1], [0, 0, 1, 1], [], []>} : vector<32x4xf32>, vector<4x32xf32>, vector<32x32xf32> -> vector<32x32xf32>
    %99 = arith.addf %74, %98 : vector<32x32xf32>
    %100 = vector.extract_strided_slice %42 {offsets = [0, 1, 0], sizes = [32, 1, 4], strides = [1, 1, 1]} : vector<32x8x4xf32> to vector<32x1x4xf32>
    %101 = vector.shape_cast %100 : vector<32x1x4xf32> to vector<32x4xf32>
    %102 = vector.shape_cast %101 : vector<32x4xf32> to vector<4x8x4xf32>
    %103 = vector.extract_strided_slice %71 {offsets = [0, 1, 0], sizes = [32, 1, 4], strides = [1, 1, 1]} : vector<32x8x4xf32> to vector<32x1x4xf32>
    %104 = vector.shape_cast %103 : vector<32x1x4xf32> to vector<32x4xf32>
    %105 = vector.shape_cast %104 : vector<32x4xf32> to vector<4x8x4xf32>
    %106 = vector.extract_strided_slice %72 {offsets = [0, 1, 0], sizes = [32, 1, 4], strides = [1, 1, 1]} : vector<32x8x4xf32> to vector<32x1x4xf32>
    %107 = vector.shape_cast %106 : vector<32x1x4xf32> to vector<32x4xf32>
    %108 = vector.shape_cast %107 : vector<32x4xf32> to vector<4x8x4xf32>
    "tpu.trace_start"() <{level = 10 : i32, message = "bqs,bks->bqk"}> : () -> ()
    %cst_38 = arith.constant dense<0.000000e+00> : vector<4x8x8xf32>
    %109 = tpu.matmul %102, %105, %cst_38 {dimension_numbers = #tpu.dot_dimension_numbers<[2], [2], [1], [1], [0, 0, 0, 1, 1, 1], [0], [0]>} : vector<4x8x4xf32>, vector<4x8x4xf32>, vector<4x8x8xf32> -> vector<4x8x8xf32>
    "tpu.trace_stop"() : () -> ()
    %cst_39 = arith.constant dense<0xFF800000> : vector<4x8xf32>
    %110 = vector.multi_reduction <maximumf>, %109, %cst_39 [2] : vector<4x8x8xf32> to vector<4x8xf32>
    %111 = vector.shape_cast %110 : vector<4x8xf32> to vector<4x8x1xf32>
    %112 = vector.broadcast %111 : vector<4x8x1xf32> to vector<4x8x8xf32>
    %113 = arith.subf %109, %112 : vector<4x8x8xf32>
    %114 = math.exp %113 : vector<4x8x8xf32>
    %cst_40 = arith.constant dense<0.000000e+00> : vector<4x8xf32>
    %115 = vector.multi_reduction <add>, %114, %cst_40 [2] : vector<4x8x8xf32> to vector<4x8xf32>
    %116 = vector.shape_cast %115 : vector<4x8xf32> to vector<4x8x1xf32>
    %117 = tpu.reciprocal %116 : vector<4x8x1xf32> -> vector<4x8x1xf32>
    %118 = vector.broadcast %117 : vector<4x8x1xf32> to vector<4x8x8xf32>
    %119 = arith.mulf %114, %118 : vector<4x8x8xf32>
    "tpu.trace_start"() <{level = 10 : i32, message = "bqk,bks->bqs"}> : () -> ()
    %cst_41 = arith.constant dense<0.000000e+00> : vector<4x8x4xf32>
    %120 = tpu.matmul %119, %108, %cst_41 {dimension_numbers = #tpu.dot_dimension_numbers<[2], [1], [1], [2], [0, 0, 0, 1, 1, 2], [0], [0]>} : vector<4x8x8xf32>, vector<4x8x4xf32>, vector<4x8x4xf32> -> vector<4x8x4xf32>
    "tpu.trace_stop"() : () -> ()
    %121 = vector.shape_cast %120 : vector<4x8x4xf32> to vector<32x4xf32>
    %122 = vector.extract_strided_slice %73 {offsets = [4, 0], sizes = [4, 32], strides = [1, 1]} : vector<32x32xf32> to vector<4x32xf32>
    %cst_42 = arith.constant dense<0.000000e+00> : vector<32x32xf32>
    %123 = tpu.matmul %121, %122, %cst_42 {dimension_numbers = #tpu.dot_dimension_numbers<[1], [0], [0], [1], [0, 0, 1, 1], [], []>} : vector<32x4xf32>, vector<4x32xf32>, vector<32x32xf32> -> vector<32x32xf32>
    %124 = arith.addf %99, %123 : vector<32x32xf32>
    %125 = vector.extract_strided_slice %42 {offsets = [0, 2, 0], sizes = [32, 1, 4], strides = [1, 1, 1]} : vector<32x8x4xf32> to vector<32x1x4xf32>
    %126 = vector.shape_cast %125 : vector<32x1x4xf32> to vector<32x4xf32>
    %127 = vector.shape_cast %126 : vector<32x4xf32> to vector<4x8x4xf32>
    %128 = vector.extract_strided_slice %71 {offsets = [0, 2, 0], sizes = [32, 1, 4], strides = [1, 1, 1]} : vector<32x8x4xf32> to vector<32x1x4xf32>
    %129 = vector.shape_cast %128 : vector<32x1x4xf32> to vector<32x4xf32>
    %130 = vector.shape_cast %129 : vector<32x4xf32> to vector<4x8x4xf32>
    %131 = vector.extract_strided_slice %72 {offsets = [0, 2, 0], sizes = [32, 1, 4], strides = [1, 1, 1]} : vector<32x8x4xf32> to vector<32x1x4xf32>
    %132 = vector.shape_cast %131 : vector<32x1x4xf32> to vector<32x4xf32>
    %133 = vector.shape_cast %132 : vector<32x4xf32> to vector<4x8x4xf32>
    "tpu.trace_start"() <{level = 10 : i32, message = "bqs,bks->bqk"}> : () -> ()
    %cst_43 = arith.constant dense<0.000000e+00> : vector<4x8x8xf32>
    %134 = tpu.matmul %127, %130, %cst_43 {dimension_numbers = #tpu.dot_dimension_numbers<[2], [2], [1], [1], [0, 0, 0, 1, 1, 1], [0], [0]>} : vector<4x8x4xf32>, vector<4x8x4xf32>, vector<4x8x8xf32> -> vector<4x8x8xf32>
    "tpu.trace_stop"() : () -> ()
    %cst_44 = arith.constant dense<0xFF800000> : vector<4x8xf32>
    %135 = vector.multi_reduction <maximumf>, %134, %cst_44 [2] : vector<4x8x8xf32> to vector<4x8xf32>
    %136 = vector.shape_cast %135 : vector<4x8xf32> to vector<4x8x1xf32>
    %137 = vector.broadcast %136 : vector<4x8x1xf32> to vector<4x8x8xf32>
    %138 = arith.subf %134, %137 : vector<4x8x8xf32>
    %139 = math.exp %138 : vector<4x8x8xf32>
    %cst_45 = arith.constant dense<0.000000e+00> : vector<4x8xf32>
    %140 = vector.multi_reduction <add>, %139, %cst_45 [2] : vector<4x8x8xf32> to vector<4x8xf32>
    %141 = vector.shape_cast %140 : vector<4x8xf32> to vector<4x8x1xf32>
    %142 = tpu.reciprocal %141 : vector<4x8x1xf32> -> vector<4x8x1xf32>
    %143 = vector.broadcast %142 : vector<4x8x1xf32> to vector<4x8x8xf32>
    %144 = arith.mulf %139, %143 : vector<4x8x8xf32>
    "tpu.trace_start"() <{level = 10 : i32, message = "bqk,bks->bqs"}> : () -> ()
    %cst_46 = arith.constant dense<0.000000e+00> : vector<4x8x4xf32>
    %145 = tpu.matmul %144, %133, %cst_46 {dimension_numbers = #tpu.dot_dimension_numbers<[2], [1], [1], [2], [0, 0, 0, 1, 1, 2], [0], [0]>} : vector<4x8x8xf32>, vector<4x8x4xf32>, vector<4x8x4xf32> -> vector<4x8x4xf32>
    "tpu.trace_stop"() : () -> ()
    %146 = vector.shape_cast %145 : vector<4x8x4xf32> to vector<32x4xf32>
    %147 = vector.extract_strided_slice %73 {offsets = [8, 0], sizes = [4, 32], strides = [1, 1]} : vector<32x32xf32> to vector<4x32xf32>
    %cst_47 = arith.constant dense<0.000000e+00> : vector<32x32xf32>
    %148 = tpu.matmul %146, %147, %cst_47 {dimension_numbers = #tpu.dot_dimension_numbers<[1], [0], [0], [1], [0, 0, 1, 1], [], []>} : vector<32x4xf32>, vector<4x32xf32>, vector<32x32xf32> -> vector<32x32xf32>
    %149 = arith.addf %124, %148 : vector<32x32xf32>
    %150 = vector.extract_strided_slice %42 {offsets = [0, 3, 0], sizes = [32, 1, 4], strides = [1, 1, 1]} : vector<32x8x4xf32> to vector<32x1x4xf32>
    %151 = vector.shape_cast %150 : vector<32x1x4xf32> to vector<32x4xf32>
    %152 = vector.shape_cast %151 : vector<32x4xf32> to vector<4x8x4xf32>
    %153 = vector.extract_strided_slice %71 {offsets = [0, 3, 0], sizes = [32, 1, 4], strides = [1, 1, 1]} : vector<32x8x4xf32> to vector<32x1x4xf32>
    %154 = vector.shape_cast %153 : vector<32x1x4xf32> to vector<32x4xf32>
    %155 = vector.shape_cast %154 : vector<32x4xf32> to vector<4x8x4xf32>
    %156 = vector.extract_strided_slice %72 {offsets = [0, 3, 0], sizes = [32, 1, 4], strides = [1, 1, 1]} : vector<32x8x4xf32> to vector<32x1x4xf32>
    %157 = vector.shape_cast %156 : vector<32x1x4xf32> to vector<32x4xf32>
    %158 = vector.shape_cast %157 : vector<32x4xf32> to vector<4x8x4xf32>
    "tpu.trace_start"() <{level = 10 : i32, message = "bqs,bks->bqk"}> : () -> ()
    %cst_48 = arith.constant dense<0.000000e+00> : vector<4x8x8xf32>
    %159 = tpu.matmul %152, %155, %cst_48 {dimension_numbers = #tpu.dot_dimension_numbers<[2], [2], [1], [1], [0, 0, 0, 1, 1, 1], [0], [0]>} : vector<4x8x4xf32>, vector<4x8x4xf32>, vector<4x8x8xf32> -> vector<4x8x8xf32>
    "tpu.trace_stop"() : () -> ()
    %cst_49 = arith.constant dense<0xFF800000> : vector<4x8xf32>
    %160 = vector.multi_reduction <maximumf>, %159, %cst_49 [2] : vector<4x8x8xf32> to vector<4x8xf32>
    %161 = vector.shape_cast %160 : vector<4x8xf32> to vector<4x8x1xf32>
    %162 = vector.broadcast %161 : vector<4x8x1xf32> to vector<4x8x8xf32>
    %163 = arith.subf %159, %162 : vector<4x8x8xf32>
    %164 = math.exp %163 : vector<4x8x8xf32>
    %cst_50 = arith.constant dense<0.000000e+00> : vector<4x8xf32>
    %165 = vector.multi_reduction <add>, %164, %cst_50 [2] : vector<4x8x8xf32> to vector<4x8xf32>
    %166 = vector.shape_cast %165 : vector<4x8xf32> to vector<4x8x1xf32>
    %167 = tpu.reciprocal %166 : vector<4x8x1xf32> -> vector<4x8x1xf32>
    %168 = vector.broadcast %167 : vector<4x8x1xf32> to vector<4x8x8xf32>
    %169 = arith.mulf %164, %168 : vector<4x8x8xf32>
    "tpu.trace_start"() <{level = 10 : i32, message = "bqk,bks->bqs"}> : () -> ()
    %cst_51 = arith.constant dense<0.000000e+00> : vector<4x8x4xf32>
    %170 = tpu.matmul %169, %158, %cst_51 {dimension_numbers = #tpu.dot_dimension_numbers<[2], [1], [1], [2], [0, 0, 0, 1, 1, 2], [0], [0]>} : vector<4x8x8xf32>, vector<4x8x4xf32>, vector<4x8x4xf32> -> vector<4x8x4xf32>
    "tpu.trace_stop"() : () -> ()
    %171 = vector.shape_cast %170 : vector<4x8x4xf32> to vector<32x4xf32>
    %172 = vector.extract_strided_slice %73 {offsets = [12, 0], sizes = [4, 32], strides = [1, 1]} : vector<32x32xf32> to vector<4x32xf32>
    %cst_52 = arith.constant dense<0.000000e+00> : vector<32x32xf32>
    %173 = tpu.matmul %171, %172, %cst_52 {dimension_numbers = #tpu.dot_dimension_numbers<[1], [0], [0], [1], [0, 0, 1, 1], [], []>} : vector<32x4xf32>, vector<4x32xf32>, vector<32x32xf32> -> vector<32x32xf32>
    %174 = arith.addf %149, %173 : vector<32x32xf32>
    %175 = vector.extract_strided_slice %42 {offsets = [0, 4, 0], sizes = [32, 1, 4], strides = [1, 1, 1]} : vector<32x8x4xf32> to vector<32x1x4xf32>
    %176 = vector.shape_cast %175 : vector<32x1x4xf32> to vector<32x4xf32>
    %177 = vector.shape_cast %176 : vector<32x4xf32> to vector<4x8x4xf32>
    %178 = vector.extract_strided_slice %71 {offsets = [0, 4, 0], sizes = [32, 1, 4], strides = [1, 1, 1]} : vector<32x8x4xf32> to vector<32x1x4xf32>
    %179 = vector.shape_cast %178 : vector<32x1x4xf32> to vector<32x4xf32>
    %180 = vector.shape_cast %179 : vector<32x4xf32> to vector<4x8x4xf32>
    %181 = vector.extract_strided_slice %72 {offsets = [0, 4, 0], sizes = [32, 1, 4], strides = [1, 1, 1]} : vector<32x8x4xf32> to vector<32x1x4xf32>
    %182 = vector.shape_cast %181 : vector<32x1x4xf32> to vector<32x4xf32>
    %183 = vector.shape_cast %182 : vector<32x4xf32> to vector<4x8x4xf32>
    "tpu.trace_start"() <{level = 10 : i32, message = "bqs,bks->bqk"}> : () -> ()
    %cst_53 = arith.constant dense<0.000000e+00> : vector<4x8x8xf32>
    %184 = tpu.matmul %177, %180, %cst_53 {dimension_numbers = #tpu.dot_dimension_numbers<[2], [2], [1], [1], [0, 0, 0, 1, 1, 1], [0], [0]>} : vector<4x8x4xf32>, vector<4x8x4xf32>, vector<4x8x8xf32> -> vector<4x8x8xf32>
    "tpu.trace_stop"() : () -> ()
    %cst_54 = arith.constant dense<0xFF800000> : vector<4x8xf32>
    %185 = vector.multi_reduction <maximumf>, %184, %cst_54 [2] : vector<4x8x8xf32> to vector<4x8xf32>
    %186 = vector.shape_cast %185 : vector<4x8xf32> to vector<4x8x1xf32>
    %187 = vector.broadcast %186 : vector<4x8x1xf32> to vector<4x8x8xf32>
    %188 = arith.subf %184, %187 : vector<4x8x8xf32>
    %189 = math.exp %188 : vector<4x8x8xf32>
    %cst_55 = arith.constant dense<0.000000e+00> : vector<4x8xf32>
    %190 = vector.multi_reduction <add>, %189, %cst_55 [2] : vector<4x8x8xf32> to vector<4x8xf32>
    %191 = vector.shape_cast %190 : vector<4x8xf32> to vector<4x8x1xf32>
    %192 = tpu.reciprocal %191 : vector<4x8x1xf32> -> vector<4x8x1xf32>
    %193 = vector.broadcast %192 : vector<4x8x1xf32> to vector<4x8x8xf32>
    %194 = arith.mulf %189, %193 : vector<4x8x8xf32>
    "tpu.trace_start"() <{level = 10 : i32, message = "bqk,bks->bqs"}> : () -> ()
    %cst_56 = arith.constant dense<0.000000e+00> : vector<4x8x4xf32>
    %195 = tpu.matmul %194, %183, %cst_56 {dimension_numbers = #tpu.dot_dimension_numbers<[2], [1], [1], [2], [0, 0, 0, 1, 1, 2], [0], [0]>} : vector<4x8x8xf32>, vector<4x8x4xf32>, vector<4x8x4xf32> -> vector<4x8x4xf32>
    "tpu.trace_stop"() : () -> ()
    %196 = vector.shape_cast %195 : vector<4x8x4xf32> to vector<32x4xf32>
    %197 = vector.extract_strided_slice %73 {offsets = [16, 0], sizes = [4, 32], strides = [1, 1]} : vector<32x32xf32> to vector<4x32xf32>
    %cst_57 = arith.constant dense<0.000000e+00> : vector<32x32xf32>
    %198 = tpu.matmul %196, %197, %cst_57 {dimension_numbers = #tpu.dot_dimension_numbers<[1], [0], [0], [1], [0, 0, 1, 1], [], []>} : vector<32x4xf32>, vector<4x32xf32>, vector<32x32xf32> -> vector<32x32xf32>
    %199 = arith.addf %174, %198 : vector<32x32xf32>
    %200 = vector.extract_strided_slice %42 {offsets = [0, 5, 0], sizes = [32, 1, 4], strides = [1, 1, 1]} : vector<32x8x4xf32> to vector<32x1x4xf32>
    %201 = vector.shape_cast %200 : vector<32x1x4xf32> to vector<32x4xf32>
    %202 = vector.shape_cast %201 : vector<32x4xf32> to vector<4x8x4xf32>
    %203 = vector.extract_strided_slice %71 {offsets = [0, 5, 0], sizes = [32, 1, 4], strides = [1, 1, 1]} : vector<32x8x4xf32> to vector<32x1x4xf32>
    %204 = vector.shape_cast %203 : vector<32x1x4xf32> to vector<32x4xf32>
    %205 = vector.shape_cast %204 : vector<32x4xf32> to vector<4x8x4xf32>
    %206 = vector.extract_strided_slice %72 {offsets = [0, 5, 0], sizes = [32, 1, 4], strides = [1, 1, 1]} : vector<32x8x4xf32> to vector<32x1x4xf32>
    %207 = vector.shape_cast %206 : vector<32x1x4xf32> to vector<32x4xf32>
    %208 = vector.shape_cast %207 : vector<32x4xf32> to vector<4x8x4xf32>
    "tpu.trace_start"() <{level = 10 : i32, message = "bqs,bks->bqk"}> : () -> ()
    %cst_58 = arith.constant dense<0.000000e+00> : vector<4x8x8xf32>
    %209 = tpu.matmul %202, %205, %cst_58 {dimension_numbers = #tpu.dot_dimension_numbers<[2], [2], [1], [1], [0, 0, 0, 1, 1, 1], [0], [0]>} : vector<4x8x4xf32>, vector<4x8x4xf32>, vector<4x8x8xf32> -> vector<4x8x8xf32>
    "tpu.trace_stop"() : () -> ()
    %cst_59 = arith.constant dense<0xFF800000> : vector<4x8xf32>
    %210 = vector.multi_reduction <maximumf>, %209, %cst_59 [2] : vector<4x8x8xf32> to vector<4x8xf32>
    %211 = vector.shape_cast %210 : vector<4x8xf32> to vector<4x8x1xf32>
    %212 = vector.broadcast %211 : vector<4x8x1xf32> to vector<4x8x8xf32>
    %213 = arith.subf %209, %212 : vector<4x8x8xf32>
    %214 = math.exp %213 : vector<4x8x8xf32>
    %cst_60 = arith.constant dense<0.000000e+00> : vector<4x8xf32>
    %215 = vector.multi_reduction <add>, %214, %cst_60 [2] : vector<4x8x8xf32> to vector<4x8xf32>
    %216 = vector.shape_cast %215 : vector<4x8xf32> to vector<4x8x1xf32>
    %217 = tpu.reciprocal %216 : vector<4x8x1xf32> -> vector<4x8x1xf32>
    %218 = vector.broadcast %217 : vector<4x8x1xf32> to vector<4x8x8xf32>
    %219 = arith.mulf %214, %218 : vector<4x8x8xf32>
    "tpu.trace_start"() <{level = 10 : i32, message = "bqk,bks->bqs"}> : () -> ()
    %cst_61 = arith.constant dense<0.000000e+00> : vector<4x8x4xf32>
    %220 = tpu.matmul %219, %208, %cst_61 {dimension_numbers = #tpu.dot_dimension_numbers<[2], [1], [1], [2], [0, 0, 0, 1, 1, 2], [0], [0]>} : vector<4x8x8xf32>, vector<4x8x4xf32>, vector<4x8x4xf32> -> vector<4x8x4xf32>
    "tpu.trace_stop"() : () -> ()
    %221 = vector.shape_cast %220 : vector<4x8x4xf32> to vector<32x4xf32>
    %222 = vector.extract_strided_slice %73 {offsets = [20, 0], sizes = [4, 32], strides = [1, 1]} : vector<32x32xf32> to vector<4x32xf32>
    %cst_62 = arith.constant dense<0.000000e+00> : vector<32x32xf32>
    %223 = tpu.matmul %221, %222, %cst_62 {dimension_numbers = #tpu.dot_dimension_numbers<[1], [0], [0], [1], [0, 0, 1, 1], [], []>} : vector<32x4xf32>, vector<4x32xf32>, vector<32x32xf32> -> vector<32x32xf32>
    %224 = arith.addf %199, %223 : vector<32x32xf32>
    %225 = vector.extract_strided_slice %42 {offsets = [0, 6, 0], sizes = [32, 1, 4], strides = [1, 1, 1]} : vector<32x8x4xf32> to vector<32x1x4xf32>
    %226 = vector.shape_cast %225 : vector<32x1x4xf32> to vector<32x4xf32>
    %227 = vector.shape_cast %226 : vector<32x4xf32> to vector<4x8x4xf32>
    %228 = vector.extract_strided_slice %71 {offsets = [0, 6, 0], sizes = [32, 1, 4], strides = [1, 1, 1]} : vector<32x8x4xf32> to vector<32x1x4xf32>
    %229 = vector.shape_cast %228 : vector<32x1x4xf32> to vector<32x4xf32>
    %230 = vector.shape_cast %229 : vector<32x4xf32> to vector<4x8x4xf32>
    %231 = vector.extract_strided_slice %72 {offsets = [0, 6, 0], sizes = [32, 1, 4], strides = [1, 1, 1]} : vector<32x8x4xf32> to vector<32x1x4xf32>
    %232 = vector.shape_cast %231 : vector<32x1x4xf32> to vector<32x4xf32>
    %233 = vector.shape_cast %232 : vector<32x4xf32> to vector<4x8x4xf32>
    "tpu.trace_start"() <{level = 10 : i32, message = "bqs,bks->bqk"}> : () -> ()
    %cst_63 = arith.constant dense<0.000000e+00> : vector<4x8x8xf32>
    %234 = tpu.matmul %227, %230, %cst_63 {dimension_numbers = #tpu.dot_dimension_numbers<[2], [2], [1], [1], [0, 0, 0, 1, 1, 1], [0], [0]>} : vector<4x8x4xf32>, vector<4x8x4xf32>, vector<4x8x8xf32> -> vector<4x8x8xf32>
    "tpu.trace_stop"() : () -> ()
    %cst_64 = arith.constant dense<0xFF800000> : vector<4x8xf32>
    %235 = vector.multi_reduction <maximumf>, %234, %cst_64 [2] : vector<4x8x8xf32> to vector<4x8xf32>
    %236 = vector.shape_cast %235 : vector<4x8xf32> to vector<4x8x1xf32>
    %237 = vector.broadcast %236 : vector<4x8x1xf32> to vector<4x8x8xf32>
    %238 = arith.subf %234, %237 : vector<4x8x8xf32>
    %239 = math.exp %238 : vector<4x8x8xf32>
    %cst_65 = arith.constant dense<0.000000e+00> : vector<4x8xf32>
    %240 = vector.multi_reduction <add>, %239, %cst_65 [2] : vector<4x8x8xf32> to vector<4x8xf32>
    %241 = vector.shape_cast %240 : vector<4x8xf32> to vector<4x8x1xf32>
    %242 = tpu.reciprocal %241 : vector<4x8x1xf32> -> vector<4x8x1xf32>
    %243 = vector.broadcast %242 : vector<4x8x1xf32> to vector<4x8x8xf32>
    %244 = arith.mulf %239, %243 : vector<4x8x8xf32>
    "tpu.trace_start"() <{level = 10 : i32, message = "bqk,bks->bqs"}> : () -> ()
    %cst_66 = arith.constant dense<0.000000e+00> : vector<4x8x4xf32>
    %245 = tpu.matmul %244, %233, %cst_66 {dimension_numbers = #tpu.dot_dimension_numbers<[2], [1], [1], [2], [0, 0, 0, 1, 1, 2], [0], [0]>} : vector<4x8x8xf32>, vector<4x8x4xf32>, vector<4x8x4xf32> -> vector<4x8x4xf32>
    "tpu.trace_stop"() : () -> ()
    %246 = vector.shape_cast %245 : vector<4x8x4xf32> to vector<32x4xf32>
    %247 = vector.extract_strided_slice %73 {offsets = [24, 0], sizes = [4, 32], strides = [1, 1]} : vector<32x32xf32> to vector<4x32xf32>
    %cst_67 = arith.constant dense<0.000000e+00> : vector<32x32xf32>
    %248 = tpu.matmul %246, %247, %cst_67 {dimension_numbers = #tpu.dot_dimension_numbers<[1], [0], [0], [1], [0, 0, 1, 1], [], []>} : vector<32x4xf32>, vector<4x32xf32>, vector<32x32xf32> -> vector<32x32xf32>
    %249 = arith.addf %224, %248 : vector<32x32xf32>
    %250 = vector.extract_strided_slice %42 {offsets = [0, 7, 0], sizes = [32, 1, 4], strides = [1, 1, 1]} : vector<32x8x4xf32> to vector<32x1x4xf32>
    %251 = vector.shape_cast %250 : vector<32x1x4xf32> to vector<32x4xf32>
    %252 = vector.shape_cast %251 : vector<32x4xf32> to vector<4x8x4xf32>
    %253 = vector.extract_strided_slice %71 {offsets = [0, 7, 0], sizes = [32, 1, 4], strides = [1, 1, 1]} : vector<32x8x4xf32> to vector<32x1x4xf32>
    %254 = vector.shape_cast %253 : vector<32x1x4xf32> to vector<32x4xf32>
    %255 = vector.shape_cast %254 : vector<32x4xf32> to vector<4x8x4xf32>
    %256 = vector.extract_strided_slice %72 {offsets = [0, 7, 0], sizes = [32, 1, 4], strides = [1, 1, 1]} : vector<32x8x4xf32> to vector<32x1x4xf32>
    %257 = vector.shape_cast %256 : vector<32x1x4xf32> to vector<32x4xf32>
    %258 = vector.shape_cast %257 : vector<32x4xf32> to vector<4x8x4xf32>
    "tpu.trace_start"() <{level = 10 : i32, message = "bqs,bks->bqk"}> : () -> ()
    %cst_68 = arith.constant dense<0.000000e+00> : vector<4x8x8xf32>
    %259 = tpu.matmul %252, %255, %cst_68 {dimension_numbers = #tpu.dot_dimension_numbers<[2], [2], [1], [1], [0, 0, 0, 1, 1, 1], [0], [0]>} : vector<4x8x4xf32>, vector<4x8x4xf32>, vector<4x8x8xf32> -> vector<4x8x8xf32>
    "tpu.trace_stop"() : () -> ()
    %cst_69 = arith.constant dense<0xFF800000> : vector<4x8xf32>
    %260 = vector.multi_reduction <maximumf>, %259, %cst_69 [2] : vector<4x8x8xf32> to vector<4x8xf32>
    %261 = vector.shape_cast %260 : vector<4x8xf32> to vector<4x8x1xf32>
    %262 = vector.broadcast %261 : vector<4x8x1xf32> to vector<4x8x8xf32>
    %263 = arith.subf %259, %262 : vector<4x8x8xf32>
    %264 = math.exp %263 : vector<4x8x8xf32>
    %cst_70 = arith.constant dense<0.000000e+00> : vector<4x8xf32>
    %265 = vector.multi_reduction <add>, %264, %cst_70 [2] : vector<4x8x8xf32> to vector<4x8xf32>
    %266 = vector.shape_cast %265 : vector<4x8xf32> to vector<4x8x1xf32>
    %267 = tpu.reciprocal %266 : vector<4x8x1xf32> -> vector<4x8x1xf32>
    %268 = vector.broadcast %267 : vector<4x8x1xf32> to vector<4x8x8xf32>
    %269 = arith.mulf %264, %268 : vector<4x8x8xf32>
    "tpu.trace_start"() <{level = 10 : i32, message = "bqk,bks->bqs"}> : () -> ()
    %cst_71 = arith.constant dense<0.000000e+00> : vector<4x8x4xf32>
    %270 = tpu.matmul %269, %258, %cst_71 {dimension_numbers = #tpu.dot_dimension_numbers<[2], [1], [1], [2], [0, 0, 0, 1, 1, 2], [0], [0]>} : vector<4x8x8xf32>, vector<4x8x4xf32>, vector<4x8x4xf32> -> vector<4x8x4xf32>
    "tpu.trace_stop"() : () -> ()
    %271 = vector.shape_cast %270 : vector<4x8x4xf32> to vector<32x4xf32>
    %272 = vector.extract_strided_slice %73 {offsets = [28, 0], sizes = [4, 32], strides = [1, 1]} : vector<32x32xf32> to vector<4x32xf32>
    %cst_72 = arith.constant dense<0.000000e+00> : vector<32x32xf32>
    %273 = tpu.matmul %271, %272, %cst_72 {dimension_numbers = #tpu.dot_dimension_numbers<[1], [0], [0], [1], [0, 0, 1, 1], [], []>} : vector<32x4xf32>, vector<4x32xf32>, vector<32x32xf32> -> vector<32x32xf32>
    %274 = arith.addf %249, %273 : vector<32x32xf32>
    %c0_73 = arith.constant 0 : index
    %c0_74 = arith.constant 0 : index
    %275 = vector.load %arg6[%c0_73, %c0_74] : memref<1x32xf32, #tpu.memory_space<vmem>>, vector<1x32xf32>
    %276 = vector.shape_cast %275 : vector<1x32xf32> to vector<32xf32>
    %277 = vector.shape_cast %276 : vector<32xf32> to vector<1x32xf32>
    %278 = vector.broadcast %277 : vector<1x32xf32> to vector<32x32xf32>
    %279 = arith.addf %274, %278 : vector<32x32xf32>
    %280 = arith.addf %1, %279 : vector<32x32xf32>
    %c0_75 = arith.constant 0 : index
    %c0_76 = arith.constant 0 : index
    %281 = vector.load %arg15[%c0_75, %c0_76] : memref<1x32xf32, #tpu.memory_space<vmem>>, vector<1x32xf32>
    %282 = vector.shape_cast %281 : vector<1x32xf32> to vector<32xf32>
    %c0_77 = arith.constant 0 : index
    %c0_78 = arith.constant 0 : index
    %283 = vector.load %arg16[%c0_77, %c0_78] : memref<1x32xf32, #tpu.memory_space<vmem>>, vector<1x32xf32>
    %284 = vector.shape_cast %283 : vector<1x32xf32> to vector<32xf32>
    %cst_79 = arith.constant dense<0.000000e+00> : vector<32xf32>
    %285 = vector.multi_reduction <add>, %280, %cst_79 [1] : vector<32x32xf32> to vector<32xf32>
    %286 = vector.shape_cast %285 : vector<32xf32> to vector<32x1xf32>
    %cst_80 = arith.constant 3.200000e+01 : f32
    %287 = vector.broadcast %cst_80 : f32 to vector<32x1xf32>
    %288 = arith.divf %286, %287 : vector<32x1xf32>
    %289 = vector.broadcast %288 : vector<32x1xf32> to vector<32x32xf32>
    %290 = arith.subf %280, %289 : vector<32x32xf32>
    %291 = arith.mulf %290, %290 : vector<32x32xf32>
    %cst_81 = arith.constant dense<0.000000e+00> : vector<32xf32>
    %292 = vector.multi_reduction <add>, %291, %cst_81 [1] : vector<32x32xf32> to vector<32xf32>
    %293 = vector.shape_cast %292 : vector<32xf32> to vector<32x1xf32>
    %cst_82 = arith.constant 3.200000e+01 : f32
    %294 = vector.broadcast %cst_82 : f32 to vector<32x1xf32>
    %295 = arith.divf %293, %294 : vector<32x1xf32>
    %296 = vector.broadcast %288 : vector<32x1xf32> to vector<32x32xf32>
    %297 = arith.subf %280, %296 : vector<32x32xf32>
    %cst_83 = arith.constant 9.99999974E-6 : f32
    %298 = vector.broadcast %cst_83 : f32 to vector<32x1xf32>
    %299 = arith.addf %295, %298 : vector<32x1xf32>
    %300 = math.rsqrt %299 : vector<32x1xf32>
    %301 = vector.broadcast %300 : vector<32x1xf32> to vector<32x32xf32>
    %302 = arith.mulf %297, %301 : vector<32x32xf32>
    %303 = vector.shape_cast %282 : vector<32xf32> to vector<1x32xf32>
    %304 = vector.broadcast %303 : vector<1x32xf32> to vector<32x32xf32>
    %305 = arith.mulf %302, %304 : vector<32x32xf32>
    %306 = vector.shape_cast %284 : vector<32xf32> to vector<1x32xf32>
    %307 = vector.broadcast %306 : vector<1x32xf32> to vector<32x32xf32>
    %308 = arith.addf %305, %307 : vector<32x32xf32>
    %c0_84 = arith.constant 0 : index
    %c0_85 = arith.constant 0 : index
    %309 = vector.load %arg11[%c0_84, %c0_85] : memref<32x32xf32, #tpu.memory_space<vmem>>, vector<32x32xf32>
    %cst_86 = arith.constant dense<0.000000e+00> : vector<32x32xf32>
    %310 = tpu.matmul %308, %309, %cst_86 {dimension_numbers = #tpu.dot_dimension_numbers<[1], [0], [0], [1], [0, 0, 1, 1], [], []>} : vector<32x32xf32>, vector<32x32xf32>, vector<32x32xf32> -> vector<32x32xf32>
    %c0_87 = arith.constant 0 : index
    %c0_88 = arith.constant 0 : index
    %311 = vector.load %arg12[%c0_87, %c0_88] : memref<1x32xf32, #tpu.memory_space<vmem>>, vector<1x32xf32>
    %312 = vector.shape_cast %311 : vector<1x32xf32> to vector<32xf32>
    %313 = vector.shape_cast %312 : vector<32xf32> to vector<1x32xf32>
    %314 = vector.broadcast %313 : vector<1x32xf32> to vector<32x32xf32>
    %315 = arith.addf %310, %314 : vector<32x32xf32>
    %cst_89 = arith.constant 0.000000e+00 : f32
    %316 = vector.broadcast %cst_89 : f32 to vector<32x32xf32>
    %317 = arith.maximumf %315, %316 : vector<32x32xf32>
    %c0_90 = arith.constant 0 : index
    %c0_91 = arith.constant 0 : index
    %318 = vector.load %arg13[%c0_90, %c0_91] : memref<32x32xf32, #tpu.memory_space<vmem>>, vector<32x32xf32>
    %cst_92 = arith.constant dense<0.000000e+00> : vector<32x32xf32>
    %319 = tpu.matmul %317, %318, %cst_92 {dimension_numbers = #tpu.dot_dimension_numbers<[1], [0], [0], [1], [0, 0, 1, 1], [], []>} : vector<32x32xf32>, vector<32x32xf32>, vector<32x32xf32> -> vector<32x32xf32>
    %c0_93 = arith.constant 0 : index
    %c0_94 = arith.constant 0 : index
    %320 = vector.load %arg14[%c0_93, %c0_94] : memref<1x32xf32, #tpu.memory_space<vmem>>, vector<1x32xf32>
    %321 = vector.shape_cast %320 : vector<1x32xf32> to vector<32xf32>
    %322 = vector.shape_cast %321 : vector<32xf32> to vector<1x32xf32>
    %323 = vector.broadcast %322 : vector<1x32xf32> to vector<32x32xf32>
    %324 = arith.addf %319, %323 : vector<32x32xf32>
    %325 = arith.addf %308, %324 : vector<32x32xf32>
    %c0_95 = arith.constant 0 : index
    %c0_96 = arith.constant 0 : index
    %326 = vector.load %arg17[%c0_95, %c0_96] : memref<1x32xf32, #tpu.memory_space<vmem>>, vector<1x32xf32>
    %327 = vector.shape_cast %326 : vector<1x32xf32> to vector<32xf32>
    %c0_97 = arith.constant 0 : index
    %c0_98 = arith.constant 0 : index
    %328 = vector.load %arg18[%c0_97, %c0_98] : memref<1x32xf32, #tpu.memory_space<vmem>>, vector<1x32xf32>
    %329 = vector.shape_cast %328 : vector<1x32xf32> to vector<32xf32>
    %cst_99 = arith.constant dense<0.000000e+00> : vector<32xf32>
    %330 = vector.multi_reduction <add>, %325, %cst_99 [1] : vector<32x32xf32> to vector<32xf32>
    %331 = vector.shape_cast %330 : vector<32xf32> to vector<32x1xf32>
    %cst_100 = arith.constant 3.200000e+01 : f32
    %332 = vector.broadcast %cst_100 : f32 to vector<32x1xf32>
    %333 = arith.divf %331, %332 : vector<32x1xf32>
    %334 = vector.broadcast %333 : vector<32x1xf32> to vector<32x32xf32>
    %335 = arith.subf %325, %334 : vector<32x32xf32>
    %336 = arith.mulf %335, %335 : vector<32x32xf32>
    %cst_101 = arith.constant dense<0.000000e+00> : vector<32xf32>
    %337 = vector.multi_reduction <add>, %336, %cst_101 [1] : vector<32x32xf32> to vector<32xf32>
    %338 = vector.shape_cast %337 : vector<32xf32> to vector<32x1xf32>
    %cst_102 = arith.constant 3.200000e+01 : f32
    %339 = vector.broadcast %cst_102 : f32 to vector<32x1xf32>
    %340 = arith.divf %338, %339 : vector<32x1xf32>
    %341 = vector.broadcast %333 : vector<32x1xf32> to vector<32x32xf32>
    %342 = arith.subf %325, %341 : vector<32x32xf32>
    %cst_103 = arith.constant 9.99999974E-6 : f32
    %343 = vector.broadcast %cst_103 : f32 to vector<32x1xf32>
    %344 = arith.addf %340, %343 : vector<32x1xf32>
    %345 = math.rsqrt %344 : vector<32x1xf32>
    %346 = vector.broadcast %345 : vector<32x1xf32> to vector<32x32xf32>
    %347 = arith.mulf %342, %346 : vector<32x32xf32>
    %348 = vector.shape_cast %327 : vector<32xf32> to vector<1x32xf32>
    %349 = vector.broadcast %348 : vector<1x32xf32> to vector<32x32xf32>
    %350 = arith.mulf %347, %349 : vector<32x32xf32>
    %351 = vector.shape_cast %329 : vector<32xf32> to vector<1x32xf32>
    %352 = vector.broadcast %351 : vector<1x32xf32> to vector<32x32xf32>
    %353 = arith.addf %350, %352 : vector<32x32xf32>
    %354 = vector.shape_cast %353 : vector<32x32xf32> to vector<4x8x32xf32>
    %c0_104 = arith.constant 0 : index
    %c0_105 = arith.constant 0 : index
    %c0_106 = arith.constant 0 : index
    %355 = vector.load %arg19[%c0_104, %c0_105, %c0_106] : memref<4x8x32xf32, #tpu.memory_space<vmem>>, vector<4x8x32xf32>
    tpu.vector_store %arg19[%c0_104, %c0_105, %c0_106], %354 {strides = array<i32>} : memref<4x8x32xf32, #tpu.memory_space<vmem>>, vector<4x8x32xf32>,
    return
  }
  func.func @transform_0(%arg0: i32) -> (i32, i32, i32) {
    %c0_i32 = arith.constant 0 : i32
    %c0_i32_0 = arith.constant 0 : i32
    %c0_i32_1 = arith.constant 0 : i32
    return %arg0, %c0_i32, %c0_i32_0 : i32, i32, i32
  }
  func.func @transform_1(%arg0: i32) -> (i32, i32) {
    %c0_i32 = arith.constant 0 : i32
    %c0_i32_0 = arith.constant 0 : i32
    %c0_i32_1 = arith.constant 0 : i32
    return %c0_i32, %c0_i32_0 : i32, i32
  }
  func.func @transform_2(%arg0: i32) -> (i32, i32) {
    %c0_i32 = arith.constant 0 : i32
    %c0_i32_0 = arith.constant 0 : i32
    %c0_i32_1 = arith.constant 0 : i32
    return %c0_i32, %c0_i32_0 : i32, i32
  }
  func.func @transform_3(%arg0: i32) -> (i32, i32) {
    %c0_i32 = arith.constant 0 : i32
    %c0_i32_0 = arith.constant 0 : i32
    %c0_i32_1 = arith.constant 0 : i32
    return %c0_i32, %c0_i32_0 : i32, i32
  }
  func.func @transform_4(%arg0: i32) -> (i32, i32) {
    %c0_i32 = arith.constant 0 : i32
    %c0_i32_0 = arith.constant 0 : i32
    %c0_i32_1 = arith.constant 0 : i32
    return %c0_i32, %c0_i32_0 : i32, i32
  }
  func.func @transform_5(%arg0: i32) -> (i32, i32) {
    %c0_i32 = arith.constant 0 : i32
    %c0_i32_0 = arith.constant 0 : i32
    %c0_i32_1 = arith.constant 0 : i32
    return %c0_i32, %c0_i32_0 : i32, i32
  }
  func.func @transform_6(%arg0: i32) -> (i32, i32) {
    %c0_i32 = arith.constant 0 : i32
    %c0_i32_0 = arith.constant 0 : i32
    %c0_i32_1 = arith.constant 0 : i32
    return %c0_i32, %c0_i32_0 : i32, i32
  }
  func.func @transform_7(%arg0: i32) -> (i32, i32) {
    %c0_i32 = arith.constant 0 : i32
    %c0_i32_0 = arith.constant 0 : i32
    %c0_i32_1 = arith.constant 0 : i32
    return %c0_i32, %c0_i32_0 : i32, i32
  }
  func.func @transform_8(%arg0: i32) -> (i32, i32) {
    %c0_i32 = arith.constant 0 : i32
    %c0_i32_0 = arith.constant 0 : i32
    %c0_i32_1 = arith.constant 0 : i32
    return %c0_i32, %c0_i32_0 : i32, i32
  }
  func.func @transform_9(%arg0: i32) -> (i32, i32) {
    %c0_i32 = arith.constant 0 : i32
    %c0_i32_0 = arith.constant 0 : i32
    %c0_i32_1 = arith.constant 0 : i32
    return %c0_i32, %c0_i32_0 : i32, i32
  }
  func.func @transform_10(%arg0: i32) -> (i32, i32) {
    %c0_i32 = arith.constant 0 : i32
    %c0_i32_0 = arith.constant 0 : i32
    %c0_i32_1 = arith.constant 0 : i32
    return %c0_i32, %c0_i32_0 : i32, i32
  }
  func.func @transform_11(%arg0: i32) -> (i32, i32) {
    %c0_i32 = arith.constant 0 : i32
    %c0_i32_0 = arith.constant 0 : i32
    %c0_i32_1 = arith.constant 0 : i32
    return %c0_i32, %c0_i32_0 : i32, i32
  }
  func.func @transform_12(%arg0: i32) -> (i32, i32) {
    %c0_i32 = arith.constant 0 : i32
    %c0_i32_0 = arith.constant 0 : i32
    %c0_i32_1 = arith.constant 0 : i32
    return %c0_i32, %c0_i32_0 : i32, i32
  }
  func.func @transform_13(%arg0: i32) -> (i32, i32) {
    %c0_i32 = arith.constant 0 : i32
    %c0_i32_0 = arith.constant 0 : i32
    %c0_i32_1 = arith.constant 0 : i32
    return %c0_i32, %c0_i32_0 : i32, i32
  }
  func.func @transform_14(%arg0: i32) -> (i32, i32) {
    %c0_i32 = arith.constant 0 : i32
    %c0_i32_0 = arith.constant 0 : i32
    %c0_i32_1 = arith.constant 0 : i32
    return %c0_i32, %c0_i32_0 : i32, i32
  }
  func.func @transform_15(%arg0: i32) -> (i32, i32) {
    %c0_i32 = arith.constant 0 : i32
    %c0_i32_0 = arith.constant 0 : i32
    %c0_i32_1 = arith.constant 0 : i32
    return %c0_i32, %c0_i32_0 : i32, i32
  }
  func.func @transform_16(%arg0: i32) -> (i32, i32) {
    %c0_i32 = arith.constant 0 : i32
    %c0_i32_0 = arith.constant 0 : i32
    %c0_i32_1 = arith.constant 0 : i32
    return %c0_i32, %c0_i32_0 : i32, i32
  }
  func.func @transform_17(%arg0: i32) -> (i32, i32) {
    %c0_i32 = arith.constant 0 : i32
    %c0_i32_0 = arith.constant 0 : i32
    %c0_i32_1 = arith.constant 0 : i32
    return %c0_i32, %c0_i32_0 : i32, i32
  }
  func.func @transform_18(%arg0: i32) -> (i32, i32, i32) {
    %c0_i32 = arith.constant 0 : i32
    %c0_i32_0 = arith.constant 0 : i32
    %c0_i32_1 = arith.constant 0 : i32
    return %arg0, %c0_i32, %c0_i32_0 : i32, i32, i32
  }
}

</mosaic_0001>

<llo_original>
// kernel: tpu_custom_call.1
$region0: #{tpu_custom_call.1}
  #allocation0 [shape = 'u32[]', space=smem, size = 0x4, offset = 0x4, fixed_abs, tag = 'smem constant byte address 0x4 - core index']
  #allocation1 [shape = 'u32[72,128]{1,0:T(1,128)}', space=vmem, size = 0x9000, scoped, tag = 'internal scratch']
  %s0 = inlined_call_operand.hbm [shape: f32[4,8,32], index: 0, kind: input, shape index: {}]
  %s1 = inlined_call_operand.hbm [shape: f32[32,32], index: 1, kind: input, shape index: {}]
  %s2 = inlined_call_operand.hbm [shape: f32[32,32], index: 2, kind: input, shape index: {}]
  %s3 = inlined_call_operand.hbm [shape: f32[32,32], index: 3, kind: input, shape index: {}]
  %s4 = inlined_call_operand.hbm [shape: f32[32,32], index: 4, kind: input, shape index: {}]
  %s5 = inlined_call_operand.vmem [shape: f32[1,32], index: 5, kind: input, shape index: {}]
  %s6 = inlined_call_operand.vmem [shape: f32[1,4], index: 6, kind: input, shape index: {}]
  %s7 = inlined_call_operand.vmem [shape: f32[1,4], index: 7, kind: input, shape index: {}]
  %s8 = inlined_call_operand.vmem [shape: f32[1,4], index: 8, kind: input, shape index: {}]
  %s9 = inlined_call_operand.vmem [shape: f32[1,4], index: 9, kind: input, shape index: {}]
  %s10 = inlined_call_operand.hbm [shape: f32[32,32], index: 10, kind: input, shape index: {}]
  %s11 = inlined_call_operand.vmem [shape: f32[1,32], index: 11, kind: input, shape index: {}]
  %s12 = inlined_call_operand.hbm [shape: f32[32,32], index: 12, kind: input, shape index: {}]
  %s13 = inlined_call_operand.vmem [shape: f32[1,32], index: 13, kind: input, shape index: {}]
  %s14 = inlined_call_operand.vmem [shape: f32[1,32], index: 14, kind: input, shape index: {}]
  %s15 = inlined_call_operand.vmem [shape: f32[1,32], index: 15, kind: input, shape index: {}]
  %s16 = inlined_call_operand.vmem [shape: f32[1,32], index: 16, kind: input, shape index: {}]
  %s17 = inlined_call_operand.vmem [shape: f32[1,32], index: 17, kind: input, shape index: {}]
  %s18 = inlined_call_operand.hbm [shape: f32[4,8,32], index: 18, kind: output, shape index: {}]
  %s19 = sld [smem:[#allocation0]]
  $region110: #{tpu_custom_call.1} parent=0
    _
  %s21 = ssub.s32 1, %s19
  %s22 = scalar_select 0, %s21, %s19
  $region1: #{tpu_custom_call.1} parent=0
    #allocation2 [shape = 'u8[16384]{0}', space=vmem, size = 0x4000, scoped, tag = 'input window, operand 0, single buffered']
    #allocation3 [shape = 's32[1]{0}', space=sflag, size = 0x4, scoped, tag = 'scoped memory for tpu_custom_call.1']
    #allocation4 [shape = 's32[1]{0}', space=sflag, size = 0x4, scoped, tag = 'scoped memory for tpu_custom_call.1']
    #allocation5 [shape = 'u8[16384]{0}', space=vmem, size = 0x4000, scoped, tag = 'input window, operand 1, single buffered']
    #allocation6 [shape = 's32[1]{0}', space=sflag, size = 0x4, scoped, tag = 'scoped memory for tpu_custom_call.1']
    #allocation7 [shape = 'u8[16384]{0}', space=vmem, size = 0x4000, scoped, tag = 'input window, operand 2, single buffered']
    #allocation8 [shape = 'u8[16384]{0}', space=vmem, size = 0x4000, scoped, tag = 'input window, operand 3, single buffered']
    #allocation9 [shape = 's32[1]{0}', space=sflag, size = 0x4, scoped, tag = 'scoped memory for tpu_custom_call.1']
    #allocation10 [shape = 'u8[16384]{0}', space=vmem, size = 0x4000, scoped, tag = 'input window, operand 4, single buffered']
    #allocation11 [shape = 'u8[16384]{0}', space=vmem, size = 0x4000, scoped, tag = 'input window, operand 10, single buffered']
    #allocation12 [shape = 's32[1]{0}', space=sflag, size = 0x4, scoped, tag = 'scoped memory for tpu_custom_call.1']
    #allocation13 [shape = 'u8[16384]{0}', space=vmem, size = 0x4000, scoped, tag = 'input window, operand 12, single buffered']
    #allocation14 [shape = 'u8[16384]{0}', space=vmem, size = 0x4000, scoped, tag = 'output window, operand 0, single buffered']
    %23 = vsyncpa [#allocation3], 0
    %24 = vsyncpa [#allocation6], 0
    %25 = vsyncpa [#allocation9], 0
    %26 = vsyncpa [#allocation12], 0
    %27 = vsyncpa [#allocation4], 0
    // Predicated region
    $region2: #{tpu_custom_call.1} parent=1 // pred_check
      _
    $region3: #{tpu_custom_call.1} parent=1 // pred_check_branch
      %29 = sbr.rel (0) target = $region5
    $region4: #{tpu_custom_call.1} parent=1 // pred_region
      %31 = vsyncadd [#allocation3], 0
      %s32 = sshll.u32 %s0, 4
      %s33 = int_to_ptr.hbm [resolvable:$true] %s32
      %s34 = sshll.u32 [#allocation2], 4
      %s35 = int_to_ptr.vmem [resolvable:$true] %s34
      %40 = dma.hbm_to_vmem [thread:$0]  %s33, 512, %s35, [#allocation3], 128, 128, 8
    $region5: #{tpu_custom_call.1} parent=1 // pred_fallthru
      _
    // Predicated region
    $region6: #{tpu_custom_call.1} parent=1 // pred_check
      _
    $region7: #{tpu_custom_call.1} parent=1 // pred_check_branch
      %42 = sbr.rel (0) target = $region9
    $region8: #{tpu_custom_call.1} parent=1 // pred_region
      %44 = vsyncadd [#allocation6], 0
      %s45 = sshll.u32 %s1, 4
      %s46 = int_to_ptr.hbm [resolvable:$true] %s45
      %s47 = sshll.u32 [#allocation5], 4
      %s48 = int_to_ptr.vmem [resolvable:$true] %s47
      %53 = dma.hbm_to_vmem [thread:$0]  %s46, 512, %s48, [#allocation6], 128, 128, 8
    $region9: #{tpu_custom_call.1} parent=1 // pred_fallthru
      _
    // Predicated region
    $region10: #{tpu_custom_call.1} parent=1 // pred_check
      _
    $region11: #{tpu_custom_call.1} parent=1 // pred_check_branch
      %55 = sbr.rel (0) target = $region13
    $region12: #{tpu_custom_call.1} parent=1 // pred_region
      %57 = vsyncadd [#allocation6], 0
      %s58 = sshll.u32 %s2, 4
      %s59 = int_to_ptr.hbm [resolvable:$true] %s58
      %s60 = sshll.u32 [#allocation7], 4
      %s61 = int_to_ptr.vmem [resolvable:$true] %s60
      %66 = dma.hbm_to_vmem [thread:$0]  %s59, 512, %s61, [#allocation6], 128, 128, 8
    $region13: #{tpu_custom_call.1} parent=1 // pred_fallthru
      _
    // Predicated region
    $region14: #{tpu_custom_call.1} parent=1 // pred_check
      _
    $region15: #{tpu_custom_call.1} parent=1 // pred_check_branch
      %68 = sbr.rel (0) target = $region17
    $region16: #{tpu_custom_call.1} parent=1 // pred_region
      %70 = vsyncadd [#allocation9], 0
      %s71 = sshll.u32 %s3, 4
      %s72 = int_to_ptr.hbm [resolvable:$true] %s71
      %s73 = sshll.u32 [#allocation8], 4
      %s74 = int_to_ptr.vmem [resolvable:$true] %s73
      %79 = dma.hbm_to_vmem [thread:$0]  %s72, 512, %s74, [#allocation9], 128, 128, 8
    $region17: #{tpu_custom_call.1} parent=1 // pred_fallthru
      _
    // Predicated region
    $region18: #{tpu_custom_call.1} parent=1 // pred_check
      _
    $region19: #{tpu_custom_call.1} parent=1 // pred_check_branch
      %81 = sbr.rel (0) target = $region21
    $region20: #{tpu_custom_call.1} parent=1 // pred_region
      %83 = vsyncadd [#allocation9], 0
      %s84 = sshll.u32 %s4, 4
      %s85 = int_to_ptr.hbm [resolvable:$true] %s84
      %s86 = sshll.u32 [#allocation10], 4
      %s87 = int_to_ptr.vmem [resolvable:$true] %s86
      %92 = dma.hbm_to_vmem [thread:$0]  %s85, 512, %s87, [#allocation9], 128, 128, 8
    $region21: #{tpu_custom_call.1} parent=1 // pred_fallthru
      _
    // Predicated region
    $region22: #{tpu_custom_call.1} parent=1 // pred_check
      _
    $region23: #{tpu_custom_call.1} parent=1 // pred_check_branch
      %94 = sbr.rel (0) target = $region25
    $region24: #{tpu_custom_call.1} parent=1 // pred_region
      _
    $region25: #{tpu_custom_call.1} parent=1 // pred_fallthru
      _
    // Predicated region
    $region26: #{tpu_custom_call.1} parent=1 // pred_check
      _
    $region27: #{tpu_custom_call.1} parent=1 // pred_check_branch
      %96 = sbr.rel (0) target = $region29
    $region28: #{tpu_custom_call.1} parent=1 // pred_region
      _
    $region29: #{tpu_custom_call.1} parent=1 // pred_fallthru
      _
    // Predicated region
    $region30: #{tpu_custom_call.1} parent=1 // pred_check
      _
    $region31: #{tpu_custom_call.1} parent=1 // pred_check_branch
      %98 = sbr.rel (0) target = $region33
    $region32: #{tpu_custom_call.1} parent=1 // pred_region
      _
    $region33: #{tpu_custom_call.1} parent=1 // pred_fallthru
      _
    // Predicated region
    $region34: #{tpu_custom_call.1} parent=1 // pred_check
      _
    $region35: #{tpu_custom_call.1} parent=1 // pred_check_branch
      %100 = sbr.rel (0) target = $region37
    $region36: #{tpu_custom_call.1} parent=1 // pred_region
      _
    $region37: #{tpu_custom_call.1} parent=1 // pred_fallthru
      _
    // Predicated region
    $region38: #{tpu_custom_call.1} parent=1 // pred_check
      _
    $region39: #{tpu_custom_call.1} parent=1 // pred_check_branch
      %102 = sbr.rel (0) target = $region41
    $region40: #{tpu_custom_call.1} parent=1 // pred_region
      _
    $region41: #{tpu_custom_call.1} parent=1 // pred_fallthru
      _
    // Predicated region
    $region42: #{tpu_custom_call.1} parent=1 // pred_check
      _
    $region43: #{tpu_custom_call.1} parent=1 // pred_check_branch
      %104 = sbr.rel (0) target = $region45
    $region44: #{tpu_custom_call.1} parent=1 // pred_region
      %106 = vsyncadd [#allocation12], 0
      %s107 = sshll.u32 %s10, 4
      %s108 = int_to_ptr.hbm [resolvable:$true] %s107
      %s109 = sshll.u32 [#allocation11], 4
      %s110 = int_to_ptr.vmem [resolvable:$true] %s109
      %115 = dma.hbm_to_vmem [thread:$0]  %s108, 512, %s110, [#allocation12], 128, 128, 8
    $region45: #{tpu_custom_call.1} parent=1 // pred_fallthru
      _
    // Predicated region
    $region46: #{tpu_custom_call.1} parent=1 // pred_check
      _
    $region47: #{tpu_custom_call.1} parent=1 // pred_check_branch
      %117 = sbr.rel (0) target = $region49
    $region48: #{tpu_custom_call.1} parent=1 // pred_region
      _
    $region49: #{tpu_custom_call.1} parent=1 // pred_fallthru
      _
    // Predicated region
    $region50: #{tpu_custom_call.1} parent=1 // pred_check
      _
    $region51: #{tpu_custom_call.1} parent=1 // pred_check_branch
      %119 = sbr.rel (0) target = $region53
    $region52: #{tpu_custom_call.1} parent=1 // pred_region
      %121 = vsyncadd [#allocation12], 0
      %s122 = sshll.u32 %s12, 4
      %s123 = int_to_ptr.hbm [resolvable:$true] %s122
      %s124 = sshll.u32 [#allocation13], 4
      %s125 = int_to_ptr.vmem [resolvable:$true] %s124
      %130 = dma.hbm_to_vmem [thread:$0]  %s123, 512, %s125, [#allocation12], 128, 128, 8
    $region53: #{tpu_custom_call.1} parent=1 // pred_fallthru
      _
    // Predicated region
    $region54: #{tpu_custom_call.1} parent=1 // pred_check
      _
    $region55: #{tpu_custom_call.1} parent=1 // pred_check_branch
      %132 = sbr.rel (0) target = $region57
    $region56: #{tpu_custom_call.1} parent=1 // pred_region
      _
    $region57: #{tpu_custom_call.1} parent=1 // pred_fallthru
      _
    // Predicated region
    $region58: #{tpu_custom_call.1} parent=1 // pred_check
      _
    $region59: #{tpu_custom_call.1} parent=1 // pred_check_branch
      %134 = sbr.rel (0) target = $region61
    $region60: #{tpu_custom_call.1} parent=1 // pred_region
      _
    $region61: #{tpu_custom_call.1} parent=1 // pred_fallthru
      _
    // Predicated region
    $region62: #{tpu_custom_call.1} parent=1 // pred_check
      _
    $region63: #{tpu_custom_call.1} parent=1 // pred_check_branch
      %136 = sbr.rel (0) target = $region65
    $region64: #{tpu_custom_call.1} parent=1 // pred_region
      _
    $region65: #{tpu_custom_call.1} parent=1 // pred_fallthru
      _
    // Predicated region
    $region66: #{tpu_custom_call.1} parent=1 // pred_check
      _
    $region67: #{tpu_custom_call.1} parent=1 // pred_check_branch
      %138 = sbr.rel (0) target = $region69
    $region68: #{tpu_custom_call.1} parent=1 // pred_region
      _
    $region69: #{tpu_custom_call.1} parent=1 // pred_fallthru
      _
    // Predicated region
    $region70: #{tpu_custom_call.1} parent=1 // pred_check
      _
    $region71: #{tpu_custom_call.1} parent=1 // pred_check_branch
      %140 = sbr.rel (0) target = $region73
    $region72: #{tpu_custom_call.1} parent=1 // pred_region
      _
    $region73: #{tpu_custom_call.1} parent=1 // pred_fallthru
      _
    // Predicated region
    $region74: #{tpu_custom_call.1} parent=1 // pred_check
      _
    $region75: #{tpu_custom_call.1} parent=1 // pred_check_branch
      %142 = sbr.rel (0) target = $region77
    $region76: #{tpu_custom_call.1} parent=1 // pred_region
      %144 = dma.done [#allocation3], 512
    $region77: #{tpu_custom_call.1} parent=1 // pred_fallthru
      _
    // Predicated region
    $region78: #{tpu_custom_call.1} parent=1 // pred_check
      _
    $region79: #{tpu_custom_call.1} parent=1 // pred_check_branch
      %146 = sbr.rel (0) target = $region81
    $region80: #{tpu_custom_call.1} parent=1 // pred_region
      %148 = dma.done [#allocation6], 512
    $region81: #{tpu_custom_call.1} parent=1 // pred_fallthru
      _
    // Predicated region
    $region82: #{tpu_custom_call.1} parent=1 // pred_check
      _
    $region83: #{tpu_custom_call.1} parent=1 // pred_check_branch
      %150 = sbr.rel (0) target = $region85
    $region84: #{tpu_custom_call.1} parent=1 // pred_region
      %152 = dma.done [#allocation6], 512
    $region85: #{tpu_custom_call.1} parent=1 // pred_fallthru
      _
    // Predicated region
    $region86: #{tpu_custom_call.1} parent=1 // pred_check
      _
    $region87: #{tpu_custom_call.1} parent=1 // pred_check_branch
      %154 = sbr.rel (0) target = $region89
    $region88: #{tpu_custom_call.1} parent=1 // pred_region
      %156 = dma.done [#allocation9], 512
    $region89: #{tpu_custom_call.1} parent=1 // pred_fallthru
      _
    // Predicated region
    $region90: #{tpu_custom_call.1} parent=1 // pred_check
      _
    $region91: #{tpu_custom_call.1} parent=1 // pred_check_branch
      %158 = sbr.rel (0) target = $region93
    $region92: #{tpu_custom_call.1} parent=1 // pred_region
      %160 = dma.done [#allocation9], 512
    $region93: #{tpu_custom_call.1} parent=1 // pred_fallthru
      _
    // Predicated region
    $region94: #{tpu_custom_call.1} parent=1 // pred_check
      _
    $region95: #{tpu_custom_call.1} parent=1 // pred_check_branch
      %162 = sbr.rel (0) target = $region97
    $region96: #{tpu_custom_call.1} parent=1 // pred_region
      %164 = dma.done [#allocation12], 512
    $region97: #{tpu_custom_call.1} parent=1 // pred_fallthru
      _
    // Predicated region
    $region98: #{tpu_custom_call.1} parent=1 // pred_check
      _
    $region99: #{tpu_custom_call.1} parent=1 // pred_check_branch
      %166 = sbr.rel (0) target = $region101
    $region100: #{tpu_custom_call.1} parent=1 // pred_region
      %168 = dma.done [#allocation12], 512
    $region101: #{tpu_custom_call.1} parent=1 // pred_fallthru
      _
    %v169 = vld [vmem:[#allocation2] sm:$0xff]
    %v170 = vld [vmem:[#allocation2 + $0x8] sm:$0xff]
    %v171 = vld [vmem:[#allocation2 + $0x10] sm:$0xff]
    %v172 = vld [vmem:[#allocation2 + $0x18] sm:$0xff]
    %v173 = vld [vmem:[#allocation5] sm:$0xff]
    %v174 = vld [vmem:[#allocation5 + $0x8] sm:$0xff]
    %v175 = vld [vmem:[#allocation5 + $0x10] sm:$0xff]
    %v176 = vld [vmem:[#allocation5 + $0x18] sm:$0xff]
    %vm177 = vcmask 261120
    %v179 = vsel %vm177, %v169, 0
    %v182 = vsel %vm177, %v170, 0
    %v185 = vsel %vm177, %v171, 0
    %v188 = vsel %vm177, %v172, 0
    %190 = vmatpush.msra.mxu0 0.0
    %191 = vmatpush.msra.mxu0 0.0
    %192 = vmatpush.msra.mxu0 0.0
    %193 = vmatpush.msra.mxu0 0.0
    %194 = vmatpush.msra.mxu0 0.0
    %195 = vmatpush.msra.mxu0 0.0
    %196 = vmatpush.msra.mxu0 0.0
    %197 = vmatpush.msra.mxu0 0.0
    %198 = vmatpush.msra.mxu0 0.0
    %199 = vmatpush.msra.mxu0 0.0
    %200 = vmatpush.msra.mxu0 0.0
    %201 = vmatpush.msra.mxu0 0.0
    %202 = vmatpush.msra.mxu0 %v176
    %203 = vmatpush.msra.mxu0 %v175
    %204 = vmatpush.msra.mxu0 %v174
    %205 = vmatpush.msra.mxu0 %v173
    %206 = vmatmul.f32.gmra.mxu0 %v179
    %v207 = vpop.f32.mrf.mxu0
    %v208 = vadd.f32 0.0, %v207
    %209 = vmatmul.f32.gmra.mxu0 %v182
    %v210 = vpop.f32.mrf.mxu0
    %v211 = vadd.f32 0.0, %v210
    %212 = vmatmul.f32.gmra.mxu0 %v185
    %v213 = vpop.f32.mrf.mxu0
    %v214 = vadd.f32 0.0, %v213
    %215 = vmatmul.f32.gmra.mxu0 %v188
    %v216 = vpop.f32.mrf.mxu0
    %v217 = vadd.f32 0.0, %v216
    %218 = vdwg.mxu0
    %v219 = vld [vmem:[#allocation7] sm:$0xff]
    %v220 = vld [vmem:[#allocation7 + $0x8] sm:$0xff]
    %v221 = vld [vmem:[#allocation7 + $0x10] sm:$0xff]
    %v222 = vld [vmem:[#allocation7 + $0x18] sm:$0xff]
    %223 = vmatpush.msra.mxu0 0.0
    %224 = vmatpush.msra.mxu0 0.0
    %225 = vmatpush.msra.mxu0 0.0
    %226 = vmatpush.msra.mxu0 0.0
    %227 = vmatpush.msra.mxu0 0.0
    %228 = vmatpush.msra.mxu0 0.0
    %229 = vmatpush.msra.mxu0 0.0
    %230 = vmatpush.msra.mxu0 0.0
    %231 = vmatpush.msra.mxu0 0.0
    %232 = vmatpush.msra.mxu0 0.0
    %233 = vmatpush.msra.mxu0 0.0
    %234 = vmatpush.msra.mxu0 0.0
    %235 = vmatpush.msra.mxu0 %v222
    %236 = vmatpush.msra.mxu0 %v221
    %237 = vmatpush.msra.mxu0 %v220
    %238 = vmatpush.msra.mxu0 %v219
    %239 = vmatmul.f32.gmra.mxu0 %v179
    %v240 = vpop.f32.mrf.mxu0
    %v241 = vadd.f32 0.0, %v240
    %242 = vmatmul.f32.gmra.mxu0 %v182
    %v243 = vpop.f32.mrf.mxu0
    %v244 = vadd.f32 0.0, %v243
    %245 = vmatmul.f32.gmra.mxu0 %v185
    %v246 = vpop.f32.mrf.mxu0
    %v247 = vadd.f32 0.0, %v246
    %248 = vmatmul.f32.gmra.mxu0 %v188
    %v249 = vpop.f32.mrf.mxu0
    %v250 = vadd.f32 0.0, %v249
    %251 = vdwg.mxu0
    %v252 = vld [vmem:[#allocation8] sm:$0xff]
    %v253 = vld [vmem:[#allocation8 + $0x8] sm:$0xff]
    %v254 = vld [vmem:[#allocation8 + $0x10] sm:$0xff]
    %v255 = vld [vmem:[#allocation8 + $0x18] sm:$0xff]
    %256 = vmatpush.msra.mxu0 0.0
    %257 = vmatpush.msra.mxu0 0.0
    %258 = vmatpush.msra.mxu0 0.0
    %259 = vmatpush.msra.mxu0 0.0
    %260 = vmatpush.msra.mxu0 0.0
    %261 = vmatpush.msra.mxu0 0.0
    %262 = vmatpush.msra.mxu0 0.0
    %263 = vmatpush.msra.mxu0 0.0
    %264 = vmatpush.msra.mxu0 0.0
    %265 = vmatpush.msra.mxu0 0.0
    %266 = vmatpush.msra.mxu0 0.0
    %267 = vmatpush.msra.mxu0 0.0
    %268 = vmatpush.msra.mxu0 %v255
    %269 = vmatpush.msra.mxu0 %v254
    %270 = vmatpush.msra.mxu0 %v253
    %271 = vmatpush.msra.mxu0 %v252
    %272 = vmatmul.f32.gmra.mxu0 %v179
    %v273 = vpop.f32.mrf.mxu0
    %v274 = vadd.f32 0.0, %v273
    %275 = vmatmul.f32.gmra.mxu0 %v182
    %v276 = vpop.f32.mrf.mxu0
    %v277 = vadd.f32 0.0, %v276
    %278 = vmatmul.f32.gmra.mxu0 %v185
    %v279 = vpop.f32.mrf.mxu0
    %v280 = vadd.f32 0.0, %v279
    %281 = vmatmul.f32.gmra.mxu0 %v188
    %v282 = vpop.f32.mrf.mxu0
    %v283 = vadd.f32 0.0, %v282
    %284 = vdwg.mxu0
    %289 = vrot.lane.b32.xlu0 %v208, 124
    %v290 = vpop.permute.xlu0 %289
    %291 = vrot.lane.b32.xlu0 %v211, 124
    %v292 = vpop.permute.xlu0 %291
    %293 = vrot.lane.b32.xlu0 %v214, 124
    %v294 = vpop.permute.xlu0 %293
    %295 = vrot.lane.b32.xlu0 %v217, 124
    %v296 = vpop.permute.xlu0 %295
    %301 = vrot.lane.b32.xlu0 %v208, 120
    %v302 = vpop.permute.xlu0 %301
    %303 = vrot.lane.b32.xlu0 %v211, 120
    %v304 = vpop.permute.xlu0 %303
    %305 = vrot.lane.b32.xlu0 %v214, 120
    %v306 = vpop.permute.xlu0 %305
    %307 = vrot.lane.b32.xlu0 %v217, 120
    %v308 = vpop.permute.xlu0 %307
    %313 = vrot.lane.b32.xlu0 %v208, 116
    %v314 = vpop.permute.xlu0 %313
    %315 = vrot.lane.b32.xlu0 %v211, 116
    %v316 = vpop.permute.xlu0 %315
    %317 = vrot.lane.b32.xlu0 %v214, 116
    %v318 = vpop.permute.xlu0 %317
    %319 = vrot.lane.b32.xlu0 %v217, 116
    %v320 = vpop.permute.xlu0 %319
    %325 = vrot.lane.b32.xlu0 %v208, 112
    %v326 = vpop.permute.xlu0 %325
    %327 = vrot.lane.b32.xlu0 %v211, 112
    %v328 = vpop.permute.xlu0 %327
    %329 = vrot.lane.b32.xlu0 %v214, 112
    %v330 = vpop.permute.xlu0 %329
    %331 = vrot.lane.b32.xlu0 %v217, 112
    %v332 = vpop.permute.xlu0 %331
    %337 = vrot.lane.b32.xlu0 %v208, 108
    %v338 = vpop.permute.xlu0 %337
    %339 = vrot.lane.b32.xlu0 %v211, 108
    %v340 = vpop.permute.xlu0 %339
    %341 = vrot.lane.b32.xlu0 %v214, 108
    %v342 = vpop.permute.xlu0 %341
    %343 = vrot.lane.b32.xlu0 %v217, 108
    %v344 = vpop.permute.xlu0 %343
    %349 = vrot.lane.b32.xlu0 %v208, 104
    %v350 = vpop.permute.xlu0 %349
    %351 = vrot.lane.b32.xlu0 %v211, 104
    %v352 = vpop.permute.xlu0 %351
    %353 = vrot.lane.b32.xlu0 %v214, 104
    %v354 = vpop.permute.xlu0 %353
    %355 = vrot.lane.b32.xlu0 %v217, 104
    %v356 = vpop.permute.xlu0 %355
    %361 = vrot.lane.b32.xlu0 %v208, 100
    %v362 = vpop.permute.xlu0 %361
    %363 = vrot.lane.b32.xlu0 %v211, 100
    %v364 = vpop.permute.xlu0 %363
    %365 = vrot.lane.b32.xlu0 %v214, 100
    %v366 = vpop.permute.xlu0 %365
    %367 = vrot.lane.b32.xlu0 %v217, 100
    %v368 = vpop.permute.xlu0 %367
    %v373 = vrot.slane %v302, 4
    %vm374 = vcmask 1047556
    %v375 = vsel %vm374, %v373, %v208
    %v376 = vrot.slane %v208, 4
    %v377 = vsel %vm374, %v302, %v376
    %v379 = vunpack.c.l.s4 1983009808
    %v380 = vunpack.c.0.s8 %v379
    %v381 = vperm.slane %v375, %v380
    %v383 = vunpack.c.l.s4 1983009808
    %v384 = vunpack.c.0.s8 %v383
    %v385 = vperm.slane %v377, %v384
    %v386 = vrot.slane %v314, 4
    %v387 = vsel %vm374, %v386, %v290
    %v388 = vrot.slane %v290, 4
    %v389 = vsel %vm374, %v314, %v388
    %v391 = vunpack.c.l.s4 1983009808
    %v392 = vunpack.c.0.s8 %v391
    %v393 = vperm.slane %v387, %v392
    %v395 = vunpack.c.l.s4 1983009808
    %v396 = vunpack.c.0.s8 %v395
    %v397 = vperm.slane %v389, %v396
    %v398 = vrot.slane %v350, 4
    %v399 = vsel %vm374, %v398, %v326
    %v400 = vrot.slane %v326, 4
    %v401 = vsel %vm374, %v350, %v400
    %v403 = vunpack.c.l.s4 1983009808
    %v404 = vunpack.c.0.s8 %v403
    %v405 = vperm.slane %v399, %v404
    %v407 = vunpack.c.l.s4 1983009808
    %v408 = vunpack.c.0.s8 %v407
    %v409 = vperm.slane %v401, %v408
    %v410 = vrot.slane %v362, 4
    %v411 = vsel %vm374, %v410, %v338
    %v412 = vrot.slane %v338, 4
    %v413 = vsel %vm374, %v362, %v412
    %v415 = vunpack.c.l.s4 1983009808
    %v416 = vunpack.c.0.s8 %v415
    %v417 = vperm.slane %v411, %v416
    %v419 = vunpack.c.l.s4 1983009808
    %v420 = vunpack.c.0.s8 %v419
    %v421 = vperm.slane %v413, %v420
    %v422 = vrot.slane %v393, 4
    %v423 = vsel %vm374, %v422, %v381
    %v424 = vrot.slane %v381, 4
    %v425 = vsel %vm374, %v393, %v424
    %v427 = vunpack.c.l.s4 1934713408
    %v428 = vunpack.c.0.s8 %v427
    %v429 = vperm.slane %v423, %v428
    %v431 = vunpack.c.l.s4 1934713408
    %v432 = vunpack.c.0.s8 %v431
    %v433 = vperm.slane %v425, %v432
    %v434 = vrot.slane %v397, 4
    %v435 = vsel %vm374, %v434, %v385
    %v436 = vrot.slane %v385, 4
    %v437 = vsel %vm374, %v397, %v436
    %v439 = vunpack.c.l.s4 1934713408
    %v440 = vunpack.c.0.s8 %v439
    %v441 = vperm.slane %v435, %v440
    %v443 = vunpack.c.l.s4 1934713408
    %v444 = vunpack.c.0.s8 %v443
    %v445 = vperm.slane %v437, %v444
    %v446 = vrot.slane %v417, 4
    %v447 = vsel %vm374, %v446, %v405
    %v448 = vrot.slane %v405, 4
    %v449 = vsel %vm374, %v417, %v448
    %v451 = vunpack.c.l.s4 1934713408
    %v452 = vunpack.c.0.s8 %v451
    %v453 = vperm.slane %v447, %v452
    %v455 = vunpack.c.l.s4 1934713408
    %v456 = vunpack.c.0.s8 %v455
    %v457 = vperm.slane %v449, %v456
    %v458 = vrot.slane %v421, 4
    %v459 = vsel %vm374, %v458, %v409
    %v460 = vrot.slane %v409, 4
    %v461 = vsel %vm374, %v421, %v460
    %v463 = vunpack.c.l.s4 1934713408
    %v464 = vunpack.c.0.s8 %v463
    %v465 = vperm.slane %v459, %v464
    %v467 = vunpack.c.l.s4 1934713408
    %v468 = vunpack.c.0.s8 %v467
    %v469 = vperm.slane %v461, %v468
    %v470 = vrot.slane %v453, 4
    %v471 = vsel %vm374, %v470, %v429
    %v472 = vrot.slane %v429, 4
    %v473 = vsel %vm374, %v453, %v472
    %v474 = vrot.slane %v457, 4
    %v475 = vsel %vm374, %v474, %v433
    %v476 = vrot.slane %v433, 4
    %v477 = vsel %vm374, %v457, %v476
    %v478 = vrot.slane %v465, 4
    %v479 = vsel %vm374, %v478, %v441
    %v480 = vrot.slane %v441, 4
    %v481 = vsel %vm374, %v465, %v480
    %v482 = vrot.slane %v469, 4
    %v483 = vsel %vm374, %v482, %v445
    %v484 = vrot.slane %v445, 4
    %v485 = vsel %vm374, %v469, %v484
    %v486 = vrot.slane %v304, 4
    %v487 = vsel %vm374, %v486, %v211
    %v488 = vrot.slane %v211, 4
    %v489 = vsel %vm374, %v304, %v488
    %v491 = vunpack.c.l.s4 1983009808
    %v492 = vunpack.c.0.s8 %v491
    %v493 = vperm.slane %v487, %v492
    %v495 = vunpack.c.l.s4 1983009808
    %v496 = vunpack.c.0.s8 %v495
    %v497 = vperm.slane %v489, %v496
    %v498 = vrot.slane %v316, 4
    %v499 = vsel %vm374, %v498, %v292
    %v500 = vrot.slane %v292, 4
    %v501 = vsel %vm374, %v316, %v500
    %v503 = vunpack.c.l.s4 1983009808
    %v504 = vunpack.c.0.s8 %v503
    %v505 = vperm.slane %v499, %v504
    %v507 = vunpack.c.l.s4 1983009808
    %v508 = vunpack.c.0.s8 %v507
    %v509 = vperm.slane %v501, %v508
    %v510 = vrot.slane %v352, 4
    %v511 = vsel %vm374, %v510, %v328
    %v512 = vrot.slane %v328, 4
    %v513 = vsel %vm374, %v352, %v512
    %v515 = vunpack.c.l.s4 1983009808
    %v516 = vunpack.c.0.s8 %v515
    %v517 = vperm.slane %v511, %v516
    %v519 = vunpack.c.l.s4 1983009808
    %v520 = vunpack.c.0.s8 %v519
    %v521 = vperm.slane %v513, %v520
    %v522 = vrot.slane %v364, 4
    %v523 = vsel %vm374, %v522, %v340
    %v524 = vrot.slane %v340, 4
    %v525 = vsel %vm374, %v364, %v524
    %v527 = vunpack.c.l.s4 1983009808
    %v528 = vunpack.c.0.s8 %v527
    %v529 = vperm.slane %v523, %v528
    %v531 = vunpack.c.l.s4 1983009808
    %v532 = vunpack.c.0.s8 %v531
    %v533 = vperm.slane %v525, %v532
    %v534 = vrot.slane %v505, 4
    %v535 = vsel %vm374, %v534, %v493
    %v536 = vrot.slane %v493, 4
    %v537 = vsel %vm374, %v505, %v536
    %v539 = vunpack.c.l.s4 1934713408
    %v540 = vunpack.c.0.s8 %v539
    %v541 = vperm.slane %v535, %v540
    %v543 = vunpack.c.l.s4 1934713408
    %v544 = vunpack.c.0.s8 %v543
    %v545 = vperm.slane %v537, %v544
    %v546 = vrot.slane %v509, 4
    %v547 = vsel %vm374, %v546, %v497
    %v548 = vrot.slane %v497, 4
    %v549 = vsel %vm374, %v509, %v548
    %v551 = vunpack.c.l.s4 1934713408
    %v552 = vunpack.c.0.s8 %v551
    %v553 = vperm.slane %v547, %v552
    %v555 = vunpack.c.l.s4 1934713408
    %v556 = vunpack.c.0.s8 %v555
    %v557 = vperm.slane %v549, %v556
    %v558 = vrot.slane %v529, 4
    %v559 = vsel %vm374, %v558, %v517
    %v560 = vrot.slane %v517, 4
    %v561 = vsel %vm374, %v529, %v560
    %v563 = vunpack.c.l.s4 1934713408
    %v564 = vunpack.c.0.s8 %v563
    %v565 = vperm.slane %v559, %v564
    %v567 = vunpack.c.l.s4 1934713408
    %v568 = vunpack.c.0.s8 %v567
    %v569 = vperm.slane %v561, %v568
    %v570 = vrot.slane %v533, 4
    %v571 = vsel %vm374, %v570, %v521
    %v572 = vrot.slane %v521, 4
    %v573 = vsel %vm374, %v533, %v572
    %v575 = vunpack.c.l.s4 1934713408
    %v576 = vunpack.c.0.s8 %v575
    %v577 = vperm.slane %v571, %v576
    %v579 = vunpack.c.l.s4 1934713408
    %v580 = vunpack.c.0.s8 %v579
    %v581 = vperm.slane %v573, %v580
    %v582 = vrot.slane %v565, 4
    %v583 = vsel %vm374, %v582, %v541
    %v584 = vrot.slane %v541, 4
    %v585 = vsel %vm374, %v565, %v584
    %v586 = vrot.slane %v569, 4
    %v587 = vsel %vm374, %v586, %v545
    %v588 = vrot.slane %v545, 4
    %v589 = vsel %vm374, %v569, %v588
    %v590 = vrot.slane %v577, 4
    %v591 = vsel %vm374, %v590, %v553
    %v592 = vrot.slane %v553, 4
    %v593 = vsel %vm374, %v577, %v592
    %v594 = vrot.slane %v581, 4
    %v595 = vsel %vm374, %v594, %v557
    %v596 = vrot.slane %v557, 4
    %v597 = vsel %vm374, %v581, %v596
    %v598 = vrot.slane %v306, 4
    %v599 = vsel %vm374, %v598, %v214
    %v600 = vrot.slane %v214, 4
    %v601 = vsel %vm374, %v306, %v600
    %v603 = vunpack.c.l.s4 1983009808
    %v604 = vunpack.c.0.s8 %v603
    %v605 = vperm.slane %v599, %v604
    %v607 = vunpack.c.l.s4 1983009808
    %v608 = vunpack.c.0.s8 %v607
    %v609 = vperm.slane %v601, %v608
    %v610 = vrot.slane %v318, 4
    %v611 = vsel %vm374, %v610, %v294
    %v612 = vrot.slane %v294, 4
    %v613 = vsel %vm374, %v318, %v612
    %v615 = vunpack.c.l.s4 1983009808
    %v616 = vunpack.c.0.s8 %v615
    %v617 = vperm.slane %v611, %v616
    %v619 = vunpack.c.l.s4 1983009808
    %v620 = vunpack.c.0.s8 %v619
    %v621 = vperm.slane %v613, %v620
    %v622 = vrot.slane %v354, 4
    %v623 = vsel %vm374, %v622, %v330
    %v624 = vrot.slane %v330, 4
    %v625 = vsel %vm374, %v354, %v624
    %v627 = vunpack.c.l.s4 1983009808
    %v628 = vunpack.c.0.s8 %v627
    %v629 = vperm.slane %v623, %v628
    %v631 = vunpack.c.l.s4 1983009808
    %v632 = vunpack.c.0.s8 %v631
    %v633 = vperm.slane %v625, %v632
    %v634 = vrot.slane %v366, 4
    %v635 = vsel %vm374, %v634, %v342
    %v636 = vrot.slane %v342, 4
    %v637 = vsel %vm374, %v366, %v636
    %v639 = vunpack.c.l.s4 1983009808
    %v640 = vunpack.c.0.s8 %v639
    %v641 = vperm.slane %v635, %v640
    %v643 = vunpack.c.l.s4 1983009808
    %v644 = vunpack.c.0.s8 %v643
    %v645 = vperm.slane %v637, %v644
    %v646 = vrot.slane %v617, 4
    %v647 = vsel %vm374, %v646, %v605
    %v648 = vrot.slane %v605, 4
    %v649 = vsel %vm374, %v617, %v648
    %v651 = vunpack.c.l.s4 1934713408
    %v652 = vunpack.c.0.s8 %v651
    %v653 = vperm.slane %v647, %v652
    %v655 = vunpack.c.l.s4 1934713408
    %v656 = vunpack.c.0.s8 %v655
    %v657 = vperm.slane %v649, %v656
    %v658 = vrot.slane %v621, 4
    %v659 = vsel %vm374, %v658, %v609
    %v660 = vrot.slane %v609, 4
    %v661 = vsel %vm374, %v621, %v660
    %v663 = vunpack.c.l.s4 1934713408
    %v664 = vunpack.c.0.s8 %v663
    %v665 = vperm.slane %v659, %v664
    %v667 = vunpack.c.l.s4 1934713408
    %v668 = vunpack.c.0.s8 %v667
    %v669 = vperm.slane %v661, %v668
    %v670 = vrot.slane %v641, 4
    %v671 = vsel %vm374, %v670, %v629
    %v672 = vrot.slane %v629, 4
    %v673 = vsel %vm374, %v641, %v672
    %v675 = vunpack.c.l.s4 1934713408
    %v676 = vunpack.c.0.s8 %v675
    %v677 = vperm.slane %v671, %v676
    %v679 = vunpack.c.l.s4 1934713408
    %v680 = vunpack.c.0.s8 %v679
    %v681 = vperm.slane %v673, %v680
    %v682 = vrot.slane %v645, 4
    %v683 = vsel %vm374, %v682, %v633
    %v684 = vrot.slane %v633, 4
    %v685 = vsel %vm374, %v645, %v684
    %v687 = vunpack.c.l.s4 1934713408
    %v688 = vunpack.c.0.s8 %v687
    %v689 = vperm.slane %v683, %v688
    %v691 = vunpack.c.l.s4 1934713408
    %v692 = vunpack.c.0.s8 %v691
    %v693 = vperm.slane %v685, %v692
    %v694 = vrot.slane %v677, 4
    %v695 = vsel %vm374, %v694, %v653
    %v696 = vrot.slane %v653, 4
    %v697 = vsel %vm374, %v677, %v696
    %v698 = vrot.slane %v681, 4
    %v699 = vsel %vm374, %v698, %v657
    %v700 = vrot.slane %v657, 4
    %v701 = vsel %vm374, %v681, %v700
    %v702 = vrot.slane %v689, 4
    %v703 = vsel %vm374, %v702, %v665
    %v704 = vrot.slane %v665, 4
    %v705 = vsel %vm374, %v689, %v704
    %v706 = vrot.slane %v693, 4
    %v707 = vsel %vm374, %v706, %v669
    %v708 = vrot.slane %v669, 4
    %v709 = vsel %vm374, %v693, %v708
    %v710 = vrot.slane %v308, 4
    %v711 = vsel %vm374, %v710, %v217
    %v712 = vrot.slane %v217, 4
    %v713 = vsel %vm374, %v308, %v712
    %v715 = vunpack.c.l.s4 1983009808
    %v716 = vunpack.c.0.s8 %v715
    %v717 = vperm.slane %v711, %v716
    %v719 = vunpack.c.l.s4 1983009808
    %v720 = vunpack.c.0.s8 %v719
    %v721 = vperm.slane %v713, %v720
    %v722 = vrot.slane %v320, 4
    %v723 = vsel %vm374, %v722, %v296
    %v724 = vrot.slane %v296, 4
    %v725 = vsel %vm374, %v320, %v724
    %v727 = vunpack.c.l.s4 1983009808
    %v728 = vunpack.c.0.s8 %v727
    %v729 = vperm.slane %v723, %v728
    %v731 = vunpack.c.l.s4 1983009808
    %v732 = vunpack.c.0.s8 %v731
    %v733 = vperm.slane %v725, %v732
    %v734 = vrot.slane %v356, 4
    %v735 = vsel %vm374, %v734, %v332
    %v736 = vrot.slane %v332, 4
    %v737 = vsel %vm374, %v356, %v736
    %v739 = vunpack.c.l.s4 1983009808
    %v740 = vunpack.c.0.s8 %v739
    %v741 = vperm.slane %v735, %v740
    %v743 = vunpack.c.l.s4 1983009808
    %v744 = vunpack.c.0.s8 %v743
    %v745 = vperm.slane %v737, %v744
    %v746 = vrot.slane %v368, 4
    %v747 = vsel %vm374, %v746, %v344
    %v748 = vrot.slane %v344, 4
    %v749 = vsel %vm374, %v368, %v748
    %v751 = vunpack.c.l.s4 1983009808
    %v752 = vunpack.c.0.s8 %v751
    %v753 = vperm.slane %v747, %v752
    %v755 = vunpack.c.l.s4 1983009808
    %v756 = vunpack.c.0.s8 %v755
    %v757 = vperm.slane %v749, %v756
    %v758 = vrot.slane %v729, 4
    %v759 = vsel %vm374, %v758, %v717
    %v760 = vrot.slane %v717, 4
    %v761 = vsel %vm374, %v729, %v760
    %v763 = vunpack.c.l.s4 1934713408
    %v764 = vunpack.c.0.s8 %v763
    %v765 = vperm.slane %v759, %v764
    %v767 = vunpack.c.l.s4 1934713408
    %v768 = vunpack.c.0.s8 %v767
    %v769 = vperm.slane %v761, %v768
    %v770 = vrot.slane %v733, 4
    %v771 = vsel %vm374, %v770, %v721
    %v772 = vrot.slane %v721, 4
    %v773 = vsel %vm374, %v733, %v772
    %v775 = vunpack.c.l.s4 1934713408
    %v776 = vunpack.c.0.s8 %v775
    %v777 = vperm.slane %v771, %v776
    %v779 = vunpack.c.l.s4 1934713408
    %v780 = vunpack.c.0.s8 %v779
    %v781 = vperm.slane %v773, %v780
    %v782 = vrot.slane %v753, 4
    %v783 = vsel %vm374, %v782, %v741
    %v784 = vrot.slane %v741, 4
    %v785 = vsel %vm374, %v753, %v784
    %v787 = vunpack.c.l.s4 1934713408
    %v788 = vunpack.c.0.s8 %v787
    %v789 = vperm.slane %v783, %v788
    %v791 = vunpack.c.l.s4 1934713408
    %v792 = vunpack.c.0.s8 %v791
    %v793 = vperm.slane %v785, %v792
    %v794 = vrot.slane %v757, 4
    %v795 = vsel %vm374, %v794, %v745
    %v796 = vrot.slane %v745, 4
    %v797 = vsel %vm374, %v757, %v796
    %v799 = vunpack.c.l.s4 1934713408
    %v800 = vunpack.c.0.s8 %v799
    %v801 = vperm.slane %v795, %v800
    %v803 = vunpack.c.l.s4 1934713408
    %v804 = vunpack.c.0.s8 %v803
    %v805 = vperm.slane %v797, %v804
    %v806 = vrot.slane %v789, 4
    %v807 = vsel %vm374, %v806, %v765
    %v808 = vrot.slane %v765, 4
    %v809 = vsel %vm374, %v789, %v808
    %v810 = vrot.slane %v793, 4
    %v811 = vsel %vm374, %v810, %v769
    %v812 = vrot.slane %v769, 4
    %v813 = vsel %vm374, %v793, %v812
    %v814 = vrot.slane %v801, 4
    %v815 = vsel %vm374, %v814, %v777
    %v816 = vrot.slane %v777, 4
    %v817 = vsel %vm374, %v801, %v816
    %v818 = vrot.slane %v805, 4
    %v819 = vsel %vm374, %v818, %v781
    %v820 = vrot.slane %v781, 4
    %v821 = vsel %vm374, %v805, %v820
    %v822 = vld [vmem:[%s6] sm:$0x1]
    %v823 = vmul.f32 %v822, 0.17677669
    %v824 = vld [vmem:[%s7] sm:$0x1]
    %v825 = vmul.f32 %v824, 0.17677669
    %vm826 = vcmask 31744
    %v827 = vsel %vm826, %v471, 0.0
    %828 = vadd.xlane.f32.xlu0 %v827
    %v829 = vpop.xlane.xlu0 %828
    %v830 = vsel %vm826, %v473, 0.0
    %831 = vadd.xlane.f32.xlu0 %v830
    %v832 = vpop.xlane.xlu0 %831
    %v833 = vsel %vm826, %v475, 0.0
    %834 = vadd.xlane.f32.xlu0 %v833
    %v835 = vpop.xlane.xlu0 %834
    %v836 = vsel %vm826, %v477, 0.0
    %837 = vadd.xlane.f32.xlu0 %v836
    %v838 = vpop.xlane.xlu0 %837
    %v839 = vsel %vm826, %v479, 0.0
    %840 = vadd.xlane.f32.xlu0 %v839
    %v841 = vpop.xlane.xlu0 %840
    %v842 = vsel %vm826, %v481, 0.0
    %843 = vadd.xlane.f32.xlu0 %v842
    %v844 = vpop.xlane.xlu0 %843
    %v845 = vsel %vm826, %v483, 0.0
    %846 = vadd.xlane.f32.xlu0 %v845
    %v847 = vpop.xlane.xlu0 %846
    %v848 = vsel %vm826, %v485, 0.0
    %849 = vadd.xlane.f32.xlu0 %v848
    %v850 = vpop.xlane.xlu0 %849
    %v851 = vsel %vm826, %v583, 0.0
    %852 = vadd.xlane.f32.xlu0 %v851
    %v853 = vpop.xlane.xlu0 %852
    %v854 = vsel %vm826, %v585, 0.0
    %855 = vadd.xlane.f32.xlu0 %v854
    %v856 = vpop.xlane.xlu0 %855
    %v857 = vsel %vm826, %v587, 0.0
    %858 = vadd.xlane.f32.xlu0 %v857
    %v859 = vpop.xlane.xlu0 %858
    %v860 = vsel %vm826, %v589, 0.0
    %861 = vadd.xlane.f32.xlu0 %v860
    %v862 = vpop.xlane.xlu0 %861
    %v863 = vsel %vm826, %v591, 0.0
    %864 = vadd.xlane.f32.xlu0 %v863
    %v865 = vpop.xlane.xlu0 %864
    %v866 = vsel %vm826, %v593, 0.0
    %867 = vadd.xlane.f32.xlu0 %v866
    %v868 = vpop.xlane.xlu0 %867
    %v869 = vsel %vm826, %v595, 0.0
    %870 = vadd.xlane.f32.xlu0 %v869
    %v871 = vpop.xlane.xlu0 %870
    %v872 = vsel %vm826, %v597, 0.0
    %873 = vadd.xlane.f32.xlu0 %v872
    %v874 = vpop.xlane.xlu0 %873
    %v875 = vsel %vm826, %v695, 0.0
    %876 = vadd.xlane.f32.xlu0 %v875
    %v877 = vpop.xlane.xlu0 %876
    %v878 = vsel %vm826, %v697, 0.0
    %879 = vadd.xlane.f32.xlu0 %v878
    %v880 = vpop.xlane.xlu0 %879
    %v881 = vsel %vm826, %v699, 0.0
    %882 = vadd.xlane.f32.xlu0 %v881
    %v883 = vpop.xlane.xlu0 %882
    %v884 = vsel %vm826, %v701, 0.0
    %885 = vadd.xlane.f32.xlu0 %v884
    %v886 = vpop.xlane.xlu0 %885
    %v887 = vsel %vm826, %v703, 0.0
    %888 = vadd.xlane.f32.xlu0 %v887
    %v889 = vpop.xlane.xlu0 %888
    %v890 = vsel %vm826, %v705, 0.0
    %891 = vadd.xlane.f32.xlu0 %v890
    %v892 = vpop.xlane.xlu0 %891
    %v893 = vsel %vm826, %v707, 0.0
    %894 = vadd.xlane.f32.xlu0 %v893
    %v895 = vpop.xlane.xlu0 %894
    %v896 = vsel %vm826, %v709, 0.0
    %897 = vadd.xlane.f32.xlu0 %v896
    %v898 = vpop.xlane.xlu0 %897
    %v899 = vsel %vm826, %v807, 0.0
    %900 = vadd.xlane.f32.xlu0 %v899
    %v901 = vpop.xlane.xlu0 %900
    %v902 = vsel %vm826, %v809, 0.0
    %903 = vadd.xlane.f32.xlu0 %v902
    %v904 = vpop.xlane.xlu0 %903
    %v905 = vsel %vm826, %v811, 0.0
    %906 = vadd.xlane.f32.xlu0 %v905
    %v907 = vpop.xlane.xlu0 %906
    %v908 = vsel %vm826, %v813, 0.0
    %909 = vadd.xlane.f32.xlu0 %v908
    %v910 = vpop.xlane.xlu0 %909
    %v911 = vsel %vm826, %v815, 0.0
    %912 = vadd.xlane.f32.xlu0 %v911
    %v913 = vpop.xlane.xlu0 %912
    %v914 = vsel %vm826, %v817, 0.0
    %915 = vadd.xlane.f32.xlu0 %v914
    %v916 = vpop.xlane.xlu0 %915
    %v917 = vsel %vm826, %v819, 0.0
    %918 = vadd.xlane.f32.xlu0 %v917
    %v919 = vpop.xlane.xlu0 %918
    %v920 = vsel %vm826, %v821, 0.0
    %921 = vadd.xlane.f32.xlu0 %v920
    %v922 = vpop.xlane.xlu0 %921
    %v923 = vrcp.pop 4.0
    %v924 = vmul.f32 4.0, %v923
    %v925 = vsub.f32 1.0, %v924
    %v926 = vmul.f32 %v923, %v925
    %v927 = vadd.f32 %v923, %v926
    %vm928 = vweird.f32 %v923
    %v929 = vsel %vm928, %v923, %v927
    %v930 = vmul.f32 %v829, %v929
    %v931 = vmul.f32 %v832, %v929
    %v932 = vmul.f32 %v835, %v929
    %v933 = vmul.f32 %v838, %v929
    %v934 = vmul.f32 %v841, %v929
    %v935 = vmul.f32 %v844, %v929
    %v936 = vmul.f32 %v847, %v929
    %v937 = vmul.f32 %v850, %v929
    %v938 = vmul.f32 %v853, %v929
    %v939 = vmul.f32 %v856, %v929
    %v940 = vmul.f32 %v859, %v929
    %v941 = vmul.f32 %v862, %v929
    %v942 = vmul.f32 %v865, %v929
    %v943 = vmul.f32 %v868, %v929
    %v944 = vmul.f32 %v871, %v929
    %v945 = vmul.f32 %v874, %v929
    %v946 = vmul.f32 %v877, %v929
    %v947 = vmul.f32 %v880, %v929
    %v948 = vmul.f32 %v883, %v929
    %v949 = vmul.f32 %v886, %v929
    %v950 = vmul.f32 %v889, %v929
    %v951 = vmul.f32 %v892, %v929
    %v952 = vmul.f32 %v895, %v929
    %v953 = vmul.f32 %v898, %v929
    %v954 = vmul.f32 %v901, %v929
    %v955 = vmul.f32 %v904, %v929
    %v956 = vmul.f32 %v907, %v929
    %v957 = vmul.f32 %v910, %v929
    %v958 = vmul.f32 %v913, %v929
    %v959 = vmul.f32 %v916, %v929
    %v960 = vmul.f32 %v919, %v929
    %v961 = vmul.f32 %v922, %v929
    %v962 = vsub.f32 %v471, %v930
    %v963 = vsub.f32 %v473, %v931
    %v964 = vsub.f32 %v475, %v932
    %v965 = vsub.f32 %v477, %v933
    %v966 = vsub.f32 %v479, %v934
    %v967 = vsub.f32 %v481, %v935
    %v968 = vsub.f32 %v483, %v936
    %v969 = vsub.f32 %v485, %v937
    %v970 = vsub.f32 %v583, %v938
    %v971 = vsub.f32 %v585, %v939
    %v972 = vsub.f32 %v587, %v940
    %v973 = vsub.f32 %v589, %v941
    %v974 = vsub.f32 %v591, %v942
    %v975 = vsub.f32 %v593, %v943
    %v976 = vsub.f32 %v595, %v944
    %v977 = vsub.f32 %v597, %v945
    %v978 = vsub.f32 %v695, %v946
    %v979 = vsub.f32 %v697, %v947
    %v980 = vsub.f32 %v699, %v948
    %v981 = vsub.f32 %v701, %v949
    %v982 = vsub.f32 %v703, %v950
    %v983 = vsub.f32 %v705, %v951
    %v984 = vsub.f32 %v707, %v952
    %v985 = vsub.f32 %v709, %v953
    %v986 = vsub.f32 %v807, %v954
    %v987 = vsub.f32 %v809, %v955
    %v988 = vsub.f32 %v811, %v956
    %v989 = vsub.f32 %v813, %v957
    %v990 = vsub.f32 %v815, %v958
    %v991 = vsub.f32 %v817, %v959
    %v992 = vsub.f32 %v819, %v960
    %v993 = vsub.f32 %v821, %v961
    %v994 = vmul.f32 %v962, %v962
    %v995 = vmul.f32 %v963, %v963
    %v996 = vmul.f32 %v964, %v964
    %v997 = vmul.f32 %v965, %v965
    %v998 = vmul.f32 %v966, %v966
    %v999 = vmul.f32 %v967, %v967
    %v1000 = vmul.f32 %v968, %v968
    %v1001 = vmul.f32 %v969, %v969
    %v1002 = vmul.f32 %v970, %v970
    %v1003 = vmul.f32 %v971, %v971
    %v1004 = vmul.f32 %v972, %v972
    %v1005 = vmul.f32 %v973, %v973
    %v1006 = vmul.f32 %v974, %v974
    %v1007 = vmul.f32 %v975, %v975
    %v1008 = vmul.f32 %v976, %v976
    %v1009 = vmul.f32 %v977, %v977
    %v1010 = vmul.f32 %v978, %v978
    %v1011 = vmul.f32 %v979, %v979
    %v1012 = vmul.f32 %v980, %v980
    %v1013 = vmul.f32 %v981, %v981
    %v1014 = vmul.f32 %v982, %v982
    %v1015 = vmul.f32 %v983, %v983
    %v1016 = vmul.f32 %v984, %v984
    %v1017 = vmul.f32 %v985, %v985
    %v1018 = vmul.f32 %v986, %v986
    %v1019 = vmul.f32 %v987, %v987
    %v1020 = vmul.f32 %v988, %v988
    %v1021 = vmul.f32 %v989, %v989
    %v1022 = vmul.f32 %v990, %v990
    %v1023 = vmul.f32 %v991, %v991
    %v1024 = vmul.f32 %v992, %v992
    %v1025 = vmul.f32 %v993, %v993
    %v1026 = vsel %vm826, %v994, 0.0
    %1027 = vadd.xlane.f32.xlu0 %v1026
    %v1028 = vpop.xlane.xlu0 %1027
    %v1029 = vsel %vm826, %v995, 0.0
    %1030 = vadd.xlane.f32.xlu0 %v1029
    %v1031 = vpop.xlane.xlu0 %1030
    %v1032 = vsel %vm826, %v996, 0.0
    %1033 = vadd.xlane.f32.xlu0 %v1032
    %v1034 = vpop.xlane.xlu0 %1033
    %v1035 = vsel %vm826, %v997, 0.0
    %1036 = vadd.xlane.f32.xlu0 %v1035
    %v1037 = vpop.xlane.xlu0 %1036
    %v1038 = vsel %vm826, %v998, 0.0
    %1039 = vadd.xlane.f32.xlu0 %v1038
    %v1040 = vpop.xlane.xlu0 %1039
    %v1041 = vsel %vm826, %v999, 0.0
    %1042 = vadd.xlane.f32.xlu0 %v1041
    %v1043 = vpop.xlane.xlu0 %1042
    %v1044 = vsel %vm826, %v1000, 0.0
    %1045 = vadd.xlane.f32.xlu0 %v1044
    %v1046 = vpop.xlane.xlu0 %1045
    %v1047 = vsel %vm826, %v1001, 0.0
    %1048 = vadd.xlane.f32.xlu0 %v1047
    %v1049 = vpop.xlane.xlu0 %1048
    %v1050 = vsel %vm826, %v1002, 0.0
    %1051 = vadd.xlane.f32.xlu0 %v1050
    %v1052 = vpop.xlane.xlu0 %1051
    %v1053 = vsel %vm826, %v1003, 0.0
    %1054 = vadd.xlane.f32.xlu0 %v1053
    %v1055 = vpop.xlane.xlu0 %1054
    %v1056 = vsel %vm826, %v1004, 0.0
    %1057 = vadd.xlane.f32.xlu0 %v1056
    %v1058 = vpop.xlane.xlu0 %1057
    %v1059 = vsel %vm826, %v1005, 0.0
    %1060 = vadd.xlane.f32.xlu0 %v1059
    %v1061 = vpop.xlane.xlu0 %1060
    %v1062 = vsel %vm826, %v1006, 0.0
    %1063 = vadd.xlane.f32.xlu0 %v1062
    %v1064 = vpop.xlane.xlu0 %1063
    %v1065 = vsel %vm826, %v1007, 0.0
    %1066 = vadd.xlane.f32.xlu0 %v1065
    %v1067 = vpop.xlane.xlu0 %1066
    %v1068 = vsel %vm826, %v1008, 0.0
    %1069 = vadd.xlane.f32.xlu0 %v1068
    %v1070 = vpop.xlane.xlu0 %1069
    %v1071 = vsel %vm826, %v1009, 0.0
    %1072 = vadd.xlane.f32.xlu0 %v1071
    %v1073 = vpop.xlane.xlu0 %1072
    %v1074 = vsel %vm826, %v1010, 0.0
    %1075 = vadd.xlane.f32.xlu0 %v1074
    %v1076 = vpop.xlane.xlu0 %1075
    %v1077 = vsel %vm826, %v1011, 0.0
    %1078 = vadd.xlane.f32.xlu0 %v1077
    %v1079 = vpop.xlane.xlu0 %1078
    %v1080 = vsel %vm826, %v1012, 0.0
    %1081 = vadd.xlane.f32.xlu0 %v1080
    %v1082 = vpop.xlane.xlu0 %1081
    %v1083 = vsel %vm826, %v1013, 0.0
    %1084 = vadd.xlane.f32.xlu0 %v1083
    %v1085 = vpop.xlane.xlu0 %1084
    %v1086 = vsel %vm826, %v1014, 0.0
    %1087 = vadd.xlane.f32.xlu0 %v1086
    %v1088 = vpop.xlane.xlu0 %1087
    %v1089 = vsel %vm826, %v1015, 0.0
    %1090 = vadd.xlane.f32.xlu0 %v1089
    %v1091 = vpop.xlane.xlu0 %1090
    %v1092 = vsel %vm826, %v1016, 0.0
    %1093 = vadd.xlane.f32.xlu0 %v1092
    %v1094 = vpop.xlane.xlu0 %1093
    %v1095 = vsel %vm826, %v1017, 0.0
    %1096 = vadd.xlane.f32.xlu0 %v1095
    %v1097 = vpop.xlane.xlu0 %1096
    %v1098 = vsel %vm826, %v1018, 0.0
    %1099 = vadd.xlane.f32.xlu0 %v1098
    %v1100 = vpop.xlane.xlu0 %1099
    %v1101 = vsel %vm826, %v1019, 0.0
    %1102 = vadd.xlane.f32.xlu0 %v1101
    %v1103 = vpop.xlane.xlu0 %1102
    %v1104 = vsel %vm826, %v1020, 0.0
    %1105 = vadd.xlane.f32.xlu0 %v1104
    %v1106 = vpop.xlane.xlu0 %1105
    %v1107 = vsel %vm826, %v1021, 0.0
    %1108 = vadd.xlane.f32.xlu0 %v1107
    %v1109 = vpop.xlane.xlu0 %1108
    %v1110 = vsel %vm826, %v1022, 0.0
    %1111 = vadd.xlane.f32.xlu0 %v1110
    %v1112 = vpop.xlane.xlu0 %1111
    %v1113 = vsel %vm826, %v1023, 0.0
    %1114 = vadd.xlane.f32.xlu0 %v1113
    %v1115 = vpop.xlane.xlu0 %1114
    %v1116 = vsel %vm826, %v1024, 0.0
    %1117 = vadd.xlane.f32.xlu0 %v1116
    %v1118 = vpop.xlane.xlu0 %1117
    %v1119 = vsel %vm826, %v1025, 0.0
    %1120 = vadd.xlane.f32.xlu0 %v1119
    %v1121 = vpop.xlane.xlu0 %1120
    %v1122 = vmul.f32 %v1028, %v929
    %v1123 = vmul.f32 %v1031, %v929
    %v1124 = vmul.f32 %v1034, %v929
    %v1125 = vmul.f32 %v1037, %v929
    %v1126 = vmul.f32 %v1040, %v929
    %v1127 = vmul.f32 %v1043, %v929
    %v1128 = vmul.f32 %v1046, %v929
    %v1129 = vmul.f32 %v1049, %v929
    %v1130 = vmul.f32 %v1052, %v929
    %v1131 = vmul.f32 %v1055, %v929
    %v1132 = vmul.f32 %v1058, %v929
    %v1133 = vmul.f32 %v1061, %v929
    %v1134 = vmul.f32 %v1064, %v929
    %v1135 = vmul.f32 %v1067, %v929
    %v1136 = vmul.f32 %v1070, %v929
    %v1137 = vmul.f32 %v1073, %v929
    %v1138 = vmul.f32 %v1076, %v929
    %v1139 = vmul.f32 %v1079, %v929
    %v1140 = vmul.f32 %v1082, %v929
    %v1141 = vmul.f32 %v1085, %v929
    %v1142 = vmul.f32 %v1088, %v929
    %v1143 = vmul.f32 %v1091, %v929
    %v1144 = vmul.f32 %v1094, %v929
    %v1145 = vmul.f32 %v1097, %v929
    %v1146 = vmul.f32 %v1100, %v929
    %v1147 = vmul.f32 %v1103, %v929
    %v1148 = vmul.f32 %v1106, %v929
    %v1149 = vmul.f32 %v1109, %v929
    %v1150 = vmul.f32 %v1112, %v929
    %v1151 = vmul.f32 %v1115, %v929
    %v1152 = vmul.f32 %v1118, %v929
    %v1153 = vmul.f32 %v1121, %v929
    %v1154 = vadd.f32 %v1122, 1e-05
    %v1155 = vadd.f32 %v1123, 1e-05
    %v1156 = vadd.f32 %v1124, 1e-05
    %v1157 = vadd.f32 %v1125, 1e-05
    %v1158 = vadd.f32 %v1126, 1e-05
    %v1159 = vadd.f32 %v1127, 1e-05
    %v1160 = vadd.f32 %v1128, 1e-05
    %v1161 = vadd.f32 %v1129, 1e-05
    %v1162 = vadd.f32 %v1130, 1e-05
    %v1163 = vadd.f32 %v1131, 1e-05
    %v1164 = vadd.f32 %v1132, 1e-05
    %v1165 = vadd.f32 %v1133, 1e-05
    %v1166 = vadd.f32 %v1134, 1e-05
    %v1167 = vadd.f32 %v1135, 1e-05
    %v1168 = vadd.f32 %v1136, 1e-05
    %v1169 = vadd.f32 %v1137, 1e-05
    %v1170 = vadd.f32 %v1138, 1e-05
    %v1171 = vadd.f32 %v1139, 1e-05
    %v1172 = vadd.f32 %v1140, 1e-05
    %v1173 = vadd.f32 %v1141, 1e-05
    %v1174 = vadd.f32 %v1142, 1e-05
    %v1175 = vadd.f32 %v1143, 1e-05
    %v1176 = vadd.f32 %v1144, 1e-05
    %v1177 = vadd.f32 %v1145, 1e-05
    %v1178 = vadd.f32 %v1146, 1e-05
    %v1179 = vadd.f32 %v1147, 1e-05
    %v1180 = vadd.f32 %v1148, 1e-05
    %v1181 = vadd.f32 %v1149, 1e-05
    %v1182 = vadd.f32 %v1150, 1e-05
    %v1183 = vadd.f32 %v1151, 1e-05
    %v1184 = vadd.f32 %v1152, 1e-05
    %v1185 = vadd.f32 %v1153, 1e-05
    %v1186 = vrsqrt.pop %v1154
    %v1187 = vmul.f32 %v1186, %v1154
    %v1188 = vmul.f32 %v1187, %v1186
    %v1189 = vmul.f32 0.5, %v1188
    %v1190 = vsub.f32 1.5, %v1189
    %v1191 = vmul.f32 %v1186, %v1190
    %vm1192 = vweird.f32 %v1154
    %vm1193 = vweird.f32 %v1186
    %vm1194 = vmor %vm1192, %vm1193
    %v1195 = vsel %vm1194, %v1186, %v1191
    %v1196 = vrsqrt.pop %v1155
    %v1197 = vmul.f32 %v1196, %v1155
    %v1198 = vmul.f32 %v1197, %v1196
    %v1199 = vmul.f32 0.5, %v1198
    %v1200 = vsub.f32 1.5, %v1199
    %v1201 = vmul.f32 %v1196, %v1200
    %vm1202 = vweird.f32 %v1155
    %vm1203 = vweird.f32 %v1196
    %vm1204 = vmor %vm1202, %vm1203
    %v1205 = vsel %vm1204, %v1196, %v1201
    %v1206 = vrsqrt.pop %v1156
    %v1207 = vmul.f32 %v1206, %v1156
    %v1208 = vmul.f32 %v1207, %v1206
    %v1209 = vmul.f32 0.5, %v1208
    %v1210 = vsub.f32 1.5, %v1209
    %v1211 = vmul.f32 %v1206, %v1210
    %vm1212 = vweird.f32 %v1156
    %vm1213 = vweird.f32 %v1206
    %vm1214 = vmor %vm1212, %vm1213
    %v1215 = vsel %vm1214, %v1206, %v1211
    %v1216 = vrsqrt.pop %v1157
    %v1217 = vmul.f32 %v1216, %v1157
    %v1218 = vmul.f32 %v1217, %v1216
    %v1219 = vmul.f32 0.5, %v1218
    %v1220 = vsub.f32 1.5, %v1219
    %v1221 = vmul.f32 %v1216, %v1220
    %vm1222 = vweird.f32 %v1157
    %vm1223 = vweird.f32 %v1216
    %vm1224 = vmor %vm1222, %vm1223
    %v1225 = vsel %vm1224, %v1216, %v1221
    %v1226 = vrsqrt.pop %v1158
    %v1227 = vmul.f32 %v1226, %v1158
    %v1228 = vmul.f32 %v1227, %v1226
    %v1229 = vmul.f32 0.5, %v1228
    %v1230 = vsub.f32 1.5, %v1229
    %v1231 = vmul.f32 %v1226, %v1230
    %vm1232 = vweird.f32 %v1158
    %vm1233 = vweird.f32 %v1226
    %vm1234 = vmor %vm1232, %vm1233
    %v1235 = vsel %vm1234, %v1226, %v1231
    %v1236 = vrsqrt.pop %v1159
    %v1237 = vmul.f32 %v1236, %v1159
    %v1238 = vmul.f32 %v1237, %v1236
    %v1239 = vmul.f32 0.5, %v1238
    %v1240 = vsub.f32 1.5, %v1239
    %v1241 = vmul.f32 %v1236, %v1240
    %vm1242 = vweird.f32 %v1159
    %vm1243 = vweird.f32 %v1236
    %vm1244 = vmor %vm1242, %vm1243
    %v1245 = vsel %vm1244, %v1236, %v1241
    %v1246 = vrsqrt.pop %v1160
    %v1247 = vmul.f32 %v1246, %v1160
    %v1248 = vmul.f32 %v1247, %v1246
    %v1249 = vmul.f32 0.5, %v1248
    %v1250 = vsub.f32 1.5, %v1249
    %v1251 = vmul.f32 %v1246, %v1250
    %vm1252 = vweird.f32 %v1160
    %vm1253 = vweird.f32 %v1246
    %vm1254 = vmor %vm1252, %vm1253
    %v1255 = vsel %vm1254, %v1246, %v1251
    %v1256 = vrsqrt.pop %v1161
    %v1257 = vmul.f32 %v1256, %v1161
    %v1258 = vmul.f32 %v1257, %v1256
    %v1259 = vmul.f32 0.5, %v1258
    %v1260 = vsub.f32 1.5, %v1259
    %v1261 = vmul.f32 %v1256, %v1260
    %vm1262 = vweird.f32 %v1161
    %vm1263 = vweird.f32 %v1256
    %vm1264 = vmor %vm1262, %vm1263
    %v1265 = vsel %vm1264, %v1256, %v1261
    %v1266 = vrsqrt.pop %v1162
    %v1267 = vmul.f32 %v1266, %v1162
    %v1268 = vmul.f32 %v1267, %v1266
    %v1269 = vmul.f32 0.5, %v1268
    %v1270 = vsub.f32 1.5, %v1269
    %v1271 = vmul.f32 %v1266, %v1270
    %vm1272 = vweird.f32 %v1162
    %vm1273 = vweird.f32 %v1266
    %vm1274 = vmor %vm1272, %vm1273
    %v1275 = vsel %vm1274, %v1266, %v1271
    %v1276 = vrsqrt.pop %v1163
    %v1277 = vmul.f32 %v1276, %v1163
    %v1278 = vmul.f32 %v1277, %v1276
    %v1279 = vmul.f32 0.5, %v1278
    %v1280 = vsub.f32 1.5, %v1279
    %v1281 = vmul.f32 %v1276, %v1280
    %vm1282 = vweird.f32 %v1163
    %vm1283 = vweird.f32 %v1276
    %vm1284 = vmor %vm1282, %vm1283
    %v1285 = vsel %vm1284, %v1276, %v1281
    %v1286 = vrsqrt.pop %v1164
    %v1287 = vmul.f32 %v1286, %v1164
    %v1288 = vmul.f32 %v1287, %v1286
    %v1289 = vmul.f32 0.5, %v1288
    %v1290 = vsub.f32 1.5, %v1289
    %v1291 = vmul.f32 %v1286, %v1290
    %vm1292 = vweird.f32 %v1164
    %vm1293 = vweird.f32 %v1286
    %vm1294 = vmor %vm1292, %vm1293
    %v1295 = vsel %vm1294, %v1286, %v1291
    %v1296 = vrsqrt.pop %v1165
    %v1297 = vmul.f32 %v1296, %v1165
    %v1298 = vmul.f32 %v1297, %v1296
    %v1299 = vmul.f32 0.5, %v1298
    %v1300 = vsub.f32 1.5, %v1299
    %v1301 = vmul.f32 %v1296, %v1300
    %vm1302 = vweird.f32 %v1165
    %vm1303 = vweird.f32 %v1296
    %vm1304 = vmor %vm1302, %vm1303
    %v1305 = vsel %vm1304, %v1296, %v1301
    %v1306 = vrsqrt.pop %v1166
    %v1307 = vmul.f32 %v1306, %v1166
    %v1308 = vmul.f32 %v1307, %v1306
    %v1309 = vmul.f32 0.5, %v1308
    %v1310 = vsub.f32 1.5, %v1309
    %v1311 = vmul.f32 %v1306, %v1310
    %vm1312 = vweird.f32 %v1166
    %vm1313 = vweird.f32 %v1306
    %vm1314 = vmor %vm1312, %vm1313
    %v1315 = vsel %vm1314, %v1306, %v1311
    %v1316 = vrsqrt.pop %v1167
    %v1317 = vmul.f32 %v1316, %v1167
    %v1318 = vmul.f32 %v1317, %v1316
    %v1319 = vmul.f32 0.5, %v1318
    %v1320 = vsub.f32 1.5, %v1319
    %v1321 = vmul.f32 %v1316, %v1320
    %vm1322 = vweird.f32 %v1167
    %vm1323 = vweird.f32 %v1316
    %vm1324 = vmor %vm1322, %vm1323
    %v1325 = vsel %vm1324, %v1316, %v1321
    %v1326 = vrsqrt.pop %v1168
    %v1327 = vmul.f32 %v1326, %v1168
    %v1328 = vmul.f32 %v1327, %v1326
    %v1329 = vmul.f32 0.5, %v1328
    %v1330 = vsub.f32 1.5, %v1329
    %v1331 = vmul.f32 %v1326, %v1330
    %vm1332 = vweird.f32 %v1168
    %vm1333 = vweird.f32 %v1326
    %vm1334 = vmor %vm1332, %vm1333
    %v1335 = vsel %vm1334, %v1326, %v1331
    %v1336 = vrsqrt.pop %v1169
    %v1337 = vmul.f32 %v1336, %v1169
    %v1338 = vmul.f32 %v1337, %v1336
    %v1339 = vmul.f32 0.5, %v1338
    %v1340 = vsub.f32 1.5, %v1339
    %v1341 = vmul.f32 %v1336, %v1340
    %vm1342 = vweird.f32 %v1169
    %vm1343 = vweird.f32 %v1336
    %vm1344 = vmor %vm1342, %vm1343
    %v1345 = vsel %vm1344, %v1336, %v1341
    %v1346 = vrsqrt.pop %v1170
    %v1347 = vmul.f32 %v1346, %v1170
    %v1348 = vmul.f32 %v1347, %v1346
    %v1349 = vmul.f32 0.5, %v1348
    %v1350 = vsub.f32 1.5, %v1349
    %v1351 = vmul.f32 %v1346, %v1350
    %vm1352 = vweird.f32 %v1170
    %vm1353 = vweird.f32 %v1346
    %vm1354 = vmor %vm1352, %vm1353
    %v1355 = vsel %vm1354, %v1346, %v1351
    %v1356 = vrsqrt.pop %v1171
    %v1357 = vmul.f32 %v1356, %v1171
    %v1358 = vmul.f32 %v1357, %v1356
    %v1359 = vmul.f32 0.5, %v1358
    %v1360 = vsub.f32 1.5, %v1359
    %v1361 = vmul.f32 %v1356, %v1360
    %vm1362 = vweird.f32 %v1171
    %vm1363 = vweird.f32 %v1356
    %vm1364 = vmor %vm1362, %vm1363
    %v1365 = vsel %vm1364, %v1356, %v1361
    %v1366 = vrsqrt.pop %v1172
    %v1367 = vmul.f32 %v1366, %v1172
    %v1368 = vmul.f32 %v1367, %v1366
    %v1369 = vmul.f32 0.5, %v1368
    %v1370 = vsub.f32 1.5, %v1369
    %v1371 = vmul.f32 %v1366, %v1370
    %vm1372 = vweird.f32 %v1172
    %vm1373 = vweird.f32 %v1366
    %vm1374 = vmor %vm1372, %vm1373
    %v1375 = vsel %vm1374, %v1366, %v1371
    %v1376 = vrsqrt.pop %v1173
    %v1377 = vmul.f32 %v1376, %v1173
    %v1378 = vmul.f32 %v1377, %v1376
    %v1379 = vmul.f32 0.5, %v1378
    %v1380 = vsub.f32 1.5, %v1379
    %v1381 = vmul.f32 %v1376, %v1380
    %vm1382 = vweird.f32 %v1173
    %vm1383 = vweird.f32 %v1376
    %vm1384 = vmor %vm1382, %vm1383
    %v1385 = vsel %vm1384, %v1376, %v1381
    %v1386 = vrsqrt.pop %v1174
    %v1387 = vmul.f32 %v1386, %v1174
    %v1388 = vmul.f32 %v1387, %v1386
    %v1389 = vmul.f32 0.5, %v1388
    %v1390 = vsub.f32 1.5, %v1389
    %v1391 = vmul.f32 %v1386, %v1390
    %vm1392 = vweird.f32 %v1174
    %vm1393 = vweird.f32 %v1386
    %vm1394 = vmor %vm1392, %vm1393
    %v1395 = vsel %vm1394, %v1386, %v1391
    %v1396 = vrsqrt.pop %v1175
    %v1397 = vmul.f32 %v1396, %v1175
    %v1398 = vmul.f32 %v1397, %v1396
    %v1399 = vmul.f32 0.5, %v1398
    %v1400 = vsub.f32 1.5, %v1399
    %v1401 = vmul.f32 %v1396, %v1400
    %vm1402 = vweird.f32 %v1175
    %vm1403 = vweird.f32 %v1396
    %vm1404 = vmor %vm1402, %vm1403
    %v1405 = vsel %vm1404, %v1396, %v1401
    %v1406 = vrsqrt.pop %v1176
    %v1407 = vmul.f32 %v1406, %v1176
    %v1408 = vmul.f32 %v1407, %v1406
    %v1409 = vmul.f32 0.5, %v1408
    %v1410 = vsub.f32 1.5, %v1409
    %v1411 = vmul.f32 %v1406, %v1410
    %vm1412 = vweird.f32 %v1176
    %vm1413 = vweird.f32 %v1406
    %vm1414 = vmor %vm1412, %vm1413
    %v1415 = vsel %vm1414, %v1406, %v1411
    %v1416 = vrsqrt.pop %v1177
    %v1417 = vmul.f32 %v1416, %v1177
    %v1418 = vmul.f32 %v1417, %v1416
    %v1419 = vmul.f32 0.5, %v1418
    %v1420 = vsub.f32 1.5, %v1419
    %v1421 = vmul.f32 %v1416, %v1420
    %vm1422 = vweird.f32 %v1177
    %vm1423 = vweird.f32 %v1416
    %vm1424 = vmor %vm1422, %vm1423
    %v1425 = vsel %vm1424, %v1416, %v1421
    %v1426 = vrsqrt.pop %v1178
    %v1427 = vmul.f32 %v1426, %v1178
    %v1428 = vmul.f32 %v1427, %v1426
    %v1429 = vmul.f32 0.5, %v1428
    %v1430 = vsub.f32 1.5, %v1429
    %v1431 = vmul.f32 %v1426, %v1430
    %vm1432 = vweird.f32 %v1178
    %vm1433 = vweird.f32 %v1426
    %vm1434 = vmor %vm1432, %vm1433
    %v1435 = vsel %vm1434, %v1426, %v1431
    %v1436 = vrsqrt.pop %v1179
    %v1437 = vmul.f32 %v1436, %v1179
    %v1438 = vmul.f32 %v1437, %v1436
    %v1439 = vmul.f32 0.5, %v1438
    %v1440 = vsub.f32 1.5, %v1439
    %v1441 = vmul.f32 %v1436, %v1440
    %vm1442 = vweird.f32 %v1179
    %vm1443 = vweird.f32 %v1436
    %vm1444 = vmor %vm1442, %vm1443
    %v1445 = vsel %vm1444, %v1436, %v1441
    %v1446 = vrsqrt.pop %v1180
    %v1447 = vmul.f32 %v1446, %v1180
    %v1448 = vmul.f32 %v1447, %v1446
    %v1449 = vmul.f32 0.5, %v1448
    %v1450 = vsub.f32 1.5, %v1449
    %v1451 = vmul.f32 %v1446, %v1450
    %vm1452 = vweird.f32 %v1180
    %vm1453 = vweird.f32 %v1446
    %vm1454 = vmor %vm1452, %vm1453
    %v1455 = vsel %vm1454, %v1446, %v1451
    %v1456 = vrsqrt.pop %v1181
    %v1457 = vmul.f32 %v1456, %v1181
    %v1458 = vmul.f32 %v1457, %v1456
    %v1459 = vmul.f32 0.5, %v1458
    %v1460 = vsub.f32 1.5, %v1459
    %v1461 = vmul.f32 %v1456, %v1460
    %vm1462 = vweird.f32 %v1181
    %vm1463 = vweird.f32 %v1456
    %vm1464 = vmor %vm1462, %vm1463
    %v1465 = vsel %vm1464, %v1456, %v1461
    %v1466 = vrsqrt.pop %v1182
    %v1467 = vmul.f32 %v1466, %v1182
    %v1468 = vmul.f32 %v1467, %v1466
    %v1469 = vmul.f32 0.5, %v1468
    %v1470 = vsub.f32 1.5, %v1469
    %v1471 = vmul.f32 %v1466, %v1470
    %vm1472 = vweird.f32 %v1182
    %vm1473 = vweird.f32 %v1466
    %vm1474 = vmor %vm1472, %vm1473
    %v1475 = vsel %vm1474, %v1466, %v1471
    %v1476 = vrsqrt.pop %v1183
    %v1477 = vmul.f32 %v1476, %v1183
    %v1478 = vmul.f32 %v1477, %v1476
    %v1479 = vmul.f32 0.5, %v1478
    %v1480 = vsub.f32 1.5, %v1479
    %v1481 = vmul.f32 %v1476, %v1480
    %vm1482 = vweird.f32 %v1183
    %vm1483 = vweird.f32 %v1476
    %vm1484 = vmor %vm1482, %vm1483
    %v1485 = vsel %vm1484, %v1476, %v1481
    %v1486 = vrsqrt.pop %v1184
    %v1487 = vmul.f32 %v1486, %v1184
    %v1488 = vmul.f32 %v1487, %v1486
    %v1489 = vmul.f32 0.5, %v1488
    %v1490 = vsub.f32 1.5, %v1489
    %v1491 = vmul.f32 %v1486, %v1490
    %vm1492 = vweird.f32 %v1184
    %vm1493 = vweird.f32 %v1486
    %vm1494 = vmor %vm1492, %vm1493
    %v1495 = vsel %vm1494, %v1486, %v1491
    %v1496 = vrsqrt.pop %v1185
    %v1497 = vmul.f32 %v1496, %v1185
    %v1498 = vmul.f32 %v1497, %v1496
    %v1499 = vmul.f32 0.5, %v1498
    %v1500 = vsub.f32 1.5, %v1499
    %v1501 = vmul.f32 %v1496, %v1500
    %vm1502 = vweird.f32 %v1185
    %vm1503 = vweird.f32 %v1496
    %vm1504 = vmor %vm1502, %vm1503
    %v1505 = vsel %vm1504, %v1496, %v1501
    %v1506 = vmul.f32 %v962, %v1195
    %v1507 = vmul.f32 %v963, %v1205
    %v1508 = vmul.f32 %v964, %v1215
    %v1509 = vmul.f32 %v965, %v1225
    %v1510 = vmul.f32 %v966, %v1235
    %v1511 = vmul.f32 %v967, %v1245
    %v1512 = vmul.f32 %v968, %v1255
    %v1513 = vmul.f32 %v969, %v1265
    %v1514 = vmul.f32 %v970, %v1275
    %v1515 = vmul.f32 %v971, %v1285
    %v1516 = vmul.f32 %v972, %v1295
    %v1517 = vmul.f32 %v973, %v1305
    %v1518 = vmul.f32 %v974, %v1315
    %v1519 = vmul.f32 %v975, %v1325
    %v1520 = vmul.f32 %v976, %v1335
    %v1521 = vmul.f32 %v977, %v1345
    %v1522 = vmul.f32 %v978, %v1355
    %v1523 = vmul.f32 %v979, %v1365
    %v1524 = vmul.f32 %v980, %v1375
    %v1525 = vmul.f32 %v981, %v1385
    %v1526 = vmul.f32 %v982, %v1395
    %v1527 = vmul.f32 %v983, %v1405
    %v1528 = vmul.f32 %v984, %v1415
    %v1529 = vmul.f32 %v985, %v1425
    %v1530 = vmul.f32 %v986, %v1435
    %v1531 = vmul.f32 %v987, %v1445
    %v1532 = vmul.f32 %v988, %v1455
    %v1533 = vmul.f32 %v989, %v1465
    %v1534 = vmul.f32 %v990, %v1475
    %v1535 = vmul.f32 %v991, %v1485
    %v1536 = vmul.f32 %v992, %v1495
    %v1537 = vmul.f32 %v993, %v1505
    %v1539 = vperm.slane %v823, 0
    %v1541 = vmul.f32 %v1506, %v1539
    %v1542 = vmul.f32 %v1507, %v1539
    %v1543 = vmul.f32 %v1508, %v1539
    %v1544 = vmul.f32 %v1509, %v1539
    %v1545 = vmul.f32 %v1510, %v1539
    %v1546 = vmul.f32 %v1511, %v1539
    %v1547 = vmul.f32 %v1512, %v1539
    %v1548 = vmul.f32 %v1513, %v1539
    %v1549 = vmul.f32 %v1514, %v1539
    %v1550 = vmul.f32 %v1515, %v1539
    %v1551 = vmul.f32 %v1516, %v1539
    %v1552 = vmul.f32 %v1517, %v1539
    %v1553 = vmul.f32 %v1518, %v1539
    %v1554 = vmul.f32 %v1519, %v1539
    %v1555 = vmul.f32 %v1520, %v1539
    %v1556 = vmul.f32 %v1521, %v1539
    %v1557 = vmul.f32 %v1522, %v1539
    %v1558 = vmul.f32 %v1523, %v1539
    %v1559 = vmul.f32 %v1524, %v1539
    %v1560 = vmul.f32 %v1525, %v1539
    %v1561 = vmul.f32 %v1526, %v1539
    %v1562 = vmul.f32 %v1527, %v1539
    %v1563 = vmul.f32 %v1528, %v1539
    %v1564 = vmul.f32 %v1529, %v1539
    %v1565 = vmul.f32 %v1530, %v1539
    %v1566 = vmul.f32 %v1531, %v1539
    %v1567 = vmul.f32 %v1532, %v1539
    %v1568 = vmul.f32 %v1533, %v1539
    %v1569 = vmul.f32 %v1534, %v1539
    %v1570 = vmul.f32 %v1535, %v1539
    %v1571 = vmul.f32 %v1536, %v1539
    %v1572 = vmul.f32 %v1537, %v1539
    %v1574 = vperm.slane %v825, 0
    %v1576 = vadd.f32 %v1541, %v1574
    %v1577 = vadd.f32 %v1542, %v1574
    %v1578 = vadd.f32 %v1543, %v1574
    %v1579 = vadd.f32 %v1544, %v1574
    %v1580 = vadd.f32 %v1545, %v1574
    %v1581 = vadd.f32 %v1546, %v1574
    %v1582 = vadd.f32 %v1547, %v1574
    %v1583 = vadd.f32 %v1548, %v1574
    %v1584 = vadd.f32 %v1549, %v1574
    %v1585 = vadd.f32 %v1550, %v1574
    %v1586 = vadd.f32 %v1551, %v1574
    %v1587 = vadd.f32 %v1552, %v1574
    %v1588 = vadd.f32 %v1553, %v1574
    %v1589 = vadd.f32 %v1554, %v1574
    %v1590 = vadd.f32 %v1555, %v1574
    %v1591 = vadd.f32 %v1556, %v1574
    %v1592 = vadd.f32 %v1557, %v1574
    %v1593 = vadd.f32 %v1558, %v1574
    %v1594 = vadd.f32 %v1559, %v1574
    %v1595 = vadd.f32 %v1560, %v1574
    %v1596 = vadd.f32 %v1561, %v1574
    %v1597 = vadd.f32 %v1562, %v1574
    %v1598 = vadd.f32 %v1563, %v1574
    %v1599 = vadd.f32 %v1564, %v1574
    %v1600 = vadd.f32 %v1565, %v1574
    %v1601 = vadd.f32 %v1566, %v1574
    %v1602 = vadd.f32 %v1567, %v1574
    %v1603 = vadd.f32 %v1568, %v1574
    %v1604 = vadd.f32 %v1569, %v1574
    %v1605 = vadd.f32 %v1570, %v1574
    %v1606 = vadd.f32 %v1571, %v1574
    %v1607 = vadd.f32 %v1572, %v1574
    %1612 = vrot.lane.b32.xlu0 %v241, 124
    %v1613 = vpop.permute.xlu0 %1612
    %1614 = vrot.lane.b32.xlu0 %v244, 124
    %v1615 = vpop.permute.xlu0 %1614
    %1616 = vrot.lane.b32.xlu0 %v247, 124
    %v1617 = vpop.permute.xlu0 %1616
    %1618 = vrot.lane.b32.xlu0 %v250, 124
    %v1619 = vpop.permute.xlu0 %1618
    %1624 = vrot.lane.b32.xlu0 %v241, 120
    %v1625 = vpop.permute.xlu0 %1624
    %1626 = vrot.lane.b32.xlu0 %v244, 120
    %v1627 = vpop.permute.xlu0 %1626
    %1628 = vrot.lane.b32.xlu0 %v247, 120
    %v1629 = vpop.permute.xlu0 %1628
    %1630 = vrot.lane.b32.xlu0 %v250, 120
    %v1631 = vpop.permute.xlu0 %1630
    %1636 = vrot.lane.b32.xlu0 %v241, 116
    %v1637 = vpop.permute.xlu0 %1636
    %1638 = vrot.lane.b32.xlu0 %v244, 116
    %v1639 = vpop.permute.xlu0 %1638
    %1640 = vrot.lane.b32.xlu0 %v247, 116
    %v1641 = vpop.permute.xlu0 %1640
    %1642 = vrot.lane.b32.xlu0 %v250, 116
    %v1643 = vpop.permute.xlu0 %1642
    %1648 = vrot.lane.b32.xlu0 %v241, 112
    %v1649 = vpop.permute.xlu0 %1648
    %1650 = vrot.lane.b32.xlu0 %v244, 112
    %v1651 = vpop.permute.xlu0 %1650
    %1652 = vrot.lane.b32.xlu0 %v247, 112
    %v1653 = vpop.permute.xlu0 %1652
    %1654 = vrot.lane.b32.xlu0 %v250, 112
    %v1655 = vpop.permute.xlu0 %1654
    %1660 = vrot.lane.b32.xlu0 %v241, 108
    %v1661 = vpop.permute.xlu0 %1660
    %1662 = vrot.lane.b32.xlu0 %v244, 108
    %v1663 = vpop.permute.xlu0 %1662
    %1664 = vrot.lane.b32.xlu0 %v247, 108
    %v1665 = vpop.permute.xlu0 %1664
    %1666 = vrot.lane.b32.xlu0 %v250, 108
    %v1667 = vpop.permute.xlu0 %1666
    %1672 = vrot.lane.b32.xlu0 %v241, 104
    %v1673 = vpop.permute.xlu0 %1672
    %1674 = vrot.lane.b32.xlu0 %v244, 104
    %v1675 = vpop.permute.xlu0 %1674
    %1676 = vrot.lane.b32.xlu0 %v247, 104
    %v1677 = vpop.permute.xlu0 %1676
    %1678 = vrot.lane.b32.xlu0 %v250, 104
    %v1679 = vpop.permute.xlu0 %1678
    %1684 = vrot.lane.b32.xlu0 %v241, 100
    %v1685 = vpop.permute.xlu0 %1684
    %1686 = vrot.lane.b32.xlu0 %v244, 100
    %v1687 = vpop.permute.xlu0 %1686
    %1688 = vrot.lane.b32.xlu0 %v247, 100
    %v1689 = vpop.permute.xlu0 %1688
    %1690 = vrot.lane.b32.xlu0 %v250, 100
    %v1691 = vpop.permute.xlu0 %1690
    %v1696 = vrot.slane %v1625, 4
    %v1697 = vsel %vm374, %v1696, %v241
    %v1698 = vrot.slane %v241, 4
    %v1699 = vsel %vm374, %v1625, %v1698
    %v1701 = vunpack.c.l.s4 1983009808
    %v1702 = vunpack.c.0.s8 %v1701
    %v1703 = vperm.slane %v1697, %v1702
    %v1705 = vunpack.c.l.s4 1983009808
    %v1706 = vunpack.c.0.s8 %v1705
    %v1707 = vperm.slane %v1699, %v1706
    %v1708 = vrot.slane %v1637, 4
    %v1709 = vsel %vm374, %v1708, %v1613
    %v1710 = vrot.slane %v1613, 4
    %v1711 = vsel %vm374, %v1637, %v1710
    %v1713 = vunpack.c.l.s4 1983009808
    %v1714 = vunpack.c.0.s8 %v1713
    %v1715 = vperm.slane %v1709, %v1714
    %v1717 = vunpack.c.l.s4 1983009808
    %v1718 = vunpack.c.0.s8 %v1717
    %v1719 = vperm.slane %v1711, %v1718
    %v1720 = vrot.slane %v1673, 4
    %v1721 = vsel %vm374, %v1720, %v1649
    %v1722 = vrot.slane %v1649, 4
    %v1723 = vsel %vm374, %v1673, %v1722
    %v1725 = vunpack.c.l.s4 1983009808
    %v1726 = vunpack.c.0.s8 %v1725
    %v1727 = vperm.slane %v1721, %v1726
    %v1729 = vunpack.c.l.s4 1983009808
    %v1730 = vunpack.c.0.s8 %v1729
    %v1731 = vperm.slane %v1723, %v1730
    %v1732 = vrot.slane %v1685, 4
    %v1733 = vsel %vm374, %v1732, %v1661
    %v1734 = vrot.slane %v1661, 4
    %v1735 = vsel %vm374, %v1685, %v1734
    %v1737 = vunpack.c.l.s4 1983009808
    %v1738 = vunpack.c.0.s8 %v1737
    %v1739 = vperm.slane %v1733, %v1738
    %v1741 = vunpack.c.l.s4 1983009808
    %v1742 = vunpack.c.0.s8 %v1741
    %v1743 = vperm.slane %v1735, %v1742
    %v1744 = vrot.slane %v1715, 4
    %v1745 = vsel %vm374, %v1744, %v1703
    %v1746 = vrot.slane %v1703, 4
    %v1747 = vsel %vm374, %v1715, %v1746
    %v1749 = vunpack.c.l.s4 1934713408
    %v1750 = vunpack.c.0.s8 %v1749
    %v1751 = vperm.slane %v1745, %v1750
    %v1753 = vunpack.c.l.s4 1934713408
    %v1754 = vunpack.c.0.s8 %v1753
    %v1755 = vperm.slane %v1747, %v1754
    %v1756 = vrot.slane %v1719, 4
    %v1757 = vsel %vm374, %v1756, %v1707
    %v1758 = vrot.slane %v1707, 4
    %v1759 = vsel %vm374, %v1719, %v1758
    %v1761 = vunpack.c.l.s4 1934713408
    %v1762 = vunpack.c.0.s8 %v1761
    %v1763 = vperm.slane %v1757, %v1762
    %v1765 = vunpack.c.l.s4 1934713408
    %v1766 = vunpack.c.0.s8 %v1765
    %v1767 = vperm.slane %v1759, %v1766
    %v1768 = vrot.slane %v1739, 4
    %v1769 = vsel %vm374, %v1768, %v1727
    %v1770 = vrot.slane %v1727, 4
    %v1771 = vsel %vm374, %v1739, %v1770
    %v1773 = vunpack.c.l.s4 1934713408
    %v1774 = vunpack.c.0.s8 %v1773
    %v1775 = vperm.slane %v1769, %v1774
    %v1777 = vunpack.c.l.s4 1934713408
    %v1778 = vunpack.c.0.s8 %v1777
    %v1779 = vperm.slane %v1771, %v1778
    %v1780 = vrot.slane %v1743, 4
    %v1781 = vsel %vm374, %v1780, %v1731
    %v1782 = vrot.slane %v1731, 4
    %v1783 = vsel %vm374, %v1743, %v1782
    %v1785 = vunpack.c.l.s4 1934713408
    %v1786 = vunpack.c.0.s8 %v1785
    %v1787 = vperm.slane %v1781, %v1786
    %v1789 = vunpack.c.l.s4 1934713408
    %v1790 = vunpack.c.0.s8 %v1789
    %v1791 = vperm.slane %v1783, %v1790
    %v1792 = vrot.slane %v1775, 4
    %v1793 = vsel %vm374, %v1792, %v1751
    %v1794 = vrot.slane %v1751, 4
    %v1795 = vsel %vm374, %v1775, %v1794
    %v1796 = vrot.slane %v1779, 4
    %v1797 = vsel %vm374, %v1796, %v1755
    %v1798 = vrot.slane %v1755, 4
    %v1799 = vsel %vm374, %v1779, %v1798
    %v1800 = vrot.slane %v1787, 4
    %v1801 = vsel %vm374, %v1800, %v1763
    %v1802 = vrot.slane %v1763, 4
    %v1803 = vsel %vm374, %v1787, %v1802
    %v1804 = vrot.slane %v1791, 4
    %v1805 = vsel %vm374, %v1804, %v1767
    %v1806 = vrot.slane %v1767, 4
    %v1807 = vsel %vm374, %v1791, %v1806
    %v1808 = vrot.slane %v1627, 4
    %v1809 = vsel %vm374, %v1808, %v244
    %v1810 = vrot.slane %v244, 4
    %v1811 = vsel %vm374, %v1627, %v1810
    %v1813 = vunpack.c.l.s4 1983009808
    %v1814 = vunpack.c.0.s8 %v1813
    %v1815 = vperm.slane %v1809, %v1814
    %v1817 = vunpack.c.l.s4 1983009808
    %v1818 = vunpack.c.0.s8 %v1817
    %v1819 = vperm.slane %v1811, %v1818
    %v1820 = vrot.slane %v1639, 4
    %v1821 = vsel %vm374, %v1820, %v1615
    %v1822 = vrot.slane %v1615, 4
    %v1823 = vsel %vm374, %v1639, %v1822
    %v1825 = vunpack.c.l.s4 1983009808
    %v1826 = vunpack.c.0.s8 %v1825
    %v1827 = vperm.slane %v1821, %v1826
    %v1829 = vunpack.c.l.s4 1983009808
    %v1830 = vunpack.c.0.s8 %v1829
    %v1831 = vperm.slane %v1823, %v1830
    %v1832 = vrot.slane %v1675, 4
    %v1833 = vsel %vm374, %v1832, %v1651
    %v1834 = vrot.slane %v1651, 4
    %v1835 = vsel %vm374, %v1675, %v1834
    %v1837 = vunpack.c.l.s4 1983009808
    %v1838 = vunpack.c.0.s8 %v1837
    %v1839 = vperm.slane %v1833, %v1838
    %v1841 = vunpack.c.l.s4 1983009808
    %v1842 = vunpack.c.0.s8 %v1841
    %v1843 = vperm.slane %v1835, %v1842
    %v1844 = vrot.slane %v1687, 4
    %v1845 = vsel %vm374, %v1844, %v1663
    %v1846 = vrot.slane %v1663, 4
    %v1847 = vsel %vm374, %v1687, %v1846
    %v1849 = vunpack.c.l.s4 1983009808
    %v1850 = vunpack.c.0.s8 %v1849
    %v1851 = vperm.slane %v1845, %v1850
    %v1853 = vunpack.c.l.s4 1983009808
    %v1854 = vunpack.c.0.s8 %v1853
    %v1855 = vperm.slane %v1847, %v1854
    %v1856 = vrot.slane %v1827, 4
    %v1857 = vsel %vm374, %v1856, %v1815
    %v1858 = vrot.slane %v1815, 4
    %v1859 = vsel %vm374, %v1827, %v1858
    %v1861 = vunpack.c.l.s4 1934713408
    %v1862 = vunpack.c.0.s8 %v1861
    %v1863 = vperm.slane %v1857, %v1862
    %v1865 = vunpack.c.l.s4 1934713408
    %v1866 = vunpack.c.0.s8 %v1865
    %v1867 = vperm.slane %v1859, %v1866
    %v1868 = vrot.slane %v1831, 4
    %v1869 = vsel %vm374, %v1868, %v1819
    %v1870 = vrot.slane %v1819, 4
    %v1871 = vsel %vm374, %v1831, %v1870
    %v1873 = vunpack.c.l.s4 1934713408
    %v1874 = vunpack.c.0.s8 %v1873
    %v1875 = vperm.slane %v1869, %v1874
    %v1877 = vunpack.c.l.s4 1934713408
    %v1878 = vunpack.c.0.s8 %v1877
    %v1879 = vperm.slane %v1871, %v1878
    %v1880 = vrot.slane %v1851, 4
    %v1881 = vsel %vm374, %v1880, %v1839
    %v1882 = vrot.slane %v1839, 4
    %v1883 = vsel %vm374, %v1851, %v1882
    %v1885 = vunpack.c.l.s4 1934713408
    %v1886 = vunpack.c.0.s8 %v1885
    %v1887 = vperm.slane %v1881, %v1886
    %v1889 = vunpack.c.l.s4 1934713408
    %v1890 = vunpack.c.0.s8 %v1889
    %v1891 = vperm.slane %v1883, %v1890
    %v1892 = vrot.slane %v1855, 4
    %v1893 = vsel %vm374, %v1892, %v1843
    %v1894 = vrot.slane %v1843, 4
    %v1895 = vsel %vm374, %v1855, %v1894
    %v1897 = vunpack.c.l.s4 1934713408
    %v1898 = vunpack.c.0.s8 %v1897
    %v1899 = vperm.slane %v1893, %v1898
    %v1901 = vunpack.c.l.s4 1934713408
    %v1902 = vunpack.c.0.s8 %v1901
    %v1903 = vperm.slane %v1895, %v1902
    %v1904 = vrot.slane %v1887, 4
    %v1905 = vsel %vm374, %v1904, %v1863
    %v1906 = vrot.slane %v1863, 4
    %v1907 = vsel %vm374, %v1887, %v1906
    %v1908 = vrot.slane %v1891, 4
    %v1909 = vsel %vm374, %v1908, %v1867
    %v1910 = vrot.slane %v1867, 4
    %v1911 = vsel %vm374, %v1891, %v1910
    %v1912 = vrot.slane %v1899, 4
    %v1913 = vsel %vm374, %v1912, %v1875
    %v1914 = vrot.slane %v1875, 4
    %v1915 = vsel %vm374, %v1899, %v1914
    %v1916 = vrot.slane %v1903, 4
    %v1917 = vsel %vm374, %v1916, %v1879
    %v1918 = vrot.slane %v1879, 4
    %v1919 = vsel %vm374, %v1903, %v1918
    %v1920 = vrot.slane %v1629, 4
    %v1921 = vsel %vm374, %v1920, %v247
    %v1922 = vrot.slane %v247, 4
    %v1923 = vsel %vm374, %v1629, %v1922
    %v1925 = vunpack.c.l.s4 1983009808
    %v1926 = vunpack.c.0.s8 %v1925
    %v1927 = vperm.slane %v1921, %v1926
    %v1929 = vunpack.c.l.s4 1983009808
    %v1930 = vunpack.c.0.s8 %v1929
    %v1931 = vperm.slane %v1923, %v1930
    %v1932 = vrot.slane %v1641, 4
    %v1933 = vsel %vm374, %v1932, %v1617
    %v1934 = vrot.slane %v1617, 4
    %v1935 = vsel %vm374, %v1641, %v1934
    %v1937 = vunpack.c.l.s4 1983009808
    %v1938 = vunpack.c.0.s8 %v1937
    %v1939 = vperm.slane %v1933, %v1938
    %v1941 = vunpack.c.l.s4 1983009808
    %v1942 = vunpack.c.0.s8 %v1941
    %v1943 = vperm.slane %v1935, %v1942
    %v1944 = vrot.slane %v1677, 4
    %v1945 = vsel %vm374, %v1944, %v1653
    %v1946 = vrot.slane %v1653, 4
    %v1947 = vsel %vm374, %v1677, %v1946
    %v1949 = vunpack.c.l.s4 1983009808
    %v1950 = vunpack.c.0.s8 %v1949
    %v1951 = vperm.slane %v1945, %v1950
    %v1953 = vunpack.c.l.s4 1983009808
    %v1954 = vunpack.c.0.s8 %v1953
    %v1955 = vperm.slane %v1947, %v1954
    %v1956 = vrot.slane %v1689, 4
    %v1957 = vsel %vm374, %v1956, %v1665
    %v1958 = vrot.slane %v1665, 4
    %v1959 = vsel %vm374, %v1689, %v1958
    %v1961 = vunpack.c.l.s4 1983009808
    %v1962 = vunpack.c.0.s8 %v1961
    %v1963 = vperm.slane %v1957, %v1962
    %v1965 = vunpack.c.l.s4 1983009808
    %v1966 = vunpack.c.0.s8 %v1965
    %v1967 = vperm.slane %v1959, %v1966
    %v1968 = vrot.slane %v1939, 4
    %v1969 = vsel %vm374, %v1968, %v1927
    %v1970 = vrot.slane %v1927, 4
    %v1971 = vsel %vm374, %v1939, %v1970
    %v1973 = vunpack.c.l.s4 1934713408
    %v1974 = vunpack.c.0.s8 %v1973
    %v1975 = vperm.slane %v1969, %v1974
    %v1977 = vunpack.c.l.s4 1934713408
    %v1978 = vunpack.c.0.s8 %v1977
    %v1979 = vperm.slane %v1971, %v1978
    %v1980 = vrot.slane %v1943, 4
    %v1981 = vsel %vm374, %v1980, %v1931
    %v1982 = vrot.slane %v1931, 4
    %v1983 = vsel %vm374, %v1943, %v1982
    %v1985 = vunpack.c.l.s4 1934713408
    %v1986 = vunpack.c.0.s8 %v1985
    %v1987 = vperm.slane %v1981, %v1986
    %v1989 = vunpack.c.l.s4 1934713408
    %v1990 = vunpack.c.0.s8 %v1989
    %v1991 = vperm.slane %v1983, %v1990
    %v1992 = vrot.slane %v1963, 4
    %v1993 = vsel %vm374, %v1992, %v1951
    %v1994 = vrot.slane %v1951, 4
    %v1995 = vsel %vm374, %v1963, %v1994
    %v1997 = vunpack.c.l.s4 1934713408
    %v1998 = vunpack.c.0.s8 %v1997
    %v1999 = vperm.slane %v1993, %v1998
    %v2001 = vunpack.c.l.s4 1934713408
    %v2002 = vunpack.c.0.s8 %v2001
    %v2003 = vperm.slane %v1995, %v2002
    %v2004 = vrot.slane %v1967, 4
    %v2005 = vsel %vm374, %v2004, %v1955
    %v2006 = vrot.slane %v1955, 4
    %v2007 = vsel %vm374, %v1967, %v2006
    %v2009 = vunpack.c.l.s4 1934713408
    %v2010 = vunpack.c.0.s8 %v2009
    %v2011 = vperm.slane %v2005, %v2010
    %v2013 = vunpack.c.l.s4 1934713408
    %v2014 = vunpack.c.0.s8 %v2013
    %v2015 = vperm.slane %v2007, %v2014
    %v2016 = vrot.slane %v1999, 4
    %v2017 = vsel %vm374, %v2016, %v1975
    %v2018 = vrot.slane %v1975, 4
    %v2019 = vsel %vm374, %v1999, %v2018
    %v2020 = vrot.slane %v2003, 4
    %v2021 = vsel %vm374, %v2020, %v1979
    %v2022 = vrot.slane %v1979, 4
    %v2023 = vsel %vm374, %v2003, %v2022
    %v2024 = vrot.slane %v2011, 4
    %v2025 = vsel %vm374, %v2024, %v1987
    %v2026 = vrot.slane %v1987, 4
    %v2027 = vsel %vm374, %v2011, %v2026
    %v2028 = vrot.slane %v2015, 4
    %v2029 = vsel %vm374, %v2028, %v1991
    %v2030 = vrot.slane %v1991, 4
    %v2031 = vsel %vm374, %v2015, %v2030
    %v2032 = vrot.slane %v1631, 4
    %v2033 = vsel %vm374, %v2032, %v250
    %v2034 = vrot.slane %v250, 4
    %v2035 = vsel %vm374, %v1631, %v2034
    %v2037 = vunpack.c.l.s4 1983009808
    %v2038 = vunpack.c.0.s8 %v2037
    %v2039 = vperm.slane %v2033, %v2038
    %v2041 = vunpack.c.l.s4 1983009808
    %v2042 = vunpack.c.0.s8 %v2041
    %v2043 = vperm.slane %v2035, %v2042
    %v2044 = vrot.slane %v1643, 4
    %v2045 = vsel %vm374, %v2044, %v1619
    %v2046 = vrot.slane %v1619, 4
    %v2047 = vsel %vm374, %v1643, %v2046
    %v2049 = vunpack.c.l.s4 1983009808
    %v2050 = vunpack.c.0.s8 %v2049
    %v2051 = vperm.slane %v2045, %v2050
    %v2053 = vunpack.c.l.s4 1983009808
    %v2054 = vunpack.c.0.s8 %v2053
    %v2055 = vperm.slane %v2047, %v2054
    %v2056 = vrot.slane %v1679, 4
    %v2057 = vsel %vm374, %v2056, %v1655
    %v2058 = vrot.slane %v1655, 4
    %v2059 = vsel %vm374, %v1679, %v2058
    %v2061 = vunpack.c.l.s4 1983009808
    %v2062 = vunpack.c.0.s8 %v2061
    %v2063 = vperm.slane %v2057, %v2062
    %v2065 = vunpack.c.l.s4 1983009808
    %v2066 = vunpack.c.0.s8 %v2065
    %v2067 = vperm.slane %v2059, %v2066
    %v2068 = vrot.slane %v1691, 4
    %v2069 = vsel %vm374, %v2068, %v1667
    %v2070 = vrot.slane %v1667, 4
    %v2071 = vsel %vm374, %v1691, %v2070
    %v2073 = vunpack.c.l.s4 1983009808
    %v2074 = vunpack.c.0.s8 %v2073
    %v2075 = vperm.slane %v2069, %v2074
    %v2077 = vunpack.c.l.s4 1983009808
    %v2078 = vunpack.c.0.s8 %v2077
    %v2079 = vperm.slane %v2071, %v2078
    %v2080 = vrot.slane %v2051, 4
    %v2081 = vsel %vm374, %v2080, %v2039
    %v2082 = vrot.slane %v2039, 4
    %v2083 = vsel %vm374, %v2051, %v2082
    %v2085 = vunpack.c.l.s4 1934713408
    %v2086 = vunpack.c.0.s8 %v2085
    %v2087 = vperm.slane %v2081, %v2086
    %v2089 = vunpack.c.l.s4 1934713408
    %v2090 = vunpack.c.0.s8 %v2089
    %v2091 = vperm.slane %v2083, %v2090
    %v2092 = vrot.slane %v2055, 4
    %v2093 = vsel %vm374, %v2092, %v2043
    %v2094 = vrot.slane %v2043, 4
    %v2095 = vsel %vm374, %v2055, %v2094
    %v2097 = vunpack.c.l.s4 1934713408
    %v2098 = vunpack.c.0.s8 %v2097
    %v2099 = vperm.slane %v2093, %v2098
    %v2101 = vunpack.c.l.s4 1934713408
    %v2102 = vunpack.c.0.s8 %v2101
    %v2103 = vperm.slane %v2095, %v2102
    %v2104 = vrot.slane %v2075, 4
    %v2105 = vsel %vm374, %v2104, %v2063
    %v2106 = vrot.slane %v2063, 4
    %v2107 = vsel %vm374, %v2075, %v2106
    %v2109 = vunpack.c.l.s4 1934713408
    %v2110 = vunpack.c.0.s8 %v2109
    %v2111 = vperm.slane %v2105, %v2110
    %v2113 = vunpack.c.l.s4 1934713408
    %v2114 = vunpack.c.0.s8 %v2113
    %v2115 = vperm.slane %v2107, %v2114
    %v2116 = vrot.slane %v2079, 4
    %v2117 = vsel %vm374, %v2116, %v2067
    %v2118 = vrot.slane %v2067, 4
    %v2119 = vsel %vm374, %v2079, %v2118
    %v2121 = vunpack.c.l.s4 1934713408
    %v2122 = vunpack.c.0.s8 %v2121
    %v2123 = vperm.slane %v2117, %v2122
    %v2125 = vunpack.c.l.s4 1934713408
    %v2126 = vunpack.c.0.s8 %v2125
    %v2127 = vperm.slane %v2119, %v2126
    %v2128 = vrot.slane %v2111, 4
    %v2129 = vsel %vm374, %v2128, %v2087
    %v2130 = vrot.slane %v2087, 4
    %v2131 = vsel %vm374, %v2111, %v2130
    %v2132 = vrot.slane %v2115, 4
    %v2133 = vsel %vm374, %v2132, %v2091
    %v2134 = vrot.slane %v2091, 4
    %v2135 = vsel %vm374, %v2115, %v2134
    %v2136 = vrot.slane %v2123, 4
    %v2137 = vsel %vm374, %v2136, %v2099
    %v2138 = vrot.slane %v2099, 4
    %v2139 = vsel %vm374, %v2123, %v2138
    %v2140 = vrot.slane %v2127, 4
    %v2141 = vsel %vm374, %v2140, %v2103
    %v2142 = vrot.slane %v2103, 4
    %v2143 = vsel %vm374, %v2127, %v2142
    %v2144 = vld [vmem:[%s8] sm:$0x1]
    %v2145 = vld [vmem:[%s9] sm:$0x1]
    %v2146 = vsel %vm826, %v1793, 0.0
    %2147 = vadd.xlane.f32.xlu0 %v2146
    %v2148 = vpop.xlane.xlu0 %2147
    %v2149 = vsel %vm826, %v1795, 0.0
    %2150 = vadd.xlane.f32.xlu0 %v2149
    %v2151 = vpop.xlane.xlu0 %2150
    %v2152 = vsel %vm826, %v1797, 0.0
    %2153 = vadd.xlane.f32.xlu0 %v2152
    %v2154 = vpop.xlane.xlu0 %2153
    %v2155 = vsel %vm826, %v1799, 0.0
    %2156 = vadd.xlane.f32.xlu0 %v2155
    %v2157 = vpop.xlane.xlu0 %2156
    %v2158 = vsel %vm826, %v1801, 0.0
    %2159 = vadd.xlane.f32.xlu0 %v2158
    %v2160 = vpop.xlane.xlu0 %2159
    %v2161 = vsel %vm826, %v1803, 0.0
    %2162 = vadd.xlane.f32.xlu0 %v2161
    %v2163 = vpop.xlane.xlu0 %2162
    %v2164 = vsel %vm826, %v1805, 0.0
    %2165 = vadd.xlane.f32.xlu0 %v2164
    %v2166 = vpop.xlane.xlu0 %2165
    %v2167 = vsel %vm826, %v1807, 0.0
    %2168 = vadd.xlane.f32.xlu0 %v2167
    %v2169 = vpop.xlane.xlu0 %2168
    %v2170 = vsel %vm826, %v1905, 0.0
    %2171 = vadd.xlane.f32.xlu0 %v2170
    %v2172 = vpop.xlane.xlu0 %2171
    %v2173 = vsel %vm826, %v1907, 0.0
    %2174 = vadd.xlane.f32.xlu0 %v2173
    %v2175 = vpop.xlane.xlu0 %2174
    %v2176 = vsel %vm826, %v1909, 0.0
    %2177 = vadd.xlane.f32.xlu0 %v2176
    %v2178 = vpop.xlane.xlu0 %2177
    %v2179 = vsel %vm826, %v1911, 0.0
    %2180 = vadd.xlane.f32.xlu0 %v2179
    %v2181 = vpop.xlane.xlu0 %2180
    %v2182 = vsel %vm826, %v1913, 0.0
    %2183 = vadd.xlane.f32.xlu0 %v2182
    %v2184 = vpop.xlane.xlu0 %2183
    %v2185 = vsel %vm826, %v1915, 0.0
    %2186 = vadd.xlane.f32.xlu0 %v2185
    %v2187 = vpop.xlane.xlu0 %2186
    %v2188 = vsel %vm826, %v1917, 0.0
    %2189 = vadd.xlane.f32.xlu0 %v2188
    %v2190 = vpop.xlane.xlu0 %2189
    %v2191 = vsel %vm826, %v1919, 0.0
    %2192 = vadd.xlane.f32.xlu0 %v2191
    %v2193 = vpop.xlane.xlu0 %2192
    %v2194 = vsel %vm826, %v2017, 0.0
    %2195 = vadd.xlane.f32.xlu0 %v2194
    %v2196 = vpop.xlane.xlu0 %2195
    %v2197 = vsel %vm826, %v2019, 0.0
    %2198 = vadd.xlane.f32.xlu0 %v2197
    %v2199 = vpop.xlane.xlu0 %2198
    %v2200 = vsel %vm826, %v2021, 0.0
    %2201 = vadd.xlane.f32.xlu0 %v2200
    %v2202 = vpop.xlane.xlu0 %2201
    %v2203 = vsel %vm826, %v2023, 0.0
    %2204 = vadd.xlane.f32.xlu0 %v2203
    %v2205 = vpop.xlane.xlu0 %2204
    %v2206 = vsel %vm826, %v2025, 0.0
    %2207 = vadd.xlane.f32.xlu0 %v2206
    %v2208 = vpop.xlane.xlu0 %2207
    %v2209 = vsel %vm826, %v2027, 0.0
    %2210 = vadd.xlane.f32.xlu0 %v2209
    %v2211 = vpop.xlane.xlu0 %2210
    %v2212 = vsel %vm826, %v2029, 0.0
    %2213 = vadd.xlane.f32.xlu0 %v2212
    %v2214 = vpop.xlane.xlu0 %2213
    %v2215 = vsel %vm826, %v2031, 0.0
    %2216 = vadd.xlane.f32.xlu0 %v2215
    %v2217 = vpop.xlane.xlu0 %2216
    %v2218 = vsel %vm826, %v2129, 0.0
    %2219 = vadd.xlane.f32.xlu0 %v2218
    %v2220 = vpop.xlane.xlu0 %2219
    %v2221 = vsel %vm826, %v2131, 0.0
    %2222 = vadd.xlane.f32.xlu0 %v2221
    %v2223 = vpop.xlane.xlu0 %2222
    %v2224 = vsel %vm826, %v2133, 0.0
    %2225 = vadd.xlane.f32.xlu0 %v2224
    %v2226 = vpop.xlane.xlu0 %2225
    %v2227 = vsel %vm826, %v2135, 0.0
    %2228 = vadd.xlane.f32.xlu0 %v2227
    %v2229 = vpop.xlane.xlu0 %2228
    %v2230 = vsel %vm826, %v2137, 0.0
    %2231 = vadd.xlane.f32.xlu0 %v2230
    %v2232 = vpop.xlane.xlu0 %2231
    %v2233 = vsel %vm826, %v2139, 0.0
    %2234 = vadd.xlane.f32.xlu0 %v2233
    %v2235 = vpop.xlane.xlu0 %2234
    %v2236 = vsel %vm826, %v2141, 0.0
    %2237 = vadd.xlane.f32.xlu0 %v2236
    %v2238 = vpop.xlane.xlu0 %2237
    %v2239 = vsel %vm826, %v2143, 0.0
    %2240 = vadd.xlane.f32.xlu0 %v2239
    %v2241 = vpop.xlane.xlu0 %2240
    %v2242 = vmul.f32 %v2148, %v929
    %v2243 = vmul.f32 %v2151, %v929
    %v2244 = vmul.f32 %v2154, %v929
    %v2245 = vmul.f32 %v2157, %v929
    %v2246 = vmul.f32 %v2160, %v929
    %v2247 = vmul.f32 %v2163, %v929
    %v2248 = vmul.f32 %v2166, %v929
    %v2249 = vmul.f32 %v2169, %v929
    %v2250 = vmul.f32 %v2172, %v929
    %v2251 = vmul.f32 %v2175, %v929
    %v2252 = vmul.f32 %v2178, %v929
    %v2253 = vmul.f32 %v2181, %v929
    %v2254 = vmul.f32 %v2184, %v929
    %v2255 = vmul.f32 %v2187, %v929
    %v2256 = vmul.f32 %v2190, %v929
    %v2257 = vmul.f32 %v2193, %v929
    %v2258 = vmul.f32 %v2196, %v929
    %v2259 = vmul.f32 %v2199, %v929
    %v2260 = vmul.f32 %v2202, %v929
    %v2261 = vmul.f32 %v2205, %v929
    %v2262 = vmul.f32 %v2208, %v929
    %v2263 = vmul.f32 %v2211, %v929
    %v2264 = vmul.f32 %v2214, %v929
    %v2265 = vmul.f32 %v2217, %v929
    %v2266 = vmul.f32 %v2220, %v929
    %v2267 = vmul.f32 %v2223, %v929
    %v2268 = vmul.f32 %v2226, %v929
    %v2269 = vmul.f32 %v2229, %v929
    %v2270 = vmul.f32 %v2232, %v929
    %v2271 = vmul.f32 %v2235, %v929
    %v2272 = vmul.f32 %v2238, %v929
    %v2273 = vmul.f32 %v2241, %v929
    %v2274 = vsub.f32 %v1793, %v2242
    %v2275 = vsub.f32 %v1795, %v2243
    %v2276 = vsub.f32 %v1797, %v2244
    %v2277 = vsub.f32 %v1799, %v2245
    %v2278 = vsub.f32 %v1801, %v2246
    %v2279 = vsub.f32 %v1803, %v2247
    %v2280 = vsub.f32 %v1805, %v2248
    %v2281 = vsub.f32 %v1807, %v2249
    %v2282 = vsub.f32 %v1905, %v2250
    %v2283 = vsub.f32 %v1907, %v2251
    %v2284 = vsub.f32 %v1909, %v2252
    %v2285 = vsub.f32 %v1911, %v2253
    %v2286 = vsub.f32 %v1913, %v2254
    %v2287 = vsub.f32 %v1915, %v2255
    %v2288 = vsub.f32 %v1917, %v2256
    %v2289 = vsub.f32 %v1919, %v2257
    %v2290 = vsub.f32 %v2017, %v2258
    %v2291 = vsub.f32 %v2019, %v2259
    %v2292 = vsub.f32 %v2021, %v2260
    %v2293 = vsub.f32 %v2023, %v2261
    %v2294 = vsub.f32 %v2025, %v2262
    %v2295 = vsub.f32 %v2027, %v2263
    %v2296 = vsub.f32 %v2029, %v2264
    %v2297 = vsub.f32 %v2031, %v2265
    %v2298 = vsub.f32 %v2129, %v2266
    %v2299 = vsub.f32 %v2131, %v2267
    %v2300 = vsub.f32 %v2133, %v2268
    %v2301 = vsub.f32 %v2135, %v2269
    %v2302 = vsub.f32 %v2137, %v2270
    %v2303 = vsub.f32 %v2139, %v2271
    %v2304 = vsub.f32 %v2141, %v2272
    %v2305 = vsub.f32 %v2143, %v2273
    %v2306 = vmul.f32 %v2274, %v2274
    %v2307 = vmul.f32 %v2275, %v2275
    %v2308 = vmul.f32 %v2276, %v2276
    %v2309 = vmul.f32 %v2277, %v2277
    %v2310 = vmul.f32 %v2278, %v2278
    %v2311 = vmul.f32 %v2279, %v2279
    %v2312 = vmul.f32 %v2280, %v2280
    %v2313 = vmul.f32 %v2281, %v2281
    %v2314 = vmul.f32 %v2282, %v2282
    %v2315 = vmul.f32 %v2283, %v2283
    %v2316 = vmul.f32 %v2284, %v2284
    %v2317 = vmul.f32 %v2285, %v2285
    %v2318 = vmul.f32 %v2286, %v2286
    %v2319 = vmul.f32 %v2287, %v2287
    %v2320 = vmul.f32 %v2288, %v2288
    %v2321 = vmul.f32 %v2289, %v2289
    %v2322 = vmul.f32 %v2290, %v2290
    %v2323 = vmul.f32 %v2291, %v2291
    %v2324 = vmul.f32 %v2292, %v2292
    %v2325 = vmul.f32 %v2293, %v2293
    %v2326 = vmul.f32 %v2294, %v2294
    %v2327 = vmul.f32 %v2295, %v2295
    %v2328 = vmul.f32 %v2296, %v2296
    %v2329 = vmul.f32 %v2297, %v2297
    %v2330 = vmul.f32 %v2298, %v2298
    %v2331 = vmul.f32 %v2299, %v2299
    %v2332 = vmul.f32 %v2300, %v2300
    %v2333 = vmul.f32 %v2301, %v2301
    %v2334 = vmul.f32 %v2302, %v2302
    %v2335 = vmul.f32 %v2303, %v2303
    %v2336 = vmul.f32 %v2304, %v2304
    %v2337 = vmul.f32 %v2305, %v2305
    %v2338 = vsel %vm826, %v2306, 0.0
    %2339 = vadd.xlane.f32.xlu0 %v2338
    %v2340 = vpop.xlane.xlu0 %2339
    %v2341 = vsel %vm826, %v2307, 0.0
    %2342 = vadd.xlane.f32.xlu0 %v2341
    %v2343 = vpop.xlane.xlu0 %2342
    %v2344 = vsel %vm826, %v2308, 0.0
    %2345 = vadd.xlane.f32.xlu0 %v2344
    %v2346 = vpop.xlane.xlu0 %2345
    %v2347 = vsel %vm826, %v2309, 0.0
    %2348 = vadd.xlane.f32.xlu0 %v2347
    %v2349 = vpop.xlane.xlu0 %2348
    %v2350 = vsel %vm826, %v2310, 0.0
    %2351 = vadd.xlane.f32.xlu0 %v2350
    %v2352 = vpop.xlane.xlu0 %2351
    %v2353 = vsel %vm826, %v2311, 0.0
    %2354 = vadd.xlane.f32.xlu0 %v2353
    %v2355 = vpop.xlane.xlu0 %2354
    %v2356 = vsel %vm826, %v2312, 0.0
    %2357 = vadd.xlane.f32.xlu0 %v2356
    %v2358 = vpop.xlane.xlu0 %2357
    %v2359 = vsel %vm826, %v2313, 0.0
    %2360 = vadd.xlane.f32.xlu0 %v2359
    %v2361 = vpop.xlane.xlu0 %2360
    %v2362 = vsel %vm826, %v2314, 0.0
    %2363 = vadd.xlane.f32.xlu0 %v2362
    %v2364 = vpop.xlane.xlu0 %2363
    %v2365 = vsel %vm826, %v2315, 0.0
    %2366 = vadd.xlane.f32.xlu0 %v2365
    %v2367 = vpop.xlane.xlu0 %2366
    %v2368 = vsel %vm826, %v2316, 0.0
    %2369 = vadd.xlane.f32.xlu0 %v2368
    %v2370 = vpop.xlane.xlu0 %2369
    %v2371 = vsel %vm826, %v2317, 0.0
    %2372 = vadd.xlane.f32.xlu0 %v2371
    %v2373 = vpop.xlane.xlu0 %2372
    %v2374 = vsel %vm826, %v2318, 0.0
    %2375 = vadd.xlane.f32.xlu0 %v2374
    %v2376 = vpop.xlane.xlu0 %2375
    %v2377 = vsel %vm826, %v2319, 0.0
    %2378 = vadd.xlane.f32.xlu0 %v2377
    %v2379 = vpop.xlane.xlu0 %2378
    %v2380 = vsel %vm826, %v2320, 0.0
    %2381 = vadd.xlane.f32.xlu0 %v2380
    %v2382 = vpop.xlane.xlu0 %2381
    %v2383 = vsel %vm826, %v2321, 0.0
    %2384 = vadd.xlane.f32.xlu0 %v2383
    %v2385 = vpop.xlane.xlu0 %2384
    %v2386 = vsel %vm826, %v2322, 0.0
    %2387 = vadd.xlane.f32.xlu0 %v2386
    %v2388 = vpop.xlane.xlu0 %2387
    %v2389 = vsel %vm826, %v2323, 0.0
    %2390 = vadd.xlane.f32.xlu0 %v2389
    %v2391 = vpop.xlane.xlu0 %2390
    %v2392 = vsel %vm826, %v2324, 0.0
    %2393 = vadd.xlane.f32.xlu0 %v2392
    %v2394 = vpop.xlane.xlu0 %2393
    %v2395 = vsel %vm826, %v2325, 0.0
    %2396 = vadd.xlane.f32.xlu0 %v2395
    %v2397 = vpop.xlane.xlu0 %2396
    %v2398 = vsel %vm826, %v2326, 0.0
    %2399 = vadd.xlane.f32.xlu0 %v2398
    %v2400 = vpop.xlane.xlu0 %2399
    %v2401 = vsel %vm826, %v2327, 0.0
    %2402 = vadd.xlane.f32.xlu0 %v2401
    %v2403 = vpop.xlane.xlu0 %2402
    %v2404 = vsel %vm826, %v2328, 0.0
    %2405 = vadd.xlane.f32.xlu0 %v2404
    %v2406 = vpop.xlane.xlu0 %2405
    %v2407 = vsel %vm826, %v2329, 0.0
    %2408 = vadd.xlane.f32.xlu0 %v2407
    %v2409 = vpop.xlane.xlu0 %2408
    %v2410 = vsel %vm826, %v2330, 0.0
    %2411 = vadd.xlane.f32.xlu0 %v2410
    %v2412 = vpop.xlane.xlu0 %2411
    %v2413 = vsel %vm826, %v2331, 0.0
    %2414 = vadd.xlane.f32.xlu0 %v2413
    %v2415 = vpop.xlane.xlu0 %2414
    %v2416 = vsel %vm826, %v2332, 0.0
    %2417 = vadd.xlane.f32.xlu0 %v2416
    %v2418 = vpop.xlane.xlu0 %2417
    %v2419 = vsel %vm826, %v2333, 0.0
    %2420 = vadd.xlane.f32.xlu0 %v2419
    %v2421 = vpop.xlane.xlu0 %2420
    %v2422 = vsel %vm826, %v2334, 0.0
    %2423 = vadd.xlane.f32.xlu0 %v2422
    %v2424 = vpop.xlane.xlu0 %2423
    %v2425 = vsel %vm826, %v2335, 0.0
    %2426 = vadd.xlane.f32.xlu0 %v2425
    %v2427 = vpop.xlane.xlu0 %2426
    %v2428 = vsel %vm826, %v2336, 0.0
    %2429 = vadd.xlane.f32.xlu0 %v2428
    %v2430 = vpop.xlane.xlu0 %2429
    %v2431 = vsel %vm826, %v2337, 0.0
    %2432 = vadd.xlane.f32.xlu0 %v2431
    %v2433 = vpop.xlane.xlu0 %2432
    %v2434 = vmul.f32 %v2340, %v929
    %v2435 = vmul.f32 %v2343, %v929
    %v2436 = vmul.f32 %v2346, %v929
    %v2437 = vmul.f32 %v2349, %v929
    %v2438 = vmul.f32 %v2352, %v929
    %v2439 = vmul.f32 %v2355, %v929
    %v2440 = vmul.f32 %v2358, %v929
    %v2441 = vmul.f32 %v2361, %v929
    %v2442 = vmul.f32 %v2364, %v929
    %v2443 = vmul.f32 %v2367, %v929
    %v2444 = vmul.f32 %v2370, %v929
    %v2445 = vmul.f32 %v2373, %v929
    %v2446 = vmul.f32 %v2376, %v929
    %v2447 = vmul.f32 %v2379, %v929
    %v2448 = vmul.f32 %v2382, %v929
    %v2449 = vmul.f32 %v2385, %v929
    %v2450 = vmul.f32 %v2388, %v929
    %v2451 = vmul.f32 %v2391, %v929
    %v2452 = vmul.f32 %v2394, %v929
    %v2453 = vmul.f32 %v2397, %v929
    %v2454 = vmul.f32 %v2400, %v929
    %v2455 = vmul.f32 %v2403, %v929
    %v2456 = vmul.f32 %v2406, %v929
    %v2457 = vmul.f32 %v2409, %v929
    %v2458 = vmul.f32 %v2412, %v929
    %v2459 = vmul.f32 %v2415, %v929
    %v2460 = vmul.f32 %v2418, %v929
    %v2461 = vmul.f32 %v2421, %v929
    %v2462 = vmul.f32 %v2424, %v929
    %v2463 = vmul.f32 %v2427, %v929
    %v2464 = vmul.f32 %v2430, %v929
    %v2465 = vmul.f32 %v2433, %v929
    %v2466 = vadd.f32 %v2434, 1e-05
    %v2467 = vadd.f32 %v2435, 1e-05
    %v2468 = vadd.f32 %v2436, 1e-05
    %v2469 = vadd.f32 %v2437, 1e-05
    %v2470 = vadd.f32 %v2438, 1e-05
    %v2471 = vadd.f32 %v2439, 1e-05
    %v2472 = vadd.f32 %v2440, 1e-05
    %v2473 = vadd.f32 %v2441, 1e-05
    %v2474 = vadd.f32 %v2442, 1e-05
    %v2475 = vadd.f32 %v2443, 1e-05
    %v2476 = vadd.f32 %v2444, 1e-05
    %v2477 = vadd.f32 %v2445, 1e-05
    %v2478 = vadd.f32 %v2446, 1e-05
    %v2479 = vadd.f32 %v2447, 1e-05
    %v2480 = vadd.f32 %v2448, 1e-05
    %v2481 = vadd.f32 %v2449, 1e-05
    %v2482 = vadd.f32 %v2450, 1e-05
    %v2483 = vadd.f32 %v2451, 1e-05
    %v2484 = vadd.f32 %v2452, 1e-05
    %v2485 = vadd.f32 %v2453, 1e-05
    %v2486 = vadd.f32 %v2454, 1e-05
    %v2487 = vadd.f32 %v2455, 1e-05
    %v2488 = vadd.f32 %v2456, 1e-05
    %v2489 = vadd.f32 %v2457, 1e-05
    %v2490 = vadd.f32 %v2458, 1e-05
    %v2491 = vadd.f32 %v2459, 1e-05
    %v2492 = vadd.f32 %v2460, 1e-05
    %v2493 = vadd.f32 %v2461, 1e-05
    %v2494 = vadd.f32 %v2462, 1e-05
    %v2495 = vadd.f32 %v2463, 1e-05
    %v2496 = vadd.f32 %v2464, 1e-05
    %v2497 = vadd.f32 %v2465, 1e-05
    %v2498 = vrsqrt.pop %v2466
    %v2499 = vmul.f32 %v2498, %v2466
    %v2500 = vmul.f32 %v2499, %v2498
    %v2501 = vmul.f32 0.5, %v2500
    %v2502 = vsub.f32 1.5, %v2501
    %v2503 = vmul.f32 %v2498, %v2502
    %vm2504 = vweird.f32 %v2466
    %vm2505 = vweird.f32 %v2498
    %vm2506 = vmor %vm2504, %vm2505
    %v2507 = vsel %vm2506, %v2498, %v2503
    %v2508 = vrsqrt.pop %v2467
    %v2509 = vmul.f32 %v2508, %v2467
    %v2510 = vmul.f32 %v2509, %v2508
    %v2511 = vmul.f32 0.5, %v2510
    %v2512 = vsub.f32 1.5, %v2511
    %v2513 = vmul.f32 %v2508, %v2512
    %vm2514 = vweird.f32 %v2467
    %vm2515 = vweird.f32 %v2508
    %vm2516 = vmor %vm2514, %vm2515
    %v2517 = vsel %vm2516, %v2508, %v2513
    %v2518 = vrsqrt.pop %v2468
    %v2519 = vmul.f32 %v2518, %v2468
    %v2520 = vmul.f32 %v2519, %v2518
    %v2521 = vmul.f32 0.5, %v2520
    %v2522 = vsub.f32 1.5, %v2521
    %v2523 = vmul.f32 %v2518, %v2522
    %vm2524 = vweird.f32 %v2468
    %vm2525 = vweird.f32 %v2518
    %vm2526 = vmor %vm2524, %vm2525
    %v2527 = vsel %vm2526, %v2518, %v2523
    %v2528 = vrsqrt.pop %v2469
    %v2529 = vmul.f32 %v2528, %v2469
    %v2530 = vmul.f32 %v2529, %v2528
    %v2531 = vmul.f32 0.5, %v2530
    %v2532 = vsub.f32 1.5, %v2531
    %v2533 = vmul.f32 %v2528, %v2532
    %vm2534 = vweird.f32 %v2469
    %vm2535 = vweird.f32 %v2528
    %vm2536 = vmor %vm2534, %vm2535
    %v2537 = vsel %vm2536, %v2528, %v2533
    %v2538 = vrsqrt.pop %v2470
    %v2539 = vmul.f32 %v2538, %v2470
    %v2540 = vmul.f32 %v2539, %v2538
    %v2541 = vmul.f32 0.5, %v2540
    %v2542 = vsub.f32 1.5, %v2541
    %v2543 = vmul.f32 %v2538, %v2542
    %vm2544 = vweird.f32 %v2470
    %vm2545 = vweird.f32 %v2538
    %vm2546 = vmor %vm2544, %vm2545
    %v2547 = vsel %vm2546, %v2538, %v2543
    %v2548 = vrsqrt.pop %v2471
    %v2549 = vmul.f32 %v2548, %v2471
    %v2550 = vmul.f32 %v2549, %v2548
    %v2551 = vmul.f32 0.5, %v2550
    %v2552 = vsub.f32 1.5, %v2551
    %v2553 = vmul.f32 %v2548, %v2552
    %vm2554 = vweird.f32 %v2471
    %vm2555 = vweird.f32 %v2548
    %vm2556 = vmor %vm2554, %vm2555
    %v2557 = vsel %vm2556, %v2548, %v2553
    %v2558 = vrsqrt.pop %v2472
    %v2559 = vmul.f32 %v2558, %v2472
    %v2560 = vmul.f32 %v2559, %v2558
    %v2561 = vmul.f32 0.5, %v2560
    %v2562 = vsub.f32 1.5, %v2561
    %v2563 = vmul.f32 %v2558, %v2562
    %vm2564 = vweird.f32 %v2472
    %vm2565 = vweird.f32 %v2558
    %vm2566 = vmor %vm2564, %vm2565
    %v2567 = vsel %vm2566, %v2558, %v2563
    %v2568 = vrsqrt.pop %v2473
    %v2569 = vmul.f32 %v2568, %v2473
    %v2570 = vmul.f32 %v2569, %v2568
    %v2571 = vmul.f32 0.5, %v2570
    %v2572 = vsub.f32 1.5, %v2571
    %v2573 = vmul.f32 %v2568, %v2572
    %vm2574 = vweird.f32 %v2473
    %vm2575 = vweird.f32 %v2568
    %vm2576 = vmor %vm2574, %vm2575
    %v2577 = vsel %vm2576, %v2568, %v2573
    %v2578 = vrsqrt.pop %v2474
    %v2579 = vmul.f32 %v2578, %v2474
    %v2580 = vmul.f32 %v2579, %v2578
    %v2581 = vmul.f32 0.5, %v2580
    %v2582 = vsub.f32 1.5, %v2581
    %v2583 = vmul.f32 %v2578, %v2582
    %vm2584 = vweird.f32 %v2474
    %vm2585 = vweird.f32 %v2578
    %vm2586 = vmor %vm2584, %vm2585
    %v2587 = vsel %vm2586, %v2578, %v2583
    %v2588 = vrsqrt.pop %v2475
    %v2589 = vmul.f32 %v2588, %v2475
    %v2590 = vmul.f32 %v2589, %v2588
    %v2591 = vmul.f32 0.5, %v2590
    %v2592 = vsub.f32 1.5, %v2591
    %v2593 = vmul.f32 %v2588, %v2592
    %vm2594 = vweird.f32 %v2475
    %vm2595 = vweird.f32 %v2588
    %vm2596 = vmor %vm2594, %vm2595
    %v2597 = vsel %vm2596, %v2588, %v2593
    %v2598 = vrsqrt.pop %v2476
    %v2599 = vmul.f32 %v2598, %v2476
    %v2600 = vmul.f32 %v2599, %v2598
    %v2601 = vmul.f32 0.5, %v2600
    %v2602 = vsub.f32 1.5, %v2601
    %v2603 = vmul.f32 %v2598, %v2602
    %vm2604 = vweird.f32 %v2476
    %vm2605 = vweird.f32 %v2598
    %vm2606 = vmor %vm2604, %vm2605
    %v2607 = vsel %vm2606, %v2598, %v2603
    %v2608 = vrsqrt.pop %v2477
    %v2609 = vmul.f32 %v2608, %v2477
    %v2610 = vmul.f32 %v2609, %v2608
    %v2611 = vmul.f32 0.5, %v2610
    %v2612 = vsub.f32 1.5, %v2611
    %v2613 = vmul.f32 %v2608, %v2612
    %vm2614 = vweird.f32 %v2477
    %vm2615 = vweird.f32 %v2608
    %vm2616 = vmor %vm2614, %vm2615
    %v2617 = vsel %vm2616, %v2608, %v2613
    %v2618 = vrsqrt.pop %v2478
    %v2619 = vmul.f32 %v2618, %v2478
    %v2620 = vmul.f32 %v2619, %v2618
    %v2621 = vmul.f32 0.5, %v2620
    %v2622 = vsub.f32 1.5, %v2621
    %v2623 = vmul.f32 %v2618, %v2622
    %vm2624 = vweird.f32 %v2478
    %vm2625 = vweird.f32 %v2618
    %vm2626 = vmor %vm2624, %vm2625
    %v2627 = vsel %vm2626, %v2618, %v2623
    %v2628 = vrsqrt.pop %v2479
    %v2629 = vmul.f32 %v2628, %v2479
    %v2630 = vmul.f32 %v2629, %v2628
    %v2631 = vmul.f32 0.5, %v2630
    %v2632 = vsub.f32 1.5, %v2631
    %v2633 = vmul.f32 %v2628, %v2632
    %vm2634 = vweird.f32 %v2479
    %vm2635 = vweird.f32 %v2628
    %vm2636 = vmor %vm2634, %vm2635
    %v2637 = vsel %vm2636, %v2628, %v2633
    %v2638 = vrsqrt.pop %v2480
    %v2639 = vmul.f32 %v2638, %v2480
    %v2640 = vmul.f32 %v2639, %v2638
    %v2641 = vmul.f32 0.5, %v2640
    %v2642 = vsub.f32 1.5, %v2641
    %v2643 = vmul.f32 %v2638, %v2642
    %vm2644 = vweird.f32 %v2480
    %vm2645 = vweird.f32 %v2638
    %vm2646 = vmor %vm2644, %vm2645
    %v2647 = vsel %vm2646, %v2638, %v2643
    %v2648 = vrsqrt.pop %v2481
    %v2649 = vmul.f32 %v2648, %v2481
    %v2650 = vmul.f32 %v2649, %v2648
    %v2651 = vmul.f32 0.5, %v2650
    %v2652 = vsub.f32 1.5, %v2651
    %v2653 = vmul.f32 %v2648, %v2652
    %vm2654 = vweird.f32 %v2481
    %vm2655 = vweird.f32 %v2648
    %vm2656 = vmor %vm2654, %vm2655
    %v2657 = vsel %vm2656, %v2648, %v2653
    %v2658 = vrsqrt.pop %v2482
    %v2659 = vmul.f32 %v2658, %v2482
    %v2660 = vmul.f32 %v2659, %v2658
    %v2661 = vmul.f32 0.5, %v2660
    %v2662 = vsub.f32 1.5, %v2661
    %v2663 = vmul.f32 %v2658, %v2662
    %vm2664 = vweird.f32 %v2482
    %vm2665 = vweird.f32 %v2658
    %vm2666 = vmor %vm2664, %vm2665
    %v2667 = vsel %vm2666, %v2658, %v2663
    %v2668 = vrsqrt.pop %v2483
    %v2669 = vmul.f32 %v2668, %v2483
    %v2670 = vmul.f32 %v2669, %v2668
    %v2671 = vmul.f32 0.5, %v2670
    %v2672 = vsub.f32 1.5, %v2671
    %v2673 = vmul.f32 %v2668, %v2672
    %vm2674 = vweird.f32 %v2483
    %vm2675 = vweird.f32 %v2668
    %vm2676 = vmor %vm2674, %vm2675
    %v2677 = vsel %vm2676, %v2668, %v2673
    %v2678 = vrsqrt.pop %v2484
    %v2679 = vmul.f32 %v2678, %v2484
    %v2680 = vmul.f32 %v2679, %v2678
    %v2681 = vmul.f32 0.5, %v2680
    %v2682 = vsub.f32 1.5, %v2681
    %v2683 = vmul.f32 %v2678, %v2682
    %vm2684 = vweird.f32 %v2484
    %vm2685 = vweird.f32 %v2678
    %vm2686 = vmor %vm2684, %vm2685
    %v2687 = vsel %vm2686, %v2678, %v2683
    %v2688 = vrsqrt.pop %v2485
    %v2689 = vmul.f32 %v2688, %v2485
    %v2690 = vmul.f32 %v2689, %v2688
    %v2691 = vmul.f32 0.5, %v2690
    %v2692 = vsub.f32 1.5, %v2691
    %v2693 = vmul.f32 %v2688, %v2692
    %vm2694 = vweird.f32 %v2485
    %vm2695 = vweird.f32 %v2688
    %vm2696 = vmor %vm2694, %vm2695
    %v2697 = vsel %vm2696, %v2688, %v2693
    %v2698 = vrsqrt.pop %v2486
    %v2699 = vmul.f32 %v2698, %v2486
    %v2700 = vmul.f32 %v2699, %v2698
    %v2701 = vmul.f32 0.5, %v2700
    %v2702 = vsub.f32 1.5, %v2701
    %v2703 = vmul.f32 %v2698, %v2702
    %vm2704 = vweird.f32 %v2486
    %vm2705 = vweird.f32 %v2698
    %vm2706 = vmor %vm2704, %vm2705
    %v2707 = vsel %vm2706, %v2698, %v2703
    %v2708 = vrsqrt.pop %v2487
    %v2709 = vmul.f32 %v2708, %v2487
    %v2710 = vmul.f32 %v2709, %v2708
    %v2711 = vmul.f32 0.5, %v2710
    %v2712 = vsub.f32 1.5, %v2711
    %v2713 = vmul.f32 %v2708, %v2712
    %vm2714 = vweird.f32 %v2487
    %vm2715 = vweird.f32 %v2708
    %vm2716 = vmor %vm2714, %vm2715
    %v2717 = vsel %vm2716, %v2708, %v2713
    %v2718 = vrsqrt.pop %v2488
    %v2719 = vmul.f32 %v2718, %v2488
    %v2720 = vmul.f32 %v2719, %v2718
    %v2721 = vmul.f32 0.5, %v2720
    %v2722 = vsub.f32 1.5, %v2721
    %v2723 = vmul.f32 %v2718, %v2722
    %vm2724 = vweird.f32 %v2488
    %vm2725 = vweird.f32 %v2718
    %vm2726 = vmor %vm2724, %vm2725
    %v2727 = vsel %vm2726, %v2718, %v2723
    %v2728 = vrsqrt.pop %v2489
    %v2729 = vmul.f32 %v2728, %v2489
    %v2730 = vmul.f32 %v2729, %v2728
    %v2731 = vmul.f32 0.5, %v2730
    %v2732 = vsub.f32 1.5, %v2731
    %v2733 = vmul.f32 %v2728, %v2732
    %vm2734 = vweird.f32 %v2489
    %vm2735 = vweird.f32 %v2728
    %vm2736 = vmor %vm2734, %vm2735
    %v2737 = vsel %vm2736, %v2728, %v2733
    %v2738 = vrsqrt.pop %v2490
    %v2739 = vmul.f32 %v2738, %v2490
    %v2740 = vmul.f32 %v2739, %v2738
    %v2741 = vmul.f32 0.5, %v2740
    %v2742 = vsub.f32 1.5, %v2741
    %v2743 = vmul.f32 %v2738, %v2742
    %vm2744 = vweird.f32 %v2490
    %vm2745 = vweird.f32 %v2738
    %vm2746 = vmor %vm2744, %vm2745
    %v2747 = vsel %vm2746, %v2738, %v2743
    %v2748 = vrsqrt.pop %v2491
    %v2749 = vmul.f32 %v2748, %v2491
    %v2750 = vmul.f32 %v2749, %v2748
    %v2751 = vmul.f32 0.5, %v2750
    %v2752 = vsub.f32 1.5, %v2751
    %v2753 = vmul.f32 %v2748, %v2752
    %vm2754 = vweird.f32 %v2491
    %vm2755 = vweird.f32 %v2748
    %vm2756 = vmor %vm2754, %vm2755
    %v2757 = vsel %vm2756, %v2748, %v2753
    %v2758 = vrsqrt.pop %v2492
    %v2759 = vmul.f32 %v2758, %v2492
    %v2760 = vmul.f32 %v2759, %v2758
    %v2761 = vmul.f32 0.5, %v2760
    %v2762 = vsub.f32 1.5, %v2761
    %v2763 = vmul.f32 %v2758, %v2762
    %vm2764 = vweird.f32 %v2492
    %vm2765 = vweird.f32 %v2758
    %vm2766 = vmor %vm2764, %vm2765
    %v2767 = vsel %vm2766, %v2758, %v2763
    %v2768 = vrsqrt.pop %v2493
    %v2769 = vmul.f32 %v2768, %v2493
    %v2770 = vmul.f32 %v2769, %v2768
    %v2771 = vmul.f32 0.5, %v2770
    %v2772 = vsub.f32 1.5, %v2771
    %v2773 = vmul.f32 %v2768, %v2772
    %vm2774 = vweird.f32 %v2493
    %vm2775 = vweird.f32 %v2768
    %vm2776 = vmor %vm2774, %vm2775
    %v2777 = vsel %vm2776, %v2768, %v2773
    %v2778 = vrsqrt.pop %v2494
    %v2779 = vmul.f32 %v2778, %v2494
    %v2780 = vmul.f32 %v2779, %v2778
    %v2781 = vmul.f32 0.5, %v2780
    %v2782 = vsub.f32 1.5, %v2781
    %v2783 = vmul.f32 %v2778, %v2782
    %vm2784 = vweird.f32 %v2494
    %vm2785 = vweird.f32 %v2778
    %vm2786 = vmor %vm2784, %vm2785
    %v2787 = vsel %vm2786, %v2778, %v2783
    %v2788 = vrsqrt.pop %v2495
    %v2789 = vmul.f32 %v2788, %v2495
    %v2790 = vmul.f32 %v2789, %v2788
    %v2791 = vmul.f32 0.5, %v2790
    %v2792 = vsub.f32 1.5, %v2791
    %v2793 = vmul.f32 %v2788, %v2792
    %vm2794 = vweird.f32 %v2495
    %vm2795 = vweird.f32 %v2788
    %vm2796 = vmor %vm2794, %vm2795
    %v2797 = vsel %vm2796, %v2788, %v2793
    %v2798 = vrsqrt.pop %v2496
    %v2799 = vmul.f32 %v2798, %v2496
    %v2800 = vmul.f32 %v2799, %v2798
    %v2801 = vmul.f32 0.5, %v2800
    %v2802 = vsub.f32 1.5, %v2801
    %v2803 = vmul.f32 %v2798, %v2802
    %vm2804 = vweird.f32 %v2496
    %vm2805 = vweird.f32 %v2798
    %vm2806 = vmor %vm2804, %vm2805
    %v2807 = vsel %vm2806, %v2798, %v2803
    %v2808 = vrsqrt.pop %v2497
    %v2809 = vmul.f32 %v2808, %v2497
    %v2810 = vmul.f32 %v2809, %v2808
    %v2811 = vmul.f32 0.5, %v2810
    %v2812 = vsub.f32 1.5, %v2811
    %v2813 = vmul.f32 %v2808, %v2812
    %vm2814 = vweird.f32 %v2497
    %vm2815 = vweird.f32 %v2808
    %vm2816 = vmor %vm2814, %vm2815
    %v2817 = vsel %vm2816, %v2808, %v2813
    %v2818 = vmul.f32 %v2274, %v2507
    %v2819 = vmul.f32 %v2275, %v2517
    %v2820 = vmul.f32 %v2276, %v2527
    %v2821 = vmul.f32 %v2277, %v2537
    %v2822 = vmul.f32 %v2278, %v2547
    %v2823 = vmul.f32 %v2279, %v2557
    %v2824 = vmul.f32 %v2280, %v2567
    %v2825 = vmul.f32 %v2281, %v2577
    %v2826 = vmul.f32 %v2282, %v2587
    %v2827 = vmul.f32 %v2283, %v2597
    %v2828 = vmul.f32 %v2284, %v2607
    %v2829 = vmul.f32 %v2285, %v2617
    %v2830 = vmul.f32 %v2286, %v2627
    %v2831 = vmul.f32 %v2287, %v2637
    %v2832 = vmul.f32 %v2288, %v2647
    %v2833 = vmul.f32 %v2289, %v2657
    %v2834 = vmul.f32 %v2290, %v2667
    %v2835 = vmul.f32 %v2291, %v2677
    %v2836 = vmul.f32 %v2292, %v2687
    %v2837 = vmul.f32 %v2293, %v2697
    %v2838 = vmul.f32 %v2294, %v2707
    %v2839 = vmul.f32 %v2295, %v2717
    %v2840 = vmul.f32 %v2296, %v2727
    %v2841 = vmul.f32 %v2297, %v2737
    %v2842 = vmul.f32 %v2298, %v2747
    %v2843 = vmul.f32 %v2299, %v2757
    %v2844 = vmul.f32 %v2300, %v2767
    %v2845 = vmul.f32 %v2301, %v2777
    %v2846 = vmul.f32 %v2302, %v2787
    %v2847 = vmul.f32 %v2303, %v2797
    %v2848 = vmul.f32 %v2304, %v2807
    %v2849 = vmul.f32 %v2305, %v2817
    %v2851 = vperm.slane %v2144, 0
    %v2853 = vmul.f32 %v2818, %v2851
    %v2854 = vmul.f32 %v2819, %v2851
    %v2855 = vmul.f32 %v2820, %v2851
    %v2856 = vmul.f32 %v2821, %v2851
    %v2857 = vmul.f32 %v2822, %v2851
    %v2858 = vmul.f32 %v2823, %v2851
    %v2859 = vmul.f32 %v2824, %v2851
    %v2860 = vmul.f32 %v2825, %v2851
    %v2861 = vmul.f32 %v2826, %v2851
    %v2862 = vmul.f32 %v2827, %v2851
    %v2863 = vmul.f32 %v2828, %v2851
    %v2864 = vmul.f32 %v2829, %v2851
    %v2865 = vmul.f32 %v2830, %v2851
    %v2866 = vmul.f32 %v2831, %v2851
    %v2867 = vmul.f32 %v2832, %v2851
    %v2868 = vmul.f32 %v2833, %v2851
    %v2869 = vmul.f32 %v2834, %v2851
    %v2870 = vmul.f32 %v2835, %v2851
    %v2871 = vmul.f32 %v2836, %v2851
    %v2872 = vmul.f32 %v2837, %v2851
    %v2873 = vmul.f32 %v2838, %v2851
    %v2874 = vmul.f32 %v2839, %v2851
    %v2875 = vmul.f32 %v2840, %v2851
    %v2876 = vmul.f32 %v2841, %v2851
    %v2877 = vmul.f32 %v2842, %v2851
    %v2878 = vmul.f32 %v2843, %v2851
    %v2879 = vmul.f32 %v2844, %v2851
    %v2880 = vmul.f32 %v2845, %v2851
    %v2881 = vmul.f32 %v2846, %v2851
    %v2882 = vmul.f32 %v2847, %v2851
    %v2883 = vmul.f32 %v2848, %v2851
    %v2884 = vmul.f32 %v2849, %v2851
    %v2886 = vperm.slane %v2145, 0
    %v2888 = vadd.f32 %v2853, %v2886
    %v2889 = vadd.f32 %v2854, %v2886
    %v2890 = vadd.f32 %v2855, %v2886
    %v2891 = vadd.f32 %v2856, %v2886
    %v2892 = vadd.f32 %v2857, %v2886
    %v2893 = vadd.f32 %v2858, %v2886
    %v2894 = vadd.f32 %v2859, %v2886
    %v2895 = vadd.f32 %v2860, %v2886
    %v2896 = vadd.f32 %v2861, %v2886
    %v2897 = vadd.f32 %v2862, %v2886
    %v2898 = vadd.f32 %v2863, %v2886
    %v2899 = vadd.f32 %v2864, %v2886
    %v2900 = vadd.f32 %v2865, %v2886
    %v2901 = vadd.f32 %v2866, %v2886
    %v2902 = vadd.f32 %v2867, %v2886
    %v2903 = vadd.f32 %v2868, %v2886
    %v2904 = vadd.f32 %v2869, %v2886
    %v2905 = vadd.f32 %v2870, %v2886
    %v2906 = vadd.f32 %v2871, %v2886
    %v2907 = vadd.f32 %v2872, %v2886
    %v2908 = vadd.f32 %v2873, %v2886
    %v2909 = vadd.f32 %v2874, %v2886
    %v2910 = vadd.f32 %v2875, %v2886
    %v2911 = vadd.f32 %v2876, %v2886
    %v2912 = vadd.f32 %v2877, %v2886
    %v2913 = vadd.f32 %v2878, %v2886
    %v2914 = vadd.f32 %v2879, %v2886
    %v2915 = vadd.f32 %v2880, %v2886
    %v2916 = vadd.f32 %v2881, %v2886
    %v2917 = vadd.f32 %v2882, %v2886
    %v2918 = vadd.f32 %v2883, %v2886
    %v2919 = vadd.f32 %v2884, %v2886
    %2924 = vrot.lane.b32.xlu0 %v274, 124
    %v2925 = vpop.permute.xlu0 %2924
    %2926 = vrot.lane.b32.xlu0 %v277, 124
    %v2927 = vpop.permute.xlu0 %2926
    %2928 = vrot.lane.b32.xlu0 %v280, 124
    %v2929 = vpop.permute.xlu0 %2928
    %2930 = vrot.lane.b32.xlu0 %v283, 124
    %v2931 = vpop.permute.xlu0 %2930
    %2936 = vrot.lane.b32.xlu0 %v274, 120
    %v2937 = vpop.permute.xlu0 %2936
    %2938 = vrot.lane.b32.xlu0 %v277, 120
    %v2939 = vpop.permute.xlu0 %2938
    %2940 = vrot.lane.b32.xlu0 %v280, 120
    %v2941 = vpop.permute.xlu0 %2940
    %2942 = vrot.lane.b32.xlu0 %v283, 120
    %v2943 = vpop.permute.xlu0 %2942
    %2948 = vrot.lane.b32.xlu0 %v274, 116
    %v2949 = vpop.permute.xlu0 %2948
    %2950 = vrot.lane.b32.xlu0 %v277, 116
    %v2951 = vpop.permute.xlu0 %2950
    %2952 = vrot.lane.b32.xlu0 %v280, 116
    %v2953 = vpop.permute.xlu0 %2952
    %2954 = vrot.lane.b32.xlu0 %v283, 116
    %v2955 = vpop.permute.xlu0 %2954
    %2960 = vrot.lane.b32.xlu0 %v274, 112
    %v2961 = vpop.permute.xlu0 %2960
    %2962 = vrot.lane.b32.xlu0 %v277, 112
    %v2963 = vpop.permute.xlu0 %2962
    %2964 = vrot.lane.b32.xlu0 %v280, 112
    %v2965 = vpop.permute.xlu0 %2964
    %2966 = vrot.lane.b32.xlu0 %v283, 112
    %v2967 = vpop.permute.xlu0 %2966
    %2972 = vrot.lane.b32.xlu0 %v274, 108
    %v2973 = vpop.permute.xlu0 %2972
    %2974 = vrot.lane.b32.xlu0 %v277, 108
    %v2975 = vpop.permute.xlu0 %2974
    %2976 = vrot.lane.b32.xlu0 %v280, 108
    %v2977 = vpop.permute.xlu0 %2976
    %2978 = vrot.lane.b32.xlu0 %v283, 108
    %v2979 = vpop.permute.xlu0 %2978
    %2984 = vrot.lane.b32.xlu0 %v274, 104
    %v2985 = vpop.permute.xlu0 %2984
    %2986 = vrot.lane.b32.xlu0 %v277, 104
    %v2987 = vpop.permute.xlu0 %2986
    %2988 = vrot.lane.b32.xlu0 %v280, 104
    %v2989 = vpop.permute.xlu0 %2988
    %2990 = vrot.lane.b32.xlu0 %v283, 104
    %v2991 = vpop.permute.xlu0 %2990
    %2996 = vrot.lane.b32.xlu0 %v274, 100
    %v2997 = vpop.permute.xlu0 %2996
    %2998 = vrot.lane.b32.xlu0 %v277, 100
    %v2999 = vpop.permute.xlu0 %2998
    %3000 = vrot.lane.b32.xlu0 %v280, 100
    %v3001 = vpop.permute.xlu0 %3000
    %3002 = vrot.lane.b32.xlu0 %v283, 100
    %v3003 = vpop.permute.xlu0 %3002
    %v3008 = vrot.slane %v2937, 4
    %v3009 = vsel %vm374, %v3008, %v274
    %v3010 = vrot.slane %v274, 4
    %v3011 = vsel %vm374, %v2937, %v3010
    %v3013 = vunpack.c.l.s4 1983009808
    %v3014 = vunpack.c.0.s8 %v3013
    %v3015 = vperm.slane %v3009, %v3014
    %v3017 = vunpack.c.l.s4 1983009808
    %v3018 = vunpack.c.0.s8 %v3017
    %v3019 = vperm.slane %v3011, %v3018
    %v3020 = vrot.slane %v2949, 4
    %v3021 = vsel %vm374, %v3020, %v2925
    %v3022 = vrot.slane %v2925, 4
    %v3023 = vsel %vm374, %v2949, %v3022
    %v3025 = vunpack.c.l.s4 1983009808
    %v3026 = vunpack.c.0.s8 %v3025
    %v3027 = vperm.slane %v3021, %v3026
    %v3029 = vunpack.c.l.s4 1983009808
    %v3030 = vunpack.c.0.s8 %v3029
    %v3031 = vperm.slane %v3023, %v3030
    %v3032 = vrot.slane %v2985, 4
    %v3033 = vsel %vm374, %v3032, %v2961
    %v3034 = vrot.slane %v2961, 4
    %v3035 = vsel %vm374, %v2985, %v3034
    %v3037 = vunpack.c.l.s4 1983009808
    %v3038 = vunpack.c.0.s8 %v3037
    %v3039 = vperm.slane %v3033, %v3038
    %v3041 = vunpack.c.l.s4 1983009808
    %v3042 = vunpack.c.0.s8 %v3041
    %v3043 = vperm.slane %v3035, %v3042
    %v3044 = vrot.slane %v2997, 4
    %v3045 = vsel %vm374, %v3044, %v2973
    %v3046 = vrot.slane %v2973, 4
    %v3047 = vsel %vm374, %v2997, %v3046
    %v3049 = vunpack.c.l.s4 1983009808
    %v3050 = vunpack.c.0.s8 %v3049
    %v3051 = vperm.slane %v3045, %v3050
    %v3053 = vunpack.c.l.s4 1983009808
    %v3054 = vunpack.c.0.s8 %v3053
    %v3055 = vperm.slane %v3047, %v3054
    %v3056 = vrot.slane %v3027, 4
    %v3057 = vsel %vm374, %v3056, %v3015
    %v3058 = vrot.slane %v3015, 4
    %v3059 = vsel %vm374, %v3027, %v3058
    %v3061 = vunpack.c.l.s4 1934713408
    %v3062 = vunpack.c.0.s8 %v3061
    %v3063 = vperm.slane %v3057, %v3062
    %v3065 = vunpack.c.l.s4 1934713408
    %v3066 = vunpack.c.0.s8 %v3065
    %v3067 = vperm.slane %v3059, %v3066
    %v3068 = vrot.slane %v3031, 4
    %v3069 = vsel %vm374, %v3068, %v3019
    %v3070 = vrot.slane %v3019, 4
    %v3071 = vsel %vm374, %v3031, %v3070
    %v3073 = vunpack.c.l.s4 1934713408
    %v3074 = vunpack.c.0.s8 %v3073
    %v3075 = vperm.slane %v3069, %v3074
    %v3077 = vunpack.c.l.s4 1934713408
    %v3078 = vunpack.c.0.s8 %v3077
    %v3079 = vperm.slane %v3071, %v3078
    %v3080 = vrot.slane %v3051, 4
    %v3081 = vsel %vm374, %v3080, %v3039
    %v3082 = vrot.slane %v3039, 4
    %v3083 = vsel %vm374, %v3051, %v3082
    %v3085 = vunpack.c.l.s4 1934713408
    %v3086 = vunpack.c.0.s8 %v3085
    %v3087 = vperm.slane %v3081, %v3086
    %v3089 = vunpack.c.l.s4 1934713408
    %v3090 = vunpack.c.0.s8 %v3089
    %v3091 = vperm.slane %v3083, %v3090
    %v3092 = vrot.slane %v3055, 4
    %v3093 = vsel %vm374, %v3092, %v3043
    %v3094 = vrot.slane %v3043, 4
    %v3095 = vsel %vm374, %v3055, %v3094
    %v3097 = vunpack.c.l.s4 1934713408
    %v3098 = vunpack.c.0.s8 %v3097
    %v3099 = vperm.slane %v3093, %v3098
    %v3101 = vunpack.c.l.s4 1934713408
    %v3102 = vunpack.c.0.s8 %v3101
    %v3103 = vperm.slane %v3095, %v3102
    %v3104 = vrot.slane %v3087, 4
    %v3105 = vsel %vm374, %v3104, %v3063
    %v3106 = vrot.slane %v3063, 4
    %v3107 = vsel %vm374, %v3087, %v3106
    %v3108 = vrot.slane %v3091, 4
    %v3109 = vsel %vm374, %v3108, %v3067
    %v3110 = vrot.slane %v3067, 4
    %v3111 = vsel %vm374, %v3091, %v3110
    %v3112 = vrot.slane %v3099, 4
    %v3113 = vsel %vm374, %v3112, %v3075
    %v3114 = vrot.slane %v3075, 4
    %v3115 = vsel %vm374, %v3099, %v3114
    %v3116 = vrot.slane %v3103, 4
    %v3117 = vsel %vm374, %v3116, %v3079
    %v3118 = vrot.slane %v3079, 4
    %v3119 = vsel %vm374, %v3103, %v3118
    %v3120 = vrot.slane %v2939, 4
    %v3121 = vsel %vm374, %v3120, %v277
    %v3122 = vrot.slane %v277, 4
    %v3123 = vsel %vm374, %v2939, %v3122
    %v3125 = vunpack.c.l.s4 1983009808
    %v3126 = vunpack.c.0.s8 %v3125
    %v3127 = vperm.slane %v3121, %v3126
    %v3129 = vunpack.c.l.s4 1983009808
    %v3130 = vunpack.c.0.s8 %v3129
    %v3131 = vperm.slane %v3123, %v3130
    %v3132 = vrot.slane %v2951, 4
    %v3133 = vsel %vm374, %v3132, %v2927
    %v3134 = vrot.slane %v2927, 4
    %v3135 = vsel %vm374, %v2951, %v3134
    %v3137 = vunpack.c.l.s4 1983009808
    %v3138 = vunpack.c.0.s8 %v3137
    %v3139 = vperm.slane %v3133, %v3138
    %v3141 = vunpack.c.l.s4 1983009808
    %v3142 = vunpack.c.0.s8 %v3141
    %v3143 = vperm.slane %v3135, %v3142
    %v3144 = vrot.slane %v2987, 4
    %v3145 = vsel %vm374, %v3144, %v2963
    %v3146 = vrot.slane %v2963, 4
    %v3147 = vsel %vm374, %v2987, %v3146
    %v3149 = vunpack.c.l.s4 1983009808
    %v3150 = vunpack.c.0.s8 %v3149
    %v3151 = vperm.slane %v3145, %v3150
    %v3153 = vunpack.c.l.s4 1983009808
    %v3154 = vunpack.c.0.s8 %v3153
    %v3155 = vperm.slane %v3147, %v3154
    %v3156 = vrot.slane %v2999, 4
    %v3157 = vsel %vm374, %v3156, %v2975
    %v3158 = vrot.slane %v2975, 4
    %v3159 = vsel %vm374, %v2999, %v3158
    %v3161 = vunpack.c.l.s4 1983009808
    %v3162 = vunpack.c.0.s8 %v3161
    %v3163 = vperm.slane %v3157, %v3162
    %v3165 = vunpack.c.l.s4 1983009808
    %v3166 = vunpack.c.0.s8 %v3165
    %v3167 = vperm.slane %v3159, %v3166
    %v3168 = vrot.slane %v3139, 4
    %v3169 = vsel %vm374, %v3168, %v3127
    %v3170 = vrot.slane %v3127, 4
    %v3171 = vsel %vm374, %v3139, %v3170
    %v3173 = vunpack.c.l.s4 1934713408
    %v3174 = vunpack.c.0.s8 %v3173
    %v3175 = vperm.slane %v3169, %v3174
    %v3177 = vunpack.c.l.s4 1934713408
    %v3178 = vunpack.c.0.s8 %v3177
    %v3179 = vperm.slane %v3171, %v3178
    %v3180 = vrot.slane %v3143, 4
    %v3181 = vsel %vm374, %v3180, %v3131
    %v3182 = vrot.slane %v3131, 4
    %v3183 = vsel %vm374, %v3143, %v3182
    %v3185 = vunpack.c.l.s4 1934713408
    %v3186 = vunpack.c.0.s8 %v3185
    %v3187 = vperm.slane %v3181, %v3186
    %v3189 = vunpack.c.l.s4 1934713408
    %v3190 = vunpack.c.0.s8 %v3189
    %v3191 = vperm.slane %v3183, %v3190
    %v3192 = vrot.slane %v3163, 4
    %v3193 = vsel %vm374, %v3192, %v3151
    %v3194 = vrot.slane %v3151, 4
    %v3195 = vsel %vm374, %v3163, %v3194
    %v3197 = vunpack.c.l.s4 1934713408
    %v3198 = vunpack.c.0.s8 %v3197
    %v3199 = vperm.slane %v3193, %v3198
    %v3201 = vunpack.c.l.s4 1934713408
    %v3202 = vunpack.c.0.s8 %v3201
    %v3203 = vperm.slane %v3195, %v3202
    %v3204 = vrot.slane %v3167, 4
    %v3205 = vsel %vm374, %v3204, %v3155
    %v3206 = vrot.slane %v3155, 4
    %v3207 = vsel %vm374, %v3167, %v3206
    %v3209 = vunpack.c.l.s4 1934713408
    %v3210 = vunpack.c.0.s8 %v3209
    %v3211 = vperm.slane %v3205, %v3210
    %v3213 = vunpack.c.l.s4 1934713408
    %v3214 = vunpack.c.0.s8 %v3213
    %v3215 = vperm.slane %v3207, %v3214
    %v3216 = vrot.slane %v3199, 4
    %v3217 = vsel %vm374, %v3216, %v3175
    %v3218 = vrot.slane %v3175, 4
    %v3219 = vsel %vm374, %v3199, %v3218
    %v3220 = vrot.slane %v3203, 4
    %v3221 = vsel %vm374, %v3220, %v3179
    %v3222 = vrot.slane %v3179, 4
    %v3223 = vsel %vm374, %v3203, %v3222
    %v3224 = vrot.slane %v3211, 4
    %v3225 = vsel %vm374, %v3224, %v3187
    %v3226 = vrot.slane %v3187, 4
    %v3227 = vsel %vm374, %v3211, %v3226
    %v3228 = vrot.slane %v3215, 4
    %v3229 = vsel %vm374, %v3228, %v3191
    %v3230 = vrot.slane %v3191, 4
    %v3231 = vsel %vm374, %v3215, %v3230
    %v3232 = vrot.slane %v2941, 4
    %v3233 = vsel %vm374, %v3232, %v280
    %v3234 = vrot.slane %v280, 4
    %v3235 = vsel %vm374, %v2941, %v3234
    %v3237 = vunpack.c.l.s4 1983009808
    %v3238 = vunpack.c.0.s8 %v3237
    %v3239 = vperm.slane %v3233, %v3238
    %v3241 = vunpack.c.l.s4 1983009808
    %v3242 = vunpack.c.0.s8 %v3241
    %v3243 = vperm.slane %v3235, %v3242
    %v3244 = vrot.slane %v2953, 4
    %v3245 = vsel %vm374, %v3244, %v2929
    %v3246 = vrot.slane %v2929, 4
    %v3247 = vsel %vm374, %v2953, %v3246
    %v3249 = vunpack.c.l.s4 1983009808
    %v3250 = vunpack.c.0.s8 %v3249
    %v3251 = vperm.slane %v3245, %v3250
    %v3253 = vunpack.c.l.s4 1983009808
    %v3254 = vunpack.c.0.s8 %v3253
    %v3255 = vperm.slane %v3247, %v3254
    %v3256 = vrot.slane %v2989, 4
    %v3257 = vsel %vm374, %v3256, %v2965
    %v3258 = vrot.slane %v2965, 4
    %v3259 = vsel %vm374, %v2989, %v3258
    %v3261 = vunpack.c.l.s4 1983009808
    %v3262 = vunpack.c.0.s8 %v3261
    %v3263 = vperm.slane %v3257, %v3262
    %v3265 = vunpack.c.l.s4 1983009808
    %v3266 = vunpack.c.0.s8 %v3265
    %v3267 = vperm.slane %v3259, %v3266
    %v3268 = vrot.slane %v3001, 4
    %v3269 = vsel %vm374, %v3268, %v2977
    %v3270 = vrot.slane %v2977, 4
    %v3271 = vsel %vm374, %v3001, %v3270
    %v3273 = vunpack.c.l.s4 1983009808
    %v3274 = vunpack.c.0.s8 %v3273
    %v3275 = vperm.slane %v3269, %v3274
    %v3277 = vunpack.c.l.s4 1983009808
    %v3278 = vunpack.c.0.s8 %v3277
    %v3279 = vperm.slane %v3271, %v3278
    %v3280 = vrot.slane %v3251, 4
    %v3281 = vsel %vm374, %v3280, %v3239
    %v3282 = vrot.slane %v3239, 4
    %v3283 = vsel %vm374, %v3251, %v3282
    %v3285 = vunpack.c.l.s4 1934713408
    %v3286 = vunpack.c.0.s8 %v3285
    %v3287 = vperm.slane %v3281, %v3286
    %v3289 = vunpack.c.l.s4 1934713408
    %v3290 = vunpack.c.0.s8 %v3289
    %v3291 = vperm.slane %v3283, %v3290
    %v3292 = vrot.slane %v3255, 4
    %v3293 = vsel %vm374, %v3292, %v3243
    %v3294 = vrot.slane %v3243, 4
    %v3295 = vsel %vm374, %v3255, %v3294
    %v3297 = vunpack.c.l.s4 1934713408
    %v3298 = vunpack.c.0.s8 %v3297
    %v3299 = vperm.slane %v3293, %v3298
    %v3301 = vunpack.c.l.s4 1934713408
    %v3302 = vunpack.c.0.s8 %v3301
    %v3303 = vperm.slane %v3295, %v3302
    %v3304 = vrot.slane %v3275, 4
    %v3305 = vsel %vm374, %v3304, %v3263
    %v3306 = vrot.slane %v3263, 4
    %v3307 = vsel %vm374, %v3275, %v3306
    %v3309 = vunpack.c.l.s4 1934713408
    %v3310 = vunpack.c.0.s8 %v3309
    %v3311 = vperm.slane %v3305, %v3310
    %v3313 = vunpack.c.l.s4 1934713408
    %v3314 = vunpack.c.0.s8 %v3313
    %v3315 = vperm.slane %v3307, %v3314
    %v3316 = vrot.slane %v3279, 4
    %v3317 = vsel %vm374, %v3316, %v3267
    %v3318 = vrot.slane %v3267, 4
    %v3319 = vsel %vm374, %v3279, %v3318
    %v3321 = vunpack.c.l.s4 1934713408
    %v3322 = vunpack.c.0.s8 %v3321
    %v3323 = vperm.slane %v3317, %v3322
    %v3325 = vunpack.c.l.s4 1934713408
    %v3326 = vunpack.c.0.s8 %v3325
    %v3327 = vperm.slane %v3319, %v3326
    %v3328 = vrot.slane %v3311, 4
    %v3329 = vsel %vm374, %v3328, %v3287
    %v3330 = vrot.slane %v3287, 4
    %v3331 = vsel %vm374, %v3311, %v3330
    %v3332 = vrot.slane %v3315, 4
    %v3333 = vsel %vm374, %v3332, %v3291
    %v3334 = vrot.slane %v3291, 4
    %v3335 = vsel %vm374, %v3315, %v3334
    %v3336 = vrot.slane %v3323, 4
    %v3337 = vsel %vm374, %v3336, %v3299
    %v3338 = vrot.slane %v3299, 4
    %v3339 = vsel %vm374, %v3323, %v3338
    %v3340 = vrot.slane %v3327, 4
    %v3341 = vsel %vm374, %v3340, %v3303
    %v3342 = vrot.slane %v3303, 4
    %v3343 = vsel %vm374, %v3327, %v3342
    %v3344 = vrot.slane %v2943, 4
    %v3345 = vsel %vm374, %v3344, %v283
    %v3346 = vrot.slane %v283, 4
    %v3347 = vsel %vm374, %v2943, %v3346
    %v3349 = vunpack.c.l.s4 1983009808
    %v3350 = vunpack.c.0.s8 %v3349
    %v3351 = vperm.slane %v3345, %v3350
    %v3353 = vunpack.c.l.s4 1983009808
    %v3354 = vunpack.c.0.s8 %v3353
    %v3355 = vperm.slane %v3347, %v3354
    %v3356 = vrot.slane %v2955, 4
    %v3357 = vsel %vm374, %v3356, %v2931
    %v3358 = vrot.slane %v2931, 4
    %v3359 = vsel %vm374, %v2955, %v3358
    %v3361 = vunpack.c.l.s4 1983009808
    %v3362 = vunpack.c.0.s8 %v3361
    %v3363 = vperm.slane %v3357, %v3362
    %v3365 = vunpack.c.l.s4 1983009808
    %v3366 = vunpack.c.0.s8 %v3365
    %v3367 = vperm.slane %v3359, %v3366
    %v3368 = vrot.slane %v2991, 4
    %v3369 = vsel %vm374, %v3368, %v2967
    %v3370 = vrot.slane %v2967, 4
    %v3371 = vsel %vm374, %v2991, %v3370
    %v3373 = vunpack.c.l.s4 1983009808
    %v3374 = vunpack.c.0.s8 %v3373
    %v3375 = vperm.slane %v3369, %v3374
    %v3377 = vunpack.c.l.s4 1983009808
    %v3378 = vunpack.c.0.s8 %v3377
    %v3379 = vperm.slane %v3371, %v3378
    %v3380 = vrot.slane %v3003, 4
    %v3381 = vsel %vm374, %v3380, %v2979
    %v3382 = vrot.slane %v2979, 4
    %v3383 = vsel %vm374, %v3003, %v3382
    %v3385 = vunpack.c.l.s4 1983009808
    %v3386 = vunpack.c.0.s8 %v3385
    %v3387 = vperm.slane %v3381, %v3386
    %v3389 = vunpack.c.l.s4 1983009808
    %v3390 = vunpack.c.0.s8 %v3389
    %v3391 = vperm.slane %v3383, %v3390
    %v3392 = vrot.slane %v3363, 4
    %v3393 = vsel %vm374, %v3392, %v3351
    %v3394 = vrot.slane %v3351, 4
    %v3395 = vsel %vm374, %v3363, %v3394
    %v3397 = vunpack.c.l.s4 1934713408
    %v3398 = vunpack.c.0.s8 %v3397
    %v3399 = vperm.slane %v3393, %v3398
    %v3401 = vunpack.c.l.s4 1934713408
    %v3402 = vunpack.c.0.s8 %v3401
    %v3403 = vperm.slane %v3395, %v3402
    %v3404 = vrot.slane %v3367, 4
    %v3405 = vsel %vm374, %v3404, %v3355
    %v3406 = vrot.slane %v3355, 4
    %v3407 = vsel %vm374, %v3367, %v3406
    %v3409 = vunpack.c.l.s4 1934713408
    %v3410 = vunpack.c.0.s8 %v3409
    %v3411 = vperm.slane %v3405, %v3410
    %v3413 = vunpack.c.l.s4 1934713408
    %v3414 = vunpack.c.0.s8 %v3413
    %v3415 = vperm.slane %v3407, %v3414
    %v3416 = vrot.slane %v3387, 4
    %v3417 = vsel %vm374, %v3416, %v3375
    %v3418 = vrot.slane %v3375, 4
    %v3419 = vsel %vm374, %v3387, %v3418
    %v3421 = vunpack.c.l.s4 1934713408
    %v3422 = vunpack.c.0.s8 %v3421
    %v3423 = vperm.slane %v3417, %v3422
    %v3425 = vunpack.c.l.s4 1934713408
    %v3426 = vunpack.c.0.s8 %v3425
    %v3427 = vperm.slane %v3419, %v3426
    %v3428 = vrot.slane %v3391, 4
    %v3429 = vsel %vm374, %v3428, %v3379
    %v3430 = vrot.slane %v3379, 4
    %v3431 = vsel %vm374, %v3391, %v3430
    %v3433 = vunpack.c.l.s4 1934713408
    %v3434 = vunpack.c.0.s8 %v3433
    %v3435 = vperm.slane %v3429, %v3434
    %v3437 = vunpack.c.l.s4 1934713408
    %v3438 = vunpack.c.0.s8 %v3437
    %v3439 = vperm.slane %v3431, %v3438
    %v3440 = vrot.slane %v3423, 4
    %v3441 = vsel %vm374, %v3440, %v3399
    %v3442 = vrot.slane %v3399, 4
    %v3443 = vsel %vm374, %v3423, %v3442
    %v3444 = vrot.slane %v3427, 4
    %v3445 = vsel %vm374, %v3444, %v3403
    %v3446 = vrot.slane %v3403, 4
    %v3447 = vsel %vm374, %v3427, %v3446
    %v3448 = vrot.slane %v3435, 4
    %v3449 = vsel %vm374, %v3448, %v3411
    %v3450 = vrot.slane %v3411, 4
    %v3451 = vsel %vm374, %v3435, %v3450
    %v3452 = vrot.slane %v3439, 4
    %v3453 = vsel %vm374, %v3452, %v3415
    %v3454 = vrot.slane %v3415, 4
    %v3455 = vsel %vm374, %v3439, %v3454
    %v3456 = vld [vmem:[#allocation10] sm:$0xff]
    %v3457 = vld [vmem:[#allocation10 + $0x8] sm:$0xff]
    %v3458 = vld [vmem:[#allocation10 + $0x10] sm:$0xff]
    %v3459 = vld [vmem:[#allocation10 + $0x18] sm:$0xff]
    %v3468 = vrot.slane %v1577, 7
    %vm3469 = vcmask 1041409
    %v3470 = vsel %vm3469, %v3468, %v1576
    %v3471 = vrot.slane %v1578, 6
    %vm3472 = vcmask 1042434
    %v3473 = vsel %vm3472, %v3471, %v3470
    %v3474 = vrot.slane %v1579, 5
    %vm3475 = vcmask 1043459
    %v3476 = vsel %vm3475, %v3474, %v3473
    %v3477 = vrot.slane %v1580, 4
    %vm3478 = vcmask 1044484
    %v3479 = vsel %vm3478, %v3477, %v3476
    %v3480 = vrot.slane %v1581, 3
    %vm3481 = vcmask 1045509
    %v3482 = vsel %vm3481, %v3480, %v3479
    %v3483 = vrot.slane %v1582, 2
    %vm3484 = vcmask 1046534
    %v3485 = vsel %vm3484, %v3483, %v3482
    %v3486 = vrot.slane %v1583, 1
    %vm3487 = vcmask 1047559
    %v3488 = vsel %vm3487, %v3486, %v3485
    %v3497 = vrot.slane %v2889, 7
    %v3498 = vsel %vm3469, %v3497, %v2888
    %v3499 = vrot.slane %v2890, 6
    %v3500 = vsel %vm3472, %v3499, %v3498
    %v3501 = vrot.slane %v2891, 5
    %v3502 = vsel %vm3475, %v3501, %v3500
    %v3503 = vrot.slane %v2892, 4
    %v3504 = vsel %vm3478, %v3503, %v3502
    %v3505 = vrot.slane %v2893, 3
    %v3506 = vsel %vm3481, %v3505, %v3504
    %v3507 = vrot.slane %v2894, 2
    %v3508 = vsel %vm3484, %v3507, %v3506
    %v3509 = vrot.slane %v2895, 1
    %v3510 = vsel %vm3487, %v3509, %v3508
    %v3511 = vsel %vm826, %v3488, 0
    %v3513 = vsel %vm826, %v3510, 0
    %3515 = vmatpush.xpose.msra.mxu0 0.0
    %3516 = vmatpush.xpose.msra.mxu0 0.0
    %3517 = vmatpush.xpose.msra.mxu0 0.0
    %3518 = vmatpush.xpose.msra.mxu0 0.0
    %3519 = vmatpush.xpose.msra.mxu0 0.0
    %3520 = vmatpush.xpose.msra.mxu0 0.0
    %3521 = vmatpush.xpose.msra.mxu0 0.0
    %3522 = vmatpush.xpose.msra.mxu0 0.0
    %3523 = vmatpush.xpose.msra.mxu0 0.0
    %3524 = vmatpush.xpose.msra.mxu0 0.0
    %3525 = vmatpush.xpose.msra.mxu0 0.0
    %3526 = vmatpush.xpose.msra.mxu0 0.0
    %3527 = vmatpush.xpose.msra.mxu0 0.0
    %3528 = vmatpush.xpose.msra.mxu0 0.0
    %3529 = vmatpush.xpose.msra.mxu0 0.0
    %3530 = vmatpush.xpose.msra.mxu0 %v3513
    %3531 = vmatmul.f32.gmra.mxu0 %v3511
    %v3532 = vpop.f32.mrf.mxu0
    %v3533 = vadd.f32 0.0, %v3532
    %3534 = vdwg.mxu0
    %v3543 = vrot.slane %v1585, 7
    %v3544 = vsel %vm3469, %v3543, %v1584
    %v3545 = vrot.slane %v1586, 6
    %v3546 = vsel %vm3472, %v3545, %v3544
    %v3547 = vrot.slane %v1587, 5
    %v3548 = vsel %vm3475, %v3547, %v3546
    %v3549 = vrot.slane %v1588, 4
    %v3550 = vsel %vm3478, %v3549, %v3548
    %v3551 = vrot.slane %v1589, 3
    %v3552 = vsel %vm3481, %v3551, %v3550
    %v3553 = vrot.slane %v1590, 2
    %v3554 = vsel %vm3484, %v3553, %v3552
    %v3555 = vrot.slane %v1591, 1
    %v3556 = vsel %vm3487, %v3555, %v3554
    %v3565 = vrot.slane %v2897, 7
    %v3566 = vsel %vm3469, %v3565, %v2896
    %v3567 = vrot.slane %v2898, 6
    %v3568 = vsel %vm3472, %v3567, %v3566
    %v3569 = vrot.slane %v2899, 5
    %v3570 = vsel %vm3475, %v3569, %v3568
    %v3571 = vrot.slane %v2900, 4
    %v3572 = vsel %vm3478, %v3571, %v3570
    %v3573 = vrot.slane %v2901, 3
    %v3574 = vsel %vm3481, %v3573, %v3572
    %v3575 = vrot.slane %v2902, 2
    %v3576 = vsel %vm3484, %v3575, %v3574
    %v3577 = vrot.slane %v2903, 1
    %v3578 = vsel %vm3487, %v3577, %v3576
    %v3579 = vsel %vm826, %v3556, 0
    %v3581 = vsel %vm826, %v3578, 0
    %3583 = vmatpush.xpose.msra.mxu0 0.0
    %3584 = vmatpush.xpose.msra.mxu0 0.0
    %3585 = vmatpush.xpose.msra.mxu0 0.0
    %3586 = vmatpush.xpose.msra.mxu0 0.0
    %3587 = vmatpush.xpose.msra.mxu0 0.0
    %3588 = vmatpush.xpose.msra.mxu0 0.0
    %3589 = vmatpush.xpose.msra.mxu0 0.0
    %3590 = vmatpush.xpose.msra.mxu0 0.0
    %3591 = vmatpush.xpose.msra.mxu0 0.0
    %3592 = vmatpush.xpose.msra.mxu0 0.0
    %3593 = vmatpush.xpose.msra.mxu0 0.0
    %3594 = vmatpush.xpose.msra.mxu0 0.0
    %3595 = vmatpush.xpose.msra.mxu0 0.0
    %3596 = vmatpush.xpose.msra.mxu0 0.0
    %3597 = vmatpush.xpose.msra.mxu0 0.0
    %3598 = vmatpush.xpose.msra.mxu0 %v3581
    %3599 = vmatmul.f32.gmra.mxu0 %v3579
    %v3600 = vpop.f32.mrf.mxu0
    %v3601 = vadd.f32 0.0, %v3600
    %3602 = vdwg.mxu0
    %v3611 = vrot.slane %v1593, 7
    %v3612 = vsel %vm3469, %v3611, %v1592
    %v3613 = vrot.slane %v1594, 6
    %v3614 = vsel %vm3472, %v3613, %v3612
    %v3615 = vrot.slane %v1595, 5
    %v3616 = vsel %vm3475, %v3615, %v3614
    %v3617 = vrot.slane %v1596, 4
    %v3618 = vsel %vm3478, %v3617, %v3616
    %v3619 = vrot.slane %v1597, 3
    %v3620 = vsel %vm3481, %v3619, %v3618
    %v3621 = vrot.slane %v1598, 2
    %v3622 = vsel %vm3484, %v3621, %v3620
    %v3623 = vrot.slane %v1599, 1
    %v3624 = vsel %vm3487, %v3623, %v3622
    %v3633 = vrot.slane %v2905, 7
    %v3634 = vsel %vm3469, %v3633, %v2904
    %v3635 = vrot.slane %v2906, 6
    %v3636 = vsel %vm3472, %v3635, %v3634
    %v3637 = vrot.slane %v2907, 5
    %v3638 = vsel %vm3475, %v3637, %v3636
    %v3639 = vrot.slane %v2908, 4
    %v3640 = vsel %vm3478, %v3639, %v3638
    %v3641 = vrot.slane %v2909, 3
    %v3642 = vsel %vm3481, %v3641, %v3640
    %v3643 = vrot.slane %v2910, 2
    %v3644 = vsel %vm3484, %v3643, %v3642
    %v3645 = vrot.slane %v2911, 1
    %v3646 = vsel %vm3487, %v3645, %v3644
    %v3647 = vsel %vm826, %v3624, 0
    %v3649 = vsel %vm826, %v3646, 0
    %3651 = vmatpush.xpose.msra.mxu0 0.0
    %3652 = vmatpush.xpose.msra.mxu0 0.0
    %3653 = vmatpush.xpose.msra.mxu0 0.0
    %3654 = vmatpush.xpose.msra.mxu0 0.0
    %3655 = vmatpush.xpose.msra.mxu0 0.0
    %3656 = vmatpush.xpose.msra.mxu0 0.0
    %3657 = vmatpush.xpose.msra.mxu0 0.0
    %3658 = vmatpush.xpose.msra.mxu0 0.0
    %3659 = vmatpush.xpose.msra.mxu0 0.0
    %3660 = vmatpush.xpose.msra.mxu0 0.0
    %3661 = vmatpush.xpose.msra.mxu0 0.0
    %3662 = vmatpush.xpose.msra.mxu0 0.0
    %3663 = vmatpush.xpose.msra.mxu0 0.0
    %3664 = vmatpush.xpose.msra.mxu0 0.0
    %3665 = vmatpush.xpose.msra.mxu0 0.0
    %3666 = vmatpush.xpose.msra.mxu0 %v3649
    %3667 = vmatmul.f32.gmra.mxu0 %v3647
    %v3668 = vpop.f32.mrf.mxu0
    %v3669 = vadd.f32 0.0, %v3668
    %3670 = vdwg.mxu0
    %v3679 = vrot.slane %v1601, 7
    %v3680 = vsel %vm3469, %v3679, %v1600
    %v3681 = vrot.slane %v1602, 6
    %v3682 = vsel %vm3472, %v3681, %v3680
    %v3683 = vrot.slane %v1603, 5
    %v3684 = vsel %vm3475, %v3683, %v3682
    %v3685 = vrot.slane %v1604, 4
    %v3686 = vsel %vm3478, %v3685, %v3684
    %v3687 = vrot.slane %v1605, 3
    %v3688 = vsel %vm3481, %v3687, %v3686
    %v3689 = vrot.slane %v1606, 2
    %v3690 = vsel %vm3484, %v3689, %v3688
    %v3691 = vrot.slane %v1607, 1
    %v3692 = vsel %vm3487, %v3691, %v3690
    %v3701 = vrot.slane %v2913, 7
    %v3702 = vsel %vm3469, %v3701, %v2912
    %v3703 = vrot.slane %v2914, 6
    %v3704 = vsel %vm3472, %v3703, %v3702
    %v3705 = vrot.slane %v2915, 5
    %v3706 = vsel %vm3475, %v3705, %v3704
    %v3707 = vrot.slane %v2916, 4
    %v3708 = vsel %vm3478, %v3707, %v3706
    %v3709 = vrot.slane %v2917, 3
    %v3710 = vsel %vm3481, %v3709, %v3708
    %v3711 = vrot.slane %v2918, 2
    %v3712 = vsel %vm3484, %v3711, %v3710
    %v3713 = vrot.slane %v2919, 1
    %v3714 = vsel %vm3487, %v3713, %v3712
    %v3715 = vsel %vm826, %v3692, 0
    %v3717 = vsel %vm826, %v3714, 0
    %3719 = vmatpush.xpose.msra.mxu0 0.0
    %3720 = vmatpush.xpose.msra.mxu0 0.0
    %3721 = vmatpush.xpose.msra.mxu0 0.0
    %3722 = vmatpush.xpose.msra.mxu0 0.0
    %3723 = vmatpush.xpose.msra.mxu0 0.0
    %3724 = vmatpush.xpose.msra.mxu0 0.0
    %3725 = vmatpush.xpose.msra.mxu0 0.0
    %3726 = vmatpush.xpose.msra.mxu0 0.0
    %3727 = vmatpush.xpose.msra.mxu0 0.0
    %3728 = vmatpush.xpose.msra.mxu0 0.0
    %3729 = vmatpush.xpose.msra.mxu0 0.0
    %3730 = vmatpush.xpose.msra.mxu0 0.0
    %3731 = vmatpush.xpose.msra.mxu0 0.0
    %3732 = vmatpush.xpose.msra.mxu0 0.0
    %3733 = vmatpush.xpose.msra.mxu0 0.0
    %3734 = vmatpush.xpose.msra.mxu0 %v3717
    %3735 = vmatmul.f32.gmra.mxu0 %v3715
    %v3736 = vpop.f32.mrf.mxu0
    %v3737 = vadd.f32 0.0, %v3736
    %3738 = vdwg.mxu0
    %vm3739 = vcmask 64512
    %v3740 = vsel %vm3739, %v3533, -inf
    %3741 = vmax.xlane.f32.xlu0 %v3740
    %v3742 = vpop.xlane.xlu0 %3741
    %v3743 = vsel %vm3739, %v3601, -inf
    %3744 = vmax.xlane.f32.xlu0 %v3743
    %v3745 = vpop.xlane.xlu0 %3744
    %v3746 = vsel %vm3739, %v3669, -inf
    %3747 = vmax.xlane.f32.xlu0 %v3746
    %v3748 = vpop.xlane.xlu0 %3747
    %v3749 = vsel %vm3739, %v3737, -inf
    %3750 = vmax.xlane.f32.xlu0 %v3749
    %v3751 = vpop.xlane.xlu0 %3750
    %v3752 = vsub.f32 %v3533, %v3742
    %v3753 = vsub.f32 %v3601, %v3745
    %v3754 = vsub.f32 %v3669, %v3748
    %v3755 = vsub.f32 %v3737, %v3751
    %v3756 = vmul.f32 %v3752, 1.442695
    %v3757 = vpow.pop %v3756
    %v3758 = vmul.f32 %v3753, 1.442695
    %v3759 = vpow.pop %v3758
    %v3760 = vmul.f32 %v3754, 1.442695
    %v3761 = vpow.pop %v3760
    %v3762 = vmul.f32 %v3755, 1.442695
    %v3763 = vpow.pop %v3762
    %v3764 = vsel %vm3739, %v3757, 0.0
    %3765 = vadd.xlane.f32.xlu0 %v3764
    %v3766 = vpop.xlane.xlu0 %3765
    %v3767 = vsel %vm3739, %v3759, 0.0
    %3768 = vadd.xlane.f32.xlu0 %v3767
    %v3769 = vpop.xlane.xlu0 %3768
    %v3770 = vsel %vm3739, %v3761, 0.0
    %3771 = vadd.xlane.f32.xlu0 %v3770
    %v3772 = vpop.xlane.xlu0 %3771
    %v3773 = vsel %vm3739, %v3763, 0.0
    %3774 = vadd.xlane.f32.xlu0 %v3773
    %v3775 = vpop.xlane.xlu0 %3774
    %v3776 = vrcp.pop %v3766
    %v3777 = vmul.f32 %v3766, %v3776
    %v3778 = vsub.f32 1.0, %v3777
    %v3779 = vmul.f32 %v3776, %v3778
    %v3780 = vadd.f32 %v3776, %v3779
    %vm3781 = vweird.f32 %v3766
    %vm3782 = vweird.f32 %v3776
    %vm3783 = vmor %vm3781, %vm3782
    %v3784 = vsel %vm3783, %v3776, %v3780
    %v3785 = vand.u32 2147483647, %v3766
    %vm3786 = vcmp.eq.f32.partialorder %v3785, 8.507059e+37
    %v3787 = vand.u32 %v3766, 2147483648
    %v3788 = vor.u32 1.1754944e-38, %v3787
    %v3789 = vsel %vm3786, %v3788, %v3784
    %v3790 = vrcp.pop %v3769
    %v3791 = vmul.f32 %v3769, %v3790
    %v3792 = vsub.f32 1.0, %v3791
    %v3793 = vmul.f32 %v3790, %v3792
    %v3794 = vadd.f32 %v3790, %v3793
    %vm3795 = vweird.f32 %v3769
    %vm3796 = vweird.f32 %v3790
    %vm3797 = vmor %vm3795, %vm3796
    %v3798 = vsel %vm3797, %v3790, %v3794
    %v3799 = vand.u32 2147483647, %v3769
    %vm3800 = vcmp.eq.f32.partialorder %v3799, 8.507059e+37
    %v3801 = vand.u32 %v3769, 2147483648
    %v3802 = vor.u32 1.1754944e-38, %v3801
    %v3803 = vsel %vm3800, %v3802, %v3798
    %v3804 = vrcp.pop %v3772
    %v3805 = vmul.f32 %v3772, %v3804
    %v3806 = vsub.f32 1.0, %v3805
    %v3807 = vmul.f32 %v3804, %v3806
    %v3808 = vadd.f32 %v3804, %v3807
    %vm3809 = vweird.f32 %v3772
    %vm3810 = vweird.f32 %v3804
    %vm3811 = vmor %vm3809, %vm3810
    %v3812 = vsel %vm3811, %v3804, %v3808
    %v3813 = vand.u32 2147483647, %v3772
    %vm3814 = vcmp.eq.f32.partialorder %v3813, 8.507059e+37
    %v3815 = vand.u32 %v3772, 2147483648
    %v3816 = vor.u32 1.1754944e-38, %v3815
    %v3817 = vsel %vm3814, %v3816, %v3812
    %v3818 = vrcp.pop %v3775
    %v3819 = vmul.f32 %v3775, %v3818
    %v3820 = vsub.f32 1.0, %v3819
    %v3821 = vmul.f32 %v3818, %v3820
    %v3822 = vadd.f32 %v3818, %v3821
    %vm3823 = vweird.f32 %v3775
    %vm3824 = vweird.f32 %v3818
    %vm3825 = vmor %vm3823, %vm3824
    %v3826 = vsel %vm3825, %v3818, %v3822
    %v3827 = vand.u32 2147483647, %v3775
    %vm3828 = vcmp.eq.f32.partialorder %v3827, 8.507059e+37
    %v3829 = vand.u32 %v3775, 2147483648
    %v3830 = vor.u32 1.1754944e-38, %v3829
    %v3831 = vsel %vm3828, %v3830, %v3826
    %v3832 = vmul.f32 %v3757, %v3789
    %v3833 = vmul.f32 %v3759, %v3803
    %v3834 = vmul.f32 %v3761, %v3817
    %v3835 = vmul.f32 %v3763, %v3831
    %v3844 = vrot.slane %v3107, 7
    %v3845 = vsel %vm3469, %v3844, %v3105
    %v3846 = vrot.slane %v3109, 6
    %v3847 = vsel %vm3472, %v3846, %v3845
    %v3848 = vrot.slane %v3111, 5
    %v3849 = vsel %vm3475, %v3848, %v3847
    %v3850 = vrot.slane %v3113, 4
    %v3851 = vsel %vm3478, %v3850, %v3849
    %v3852 = vrot.slane %v3115, 3
    %v3853 = vsel %vm3481, %v3852, %v3851
    %v3854 = vrot.slane %v3117, 2
    %v3855 = vsel %vm3484, %v3854, %v3853
    %v3856 = vrot.slane %v3119, 1
    %v3857 = vsel %vm3487, %v3856, %v3855
    %v3860 = vsel %vm3739, %v3832, 0
    %3862 = vmatpush.msra.mxu0 0.0
    %3863 = vmatpush.msra.mxu0 0.0
    %3864 = vmatpush.msra.mxu0 0.0
    %3865 = vmatpush.msra.mxu0 0.0
    %3866 = vmatpush.msra.mxu0 0.0
    %3867 = vmatpush.msra.mxu0 0.0
    %3868 = vmatpush.msra.mxu0 0.0
    %3869 = vmatpush.msra.mxu0 0.0
    %3870 = vmatpush.msra.mxu0 0.0
    %3871 = vmatpush.msra.mxu0 0.0
    %3872 = vmatpush.msra.mxu0 0.0
    %3873 = vmatpush.msra.mxu0 0.0
    %3874 = vmatpush.msra.mxu0 0.0
    %3875 = vmatpush.msra.mxu0 0.0
    %3876 = vmatpush.msra.mxu0 0.0
    %3877 = vmatpush.msra.mxu0 %v3857
    %3878 = vmatmul.f32.gmra.mxu0 %v3860
    %v3879 = vpop.f32.mrf.mxu0
    %v3880 = vadd.f32 0.0, %v3879
    %3881 = vdwg.mxu0
    %v3890 = vrot.slane %v3219, 7
    %v3891 = vsel %vm3469, %v3890, %v3217
    %v3892 = vrot.slane %v3221, 6
    %v3893 = vsel %vm3472, %v3892, %v3891
    %v3894 = vrot.slane %v3223, 5
    %v3895 = vsel %vm3475, %v3894, %v3893
    %v3896 = vrot.slane %v3225, 4
    %v3897 = vsel %vm3478, %v3896, %v3895
    %v3898 = vrot.slane %v3227, 3
    %v3899 = vsel %vm3481, %v3898, %v3897
    %v3900 = vrot.slane %v3229, 2
    %v3901 = vsel %vm3484, %v3900, %v3899
    %v3902 = vrot.slane %v3231, 1
    %v3903 = vsel %vm3487, %v3902, %v3901
    %v3906 = vsel %vm3739, %v3833, 0
    %3908 = vmatpush.msra.mxu0 0.0
    %3909 = vmatpush.msra.mxu0 0.0
    %3910 = vmatpush.msra.mxu0 0.0
    %3911 = vmatpush.msra.mxu0 0.0
    %3912 = vmatpush.msra.mxu0 0.0
    %3913 = vmatpush.msra.mxu0 0.0
    %3914 = vmatpush.msra.mxu0 0.0
    %3915 = vmatpush.msra.mxu0 0.0
    %3916 = vmatpush.msra.mxu0 0.0
    %3917 = vmatpush.msra.mxu0 0.0
    %3918 = vmatpush.msra.mxu0 0.0
    %3919 = vmatpush.msra.mxu0 0.0
    %3920 = vmatpush.msra.mxu0 0.0
    %3921 = vmatpush.msra.mxu0 0.0
    %3922 = vmatpush.msra.mxu0 0.0
    %3923 = vmatpush.msra.mxu0 %v3903
    %3924 = vmatmul.f32.gmra.mxu0 %v3906
    %v3925 = vpop.f32.mrf.mxu0
    %v3926 = vadd.f32 0.0, %v3925
    %3927 = vdwg.mxu0
    %v3936 = vrot.slane %v3331, 7
    %v3937 = vsel %vm3469, %v3936, %v3329
    %v3938 = vrot.slane %v3333, 6
    %v3939 = vsel %vm3472, %v3938, %v3937
    %v3940 = vrot.slane %v3335, 5
    %v3941 = vsel %vm3475, %v3940, %v3939
    %v3942 = vrot.slane %v3337, 4
    %v3943 = vsel %vm3478, %v3942, %v3941
    %v3944 = vrot.slane %v3339, 3
    %v3945 = vsel %vm3481, %v3944, %v3943
    %v3946 = vrot.slane %v3341, 2
    %v3947 = vsel %vm3484, %v3946, %v3945
    %v3948 = vrot.slane %v3343, 1
    %v3949 = vsel %vm3487, %v3948, %v3947
    %v3952 = vsel %vm3739, %v3834, 0
    %3954 = vmatpush.msra.mxu0 0.0
    %3955 = vmatpush.msra.mxu0 0.0
    %3956 = vmatpush.msra.mxu0 0.0
    %3957 = vmatpush.msra.mxu0 0.0
    %3958 = vmatpush.msra.mxu0 0.0
    %3959 = vmatpush.msra.mxu0 0.0
    %3960 = vmatpush.msra.mxu0 0.0
    %3961 = vmatpush.msra.mxu0 0.0
    %3962 = vmatpush.msra.mxu0 0.0
    %3963 = vmatpush.msra.mxu0 0.0
    %3964 = vmatpush.msra.mxu0 0.0
    %3965 = vmatpush.msra.mxu0 0.0
    %3966 = vmatpush.msra.mxu0 0.0
    %3967 = vmatpush.msra.mxu0 0.0
    %3968 = vmatpush.msra.mxu0 0.0
    %3969 = vmatpush.msra.mxu0 %v3949
    %3970 = vmatmul.f32.gmra.mxu0 %v3952
    %v3971 = vpop.f32.mrf.mxu0
    %v3972 = vadd.f32 0.0, %v3971
    %3973 = vdwg.mxu0
    %v3982 = vrot.slane %v3443, 7
    %v3983 = vsel %vm3469, %v3982, %v3441
    %v3984 = vrot.slane %v3445, 6
    %v3985 = vsel %vm3472, %v3984, %v3983
    %v3986 = vrot.slane %v3447, 5
    %v3987 = vsel %vm3475, %v3986, %v3985
    %v3988 = vrot.slane %v3449, 4
    %v3989 = vsel %vm3478, %v3988, %v3987
    %v3990 = vrot.slane %v3451, 3
    %v3991 = vsel %vm3481, %v3990, %v3989
    %v3992 = vrot.slane %v3453, 2
    %v3993 = vsel %vm3484, %v3992, %v3991
    %v3994 = vrot.slane %v3455, 1
    %v3995 = vsel %vm3487, %v3994, %v3993
    %v3998 = vsel %vm3739, %v3835, 0
    %4000 = vmatpush.msra.mxu0 0.0
    %4001 = vmatpush.msra.mxu0 0.0
    %4002 = vmatpush.msra.mxu0 0.0
    %4003 = vmatpush.msra.mxu0 0.0
    %4004 = vmatpush.msra.mxu0 0.0
    %4005 = vmatpush.msra.mxu0 0.0
    %4006 = vmatpush.msra.mxu0 0.0
    %4007 = vmatpush.msra.mxu0 0.0
    %4008 = vmatpush.msra.mxu0 0.0
    %4009 = vmatpush.msra.mxu0 0.0
    %4010 = vmatpush.msra.mxu0 0.0
    %4011 = vmatpush.msra.mxu0 0.0
    %4012 = vmatpush.msra.mxu0 0.0
    %4013 = vmatpush.msra.mxu0 0.0
    %4014 = vmatpush.msra.mxu0 0.0
    %4015 = vmatpush.msra.mxu0 %v3995
    %4016 = vmatmul.f32.gmra.mxu0 %v3998
    %v4017 = vpop.f32.mrf.mxu0
    %v4018 = vadd.f32 0.0, %v4017
    %4019 = vdwg.mxu0
    %v4020 = vrot.slane %v1576, 1
    %v4021 = vsel %vm3469, %v1577, %v4020
    %v4022 = vrot.slane %v1578, 7
    %v4023 = vsel %vm3472, %v4022, %v4021
    %v4024 = vrot.slane %v1579, 6
    %v4025 = vsel %vm3475, %v4024, %v4023
    %v4026 = vrot.slane %v1580, 5
    %v4027 = vsel %vm3478, %v4026, %v4025
    %v4028 = vrot.slane %v1581, 4
    %v4029 = vsel %vm3481, %v4028, %v4027
    %v4030 = vrot.slane %v1582, 3
    %v4031 = vsel %vm3484, %v4030, %v4029
    %v4032 = vrot.slane %v1583, 2
    %v4033 = vsel %vm3487, %v4032, %v4031
    %v4034 = vrot.slane %v2888, 1
    %v4035 = vsel %vm3469, %v2889, %v4034
    %v4036 = vrot.slane %v2890, 7
    %v4037 = vsel %vm3472, %v4036, %v4035
    %v4038 = vrot.slane %v2891, 6
    %v4039 = vsel %vm3475, %v4038, %v4037
    %v4040 = vrot.slane %v2892, 5
    %v4041 = vsel %vm3478, %v4040, %v4039
    %v4042 = vrot.slane %v2893, 4
    %v4043 = vsel %vm3481, %v4042, %v4041
    %v4044 = vrot.slane %v2894, 3
    %v4045 = vsel %vm3484, %v4044, %v4043
    %v4046 = vrot.slane %v2895, 2
    %v4047 = vsel %vm3487, %v4046, %v4045
    %v4048 = vsel %vm826, %v4033, 0
    %v4050 = vsel %vm826, %v4047, 0
    %4052 = vmatpush.xpose.msra.mxu0 0.0
    %4053 = vmatpush.xpose.msra.mxu0 0.0
    %4054 = vmatpush.xpose.msra.mxu0 0.0
    %4055 = vmatpush.xpose.msra.mxu0 0.0
    %4056 = vmatpush.xpose.msra.mxu0 0.0
    %4057 = vmatpush.xpose.msra.mxu0 0.0
    %4058 = vmatpush.xpose.msra.mxu0 0.0
    %4059 = vmatpush.xpose.msra.mxu0 0.0
    %4060 = vmatpush.xpose.msra.mxu0 0.0
    %4061 = vmatpush.xpose.msra.mxu0 0.0
    %4062 = vmatpush.xpose.msra.mxu0 0.0
    %4063 = vmatpush.xpose.msra.mxu0 0.0
    %4064 = vmatpush.xpose.msra.mxu0 0.0
    %4065 = vmatpush.xpose.msra.mxu0 0.0
    %4066 = vmatpush.xpose.msra.mxu0 0.0
    %4067 = vmatpush.xpose.msra.mxu0 %v4050
    %4068 = vmatmul.f32.gmra.mxu0 %v4048
    %v4069 = vpop.f32.mrf.mxu0
    %v4070 = vadd.f32 0.0, %v4069
    %4071 = vdwg.mxu0
    %v4072 = vrot.slane %v1584, 1
    %v4073 = vsel %vm3469, %v1585, %v4072
    %v4074 = vrot.slane %v1586, 7
    %v4075 = vsel %vm3472, %v4074, %v4073
    %v4076 = vrot.slane %v1587, 6
    %v4077 = vsel %vm3475, %v4076, %v4075
    %v4078 = vrot.slane %v1588, 5
    %v4079 = vsel %vm3478, %v4078, %v4077
    %v4080 = vrot.slane %v1589, 4
    %v4081 = vsel %vm3481, %v4080, %v4079
    %v4082 = vrot.slane %v1590, 3
    %v4083 = vsel %vm3484, %v4082, %v4081
    %v4084 = vrot.slane %v1591, 2
    %v4085 = vsel %vm3487, %v4084, %v4083
    %v4086 = vrot.slane %v2896, 1
    %v4087 = vsel %vm3469, %v2897, %v4086
    %v4088 = vrot.slane %v2898, 7
    %v4089 = vsel %vm3472, %v4088, %v4087
    %v4090 = vrot.slane %v2899, 6
    %v4091 = vsel %vm3475, %v4090, %v4089
    %v4092 = vrot.slane %v2900, 5
    %v4093 = vsel %vm3478, %v4092, %v4091
    %v4094 = vrot.slane %v2901, 4
    %v4095 = vsel %vm3481, %v4094, %v4093
    %v4096 = vrot.slane %v2902, 3
    %v4097 = vsel %vm3484, %v4096, %v4095
    %v4098 = vrot.slane %v2903, 2
    %v4099 = vsel %vm3487, %v4098, %v4097
    %v4100 = vsel %vm826, %v4085, 0
    %v4102 = vsel %vm826, %v4099, 0
    %4104 = vmatpush.xpose.msra.mxu0 0.0
    %4105 = vmatpush.xpose.msra.mxu0 0.0
    %4106 = vmatpush.xpose.msra.mxu0 0.0
    %4107 = vmatpush.xpose.msra.mxu0 0.0
    %4108 = vmatpush.xpose.msra.mxu0 0.0
    %4109 = vmatpush.xpose.msra.mxu0 0.0
    %4110 = vmatpush.xpose.msra.mxu0 0.0
    %4111 = vmatpush.xpose.msra.mxu0 0.0
    %4112 = vmatpush.xpose.msra.mxu0 0.0
    %4113 = vmatpush.xpose.msra.mxu0 0.0
    %4114 = vmatpush.xpose.msra.mxu0 0.0
    %4115 = vmatpush.xpose.msra.mxu0 0.0
    %4116 = vmatpush.xpose.msra.mxu0 0.0
    %4117 = vmatpush.xpose.msra.mxu0 0.0
    %4118 = vmatpush.xpose.msra.mxu0 0.0
    %4119 = vmatpush.xpose.msra.mxu0 %v4102
    %4120 = vmatmul.f32.gmra.mxu0 %v4100
    %v4121 = vpop.f32.mrf.mxu0
    %v4122 = vadd.f32 0.0, %v4121
    %4123 = vdwg.mxu0
    %v4124 = vrot.slane %v1592, 1
    %v4125 = vsel %vm3469, %v1593, %v4124
    %v4126 = vrot.slane %v1594, 7
    %v4127 = vsel %vm3472, %v4126, %v4125
    %v4128 = vrot.slane %v1595, 6
    %v4129 = vsel %vm3475, %v4128, %v4127
    %v4130 = vrot.slane %v1596, 5
    %v4131 = vsel %vm3478, %v4130, %v4129
    %v4132 = vrot.slane %v1597, 4
    %v4133 = vsel %vm3481, %v4132, %v4131
    %v4134 = vrot.slane %v1598, 3
    %v4135 = vsel %vm3484, %v4134, %v4133
    %v4136 = vrot.slane %v1599, 2
    %v4137 = vsel %vm3487, %v4136, %v4135
    %v4138 = vrot.slane %v2904, 1
    %v4139 = vsel %vm3469, %v2905, %v4138
    %v4140 = vrot.slane %v2906, 7
    %v4141 = vsel %vm3472, %v4140, %v4139
    %v4142 = vrot.slane %v2907, 6
    %v4143 = vsel %vm3475, %v4142, %v4141
    %v4144 = vrot.slane %v2908, 5
    %v4145 = vsel %vm3478, %v4144, %v4143
    %v4146 = vrot.slane %v2909, 4
    %v4147 = vsel %vm3481, %v4146, %v4145
    %v4148 = vrot.slane %v2910, 3
    %v4149 = vsel %vm3484, %v4148, %v4147
    %v4150 = vrot.slane %v2911, 2
    %v4151 = vsel %vm3487, %v4150, %v4149
    %v4152 = vsel %vm826, %v4137, 0
    %v4154 = vsel %vm826, %v4151, 0
    %4156 = vmatpush.xpose.msra.mxu0 0.0
    %4157 = vmatpush.xpose.msra.mxu0 0.0
    %4158 = vmatpush.xpose.msra.mxu0 0.0
    %4159 = vmatpush.xpose.msra.mxu0 0.0
    %4160 = vmatpush.xpose.msra.mxu0 0.0
    %4161 = vmatpush.xpose.msra.mxu0 0.0
    %4162 = vmatpush.xpose.msra.mxu0 0.0
    %4163 = vmatpush.xpose.msra.mxu0 0.0
    %4164 = vmatpush.xpose.msra.mxu0 0.0
    %4165 = vmatpush.xpose.msra.mxu0 0.0
    %4166 = vmatpush.xpose.msra.mxu0 0.0
    %4167 = vmatpush.xpose.msra.mxu0 0.0
    %4168 = vmatpush.xpose.msra.mxu0 0.0
    %4169 = vmatpush.xpose.msra.mxu0 0.0
    %4170 = vmatpush.xpose.msra.mxu0 0.0
    %4171 = vmatpush.xpose.msra.mxu0 %v4154
    %4172 = vmatmul.f32.gmra.mxu0 %v4152
    %v4173 = vpop.f32.mrf.mxu0
    %v4174 = vadd.f32 0.0, %v4173
    %4175 = vdwg.mxu0
    %v4176 = vrot.slane %v1600, 1
    %v4177 = vsel %vm3469, %v1601, %v4176
    %v4178 = vrot.slane %v1602, 7
    %v4179 = vsel %vm3472, %v4178, %v4177
    %v4180 = vrot.slane %v1603, 6
    %v4181 = vsel %vm3475, %v4180, %v4179
    %v4182 = vrot.slane %v1604, 5
    %v4183 = vsel %vm3478, %v4182, %v4181
    %v4184 = vrot.slane %v1605, 4
    %v4185 = vsel %vm3481, %v4184, %v4183
    %v4186 = vrot.slane %v1606, 3
    %v4187 = vsel %vm3484, %v4186, %v4185
    %v4188 = vrot.slane %v1607, 2
    %v4189 = vsel %vm3487, %v4188, %v4187
    %v4190 = vrot.slane %v2912, 1
    %v4191 = vsel %vm3469, %v2913, %v4190
    %v4192 = vrot.slane %v2914, 7
    %v4193 = vsel %vm3472, %v4192, %v4191
    %v4194 = vrot.slane %v2915, 6
    %v4195 = vsel %vm3475, %v4194, %v4193
    %v4196 = vrot.slane %v2916, 5
    %v4197 = vsel %vm3478, %v4196, %v4195
    %v4198 = vrot.slane %v2917, 4
    %v4199 = vsel %vm3481, %v4198, %v4197
    %v4200 = vrot.slane %v2918, 3
    %v4201 = vsel %vm3484, %v4200, %v4199
    %v4202 = vrot.slane %v2919, 2
    %v4203 = vsel %vm3487, %v4202, %v4201
    %v4204 = vsel %vm826, %v4189, 0
    %v4206 = vsel %vm826, %v4203, 0
    %4208 = vmatpush.xpose.msra.mxu0 0.0
    %4209 = vmatpush.xpose.msra.mxu0 0.0
    %4210 = vmatpush.xpose.msra.mxu0 0.0
    %4211 = vmatpush.xpose.msra.mxu0 0.0
    %4212 = vmatpush.xpose.msra.mxu0 0.0
    %4213 = vmatpush.xpose.msra.mxu0 0.0
    %4214 = vmatpush.xpose.msra.mxu0 0.0
    %4215 = vmatpush.xpose.msra.mxu0 0.0
    %4216 = vmatpush.xpose.msra.mxu0 0.0
    %4217 = vmatpush.xpose.msra.mxu0 0.0
    %4218 = vmatpush.xpose.msra.mxu0 0.0
    %4219 = vmatpush.xpose.msra.mxu0 0.0
    %4220 = vmatpush.xpose.msra.mxu0 0.0
    %4221 = vmatpush.xpose.msra.mxu0 0.0
    %4222 = vmatpush.xpose.msra.mxu0 0.0
    %4223 = vmatpush.xpose.msra.mxu0 %v4206
    %4224 = vmatmul.f32.gmra.mxu0 %v4204
    %v4225 = vpop.f32.mrf.mxu0
    %v4226 = vadd.f32 0.0, %v4225
    %4227 = vdwg.mxu0
    %v4228 = vsel %vm3739, %v4070, -inf
    %4229 = vmax.xlane.f32.xlu0 %v4228
    %v4230 = vpop.xlane.xlu0 %4229
    %v4231 = vsel %vm3739, %v4122, -inf
    %4232 = vmax.xlane.f32.xlu0 %v4231
    %v4233 = vpop.xlane.xlu0 %4232
    %v4234 = vsel %vm3739, %v4174, -inf
    %4235 = vmax.xlane.f32.xlu0 %v4234
    %v4236 = vpop.xlane.xlu0 %4235
    %v4237 = vsel %vm3739, %v4226, -inf
    %4238 = vmax.xlane.f32.xlu0 %v4237
    %v4239 = vpop.xlane.xlu0 %4238
    %v4240 = vsub.f32 %v4070, %v4230
    %v4241 = vsub.f32 %v4122, %v4233
    %v4242 = vsub.f32 %v4174, %v4236
    %v4243 = vsub.f32 %v4226, %v4239
    %v4244 = vmul.f32 %v4240, 1.442695
    %v4245 = vpow.pop %v4244
    %v4246 = vmul.f32 %v4241, 1.442695
    %v4247 = vpow.pop %v4246
    %v4248 = vmul.f32 %v4242, 1.442695
    %v4249 = vpow.pop %v4248
    %v4250 = vmul.f32 %v4243, 1.442695
    %v4251 = vpow.pop %v4250
    %v4252 = vsel %vm3739, %v4245, 0.0
    %4253 = vadd.xlane.f32.xlu0 %v4252
    %v4254 = vpop.xlane.xlu0 %4253
    %v4255 = vsel %vm3739, %v4247, 0.0
    %4256 = vadd.xlane.f32.xlu0 %v4255
    %v4257 = vpop.xlane.xlu0 %4256
    %v4258 = vsel %vm3739, %v4249, 0.0
    %4259 = vadd.xlane.f32.xlu0 %v4258
    %v4260 = vpop.xlane.xlu0 %4259
    %v4261 = vsel %vm3739, %v4251, 0.0
    %4262 = vadd.xlane.f32.xlu0 %v4261
    %v4263 = vpop.xlane.xlu0 %4262
    %v4264 = vrcp.pop %v4254
    %v4265 = vmul.f32 %v4254, %v4264
    %v4266 = vsub.f32 1.0, %v4265
    %v4267 = vmul.f32 %v4264, %v4266
    %v4268 = vadd.f32 %v4264, %v4267
    %vm4269 = vweird.f32 %v4254
    %vm4270 = vweird.f32 %v4264
    %vm4271 = vmor %vm4269, %vm4270
    %v4272 = vsel %vm4271, %v4264, %v4268
    %v4273 = vand.u32 2147483647, %v4254
    %vm4274 = vcmp.eq.f32.partialorder %v4273, 8.507059e+37
    %v4275 = vand.u32 %v4254, 2147483648
    %v4276 = vor.u32 1.1754944e-38, %v4275
    %v4277 = vsel %vm4274, %v4276, %v4272
    %v4278 = vrcp.pop %v4257
    %v4279 = vmul.f32 %v4257, %v4278
    %v4280 = vsub.f32 1.0, %v4279
    %v4281 = vmul.f32 %v4278, %v4280
    %v4282 = vadd.f32 %v4278, %v4281
    %vm4283 = vweird.f32 %v4257
    %vm4284 = vweird.f32 %v4278
    %vm4285 = vmor %vm4283, %vm4284
    %v4286 = vsel %vm4285, %v4278, %v4282
    %v4287 = vand.u32 2147483647, %v4257
    %vm4288 = vcmp.eq.f32.partialorder %v4287, 8.507059e+37
    %v4289 = vand.u32 %v4257, 2147483648
    %v4290 = vor.u32 1.1754944e-38, %v4289
    %v4291 = vsel %vm4288, %v4290, %v4286
    %v4292 = vrcp.pop %v4260
    %v4293 = vmul.f32 %v4260, %v4292
    %v4294 = vsub.f32 1.0, %v4293
    %v4295 = vmul.f32 %v4292, %v4294
    %v4296 = vadd.f32 %v4292, %v4295
    %vm4297 = vweird.f32 %v4260
    %vm4298 = vweird.f32 %v4292
    %vm4299 = vmor %vm4297, %vm4298
    %v4300 = vsel %vm4299, %v4292, %v4296
    %v4301 = vand.u32 2147483647, %v4260
    %vm4302 = vcmp.eq.f32.partialorder %v4301, 8.507059e+37
    %v4303 = vand.u32 %v4260, 2147483648
    %v4304 = vor.u32 1.1754944e-38, %v4303
    %v4305 = vsel %vm4302, %v4304, %v4300
    %v4306 = vrcp.pop %v4263
    %v4307 = vmul.f32 %v4263, %v4306
    %v4308 = vsub.f32 1.0, %v4307
    %v4309 = vmul.f32 %v4306, %v4308
    %v4310 = vadd.f32 %v4306, %v4309
    %vm4311 = vweird.f32 %v4263
    %vm4312 = vweird.f32 %v4306
    %vm4313 = vmor %vm4311, %vm4312
    %v4314 = vsel %vm4313, %v4306, %v4310
    %v4315 = vand.u32 2147483647, %v4263
    %vm4316 = vcmp.eq.f32.partialorder %v4315, 8.507059e+37
    %v4317 = vand.u32 %v4263, 2147483648
    %v4318 = vor.u32 1.1754944e-38, %v4317
    %v4319 = vsel %vm4316, %v4318, %v4314
    %v4320 = vmul.f32 %v4245, %v4277
    %v4321 = vmul.f32 %v4247, %v4291
    %v4322 = vmul.f32 %v4249, %v4305
    %v4323 = vmul.f32 %v4251, %v4319
    %v4324 = vrot.slane %v3105, 1
    %v4325 = vsel %vm3469, %v3107, %v4324
    %v4326 = vrot.slane %v3109, 7
    %v4327 = vsel %vm3472, %v4326, %v4325
    %v4328 = vrot.slane %v3111, 6
    %v4329 = vsel %vm3475, %v4328, %v4327
    %v4330 = vrot.slane %v3113, 5
    %v4331 = vsel %vm3478, %v4330, %v4329
    %v4332 = vrot.slane %v3115, 4
    %v4333 = vsel %vm3481, %v4332, %v4331
    %v4334 = vrot.slane %v3117, 3
    %v4335 = vsel %vm3484, %v4334, %v4333
    %v4336 = vrot.slane %v3119, 2
    %v4337 = vsel %vm3487, %v4336, %v4335
    %v4340 = vsel %vm3739, %v4320, 0
    %4342 = vmatpush.msra.mxu0 0.0
    %4343 = vmatpush.msra.mxu0 0.0
    %4344 = vmatpush.msra.mxu0 0.0
    %4345 = vmatpush.msra.mxu0 0.0
    %4346 = vmatpush.msra.mxu0 0.0
    %4347 = vmatpush.msra.mxu0 0.0
    %4348 = vmatpush.msra.mxu0 0.0
    %4349 = vmatpush.msra.mxu0 0.0
    %4350 = vmatpush.msra.mxu0 0.0
    %4351 = vmatpush.msra.mxu0 0.0
    %4352 = vmatpush.msra.mxu0 0.0
    %4353 = vmatpush.msra.mxu0 0.0
    %4354 = vmatpush.msra.mxu0 0.0
    %4355 = vmatpush.msra.mxu0 0.0
    %4356 = vmatpush.msra.mxu0 0.0
    %4357 = vmatpush.msra.mxu0 %v4337
    %4358 = vmatmul.f32.gmra.mxu0 %v4340
    %v4359 = vpop.f32.mrf.mxu0
    %v4360 = vadd.f32 0.0, %v4359
    %4361 = vdwg.mxu0
    %v4362 = vrot.slane %v3217, 1
    %v4363 = vsel %vm3469, %v3219, %v4362
    %v4364 = vrot.slane %v3221, 7
    %v4365 = vsel %vm3472, %v4364, %v4363
    %v4366 = vrot.slane %v3223, 6
    %v4367 = vsel %vm3475, %v4366, %v4365
    %v4368 = vrot.slane %v3225, 5
    %v4369 = vsel %vm3478, %v4368, %v4367
    %v4370 = vrot.slane %v3227, 4
    %v4371 = vsel %vm3481, %v4370, %v4369
    %v4372 = vrot.slane %v3229, 3
    %v4373 = vsel %vm3484, %v4372, %v4371
    %v4374 = vrot.slane %v3231, 2
    %v4375 = vsel %vm3487, %v4374, %v4373
    %v4378 = vsel %vm3739, %v4321, 0
    %4380 = vmatpush.msra.mxu0 0.0
    %4381 = vmatpush.msra.mxu0 0.0
    %4382 = vmatpush.msra.mxu0 0.0
    %4383 = vmatpush.msra.mxu0 0.0
    %4384 = vmatpush.msra.mxu0 0.0
    %4385 = vmatpush.msra.mxu0 0.0
    %4386 = vmatpush.msra.mxu0 0.0
    %4387 = vmatpush.msra.mxu0 0.0
    %4388 = vmatpush.msra.mxu0 0.0
    %4389 = vmatpush.msra.mxu0 0.0
    %4390 = vmatpush.msra.mxu0 0.0
    %4391 = vmatpush.msra.mxu0 0.0
    %4392 = vmatpush.msra.mxu0 0.0
    %4393 = vmatpush.msra.mxu0 0.0
    %4394 = vmatpush.msra.mxu0 0.0
    %4395 = vmatpush.msra.mxu0 %v4375
    %4396 = vmatmul.f32.gmra.mxu0 %v4378
    %v4397 = vpop.f32.mrf.mxu0
    %v4398 = vadd.f32 0.0, %v4397
    %4399 = vdwg.mxu0
    %v4400 = vrot.slane %v3329, 1
    %v4401 = vsel %vm3469, %v3331, %v4400
    %v4402 = vrot.slane %v3333, 7
    %v4403 = vsel %vm3472, %v4402, %v4401
    %v4404 = vrot.slane %v3335, 6
    %v4405 = vsel %vm3475, %v4404, %v4403
    %v4406 = vrot.slane %v3337, 5
    %v4407 = vsel %vm3478, %v4406, %v4405
    %v4408 = vrot.slane %v3339, 4
    %v4409 = vsel %vm3481, %v4408, %v4407
    %v4410 = vrot.slane %v3341, 3
    %v4411 = vsel %vm3484, %v4410, %v4409
    %v4412 = vrot.slane %v3343, 2
    %v4413 = vsel %vm3487, %v4412, %v4411
    %v4416 = vsel %vm3739, %v4322, 0
    %4418 = vmatpush.msra.mxu0 0.0
    %4419 = vmatpush.msra.mxu0 0.0
    %4420 = vmatpush.msra.mxu0 0.0
    %4421 = vmatpush.msra.mxu0 0.0
    %4422 = vmatpush.msra.mxu0 0.0
    %4423 = vmatpush.msra.mxu0 0.0
    %4424 = vmatpush.msra.mxu0 0.0
    %4425 = vmatpush.msra.mxu0 0.0
    %4426 = vmatpush.msra.mxu0 0.0
    %4427 = vmatpush.msra.mxu0 0.0
    %4428 = vmatpush.msra.mxu0 0.0
    %4429 = vmatpush.msra.mxu0 0.0
    %4430 = vmatpush.msra.mxu0 0.0
    %4431 = vmatpush.msra.mxu0 0.0
    %4432 = vmatpush.msra.mxu0 0.0
    %4433 = vmatpush.msra.mxu0 %v4413
    %4434 = vmatmul.f32.gmra.mxu0 %v4416
    %v4435 = vpop.f32.mrf.mxu0
    %v4436 = vadd.f32 0.0, %v4435
    %4437 = vdwg.mxu0
    %v4438 = vrot.slane %v3441, 1
    %v4439 = vsel %vm3469, %v3443, %v4438
    %v4440 = vrot.slane %v3445, 7
    %v4441 = vsel %vm3472, %v4440, %v4439
    %v4442 = vrot.slane %v3447, 6
    %v4443 = vsel %vm3475, %v4442, %v4441
    %v4444 = vrot.slane %v3449, 5
    %v4445 = vsel %vm3478, %v4444, %v4443
    %v4446 = vrot.slane %v3451, 4
    %v4447 = vsel %vm3481, %v4446, %v4445
    %v4448 = vrot.slane %v3453, 3
    %v4449 = vsel %vm3484, %v4448, %v4447
    %v4450 = vrot.slane %v3455, 2
    %v4451 = vsel %vm3487, %v4450, %v4449
    %v4454 = vsel %vm3739, %v4323, 0
    %4456 = vmatpush.msra.mxu0 0.0
    %4457 = vmatpush.msra.mxu0 0.0
    %4458 = vmatpush.msra.mxu0 0.0
    %4459 = vmatpush.msra.mxu0 0.0
    %4460 = vmatpush.msra.mxu0 0.0
    %4461 = vmatpush.msra.mxu0 0.0
    %4462 = vmatpush.msra.mxu0 0.0
    %4463 = vmatpush.msra.mxu0 0.0
    %4464 = vmatpush.msra.mxu0 0.0
    %4465 = vmatpush.msra.mxu0 0.0
    %4466 = vmatpush.msra.mxu0 0.0
    %4467 = vmatpush.msra.mxu0 0.0
    %4468 = vmatpush.msra.mxu0 0.0
    %4469 = vmatpush.msra.mxu0 0.0
    %4470 = vmatpush.msra.mxu0 0.0
    %4471 = vmatpush.msra.mxu0 %v4451
    %4472 = vmatmul.f32.gmra.mxu0 %v4454
    %v4473 = vpop.f32.mrf.mxu0
    %v4474 = vadd.f32 0.0, %v4473
    %4475 = vdwg.mxu0
    %v4477 = vrot.slane %v3456, 4
    %v4479 = vsel %vm826, %v4360, 0
    %v4482 = vsel %vm826, %v4398, 0
    %v4485 = vsel %vm826, %v4436, 0
    %v4488 = vsel %vm826, %v4474, 0
    %vm4490 = vcmask 1043456
    %v4491 = vsel %vm4490, %v4477, 0
    %4493 = vmatpush.msra.mxu0 0.0
    %4494 = vmatpush.msra.mxu0 0.0
    %4495 = vmatpush.msra.mxu0 0.0
    %4496 = vmatpush.msra.mxu0 0.0
    %4497 = vmatpush.msra.mxu0 0.0
    %4498 = vmatpush.msra.mxu0 0.0
    %4499 = vmatpush.msra.mxu0 0.0
    %4500 = vmatpush.msra.mxu0 0.0
    %4501 = vmatpush.msra.mxu0 0.0
    %4502 = vmatpush.msra.mxu0 0.0
    %4503 = vmatpush.msra.mxu0 0.0
    %4504 = vmatpush.msra.mxu0 0.0
    %4505 = vmatpush.msra.mxu0 0.0
    %4506 = vmatpush.msra.mxu0 0.0
    %4507 = vmatpush.msra.mxu0 0.0
    %4508 = vmatpush.msra.mxu0 %v4491
    %4509 = vmatmul.f32.gmra.mxu0 %v4479
    %v4510 = vpop.f32.mrf.mxu0
    %v4511 = vadd.f32 0.0, %v4510
    %4512 = vmatmul.f32.gmra.mxu0 %v4482
    %v4513 = vpop.f32.mrf.mxu0
    %v4514 = vadd.f32 0.0, %v4513
    %4515 = vmatmul.f32.gmra.mxu0 %v4485
    %v4516 = vpop.f32.mrf.mxu0
    %v4517 = vadd.f32 0.0, %v4516
    %4518 = vmatmul.f32.gmra.mxu0 %v4488
    %v4519 = vpop.f32.mrf.mxu0
    %v4520 = vadd.f32 0.0, %v4519
    %4521 = vdwg.mxu0
    %v4523 = vsel %vm826, %v3880, 0
    %v4526 = vsel %vm826, %v3926, 0
    %v4529 = vsel %vm826, %v3972, 0
    %v4532 = vsel %vm826, %v4018, 0
    %v4534 = vsel %vm4490, %v3456, 0
    %4536 = vmatpush.msra.mxu0 0.0
    %4537 = vmatpush.msra.mxu0 0.0
    %4538 = vmatpush.msra.mxu0 0.0
    %4539 = vmatpush.msra.mxu0 0.0
    %4540 = vmatpush.msra.mxu0 0.0
    %4541 = vmatpush.msra.mxu0 0.0
    %4542 = vmatpush.msra.mxu0 0.0
    %4543 = vmatpush.msra.mxu0 0.0
    %4544 = vmatpush.msra.mxu0 0.0
    %4545 = vmatpush.msra.mxu0 0.0
    %4546 = vmatpush.msra.mxu0 0.0
    %4547 = vmatpush.msra.mxu0 0.0
    %4548 = vmatpush.msra.mxu0 0.0
    %4549 = vmatpush.msra.mxu0 0.0
    %4550 = vmatpush.msra.mxu0 0.0
    %4551 = vmatpush.msra.mxu0 %v4534
    %4552 = vmatmul.f32.gmra.mxu0 %v4523
    %v4553 = vpop.f32.mrf.mxu0
    %v4554 = vadd.f32 %v4511, %v4553
    %4555 = vmatmul.f32.gmra.mxu0 %v4526
    %v4556 = vpop.f32.mrf.mxu0
    %v4557 = vadd.f32 %v4514, %v4556
    %4558 = vmatmul.f32.gmra.mxu0 %v4529
    %v4559 = vpop.f32.mrf.mxu0
    %v4560 = vadd.f32 %v4517, %v4559
    %4561 = vmatmul.f32.gmra.mxu0 %v4532
    %v4562 = vpop.f32.mrf.mxu0
    %v4563 = vadd.f32 %v4520, %v4562
    %4564 = vdwg.mxu0
    %v4565 = vrot.slane %v1576, 2
    %v4566 = vrot.slane %v1577, 1
    %v4567 = vsel %vm3469, %v4566, %v4565
    %v4568 = vsel %vm3472, %v1578, %v4567
    %v4569 = vrot.slane %v1579, 7
    %v4570 = vsel %vm3475, %v4569, %v4568
    %v4571 = vrot.slane %v1580, 6
    %v4572 = vsel %vm3478, %v4571, %v4570
    %v4573 = vrot.slane %v1581, 5
    %v4574 = vsel %vm3481, %v4573, %v4572
    %v4575 = vrot.slane %v1582, 4
    %v4576 = vsel %vm3484, %v4575, %v4574
    %v4577 = vrot.slane %v1583, 3
    %v4578 = vsel %vm3487, %v4577, %v4576
    %v4579 = vrot.slane %v2888, 2
    %v4580 = vrot.slane %v2889, 1
    %v4581 = vsel %vm3469, %v4580, %v4579
    %v4582 = vsel %vm3472, %v2890, %v4581
    %v4583 = vrot.slane %v2891, 7
    %v4584 = vsel %vm3475, %v4583, %v4582
    %v4585 = vrot.slane %v2892, 6
    %v4586 = vsel %vm3478, %v4585, %v4584
    %v4587 = vrot.slane %v2893, 5
    %v4588 = vsel %vm3481, %v4587, %v4586
    %v4589 = vrot.slane %v2894, 4
    %v4590 = vsel %vm3484, %v4589, %v4588
    %v4591 = vrot.slane %v2895, 3
    %v4592 = vsel %vm3487, %v4591, %v4590
    %v4593 = vsel %vm826, %v4578, 0
    %v4595 = vsel %vm826, %v4592, 0
    %4597 = vmatpush.xpose.msra.mxu0 0.0
    %4598 = vmatpush.xpose.msra.mxu0 0.0
    %4599 = vmatpush.xpose.msra.mxu0 0.0
    %4600 = vmatpush.xpose.msra.mxu0 0.0
    %4601 = vmatpush.xpose.msra.mxu0 0.0
    %4602 = vmatpush.xpose.msra.mxu0 0.0
    %4603 = vmatpush.xpose.msra.mxu0 0.0
    %4604 = vmatpush.xpose.msra.mxu0 0.0
    %4605 = vmatpush.xpose.msra.mxu0 0.0
    %4606 = vmatpush.xpose.msra.mxu0 0.0
    %4607 = vmatpush.xpose.msra.mxu0 0.0
    %4608 = vmatpush.xpose.msra.mxu0 0.0
    %4609 = vmatpush.xpose.msra.mxu0 0.0
    %4610 = vmatpush.xpose.msra.mxu0 0.0
    %4611 = vmatpush.xpose.msra.mxu0 0.0
    %4612 = vmatpush.xpose.msra.mxu0 %v4595
    %4613 = vmatmul.f32.gmra.mxu0 %v4593
    %v4614 = vpop.f32.mrf.mxu0
    %v4615 = vadd.f32 0.0, %v4614
    %4616 = vdwg.mxu0
    %v4617 = vrot.slane %v1584, 2
    %v4618 = vrot.slane %v1585, 1
    %v4619 = vsel %vm3469, %v4618, %v4617
    %v4620 = vsel %vm3472, %v1586, %v4619
    %v4621 = vrot.slane %v1587, 7
    %v4622 = vsel %vm3475, %v4621, %v4620
    %v4623 = vrot.slane %v1588, 6
    %v4624 = vsel %vm3478, %v4623, %v4622
    %v4625 = vrot.slane %v1589, 5
    %v4626 = vsel %vm3481, %v4625, %v4624
    %v4627 = vrot.slane %v1590, 4
    %v4628 = vsel %vm3484, %v4627, %v4626
    %v4629 = vrot.slane %v1591, 3
    %v4630 = vsel %vm3487, %v4629, %v4628
    %v4631 = vrot.slane %v2896, 2
    %v4632 = vrot.slane %v2897, 1
    %v4633 = vsel %vm3469, %v4632, %v4631
    %v4634 = vsel %vm3472, %v2898, %v4633
    %v4635 = vrot.slane %v2899, 7
    %v4636 = vsel %vm3475, %v4635, %v4634
    %v4637 = vrot.slane %v2900, 6
    %v4638 = vsel %vm3478, %v4637, %v4636
    %v4639 = vrot.slane %v2901, 5
    %v4640 = vsel %vm3481, %v4639, %v4638
    %v4641 = vrot.slane %v2902, 4
    %v4642 = vsel %vm3484, %v4641, %v4640
    %v4643 = vrot.slane %v2903, 3
    %v4644 = vsel %vm3487, %v4643, %v4642
    %v4645 = vsel %vm826, %v4630, 0
    %v4647 = vsel %vm826, %v4644, 0
    %4649 = vmatpush.xpose.msra.mxu0 0.0
    %4650 = vmatpush.xpose.msra.mxu0 0.0
    %4651 = vmatpush.xpose.msra.mxu0 0.0
    %4652 = vmatpush.xpose.msra.mxu0 0.0
    %4653 = vmatpush.xpose.msra.mxu0 0.0
    %4654 = vmatpush.xpose.msra.mxu0 0.0
    %4655 = vmatpush.xpose.msra.mxu0 0.0
    %4656 = vmatpush.xpose.msra.mxu0 0.0
    %4657 = vmatpush.xpose.msra.mxu0 0.0
    %4658 = vmatpush.xpose.msra.mxu0 0.0
    %4659 = vmatpush.xpose.msra.mxu0 0.0
    %4660 = vmatpush.xpose.msra.mxu0 0.0
    %4661 = vmatpush.xpose.msra.mxu0 0.0
    %4662 = vmatpush.xpose.msra.mxu0 0.0
    %4663 = vmatpush.xpose.msra.mxu0 0.0
    %4664 = vmatpush.xpose.msra.mxu0 %v4647
    %4665 = vmatmul.f32.gmra.mxu0 %v4645
    %v4666 = vpop.f32.mrf.mxu0
    %v4667 = vadd.f32 0.0, %v4666
    %4668 = vdwg.mxu0
    %v4669 = vrot.slane %v1592, 2
    %v4670 = vrot.slane %v1593, 1
    %v4671 = vsel %vm3469, %v4670, %v4669
    %v4672 = vsel %vm3472, %v1594, %v4671
    %v4673 = vrot.slane %v1595, 7
    %v4674 = vsel %vm3475, %v4673, %v4672
    %v4675 = vrot.slane %v1596, 6
    %v4676 = vsel %vm3478, %v4675, %v4674
    %v4677 = vrot.slane %v1597, 5
    %v4678 = vsel %vm3481, %v4677, %v4676
    %v4679 = vrot.slane %v1598, 4
    %v4680 = vsel %vm3484, %v4679, %v4678
    %v4681 = vrot.slane %v1599, 3
    %v4682 = vsel %vm3487, %v4681, %v4680
    %v4683 = vrot.slane %v2904, 2
    %v4684 = vrot.slane %v2905, 1
    %v4685 = vsel %vm3469, %v4684, %v4683
    %v4686 = vsel %vm3472, %v2906, %v4685
    %v4687 = vrot.slane %v2907, 7
    %v4688 = vsel %vm3475, %v4687, %v4686
    %v4689 = vrot.slane %v2908, 6
    %v4690 = vsel %vm3478, %v4689, %v4688
    %v4691 = vrot.slane %v2909, 5
    %v4692 = vsel %vm3481, %v4691, %v4690
    %v4693 = vrot.slane %v2910, 4
    %v4694 = vsel %vm3484, %v4693, %v4692
    %v4695 = vrot.slane %v2911, 3
    %v4696 = vsel %vm3487, %v4695, %v4694
    %v4697 = vsel %vm826, %v4682, 0
    %v4699 = vsel %vm826, %v4696, 0
    %4701 = vmatpush.xpose.msra.mxu0 0.0
    %4702 = vmatpush.xpose.msra.mxu0 0.0
    %4703 = vmatpush.xpose.msra.mxu0 0.0
    %4704 = vmatpush.xpose.msra.mxu0 0.0
    %4705 = vmatpush.xpose.msra.mxu0 0.0
    %4706 = vmatpush.xpose.msra.mxu0 0.0
    %4707 = vmatpush.xpose.msra.mxu0 0.0
    %4708 = vmatpush.xpose.msra.mxu0 0.0
    %4709 = vmatpush.xpose.msra.mxu0 0.0
    %4710 = vmatpush.xpose.msra.mxu0 0.0
    %4711 = vmatpush.xpose.msra.mxu0 0.0
    %4712 = vmatpush.xpose.msra.mxu0 0.0
    %4713 = vmatpush.xpose.msra.mxu0 0.0
    %4714 = vmatpush.xpose.msra.mxu0 0.0
    %4715 = vmatpush.xpose.msra.mxu0 0.0
    %4716 = vmatpush.xpose.msra.mxu0 %v4699
    %4717 = vmatmul.f32.gmra.mxu0 %v4697
    %v4718 = vpop.f32.mrf.mxu0
    %v4719 = vadd.f32 0.0, %v4718
    %4720 = vdwg.mxu0
    %v4721 = vrot.slane %v1600, 2
    %v4722 = vrot.slane %v1601, 1
    %v4723 = vsel %vm3469, %v4722, %v4721
    %v4724 = vsel %vm3472, %v1602, %v4723
    %v4725 = vrot.slane %v1603, 7
    %v4726 = vsel %vm3475, %v4725, %v4724
    %v4727 = vrot.slane %v1604, 6
    %v4728 = vsel %vm3478, %v4727, %v4726
    %v4729 = vrot.slane %v1605, 5
    %v4730 = vsel %vm3481, %v4729, %v4728
    %v4731 = vrot.slane %v1606, 4
    %v4732 = vsel %vm3484, %v4731, %v4730
    %v4733 = vrot.slane %v1607, 3
    %v4734 = vsel %vm3487, %v4733, %v4732
    %v4735 = vrot.slane %v2912, 2
    %v4736 = vrot.slane %v2913, 1
    %v4737 = vsel %vm3469, %v4736, %v4735
    %v4738 = vsel %vm3472, %v2914, %v4737
    %v4739 = vrot.slane %v2915, 7
    %v4740 = vsel %vm3475, %v4739, %v4738
    %v4741 = vrot.slane %v2916, 6
    %v4742 = vsel %vm3478, %v4741, %v4740
    %v4743 = vrot.slane %v2917, 5
    %v4744 = vsel %vm3481, %v4743, %v4742
    %v4745 = vrot.slane %v2918, 4
    %v4746 = vsel %vm3484, %v4745, %v4744
    %v4747 = vrot.slane %v2919, 3
    %v4748 = vsel %vm3487, %v4747, %v4746
    %v4749 = vsel %vm826, %v4734, 0
    %v4751 = vsel %vm826, %v4748, 0
    %4753 = vmatpush.xpose.msra.mxu0 0.0
    %4754 = vmatpush.xpose.msra.mxu0 0.0
    %4755 = vmatpush.xpose.msra.mxu0 0.0
    %4756 = vmatpush.xpose.msra.mxu0 0.0
    %4757 = vmatpush.xpose.msra.mxu0 0.0
    %4758 = vmatpush.xpose.msra.mxu0 0.0
    %4759 = vmatpush.xpose.msra.mxu0 0.0
    %4760 = vmatpush.xpose.msra.mxu0 0.0
    %4761 = vmatpush.xpose.msra.mxu0 0.0
    %4762 = vmatpush.xpose.msra.mxu0 0.0
    %4763 = vmatpush.xpose.msra.mxu0 0.0
    %4764 = vmatpush.xpose.msra.mxu0 0.0
    %4765 = vmatpush.xpose.msra.mxu0 0.0
    %4766 = vmatpush.xpose.msra.mxu0 0.0
    %4767 = vmatpush.xpose.msra.mxu0 0.0
    %4768 = vmatpush.xpose.msra.mxu0 %v4751
    %4769 = vmatmul.f32.gmra.mxu0 %v4749
    %v4770 = vpop.f32.mrf.mxu0
    %v4771 = vadd.f32 0.0, %v4770
    %4772 = vdwg.mxu0
    %v4773 = vsel %vm3739, %v4615, -inf
    %4774 = vmax.xlane.f32.xlu0 %v4773
    %v4775 = vpop.xlane.xlu0 %4774
    %v4776 = vsel %vm3739, %v4667, -inf
    %4777 = vmax.xlane.f32.xlu0 %v4776
    %v4778 = vpop.xlane.xlu0 %4777
    %v4779 = vsel %vm3739, %v4719, -inf
    %4780 = vmax.xlane.f32.xlu0 %v4779
    %v4781 = vpop.xlane.xlu0 %4780
    %v4782 = vsel %vm3739, %v4771, -inf
    %4783 = vmax.xlane.f32.xlu0 %v4782
    %v4784 = vpop.xlane.xlu0 %4783
    %v4785 = vsub.f32 %v4615, %v4775
    %v4786 = vsub.f32 %v4667, %v4778
    %v4787 = vsub.f32 %v4719, %v4781
    %v4788 = vsub.f32 %v4771, %v4784
    %v4789 = vmul.f32 %v4785, 1.442695
    %v4790 = vpow.pop %v4789
    %v4791 = vmul.f32 %v4786, 1.442695
    %v4792 = vpow.pop %v4791
    %v4793 = vmul.f32 %v4787, 1.442695
    %v4794 = vpow.pop %v4793
    %v4795 = vmul.f32 %v4788, 1.442695
    %v4796 = vpow.pop %v4795
    %v4797 = vsel %vm3739, %v4790, 0.0
    %4798 = vadd.xlane.f32.xlu0 %v4797
    %v4799 = vpop.xlane.xlu0 %4798
    %v4800 = vsel %vm3739, %v4792, 0.0
    %4801 = vadd.xlane.f32.xlu0 %v4800
    %v4802 = vpop.xlane.xlu0 %4801
    %v4803 = vsel %vm3739, %v4794, 0.0
    %4804 = vadd.xlane.f32.xlu0 %v4803
    %v4805 = vpop.xlane.xlu0 %4804
    %v4806 = vsel %vm3739, %v4796, 0.0
    %4807 = vadd.xlane.f32.xlu0 %v4806
    %v4808 = vpop.xlane.xlu0 %4807
    %v4809 = vrcp.pop %v4799
    %v4810 = vmul.f32 %v4799, %v4809
    %v4811 = vsub.f32 1.0, %v4810
    %v4812 = vmul.f32 %v4809, %v4811
    %v4813 = vadd.f32 %v4809, %v4812
    %vm4814 = vweird.f32 %v4799
    %vm4815 = vweird.f32 %v4809
    %vm4816 = vmor %vm4814, %vm4815
    %v4817 = vsel %vm4816, %v4809, %v4813
    %v4818 = vand.u32 2147483647, %v4799
    %vm4819 = vcmp.eq.f32.partialorder %v4818, 8.507059e+37
    %v4820 = vand.u32 %v4799, 2147483648
    %v4821 = vor.u32 1.1754944e-38, %v4820
    %v4822 = vsel %vm4819, %v4821, %v4817
    %v4823 = vrcp.pop %v4802
    %v4824 = vmul.f32 %v4802, %v4823
    %v4825 = vsub.f32 1.0, %v4824
    %v4826 = vmul.f32 %v4823, %v4825
    %v4827 = vadd.f32 %v4823, %v4826
    %vm4828 = vweird.f32 %v4802
    %vm4829 = vweird.f32 %v4823
    %vm4830 = vmor %vm4828, %vm4829
    %v4831 = vsel %vm4830, %v4823, %v4827
    %v4832 = vand.u32 2147483647, %v4802
    %vm4833 = vcmp.eq.f32.partialorder %v4832, 8.507059e+37
    %v4834 = vand.u32 %v4802, 2147483648
    %v4835 = vor.u32 1.1754944e-38, %v4834
    %v4836 = vsel %vm4833, %v4835, %v4831
    %v4837 = vrcp.pop %v4805
    %v4838 = vmul.f32 %v4805, %v4837
    %v4839 = vsub.f32 1.0, %v4838
    %v4840 = vmul.f32 %v4837, %v4839
    %v4841 = vadd.f32 %v4837, %v4840
    %vm4842 = vweird.f32 %v4805
    %vm4843 = vweird.f32 %v4837
    %vm4844 = vmor %vm4842, %vm4843
    %v4845 = vsel %vm4844, %v4837, %v4841
    %v4846 = vand.u32 2147483647, %v4805
    %vm4847 = vcmp.eq.f32.partialorder %v4846, 8.507059e+37
    %v4848 = vand.u32 %v4805, 2147483648
    %v4849 = vor.u32 1.1754944e-38, %v4848
    %v4850 = vsel %vm4847, %v4849, %v4845
    %v4851 = vrcp.pop %v4808
    %v4852 = vmul.f32 %v4808, %v4851
    %v4853 = vsub.f32 1.0, %v4852
    %v4854 = vmul.f32 %v4851, %v4853
    %v4855 = vadd.f32 %v4851, %v4854
    %vm4856 = vweird.f32 %v4808
    %vm4857 = vweird.f32 %v4851
    %vm4858 = vmor %vm4856, %vm4857
    %v4859 = vsel %vm4858, %v4851, %v4855
    %v4860 = vand.u32 2147483647, %v4808
    %vm4861 = vcmp.eq.f32.partialorder %v4860, 8.507059e+37
    %v4862 = vand.u32 %v4808, 2147483648
    %v4863 = vor.u32 1.1754944e-38, %v4862
    %v4864 = vsel %vm4861, %v4863, %v4859
    %v4865 = vmul.f32 %v4790, %v4822
    %v4866 = vmul.f32 %v4792, %v4836
    %v4867 = vmul.f32 %v4794, %v4850
    %v4868 = vmul.f32 %v4796, %v4864
    %v4869 = vrot.slane %v3105, 2
    %v4870 = vrot.slane %v3107, 1
    %v4871 = vsel %vm3469, %v4870, %v4869
    %v4872 = vsel %vm3472, %v3109, %v4871
    %v4873 = vrot.slane %v3111, 7
    %v4874 = vsel %vm3475, %v4873, %v4872
    %v4875 = vrot.slane %v3113, 6
    %v4876 = vsel %vm3478, %v4875, %v4874
    %v4877 = vrot.slane %v3115, 5
    %v4878 = vsel %vm3481, %v4877, %v4876
    %v4879 = vrot.slane %v3117, 4
    %v4880 = vsel %vm3484, %v4879, %v4878
    %v4881 = vrot.slane %v3119, 3
    %v4882 = vsel %vm3487, %v4881, %v4880
    %v4885 = vsel %vm3739, %v4865, 0
    %4887 = vmatpush.msra.mxu0 0.0
    %4888 = vmatpush.msra.mxu0 0.0
    %4889 = vmatpush.msra.mxu0 0.0
    %4890 = vmatpush.msra.mxu0 0.0
    %4891 = vmatpush.msra.mxu0 0.0
    %4892 = vmatpush.msra.mxu0 0.0
    %4893 = vmatpush.msra.mxu0 0.0
    %4894 = vmatpush.msra.mxu0 0.0
    %4895 = vmatpush.msra.mxu0 0.0
    %4896 = vmatpush.msra.mxu0 0.0
    %4897 = vmatpush.msra.mxu0 0.0
    %4898 = vmatpush.msra.mxu0 0.0
    %4899 = vmatpush.msra.mxu0 0.0
    %4900 = vmatpush.msra.mxu0 0.0
    %4901 = vmatpush.msra.mxu0 0.0
    %4902 = vmatpush.msra.mxu0 %v4882
    %4903 = vmatmul.f32.gmra.mxu0 %v4885
    %v4904 = vpop.f32.mrf.mxu0
    %v4905 = vadd.f32 0.0, %v4904
    %4906 = vdwg.mxu0
    %v4907 = vrot.slane %v3217, 2
    %v4908 = vrot.slane %v3219, 1
    %v4909 = vsel %vm3469, %v4908, %v4907
    %v4910 = vsel %vm3472, %v3221, %v4909
    %v4911 = vrot.slane %v3223, 7
    %v4912 = vsel %vm3475, %v4911, %v4910
    %v4913 = vrot.slane %v3225, 6
    %v4914 = vsel %vm3478, %v4913, %v4912
    %v4915 = vrot.slane %v3227, 5
    %v4916 = vsel %vm3481, %v4915, %v4914
    %v4917 = vrot.slane %v3229, 4
    %v4918 = vsel %vm3484, %v4917, %v4916
    %v4919 = vrot.slane %v3231, 3
    %v4920 = vsel %vm3487, %v4919, %v4918
    %v4923 = vsel %vm3739, %v4866, 0
    %4925 = vmatpush.msra.mxu0 0.0
    %4926 = vmatpush.msra.mxu0 0.0
    %4927 = vmatpush.msra.mxu0 0.0
    %4928 = vmatpush.msra.mxu0 0.0
    %4929 = vmatpush.msra.mxu0 0.0
    %4930 = vmatpush.msra.mxu0 0.0
    %4931 = vmatpush.msra.mxu0 0.0
    %4932 = vmatpush.msra.mxu0 0.0
    %4933 = vmatpush.msra.mxu0 0.0
    %4934 = vmatpush.msra.mxu0 0.0
    %4935 = vmatpush.msra.mxu0 0.0
    %4936 = vmatpush.msra.mxu0 0.0
    %4937 = vmatpush.msra.mxu0 0.0
    %4938 = vmatpush.msra.mxu0 0.0
    %4939 = vmatpush.msra.mxu0 0.0
    %4940 = vmatpush.msra.mxu0 %v4920
    %4941 = vmatmul.f32.gmra.mxu0 %v4923
    %v4942 = vpop.f32.mrf.mxu0
    %v4943 = vadd.f32 0.0, %v4942
    %4944 = vdwg.mxu0
    %v4945 = vrot.slane %v3329, 2
    %v4946 = vrot.slane %v3331, 1
    %v4947 = vsel %vm3469, %v4946, %v4945
    %v4948 = vsel %vm3472, %v3333, %v4947
    %v4949 = vrot.slane %v3335, 7
    %v4950 = vsel %vm3475, %v4949, %v4948
    %v4951 = vrot.slane %v3337, 6
    %v4952 = vsel %vm3478, %v4951, %v4950
    %v4953 = vrot.slane %v3339, 5
    %v4954 = vsel %vm3481, %v4953, %v4952
    %v4955 = vrot.slane %v3341, 4
    %v4956 = vsel %vm3484, %v4955, %v4954
    %v4957 = vrot.slane %v3343, 3
    %v4958 = vsel %vm3487, %v4957, %v4956
    %v4961 = vsel %vm3739, %v4867, 0
    %4963 = vmatpush.msra.mxu0 0.0
    %4964 = vmatpush.msra.mxu0 0.0
    %4965 = vmatpush.msra.mxu0 0.0
    %4966 = vmatpush.msra.mxu0 0.0
    %4967 = vmatpush.msra.mxu0 0.0
    %4968 = vmatpush.msra.mxu0 0.0
    %4969 = vmatpush.msra.mxu0 0.0
    %4970 = vmatpush.msra.mxu0 0.0
    %4971 = vmatpush.msra.mxu0 0.0
    %4972 = vmatpush.msra.mxu0 0.0
    %4973 = vmatpush.msra.mxu0 0.0
    %4974 = vmatpush.msra.mxu0 0.0
    %4975 = vmatpush.msra.mxu0 0.0
    %4976 = vmatpush.msra.mxu0 0.0
    %4977 = vmatpush.msra.mxu0 0.0
    %4978 = vmatpush.msra.mxu0 %v4958
    %4979 = vmatmul.f32.gmra.mxu0 %v4961
    %v4980 = vpop.f32.mrf.mxu0
    %v4981 = vadd.f32 0.0, %v4980
    %4982 = vdwg.mxu0
    %v4983 = vrot.slane %v3441, 2
    %v4984 = vrot.slane %v3443, 1
    %v4985 = vsel %vm3469, %v4984, %v4983
    %v4986 = vsel %vm3472, %v3445, %v4985
    %v4987 = vrot.slane %v3447, 7
    %v4988 = vsel %vm3475, %v4987, %v4986
    %v4989 = vrot.slane %v3449, 6
    %v4990 = vsel %vm3478, %v4989, %v4988
    %v4991 = vrot.slane %v3451, 5
    %v4992 = vsel %vm3481, %v4991, %v4990
    %v4993 = vrot.slane %v3453, 4
    %v4994 = vsel %vm3484, %v4993, %v4992
    %v4995 = vrot.slane %v3455, 3
    %v4996 = vsel %vm3487, %v4995, %v4994
    %v4999 = vsel %vm3739, %v4868, 0
    %5001 = vmatpush.msra.mxu0 0.0
    %5002 = vmatpush.msra.mxu0 0.0
    %5003 = vmatpush.msra.mxu0 0.0
    %5004 = vmatpush.msra.mxu0 0.0
    %5005 = vmatpush.msra.mxu0 0.0
    %5006 = vmatpush.msra.mxu0 0.0
    %5007 = vmatpush.msra.mxu0 0.0
    %5008 = vmatpush.msra.mxu0 0.0
    %5009 = vmatpush.msra.mxu0 0.0
    %5010 = vmatpush.msra.mxu0 0.0
    %5011 = vmatpush.msra.mxu0 0.0
    %5012 = vmatpush.msra.mxu0 0.0
    %5013 = vmatpush.msra.mxu0 0.0
    %5014 = vmatpush.msra.mxu0 0.0
    %5015 = vmatpush.msra.mxu0 0.0
    %5016 = vmatpush.msra.mxu0 %v4996
    %5017 = vmatmul.f32.gmra.mxu0 %v4999
    %v5018 = vpop.f32.mrf.mxu0
    %v5019 = vadd.f32 0.0, %v5018
    %5020 = vdwg.mxu0
    %v5022 = vsel %vm826, %v4905, 0
    %v5025 = vsel %vm826, %v4943, 0
    %v5028 = vsel %vm826, %v4981, 0
    %v5031 = vsel %vm826, %v5019, 0
    %v5034 = vsel %vm4490, %v3457, 0
    %5036 = vmatpush.msra.mxu0 0.0
    %5037 = vmatpush.msra.mxu0 0.0
    %5038 = vmatpush.msra.mxu0 0.0
    %5039 = vmatpush.msra.mxu0 0.0
    %5040 = vmatpush.msra.mxu0 0.0
    %5041 = vmatpush.msra.mxu0 0.0
    %5042 = vmatpush.msra.mxu0 0.0
    %5043 = vmatpush.msra.mxu0 0.0
    %5044 = vmatpush.msra.mxu0 0.0
    %5045 = vmatpush.msra.mxu0 0.0
    %5046 = vmatpush.msra.mxu0 0.0
    %5047 = vmatpush.msra.mxu0 0.0
    %5048 = vmatpush.msra.mxu0 0.0
    %5049 = vmatpush.msra.mxu0 0.0
    %5050 = vmatpush.msra.mxu0 0.0
    %5051 = vmatpush.msra.mxu0 %v5034
    %5052 = vmatmul.f32.gmra.mxu0 %v5022
    %v5053 = vpop.f32.mrf.mxu0
    %v5054 = vadd.f32 0.0, %v5053
    %5055 = vmatmul.f32.gmra.mxu0 %v5025
    %v5056 = vpop.f32.mrf.mxu0
    %v5057 = vadd.f32 0.0, %v5056
    %5058 = vmatmul.f32.gmra.mxu0 %v5028
    %v5059 = vpop.f32.mrf.mxu0
    %v5060 = vadd.f32 0.0, %v5059
    %5061 = vmatmul.f32.gmra.mxu0 %v5031
    %v5062 = vpop.f32.mrf.mxu0
    %v5063 = vadd.f32 0.0, %v5062
    %5064 = vdwg.mxu0
    %v5065 = vadd.f32 %v4554, %v5054
    %v5066 = vadd.f32 %v4557, %v5057
    %v5067 = vadd.f32 %v4560, %v5060
    %v5068 = vadd.f32 %v4563, %v5063
    %v5069 = vrot.slane %v1576, 3
    %v5070 = vrot.slane %v1577, 2
    %v5071 = vsel %vm3469, %v5070, %v5069
    %v5072 = vrot.slane %v1578, 1
    %v5073 = vsel %vm3472, %v5072, %v5071
    %v5074 = vsel %vm3475, %v1579, %v5073
    %v5075 = vrot.slane %v1580, 7
    %v5076 = vsel %vm3478, %v5075, %v5074
    %v5077 = vrot.slane %v1581, 6
    %v5078 = vsel %vm3481, %v5077, %v5076
    %v5079 = vrot.slane %v1582, 5
    %v5080 = vsel %vm3484, %v5079, %v5078
    %v5081 = vrot.slane %v1583, 4
    %v5082 = vsel %vm3487, %v5081, %v5080
    %v5083 = vrot.slane %v2888, 3
    %v5084 = vrot.slane %v2889, 2
    %v5085 = vsel %vm3469, %v5084, %v5083
    %v5086 = vrot.slane %v2890, 1
    %v5087 = vsel %vm3472, %v5086, %v5085
    %v5088 = vsel %vm3475, %v2891, %v5087
    %v5089 = vrot.slane %v2892, 7
    %v5090 = vsel %vm3478, %v5089, %v5088
    %v5091 = vrot.slane %v2893, 6
    %v5092 = vsel %vm3481, %v5091, %v5090
    %v5093 = vrot.slane %v2894, 5
    %v5094 = vsel %vm3484, %v5093, %v5092
    %v5095 = vrot.slane %v2895, 4
    %v5096 = vsel %vm3487, %v5095, %v5094
    %v5097 = vsel %vm826, %v5082, 0
    %v5099 = vsel %vm826, %v5096, 0
    %5101 = vmatpush.xpose.msra.mxu0 0.0
    %5102 = vmatpush.xpose.msra.mxu0 0.0
    %5103 = vmatpush.xpose.msra.mxu0 0.0
    %5104 = vmatpush.xpose.msra.mxu0 0.0
    %5105 = vmatpush.xpose.msra.mxu0 0.0
    %5106 = vmatpush.xpose.msra.mxu0 0.0
    %5107 = vmatpush.xpose.msra.mxu0 0.0
    %5108 = vmatpush.xpose.msra.mxu0 0.0
    %5109 = vmatpush.xpose.msra.mxu0 0.0
    %5110 = vmatpush.xpose.msra.mxu0 0.0
    %5111 = vmatpush.xpose.msra.mxu0 0.0
    %5112 = vmatpush.xpose.msra.mxu0 0.0
    %5113 = vmatpush.xpose.msra.mxu0 0.0
    %5114 = vmatpush.xpose.msra.mxu0 0.0
    %5115 = vmatpush.xpose.msra.mxu0 0.0
    %5116 = vmatpush.xpose.msra.mxu0 %v5099
    %5117 = vmatmul.f32.gmra.mxu0 %v5097
    %v5118 = vpop.f32.mrf.mxu0
    %v5119 = vadd.f32 0.0, %v5118
    %5120 = vdwg.mxu0
    %v5121 = vrot.slane %v1584, 3
    %v5122 = vrot.slane %v1585, 2
    %v5123 = vsel %vm3469, %v5122, %v5121
    %v5124 = vrot.slane %v1586, 1
    %v5125 = vsel %vm3472, %v5124, %v5123
    %v5126 = vsel %vm3475, %v1587, %v5125
    %v5127 = vrot.slane %v1588, 7
    %v5128 = vsel %vm3478, %v5127, %v5126
    %v5129 = vrot.slane %v1589, 6
    %v5130 = vsel %vm3481, %v5129, %v5128
    %v5131 = vrot.slane %v1590, 5
    %v5132 = vsel %vm3484, %v5131, %v5130
    %v5133 = vrot.slane %v1591, 4
    %v5134 = vsel %vm3487, %v5133, %v5132
    %v5135 = vrot.slane %v2896, 3
    %v5136 = vrot.slane %v2897, 2
    %v5137 = vsel %vm3469, %v5136, %v5135
    %v5138 = vrot.slane %v2898, 1
    %v5139 = vsel %vm3472, %v5138, %v5137
    %v5140 = vsel %vm3475, %v2899, %v5139
    %v5141 = vrot.slane %v2900, 7
    %v5142 = vsel %vm3478, %v5141, %v5140
    %v5143 = vrot.slane %v2901, 6
    %v5144 = vsel %vm3481, %v5143, %v5142
    %v5145 = vrot.slane %v2902, 5
    %v5146 = vsel %vm3484, %v5145, %v5144
    %v5147 = vrot.slane %v2903, 4
    %v5148 = vsel %vm3487, %v5147, %v5146
    %v5149 = vsel %vm826, %v5134, 0
    %v5151 = vsel %vm826, %v5148, 0
    %5153 = vmatpush.xpose.msra.mxu0 0.0
    %5154 = vmatpush.xpose.msra.mxu0 0.0
    %5155 = vmatpush.xpose.msra.mxu0 0.0
    %5156 = vmatpush.xpose.msra.mxu0 0.0
    %5157 = vmatpush.xpose.msra.mxu0 0.0
    %5158 = vmatpush.xpose.msra.mxu0 0.0
    %5159 = vmatpush.xpose.msra.mxu0 0.0
    %5160 = vmatpush.xpose.msra.mxu0 0.0
    %5161 = vmatpush.xpose.msra.mxu0 0.0
    %5162 = vmatpush.xpose.msra.mxu0 0.0
    %5163 = vmatpush.xpose.msra.mxu0 0.0
    %5164 = vmatpush.xpose.msra.mxu0 0.0
    %5165 = vmatpush.xpose.msra.mxu0 0.0
    %5166 = vmatpush.xpose.msra.mxu0 0.0
    %5167 = vmatpush.xpose.msra.mxu0 0.0
    %5168 = vmatpush.xpose.msra.mxu0 %v5151
    %5169 = vmatmul.f32.gmra.mxu0 %v5149
    %v5170 = vpop.f32.mrf.mxu0
    %v5171 = vadd.f32 0.0, %v5170
    %5172 = vdwg.mxu0
    %v5173 = vrot.slane %v1592, 3
    %v5174 = vrot.slane %v1593, 2
    %v5175 = vsel %vm3469, %v5174, %v5173
    %v5176 = vrot.slane %v1594, 1
    %v5177 = vsel %vm3472, %v5176, %v5175
    %v5178 = vsel %vm3475, %v1595, %v5177
    %v5179 = vrot.slane %v1596, 7
    %v5180 = vsel %vm3478, %v5179, %v5178
    %v5181 = vrot.slane %v1597, 6
    %v5182 = vsel %vm3481, %v5181, %v5180
    %v5183 = vrot.slane %v1598, 5
    %v5184 = vsel %vm3484, %v5183, %v5182
    %v5185 = vrot.slane %v1599, 4
    %v5186 = vsel %vm3487, %v5185, %v5184
    %v5187 = vrot.slane %v2904, 3
    %v5188 = vrot.slane %v2905, 2
    %v5189 = vsel %vm3469, %v5188, %v5187
    %v5190 = vrot.slane %v2906, 1
    %v5191 = vsel %vm3472, %v5190, %v5189
    %v5192 = vsel %vm3475, %v2907, %v5191
    %v5193 = vrot.slane %v2908, 7
    %v5194 = vsel %vm3478, %v5193, %v5192
    %v5195 = vrot.slane %v2909, 6
    %v5196 = vsel %vm3481, %v5195, %v5194
    %v5197 = vrot.slane %v2910, 5
    %v5198 = vsel %vm3484, %v5197, %v5196
    %v5199 = vrot.slane %v2911, 4
    %v5200 = vsel %vm3487, %v5199, %v5198
    %v5201 = vsel %vm826, %v5186, 0
    %v5203 = vsel %vm826, %v5200, 0
    %5205 = vmatpush.xpose.msra.mxu0 0.0
    %5206 = vmatpush.xpose.msra.mxu0 0.0
    %5207 = vmatpush.xpose.msra.mxu0 0.0
    %5208 = vmatpush.xpose.msra.mxu0 0.0
    %5209 = vmatpush.xpose.msra.mxu0 0.0
    %5210 = vmatpush.xpose.msra.mxu0 0.0
    %5211 = vmatpush.xpose.msra.mxu0 0.0
    %5212 = vmatpush.xpose.msra.mxu0 0.0
    %5213 = vmatpush.xpose.msra.mxu0 0.0
    %5214 = vmatpush.xpose.msra.mxu0 0.0
    %5215 = vmatpush.xpose.msra.mxu0 0.0
    %5216 = vmatpush.xpose.msra.mxu0 0.0
    %5217 = vmatpush.xpose.msra.mxu0 0.0
    %5218 = vmatpush.xpose.msra.mxu0 0.0
    %5219 = vmatpush.xpose.msra.mxu0 0.0
    %5220 = vmatpush.xpose.msra.mxu0 %v5203
    %5221 = vmatmul.f32.gmra.mxu0 %v5201
    %v5222 = vpop.f32.mrf.mxu0
    %v5223 = vadd.f32 0.0, %v5222
    %5224 = vdwg.mxu0
    %v5225 = vrot.slane %v1600, 3
    %v5226 = vrot.slane %v1601, 2
    %v5227 = vsel %vm3469, %v5226, %v5225
    %v5228 = vrot.slane %v1602, 1
    %v5229 = vsel %vm3472, %v5228, %v5227
    %v5230 = vsel %vm3475, %v1603, %v5229
    %v5231 = vrot.slane %v1604, 7
    %v5232 = vsel %vm3478, %v5231, %v5230
    %v5233 = vrot.slane %v1605, 6
    %v5234 = vsel %vm3481, %v5233, %v5232
    %v5235 = vrot.slane %v1606, 5
    %v5236 = vsel %vm3484, %v5235, %v5234
    %v5237 = vrot.slane %v1607, 4
    %v5238 = vsel %vm3487, %v5237, %v5236
    %v5239 = vrot.slane %v2912, 3
    %v5240 = vrot.slane %v2913, 2
    %v5241 = vsel %vm3469, %v5240, %v5239
    %v5242 = vrot.slane %v2914, 1
    %v5243 = vsel %vm3472, %v5242, %v5241
    %v5244 = vsel %vm3475, %v2915, %v5243
    %v5245 = vrot.slane %v2916, 7
    %v5246 = vsel %vm3478, %v5245, %v5244
    %v5247 = vrot.slane %v2917, 6
    %v5248 = vsel %vm3481, %v5247, %v5246
    %v5249 = vrot.slane %v2918, 5
    %v5250 = vsel %vm3484, %v5249, %v5248
    %v5251 = vrot.slane %v2919, 4
    %v5252 = vsel %vm3487, %v5251, %v5250
    %v5253 = vsel %vm826, %v5238, 0
    %v5255 = vsel %vm826, %v5252, 0
    %5257 = vmatpush.xpose.msra.mxu0 0.0
    %5258 = vmatpush.xpose.msra.mxu0 0.0
    %5259 = vmatpush.xpose.msra.mxu0 0.0
    %5260 = vmatpush.xpose.msra.mxu0 0.0
    %5261 = vmatpush.xpose.msra.mxu0 0.0
    %5262 = vmatpush.xpose.msra.mxu0 0.0
    %5263 = vmatpush.xpose.msra.mxu0 0.0
    %5264 = vmatpush.xpose.msra.mxu0 0.0
    %5265 = vmatpush.xpose.msra.mxu0 0.0
    %5266 = vmatpush.xpose.msra.mxu0 0.0
    %5267 = vmatpush.xpose.msra.mxu0 0.0
    %5268 = vmatpush.xpose.msra.mxu0 0.0
    %5269 = vmatpush.xpose.msra.mxu0 0.0
    %5270 = vmatpush.xpose.msra.mxu0 0.0
    %5271 = vmatpush.xpose.msra.mxu0 0.0
    %5272 = vmatpush.xpose.msra.mxu0 %v5255
    %5273 = vmatmul.f32.gmra.mxu0 %v5253
    %v5274 = vpop.f32.mrf.mxu0
    %v5275 = vadd.f32 0.0, %v5274
    %5276 = vdwg.mxu0
    %v5277 = vsel %vm3739, %v5119, -inf
    %5278 = vmax.xlane.f32.xlu0 %v5277
    %v5279 = vpop.xlane.xlu0 %5278
    %v5280 = vsel %vm3739, %v5171, -inf
    %5281 = vmax.xlane.f32.xlu0 %v5280
    %v5282 = vpop.xlane.xlu0 %5281
    %v5283 = vsel %vm3739, %v5223, -inf
    %5284 = vmax.xlane.f32.xlu0 %v5283
    %v5285 = vpop.xlane.xlu0 %5284
    %v5286 = vsel %vm3739, %v5275, -inf
    %5287 = vmax.xlane.f32.xlu0 %v5286
    %v5288 = vpop.xlane.xlu0 %5287
    %v5289 = vsub.f32 %v5119, %v5279
    %v5290 = vsub.f32 %v5171, %v5282
    %v5291 = vsub.f32 %v5223, %v5285
    %v5292 = vsub.f32 %v5275, %v5288
    %v5293 = vmul.f32 %v5289, 1.442695
    %v5294 = vpow.pop %v5293
    %v5295 = vmul.f32 %v5290, 1.442695
    %v5296 = vpow.pop %v5295
    %v5297 = vmul.f32 %v5291, 1.442695
    %v5298 = vpow.pop %v5297
    %v5299 = vmul.f32 %v5292, 1.442695
    %v5300 = vpow.pop %v5299
    %v5301 = vsel %vm3739, %v5294, 0.0
    %5302 = vadd.xlane.f32.xlu0 %v5301
    %v5303 = vpop.xlane.xlu0 %5302
    %v5304 = vsel %vm3739, %v5296, 0.0
    %5305 = vadd.xlane.f32.xlu0 %v5304
    %v5306 = vpop.xlane.xlu0 %5305
    %v5307 = vsel %vm3739, %v5298, 0.0
    %5308 = vadd.xlane.f32.xlu0 %v5307
    %v5309 = vpop.xlane.xlu0 %5308
    %v5310 = vsel %vm3739, %v5300, 0.0
    %5311 = vadd.xlane.f32.xlu0 %v5310
    %v5312 = vpop.xlane.xlu0 %5311
    %v5313 = vrcp.pop %v5303
    %v5314 = vmul.f32 %v5303, %v5313
    %v5315 = vsub.f32 1.0, %v5314
    %v5316 = vmul.f32 %v5313, %v5315
    %v5317 = vadd.f32 %v5313, %v5316
    %vm5318 = vweird.f32 %v5303
    %vm5319 = vweird.f32 %v5313
    %vm5320 = vmor %vm5318, %vm5319
    %v5321 = vsel %vm5320, %v5313, %v5317
    %v5322 = vand.u32 2147483647, %v5303
    %vm5323 = vcmp.eq.f32.partialorder %v5322, 8.507059e+37
    %v5324 = vand.u32 %v5303, 2147483648
    %v5325 = vor.u32 1.1754944e-38, %v5324
    %v5326 = vsel %vm5323, %v5325, %v5321
    %v5327 = vrcp.pop %v5306
    %v5328 = vmul.f32 %v5306, %v5327
    %v5329 = vsub.f32 1.0, %v5328
    %v5330 = vmul.f32 %v5327, %v5329
    %v5331 = vadd.f32 %v5327, %v5330
    %vm5332 = vweird.f32 %v5306
    %vm5333 = vweird.f32 %v5327
    %vm5334 = vmor %vm5332, %vm5333
    %v5335 = vsel %vm5334, %v5327, %v5331
    %v5336 = vand.u32 2147483647, %v5306
    %vm5337 = vcmp.eq.f32.partialorder %v5336, 8.507059e+37
    %v5338 = vand.u32 %v5306, 2147483648
    %v5339 = vor.u32 1.1754944e-38, %v5338
    %v5340 = vsel %vm5337, %v5339, %v5335
    %v5341 = vrcp.pop %v5309
    %v5342 = vmul.f32 %v5309, %v5341
    %v5343 = vsub.f32 1.0, %v5342
    %v5344 = vmul.f32 %v5341, %v5343
    %v5345 = vadd.f32 %v5341, %v5344
    %vm5346 = vweird.f32 %v5309
    %vm5347 = vweird.f32 %v5341
    %vm5348 = vmor %vm5346, %vm5347
    %v5349 = vsel %vm5348, %v5341, %v5345
    %v5350 = vand.u32 2147483647, %v5309
    %vm5351 = vcmp.eq.f32.partialorder %v5350, 8.507059e+37
    %v5352 = vand.u32 %v5309, 2147483648
    %v5353 = vor.u32 1.1754944e-38, %v5352
    %v5354 = vsel %vm5351, %v5353, %v5349
    %v5355 = vrcp.pop %v5312
    %v5356 = vmul.f32 %v5312, %v5355
    %v5357 = vsub.f32 1.0, %v5356
    %v5358 = vmul.f32 %v5355, %v5357
    %v5359 = vadd.f32 %v5355, %v5358
    %vm5360 = vweird.f32 %v5312
    %vm5361 = vweird.f32 %v5355
    %vm5362 = vmor %vm5360, %vm5361
    %v5363 = vsel %vm5362, %v5355, %v5359
    %v5364 = vand.u32 2147483647, %v5312
    %vm5365 = vcmp.eq.f32.partialorder %v5364, 8.507059e+37
    %v5366 = vand.u32 %v5312, 2147483648
    %v5367 = vor.u32 1.1754944e-38, %v5366
    %v5368 = vsel %vm5365, %v5367, %v5363
    %v5369 = vmul.f32 %v5294, %v5326
    %v5370 = vmul.f32 %v5296, %v5340
    %v5371 = vmul.f32 %v5298, %v5354
    %v5372 = vmul.f32 %v5300, %v5368
    %v5373 = vrot.slane %v3105, 3
    %v5374 = vrot.slane %v3107, 2
    %v5375 = vsel %vm3469, %v5374, %v5373
    %v5376 = vrot.slane %v3109, 1
    %v5377 = vsel %vm3472, %v5376, %v5375
    %v5378 = vsel %vm3475, %v3111, %v5377
    %v5379 = vrot.slane %v3113, 7
    %v5380 = vsel %vm3478, %v5379, %v5378
    %v5381 = vrot.slane %v3115, 6
    %v5382 = vsel %vm3481, %v5381, %v5380
    %v5383 = vrot.slane %v3117, 5
    %v5384 = vsel %vm3484, %v5383, %v5382
    %v5385 = vrot.slane %v3119, 4
    %v5386 = vsel %vm3487, %v5385, %v5384
    %v5389 = vsel %vm3739, %v5369, 0
    %5391 = vmatpush.msra.mxu0 0.0
    %5392 = vmatpush.msra.mxu0 0.0
    %5393 = vmatpush.msra.mxu0 0.0
    %5394 = vmatpush.msra.mxu0 0.0
    %5395 = vmatpush.msra.mxu0 0.0
    %5396 = vmatpush.msra.mxu0 0.0
    %5397 = vmatpush.msra.mxu0 0.0
    %5398 = vmatpush.msra.mxu0 0.0
    %5399 = vmatpush.msra.mxu0 0.0
    %5400 = vmatpush.msra.mxu0 0.0
    %5401 = vmatpush.msra.mxu0 0.0
    %5402 = vmatpush.msra.mxu0 0.0
    %5403 = vmatpush.msra.mxu0 0.0
    %5404 = vmatpush.msra.mxu0 0.0
    %5405 = vmatpush.msra.mxu0 0.0
    %5406 = vmatpush.msra.mxu0 %v5386
    %5407 = vmatmul.f32.gmra.mxu0 %v5389
    %v5408 = vpop.f32.mrf.mxu0
    %v5409 = vadd.f32 0.0, %v5408
    %5410 = vdwg.mxu0
    %v5411 = vrot.slane %v3217, 3
    %v5412 = vrot.slane %v3219, 2
    %v5413 = vsel %vm3469, %v5412, %v5411
    %v5414 = vrot.slane %v3221, 1
    %v5415 = vsel %vm3472, %v5414, %v5413
    %v5416 = vsel %vm3475, %v3223, %v5415
    %v5417 = vrot.slane %v3225, 7
    %v5418 = vsel %vm3478, %v5417, %v5416
    %v5419 = vrot.slane %v3227, 6
    %v5420 = vsel %vm3481, %v5419, %v5418
    %v5421 = vrot.slane %v3229, 5
    %v5422 = vsel %vm3484, %v5421, %v5420
    %v5423 = vrot.slane %v3231, 4
    %v5424 = vsel %vm3487, %v5423, %v5422
    %v5427 = vsel %vm3739, %v5370, 0
    %5429 = vmatpush.msra.mxu0 0.0
    %5430 = vmatpush.msra.mxu0 0.0
    %5431 = vmatpush.msra.mxu0 0.0
    %5432 = vmatpush.msra.mxu0 0.0
    %5433 = vmatpush.msra.mxu0 0.0
    %5434 = vmatpush.msra.mxu0 0.0
    %5435 = vmatpush.msra.mxu0 0.0
    %5436 = vmatpush.msra.mxu0 0.0
    %5437 = vmatpush.msra.mxu0 0.0
    %5438 = vmatpush.msra.mxu0 0.0
    %5439 = vmatpush.msra.mxu0 0.0
    %5440 = vmatpush.msra.mxu0 0.0
    %5441 = vmatpush.msra.mxu0 0.0
    %5442 = vmatpush.msra.mxu0 0.0
    %5443 = vmatpush.msra.mxu0 0.0
    %5444 = vmatpush.msra.mxu0 %v5424
    %5445 = vmatmul.f32.gmra.mxu0 %v5427
    %v5446 = vpop.f32.mrf.mxu0
    %v5447 = vadd.f32 0.0, %v5446
    %5448 = vdwg.mxu0
    %v5449 = vrot.slane %v3329, 3
    %v5450 = vrot.slane %v3331, 2
    %v5451 = vsel %vm3469, %v5450, %v5449
    %v5452 = vrot.slane %v3333, 1
    %v5453 = vsel %vm3472, %v5452, %v5451
    %v5454 = vsel %vm3475, %v3335, %v5453
    %v5455 = vrot.slane %v3337, 7
    %v5456 = vsel %vm3478, %v5455, %v5454
    %v5457 = vrot.slane %v3339, 6
    %v5458 = vsel %vm3481, %v5457, %v5456
    %v5459 = vrot.slane %v3341, 5
    %v5460 = vsel %vm3484, %v5459, %v5458
    %v5461 = vrot.slane %v3343, 4
    %v5462 = vsel %vm3487, %v5461, %v5460
    %v5465 = vsel %vm3739, %v5371, 0
    %5467 = vmatpush.msra.mxu0 0.0
    %5468 = vmatpush.msra.mxu0 0.0
    %5469 = vmatpush.msra.mxu0 0.0
    %5470 = vmatpush.msra.mxu0 0.0
    %5471 = vmatpush.msra.mxu0 0.0
    %5472 = vmatpush.msra.mxu0 0.0
    %5473 = vmatpush.msra.mxu0 0.0
    %5474 = vmatpush.msra.mxu0 0.0
    %5475 = vmatpush.msra.mxu0 0.0
    %5476 = vmatpush.msra.mxu0 0.0
    %5477 = vmatpush.msra.mxu0 0.0
    %5478 = vmatpush.msra.mxu0 0.0
    %5479 = vmatpush.msra.mxu0 0.0
    %5480 = vmatpush.msra.mxu0 0.0
    %5481 = vmatpush.msra.mxu0 0.0
    %5482 = vmatpush.msra.mxu0 %v5462
    %5483 = vmatmul.f32.gmra.mxu0 %v5465
    %v5484 = vpop.f32.mrf.mxu0
    %v5485 = vadd.f32 0.0, %v5484
    %5486 = vdwg.mxu0
    %v5487 = vrot.slane %v3441, 3
    %v5488 = vrot.slane %v3443, 2
    %v5489 = vsel %vm3469, %v5488, %v5487
    %v5490 = vrot.slane %v3445, 1
    %v5491 = vsel %vm3472, %v5490, %v5489
    %v5492 = vsel %vm3475, %v3447, %v5491
    %v5493 = vrot.slane %v3449, 7
    %v5494 = vsel %vm3478, %v5493, %v5492
    %v5495 = vrot.slane %v3451, 6
    %v5496 = vsel %vm3481, %v5495, %v5494
    %v5497 = vrot.slane %v3453, 5
    %v5498 = vsel %vm3484, %v5497, %v5496
    %v5499 = vrot.slane %v3455, 4
    %v5500 = vsel %vm3487, %v5499, %v5498
    %v5503 = vsel %vm3739, %v5372, 0
    %5505 = vmatpush.msra.mxu0 0.0
    %5506 = vmatpush.msra.mxu0 0.0
    %5507 = vmatpush.msra.mxu0 0.0
    %5508 = vmatpush.msra.mxu0 0.0
    %5509 = vmatpush.msra.mxu0 0.0
    %5510 = vmatpush.msra.mxu0 0.0
    %5511 = vmatpush.msra.mxu0 0.0
    %5512 = vmatpush.msra.mxu0 0.0
    %5513 = vmatpush.msra.mxu0 0.0
    %5514 = vmatpush.msra.mxu0 0.0
    %5515 = vmatpush.msra.mxu0 0.0
    %5516 = vmatpush.msra.mxu0 0.0
    %5517 = vmatpush.msra.mxu0 0.0
    %5518 = vmatpush.msra.mxu0 0.0
    %5519 = vmatpush.msra.mxu0 0.0
    %5520 = vmatpush.msra.mxu0 %v5500
    %5521 = vmatmul.f32.gmra.mxu0 %v5503
    %v5522 = vpop.f32.mrf.mxu0
    %v5523 = vadd.f32 0.0, %v5522
    %5524 = vdwg.mxu0
    %v5525 = vrot.slane %v3457, 4
    %v5527 = vsel %vm826, %v5409, 0
    %v5530 = vsel %vm826, %v5447, 0
    %v5533 = vsel %vm826, %v5485, 0
    %v5536 = vsel %vm826, %v5523, 0
    %v5538 = vsel %vm4490, %v5525, 0
    %5540 = vmatpush.msra.mxu0 0.0
    %5541 = vmatpush.msra.mxu0 0.0
    %5542 = vmatpush.msra.mxu0 0.0
    %5543 = vmatpush.msra.mxu0 0.0
    %5544 = vmatpush.msra.mxu0 0.0
    %5545 = vmatpush.msra.mxu0 0.0
    %5546 = vmatpush.msra.mxu0 0.0
    %5547 = vmatpush.msra.mxu0 0.0
    %5548 = vmatpush.msra.mxu0 0.0
    %5549 = vmatpush.msra.mxu0 0.0
    %5550 = vmatpush.msra.mxu0 0.0
    %5551 = vmatpush.msra.mxu0 0.0
    %5552 = vmatpush.msra.mxu0 0.0
    %5553 = vmatpush.msra.mxu0 0.0
    %5554 = vmatpush.msra.mxu0 0.0
    %5555 = vmatpush.msra.mxu0 %v5538
    %5556 = vmatmul.f32.gmra.mxu0 %v5527
    %v5557 = vpop.f32.mrf.mxu0
    %v5558 = vadd.f32 0.0, %v5557
    %5559 = vmatmul.f32.gmra.mxu0 %v5530
    %v5560 = vpop.f32.mrf.mxu0
    %v5561 = vadd.f32 0.0, %v5560
    %5562 = vmatmul.f32.gmra.mxu0 %v5533
    %v5563 = vpop.f32.mrf.mxu0
    %v5564 = vadd.f32 0.0, %v5563
    %5565 = vmatmul.f32.gmra.mxu0 %v5536
    %v5566 = vpop.f32.mrf.mxu0
    %v5567 = vadd.f32 0.0, %v5566
    %5568 = vdwg.mxu0
    %v5569 = vadd.f32 %v5065, %v5558
    %v5570 = vadd.f32 %v5066, %v5561
    %v5571 = vadd.f32 %v5067, %v5564
    %v5572 = vadd.f32 %v5068, %v5567
    %v5573 = vrot.slane %v1576, 4
    %v5574 = vrot.slane %v1577, 3
    %v5575 = vsel %vm3469, %v5574, %v5573
    %v5576 = vrot.slane %v1578, 2
    %v5577 = vsel %vm3472, %v5576, %v5575
    %v5578 = vrot.slane %v1579, 1
    %v5579 = vsel %vm3475, %v5578, %v5577
    %v5580 = vsel %vm3478, %v1580, %v5579
    %v5581 = vrot.slane %v1581, 7
    %v5582 = vsel %vm3481, %v5581, %v5580
    %v5583 = vrot.slane %v1582, 6
    %v5584 = vsel %vm3484, %v5583, %v5582
    %v5585 = vrot.slane %v1583, 5
    %v5586 = vsel %vm3487, %v5585, %v5584
    %v5587 = vrot.slane %v2888, 4
    %v5588 = vrot.slane %v2889, 3
    %v5589 = vsel %vm3469, %v5588, %v5587
    %v5590 = vrot.slane %v2890, 2
    %v5591 = vsel %vm3472, %v5590, %v5589
    %v5592 = vrot.slane %v2891, 1
    %v5593 = vsel %vm3475, %v5592, %v5591
    %v5594 = vsel %vm3478, %v2892, %v5593
    %v5595 = vrot.slane %v2893, 7
    %v5596 = vsel %vm3481, %v5595, %v5594
    %v5597 = vrot.slane %v2894, 6
    %v5598 = vsel %vm3484, %v5597, %v5596
    %v5599 = vrot.slane %v2895, 5
    %v5600 = vsel %vm3487, %v5599, %v5598
    %v5601 = vsel %vm826, %v5586, 0
    %v5603 = vsel %vm826, %v5600, 0
    %5605 = vmatpush.xpose.msra.mxu0 0.0
    %5606 = vmatpush.xpose.msra.mxu0 0.0
    %5607 = vmatpush.xpose.msra.mxu0 0.0
    %5608 = vmatpush.xpose.msra.mxu0 0.0
    %5609 = vmatpush.xpose.msra.mxu0 0.0
    %5610 = vmatpush.xpose.msra.mxu0 0.0
    %5611 = vmatpush.xpose.msra.mxu0 0.0
    %5612 = vmatpush.xpose.msra.mxu0 0.0
    %5613 = vmatpush.xpose.msra.mxu0 0.0
    %5614 = vmatpush.xpose.msra.mxu0 0.0
    %5615 = vmatpush.xpose.msra.mxu0 0.0
    %5616 = vmatpush.xpose.msra.mxu0 0.0
    %5617 = vmatpush.xpose.msra.mxu0 0.0
    %5618 = vmatpush.xpose.msra.mxu0 0.0
    %5619 = vmatpush.xpose.msra.mxu0 0.0
    %5620 = vmatpush.xpose.msra.mxu0 %v5603
    %5621 = vmatmul.f32.gmra.mxu0 %v5601
    %v5622 = vpop.f32.mrf.mxu0
    %v5623 = vadd.f32 0.0, %v5622
    %5624 = vdwg.mxu0
    %v5625 = vrot.slane %v1584, 4
    %v5626 = vrot.slane %v1585, 3
    %v5627 = vsel %vm3469, %v5626, %v5625
    %v5628 = vrot.slane %v1586, 2
    %v5629 = vsel %vm3472, %v5628, %v5627
    %v5630 = vrot.slane %v1587, 1
    %v5631 = vsel %vm3475, %v5630, %v5629
    %v5632 = vsel %vm3478, %v1588, %v5631
    %v5633 = vrot.slane %v1589, 7
    %v5634 = vsel %vm3481, %v5633, %v5632
    %v5635 = vrot.slane %v1590, 6
    %v5636 = vsel %vm3484, %v5635, %v5634
    %v5637 = vrot.slane %v1591, 5
    %v5638 = vsel %vm3487, %v5637, %v5636
    %v5639 = vrot.slane %v2896, 4
    %v5640 = vrot.slane %v2897, 3
    %v5641 = vsel %vm3469, %v5640, %v5639
    %v5642 = vrot.slane %v2898, 2
    %v5643 = vsel %vm3472, %v5642, %v5641
    %v5644 = vrot.slane %v2899, 1
    %v5645 = vsel %vm3475, %v5644, %v5643
    %v5646 = vsel %vm3478, %v2900, %v5645
    %v5647 = vrot.slane %v2901, 7
    %v5648 = vsel %vm3481, %v5647, %v5646
    %v5649 = vrot.slane %v2902, 6
    %v5650 = vsel %vm3484, %v5649, %v5648
    %v5651 = vrot.slane %v2903, 5
    %v5652 = vsel %vm3487, %v5651, %v5650
    %v5653 = vsel %vm826, %v5638, 0
    %v5655 = vsel %vm826, %v5652, 0
    %5657 = vmatpush.xpose.msra.mxu0 0.0
    %5658 = vmatpush.xpose.msra.mxu0 0.0
    %5659 = vmatpush.xpose.msra.mxu0 0.0
    %5660 = vmatpush.xpose.msra.mxu0 0.0
    %5661 = vmatpush.xpose.msra.mxu0 0.0
    %5662 = vmatpush.xpose.msra.mxu0 0.0
    %5663 = vmatpush.xpose.msra.mxu0 0.0
    %5664 = vmatpush.xpose.msra.mxu0 0.0
    %5665 = vmatpush.xpose.msra.mxu0 0.0
    %5666 = vmatpush.xpose.msra.mxu0 0.0
    %5667 = vmatpush.xpose.msra.mxu0 0.0
    %5668 = vmatpush.xpose.msra.mxu0 0.0
    %5669 = vmatpush.xpose.msra.mxu0 0.0
    %5670 = vmatpush.xpose.msra.mxu0 0.0
    %5671 = vmatpush.xpose.msra.mxu0 0.0
    %5672 = vmatpush.xpose.msra.mxu0 %v5655
    %5673 = vmatmul.f32.gmra.mxu0 %v5653
    %v5674 = vpop.f32.mrf.mxu0
    %v5675 = vadd.f32 0.0, %v5674
    %5676 = vdwg.mxu0
    %v5677 = vrot.slane %v1592, 4
    %v5678 = vrot.slane %v1593, 3
    %v5679 = vsel %vm3469, %v5678, %v5677
    %v5680 = vrot.slane %v1594, 2
    %v5681 = vsel %vm3472, %v5680, %v5679
    %v5682 = vrot.slane %v1595, 1
    %v5683 = vsel %vm3475, %v5682, %v5681
    %v5684 = vsel %vm3478, %v1596, %v5683
    %v5685 = vrot.slane %v1597, 7
    %v5686 = vsel %vm3481, %v5685, %v5684
    %v5687 = vrot.slane %v1598, 6
    %v5688 = vsel %vm3484, %v5687, %v5686
    %v5689 = vrot.slane %v1599, 5
    %v5690 = vsel %vm3487, %v5689, %v5688
    %v5691 = vrot.slane %v2904, 4
    %v5692 = vrot.slane %v2905, 3
    %v5693 = vsel %vm3469, %v5692, %v5691
    %v5694 = vrot.slane %v2906, 2
    %v5695 = vsel %vm3472, %v5694, %v5693
    %v5696 = vrot.slane %v2907, 1
    %v5697 = vsel %vm3475, %v5696, %v5695
    %v5698 = vsel %vm3478, %v2908, %v5697
    %v5699 = vrot.slane %v2909, 7
    %v5700 = vsel %vm3481, %v5699, %v5698
    %v5701 = vrot.slane %v2910, 6
    %v5702 = vsel %vm3484, %v5701, %v5700
    %v5703 = vrot.slane %v2911, 5
    %v5704 = vsel %vm3487, %v5703, %v5702
    %v5705 = vsel %vm826, %v5690, 0
    %v5707 = vsel %vm826, %v5704, 0
    %5709 = vmatpush.xpose.msra.mxu0 0.0
    %5710 = vmatpush.xpose.msra.mxu0 0.0
    %5711 = vmatpush.xpose.msra.mxu0 0.0
    %5712 = vmatpush.xpose.msra.mxu0 0.0
    %5713 = vmatpush.xpose.msra.mxu0 0.0
    %5714 = vmatpush.xpose.msra.mxu0 0.0
    %5715 = vmatpush.xpose.msra.mxu0 0.0
    %5716 = vmatpush.xpose.msra.mxu0 0.0
    %5717 = vmatpush.xpose.msra.mxu0 0.0
    %5718 = vmatpush.xpose.msra.mxu0 0.0
    %5719 = vmatpush.xpose.msra.mxu0 0.0
    %5720 = vmatpush.xpose.msra.mxu0 0.0
    %5721 = vmatpush.xpose.msra.mxu0 0.0
    %5722 = vmatpush.xpose.msra.mxu0 0.0
    %5723 = vmatpush.xpose.msra.mxu0 0.0
    %5724 = vmatpush.xpose.msra.mxu0 %v5707
    %5725 = vmatmul.f32.gmra.mxu0 %v5705
    %v5726 = vpop.f32.mrf.mxu0
    %v5727 = vadd.f32 0.0, %v5726
    %5728 = vdwg.mxu0
    %v5729 = vrot.slane %v1600, 4
    %v5730 = vrot.slane %v1601, 3
    %v5731 = vsel %vm3469, %v5730, %v5729
    %v5732 = vrot.slane %v1602, 2
    %v5733 = vsel %vm3472, %v5732, %v5731
    %v5734 = vrot.slane %v1603, 1
    %v5735 = vsel %vm3475, %v5734, %v5733
    %v5736 = vsel %vm3478, %v1604, %v5735
    %v5737 = vrot.slane %v1605, 7
    %v5738 = vsel %vm3481, %v5737, %v5736
    %v5739 = vrot.slane %v1606, 6
    %v5740 = vsel %vm3484, %v5739, %v5738
    %v5741 = vrot.slane %v1607, 5
    %v5742 = vsel %vm3487, %v5741, %v5740
    %v5743 = vrot.slane %v2912, 4
    %v5744 = vrot.slane %v2913, 3
    %v5745 = vsel %vm3469, %v5744, %v5743
    %v5746 = vrot.slane %v2914, 2
    %v5747 = vsel %vm3472, %v5746, %v5745
    %v5748 = vrot.slane %v2915, 1
    %v5749 = vsel %vm3475, %v5748, %v5747
    %v5750 = vsel %vm3478, %v2916, %v5749
    %v5751 = vrot.slane %v2917, 7
    %v5752 = vsel %vm3481, %v5751, %v5750
    %v5753 = vrot.slane %v2918, 6
    %v5754 = vsel %vm3484, %v5753, %v5752
    %v5755 = vrot.slane %v2919, 5
    %v5756 = vsel %vm3487, %v5755, %v5754
    %v5757 = vsel %vm826, %v5742, 0
    %v5759 = vsel %vm826, %v5756, 0
    %5761 = vmatpush.xpose.msra.mxu0 0.0
    %5762 = vmatpush.xpose.msra.mxu0 0.0
    %5763 = vmatpush.xpose.msra.mxu0 0.0
    %5764 = vmatpush.xpose.msra.mxu0 0.0
    %5765 = vmatpush.xpose.msra.mxu0 0.0
    %5766 = vmatpush.xpose.msra.mxu0 0.0
    %5767 = vmatpush.xpose.msra.mxu0 0.0
    %5768 = vmatpush.xpose.msra.mxu0 0.0
    %5769 = vmatpush.xpose.msra.mxu0 0.0
    %5770 = vmatpush.xpose.msra.mxu0 0.0
    %5771 = vmatpush.xpose.msra.mxu0 0.0
    %5772 = vmatpush.xpose.msra.mxu0 0.0
    %5773 = vmatpush.xpose.msra.mxu0 0.0
    %5774 = vmatpush.xpose.msra.mxu0 0.0
    %5775 = vmatpush.xpose.msra.mxu0 0.0
    %5776 = vmatpush.xpose.msra.mxu0 %v5759
    %5777 = vmatmul.f32.gmra.mxu0 %v5757
    %v5778 = vpop.f32.mrf.mxu0
    %v5779 = vadd.f32 0.0, %v5778
    %5780 = vdwg.mxu0
    %v5781 = vsel %vm3739, %v5623, -inf
    %5782 = vmax.xlane.f32.xlu0 %v5781
    %v5783 = vpop.xlane.xlu0 %5782
    %v5784 = vsel %vm3739, %v5675, -inf
    %5785 = vmax.xlane.f32.xlu0 %v5784
    %v5786 = vpop.xlane.xlu0 %5785
    %v5787 = vsel %vm3739, %v5727, -inf
    %5788 = vmax.xlane.f32.xlu0 %v5787
    %v5789 = vpop.xlane.xlu0 %5788
    %v5790 = vsel %vm3739, %v5779, -inf
    %5791 = vmax.xlane.f32.xlu0 %v5790
    %v5792 = vpop.xlane.xlu0 %5791
    %v5793 = vsub.f32 %v5623, %v5783
    %v5794 = vsub.f32 %v5675, %v5786
    %v5795 = vsub.f32 %v5727, %v5789
    %v5796 = vsub.f32 %v5779, %v5792
    %v5797 = vmul.f32 %v5793, 1.442695
    %v5798 = vpow.pop %v5797
    %v5799 = vmul.f32 %v5794, 1.442695
    %v5800 = vpow.pop %v5799
    %v5801 = vmul.f32 %v5795, 1.442695
    %v5802 = vpow.pop %v5801
    %v5803 = vmul.f32 %v5796, 1.442695
    %v5804 = vpow.pop %v5803
    %v5805 = vsel %vm3739, %v5798, 0.0
    %5806 = vadd.xlane.f32.xlu0 %v5805
    %v5807 = vpop.xlane.xlu0 %5806
    %v5808 = vsel %vm3739, %v5800, 0.0
    %5809 = vadd.xlane.f32.xlu0 %v5808
    %v5810 = vpop.xlane.xlu0 %5809
    %v5811 = vsel %vm3739, %v5802, 0.0
    %5812 = vadd.xlane.f32.xlu0 %v5811
    %v5813 = vpop.xlane.xlu0 %5812
    %v5814 = vsel %vm3739, %v5804, 0.0
    %5815 = vadd.xlane.f32.xlu0 %v5814
    %v5816 = vpop.xlane.xlu0 %5815
    %v5817 = vrcp.pop %v5807
    %v5818 = vmul.f32 %v5807, %v5817
    %v5819 = vsub.f32 1.0, %v5818
    %v5820 = vmul.f32 %v5817, %v5819
    %v5821 = vadd.f32 %v5817, %v5820
    %vm5822 = vweird.f32 %v5807
    %vm5823 = vweird.f32 %v5817
    %vm5824 = vmor %vm5822, %vm5823
    %v5825 = vsel %vm5824, %v5817, %v5821
    %v5826 = vand.u32 2147483647, %v5807
    %vm5827 = vcmp.eq.f32.partialorder %v5826, 8.507059e+37
    %v5828 = vand.u32 %v5807, 2147483648
    %v5829 = vor.u32 1.1754944e-38, %v5828
    %v5830 = vsel %vm5827, %v5829, %v5825
    %v5831 = vrcp.pop %v5810
    %v5832 = vmul.f32 %v5810, %v5831
    %v5833 = vsub.f32 1.0, %v5832
    %v5834 = vmul.f32 %v5831, %v5833
    %v5835 = vadd.f32 %v5831, %v5834
    %vm5836 = vweird.f32 %v5810
    %vm5837 = vweird.f32 %v5831
    %vm5838 = vmor %vm5836, %vm5837
    %v5839 = vsel %vm5838, %v5831, %v5835
    %v5840 = vand.u32 2147483647, %v5810
    %vm5841 = vcmp.eq.f32.partialorder %v5840, 8.507059e+37
    %v5842 = vand.u32 %v5810, 2147483648
    %v5843 = vor.u32 1.1754944e-38, %v5842
    %v5844 = vsel %vm5841, %v5843, %v5839
    %v5845 = vrcp.pop %v5813
    %v5846 = vmul.f32 %v5813, %v5845
    %v5847 = vsub.f32 1.0, %v5846
    %v5848 = vmul.f32 %v5845, %v5847
    %v5849 = vadd.f32 %v5845, %v5848
    %vm5850 = vweird.f32 %v5813
    %vm5851 = vweird.f32 %v5845
    %vm5852 = vmor %vm5850, %vm5851
    %v5853 = vsel %vm5852, %v5845, %v5849
    %v5854 = vand.u32 2147483647, %v5813
    %vm5855 = vcmp.eq.f32.partialorder %v5854, 8.507059e+37
    %v5856 = vand.u32 %v5813, 2147483648
    %v5857 = vor.u32 1.1754944e-38, %v5856
    %v5858 = vsel %vm5855, %v5857, %v5853
    %v5859 = vrcp.pop %v5816
    %v5860 = vmul.f32 %v5816, %v5859
    %v5861 = vsub.f32 1.0, %v5860
    %v5862 = vmul.f32 %v5859, %v5861
    %v5863 = vadd.f32 %v5859, %v5862
    %vm5864 = vweird.f32 %v5816
    %vm5865 = vweird.f32 %v5859
    %vm5866 = vmor %vm5864, %vm5865
    %v5867 = vsel %vm5866, %v5859, %v5863
    %v5868 = vand.u32 2147483647, %v5816
    %vm5869 = vcmp.eq.f32.partialorder %v5868, 8.507059e+37
    %v5870 = vand.u32 %v5816, 2147483648
    %v5871 = vor.u32 1.1754944e-38, %v5870
    %v5872 = vsel %vm5869, %v5871, %v5867
    %v5873 = vmul.f32 %v5798, %v5830
    %v5874 = vmul.f32 %v5800, %v5844
    %v5875 = vmul.f32 %v5802, %v5858
    %v5876 = vmul.f32 %v5804, %v5872
    %v5877 = vrot.slane %v3105, 4
    %v5878 = vrot.slane %v3107, 3
    %v5879 = vsel %vm3469, %v5878, %v5877
    %v5880 = vrot.slane %v3109, 2
    %v5881 = vsel %vm3472, %v5880, %v5879
    %v5882 = vrot.slane %v3111, 1
    %v5883 = vsel %vm3475, %v5882, %v5881
    %v5884 = vsel %vm3478, %v3113, %v5883
    %v5885 = vrot.slane %v3115, 7
    %v5886 = vsel %vm3481, %v5885, %v5884
    %v5887 = vrot.slane %v3117, 6
    %v5888 = vsel %vm3484, %v5887, %v5886
    %v5889 = vrot.slane %v3119, 5
    %v5890 = vsel %vm3487, %v5889, %v5888
    %v5893 = vsel %vm3739, %v5873, 0
    %5895 = vmatpush.msra.mxu0 0.0
    %5896 = vmatpush.msra.mxu0 0.0
    %5897 = vmatpush.msra.mxu0 0.0
    %5898 = vmatpush.msra.mxu0 0.0
    %5899 = vmatpush.msra.mxu0 0.0
    %5900 = vmatpush.msra.mxu0 0.0
    %5901 = vmatpush.msra.mxu0 0.0
    %5902 = vmatpush.msra.mxu0 0.0
    %5903 = vmatpush.msra.mxu0 0.0
    %5904 = vmatpush.msra.mxu0 0.0
    %5905 = vmatpush.msra.mxu0 0.0
    %5906 = vmatpush.msra.mxu0 0.0
    %5907 = vmatpush.msra.mxu0 0.0
    %5908 = vmatpush.msra.mxu0 0.0
    %5909 = vmatpush.msra.mxu0 0.0
    %5910 = vmatpush.msra.mxu0 %v5890
    %5911 = vmatmul.f32.gmra.mxu0 %v5893
    %v5912 = vpop.f32.mrf.mxu0
    %v5913 = vadd.f32 0.0, %v5912
    %5914 = vdwg.mxu0
    %v5915 = vrot.slane %v3217, 4
    %v5916 = vrot.slane %v3219, 3
    %v5917 = vsel %vm3469, %v5916, %v5915
    %v5918 = vrot.slane %v3221, 2
    %v5919 = vsel %vm3472, %v5918, %v5917
    %v5920 = vrot.slane %v3223, 1
    %v5921 = vsel %vm3475, %v5920, %v5919
    %v5922 = vsel %vm3478, %v3225, %v5921
    %v5923 = vrot.slane %v3227, 7
    %v5924 = vsel %vm3481, %v5923, %v5922
    %v5925 = vrot.slane %v3229, 6
    %v5926 = vsel %vm3484, %v5925, %v5924
    %v5927 = vrot.slane %v3231, 5
    %v5928 = vsel %vm3487, %v5927, %v5926
    %v5931 = vsel %vm3739, %v5874, 0
    %5933 = vmatpush.msra.mxu0 0.0
    %5934 = vmatpush.msra.mxu0 0.0
    %5935 = vmatpush.msra.mxu0 0.0
    %5936 = vmatpush.msra.mxu0 0.0
    %5937 = vmatpush.msra.mxu0 0.0
    %5938 = vmatpush.msra.mxu0 0.0
    %5939 = vmatpush.msra.mxu0 0.0
    %5940 = vmatpush.msra.mxu0 0.0
    %5941 = vmatpush.msra.mxu0 0.0
    %5942 = vmatpush.msra.mxu0 0.0
    %5943 = vmatpush.msra.mxu0 0.0
    %5944 = vmatpush.msra.mxu0 0.0
    %5945 = vmatpush.msra.mxu0 0.0
    %5946 = vmatpush.msra.mxu0 0.0
    %5947 = vmatpush.msra.mxu0 0.0
    %5948 = vmatpush.msra.mxu0 %v5928
    %5949 = vmatmul.f32.gmra.mxu0 %v5931
    %v5950 = vpop.f32.mrf.mxu0
    %v5951 = vadd.f32 0.0, %v5950
    %5952 = vdwg.mxu0
    %v5953 = vrot.slane %v3329, 4
    %v5954 = vrot.slane %v3331, 3
    %v5955 = vsel %vm3469, %v5954, %v5953
    %v5956 = vrot.slane %v3333, 2
    %v5957 = vsel %vm3472, %v5956, %v5955
    %v5958 = vrot.slane %v3335, 1
    %v5959 = vsel %vm3475, %v5958, %v5957
    %v5960 = vsel %vm3478, %v3337, %v5959
    %v5961 = vrot.slane %v3339, 7
    %v5962 = vsel %vm3481, %v5961, %v5960
    %v5963 = vrot.slane %v3341, 6
    %v5964 = vsel %vm3484, %v5963, %v5962
    %v5965 = vrot.slane %v3343, 5
    %v5966 = vsel %vm3487, %v5965, %v5964
    %v5969 = vsel %vm3739, %v5875, 0
    %5971 = vmatpush.msra.mxu0 0.0
    %5972 = vmatpush.msra.mxu0 0.0
    %5973 = vmatpush.msra.mxu0 0.0
    %5974 = vmatpush.msra.mxu0 0.0
    %5975 = vmatpush.msra.mxu0 0.0
    %5976 = vmatpush.msra.mxu0 0.0
    %5977 = vmatpush.msra.mxu0 0.0
    %5978 = vmatpush.msra.mxu0 0.0
    %5979 = vmatpush.msra.mxu0 0.0
    %5980 = vmatpush.msra.mxu0 0.0
    %5981 = vmatpush.msra.mxu0 0.0
    %5982 = vmatpush.msra.mxu0 0.0
    %5983 = vmatpush.msra.mxu0 0.0
    %5984 = vmatpush.msra.mxu0 0.0
    %5985 = vmatpush.msra.mxu0 0.0
    %5986 = vmatpush.msra.mxu0 %v5966
    %5987 = vmatmul.f32.gmra.mxu0 %v5969
    %v5988 = vpop.f32.mrf.mxu0
    %v5989 = vadd.f32 0.0, %v5988
    %5990 = vdwg.mxu0
    %v5991 = vrot.slane %v3441, 4
    %v5992 = vrot.slane %v3443, 3
    %v5993 = vsel %vm3469, %v5992, %v5991
    %v5994 = vrot.slane %v3445, 2
    %v5995 = vsel %vm3472, %v5994, %v5993
    %v5996 = vrot.slane %v3447, 1
    %v5997 = vsel %vm3475, %v5996, %v5995
    %v5998 = vsel %vm3478, %v3449, %v5997
    %v5999 = vrot.slane %v3451, 7
    %v6000 = vsel %vm3481, %v5999, %v5998
    %v6001 = vrot.slane %v3453, 6
    %v6002 = vsel %vm3484, %v6001, %v6000
    %v6003 = vrot.slane %v3455, 5
    %v6004 = vsel %vm3487, %v6003, %v6002
    %v6007 = vsel %vm3739, %v5876, 0
    %6009 = vmatpush.msra.mxu0 0.0
    %6010 = vmatpush.msra.mxu0 0.0
    %6011 = vmatpush.msra.mxu0 0.0
    %6012 = vmatpush.msra.mxu0 0.0
    %6013 = vmatpush.msra.mxu0 0.0
    %6014 = vmatpush.msra.mxu0 0.0
    %6015 = vmatpush.msra.mxu0 0.0
    %6016 = vmatpush.msra.mxu0 0.0
    %6017 = vmatpush.msra.mxu0 0.0
    %6018 = vmatpush.msra.mxu0 0.0
    %6019 = vmatpush.msra.mxu0 0.0
    %6020 = vmatpush.msra.mxu0 0.0
    %6021 = vmatpush.msra.mxu0 0.0
    %6022 = vmatpush.msra.mxu0 0.0
    %6023 = vmatpush.msra.mxu0 0.0
    %6024 = vmatpush.msra.mxu0 %v6004
    %6025 = vmatmul.f32.gmra.mxu0 %v6007
    %v6026 = vpop.f32.mrf.mxu0
    %v6027 = vadd.f32 0.0, %v6026
    %6028 = vdwg.mxu0
    %v6030 = vsel %vm826, %v5913, 0
    %v6033 = vsel %vm826, %v5951, 0
    %v6036 = vsel %vm826, %v5989, 0
    %v6039 = vsel %vm826, %v6027, 0
    %v6042 = vsel %vm4490, %v3458, 0
    %6044 = vmatpush.msra.mxu0 0.0
    %6045 = vmatpush.msra.mxu0 0.0
    %6046 = vmatpush.msra.mxu0 0.0
    %6047 = vmatpush.msra.mxu0 0.0
    %6048 = vmatpush.msra.mxu0 0.0
    %6049 = vmatpush.msra.mxu0 0.0
    %6050 = vmatpush.msra.mxu0 0.0
    %6051 = vmatpush.msra.mxu0 0.0
    %6052 = vmatpush.msra.mxu0 0.0
    %6053 = vmatpush.msra.mxu0 0.0
    %6054 = vmatpush.msra.mxu0 0.0
    %6055 = vmatpush.msra.mxu0 0.0
    %6056 = vmatpush.msra.mxu0 0.0
    %6057 = vmatpush.msra.mxu0 0.0
    %6058 = vmatpush.msra.mxu0 0.0
    %6059 = vmatpush.msra.mxu0 %v6042
    %6060 = vmatmul.f32.gmra.mxu0 %v6030
    %v6061 = vpop.f32.mrf.mxu0
    %v6062 = vadd.f32 0.0, %v6061
    %6063 = vmatmul.f32.gmra.mxu0 %v6033
    %v6064 = vpop.f32.mrf.mxu0
    %v6065 = vadd.f32 0.0, %v6064
    %6066 = vmatmul.f32.gmra.mxu0 %v6036
    %v6067 = vpop.f32.mrf.mxu0
    %v6068 = vadd.f32 0.0, %v6067
    %6069 = vmatmul.f32.gmra.mxu0 %v6039
    %v6070 = vpop.f32.mrf.mxu0
    %v6071 = vadd.f32 0.0, %v6070
    %6072 = vdwg.mxu0
    %v6073 = vadd.f32 %v5569, %v6062
    %v6074 = vadd.f32 %v5570, %v6065
    %v6075 = vadd.f32 %v5571, %v6068
    %v6076 = vadd.f32 %v5572, %v6071
    %v6077 = vrot.slane %v1576, 5
    %v6078 = vrot.slane %v1577, 4
    %v6079 = vsel %vm3469, %v6078, %v6077
    %v6080 = vrot.slane %v1578, 3
    %v6081 = vsel %vm3472, %v6080, %v6079
    %v6082 = vrot.slane %v1579, 2
    %v6083 = vsel %vm3475, %v6082, %v6081
    %v6084 = vrot.slane %v1580, 1
    %v6085 = vsel %vm3478, %v6084, %v6083
    %v6086 = vsel %vm3481, %v1581, %v6085
    %v6087 = vrot.slane %v1582, 7
    %v6088 = vsel %vm3484, %v6087, %v6086
    %v6089 = vrot.slane %v1583, 6
    %v6090 = vsel %vm3487, %v6089, %v6088
    %v6091 = vrot.slane %v2888, 5
    %v6092 = vrot.slane %v2889, 4
    %v6093 = vsel %vm3469, %v6092, %v6091
    %v6094 = vrot.slane %v2890, 3
    %v6095 = vsel %vm3472, %v6094, %v6093
    %v6096 = vrot.slane %v2891, 2
    %v6097 = vsel %vm3475, %v6096, %v6095
    %v6098 = vrot.slane %v2892, 1
    %v6099 = vsel %vm3478, %v6098, %v6097
    %v6100 = vsel %vm3481, %v2893, %v6099
    %v6101 = vrot.slane %v2894, 7
    %v6102 = vsel %vm3484, %v6101, %v6100
    %v6103 = vrot.slane %v2895, 6
    %v6104 = vsel %vm3487, %v6103, %v6102
    %v6105 = vsel %vm826, %v6090, 0
    %v6107 = vsel %vm826, %v6104, 0
    %6109 = vmatpush.xpose.msra.mxu0 0.0
    %6110 = vmatpush.xpose.msra.mxu0 0.0
    %6111 = vmatpush.xpose.msra.mxu0 0.0
    %6112 = vmatpush.xpose.msra.mxu0 0.0
    %6113 = vmatpush.xpose.msra.mxu0 0.0
    %6114 = vmatpush.xpose.msra.mxu0 0.0
    %6115 = vmatpush.xpose.msra.mxu0 0.0
    %6116 = vmatpush.xpose.msra.mxu0 0.0
    %6117 = vmatpush.xpose.msra.mxu0 0.0
    %6118 = vmatpush.xpose.msra.mxu0 0.0
    %6119 = vmatpush.xpose.msra.mxu0 0.0
    %6120 = vmatpush.xpose.msra.mxu0 0.0
    %6121 = vmatpush.xpose.msra.mxu0 0.0
    %6122 = vmatpush.xpose.msra.mxu0 0.0
    %6123 = vmatpush.xpose.msra.mxu0 0.0
    %6124 = vmatpush.xpose.msra.mxu0 %v6107
    %6125 = vmatmul.f32.gmra.mxu0 %v6105
    %v6126 = vpop.f32.mrf.mxu0
    %v6127 = vadd.f32 0.0, %v6126
    %6128 = vdwg.mxu0
    %v6129 = vrot.slane %v1584, 5
    %v6130 = vrot.slane %v1585, 4
    %v6131 = vsel %vm3469, %v6130, %v6129
    %v6132 = vrot.slane %v1586, 3
    %v6133 = vsel %vm3472, %v6132, %v6131
    %v6134 = vrot.slane %v1587, 2
    %v6135 = vsel %vm3475, %v6134, %v6133
    %v6136 = vrot.slane %v1588, 1
    %v6137 = vsel %vm3478, %v6136, %v6135
    %v6138 = vsel %vm3481, %v1589, %v6137
    %v6139 = vrot.slane %v1590, 7
    %v6140 = vsel %vm3484, %v6139, %v6138
    %v6141 = vrot.slane %v1591, 6
    %v6142 = vsel %vm3487, %v6141, %v6140
    %v6143 = vrot.slane %v2896, 5
    %v6144 = vrot.slane %v2897, 4
    %v6145 = vsel %vm3469, %v6144, %v6143
    %v6146 = vrot.slane %v2898, 3
    %v6147 = vsel %vm3472, %v6146, %v6145
    %v6148 = vrot.slane %v2899, 2
    %v6149 = vsel %vm3475, %v6148, %v6147
    %v6150 = vrot.slane %v2900, 1
    %v6151 = vsel %vm3478, %v6150, %v6149
    %v6152 = vsel %vm3481, %v2901, %v6151
    %v6153 = vrot.slane %v2902, 7
    %v6154 = vsel %vm3484, %v6153, %v6152
    %v6155 = vrot.slane %v2903, 6
    %v6156 = vsel %vm3487, %v6155, %v6154
    %v6157 = vsel %vm826, %v6142, 0
    %v6159 = vsel %vm826, %v6156, 0
    %6161 = vmatpush.xpose.msra.mxu0 0.0
    %6162 = vmatpush.xpose.msra.mxu0 0.0
    %6163 = vmatpush.xpose.msra.mxu0 0.0
    %6164 = vmatpush.xpose.msra.mxu0 0.0
    %6165 = vmatpush.xpose.msra.mxu0 0.0
    %6166 = vmatpush.xpose.msra.mxu0 0.0
    %6167 = vmatpush.xpose.msra.mxu0 0.0
    %6168 = vmatpush.xpose.msra.mxu0 0.0
    %6169 = vmatpush.xpose.msra.mxu0 0.0
    %6170 = vmatpush.xpose.msra.mxu0 0.0
    %6171 = vmatpush.xpose.msra.mxu0 0.0
    %6172 = vmatpush.xpose.msra.mxu0 0.0
    %6173 = vmatpush.xpose.msra.mxu0 0.0
    %6174 = vmatpush.xpose.msra.mxu0 0.0
    %6175 = vmatpush.xpose.msra.mxu0 0.0
    %6176 = vmatpush.xpose.msra.mxu0 %v6159
    %6177 = vmatmul.f32.gmra.mxu0 %v6157
    %v6178 = vpop.f32.mrf.mxu0
    %v6179 = vadd.f32 0.0, %v6178
    %6180 = vdwg.mxu0
    %v6181 = vrot.slane %v1592, 5
    %v6182 = vrot.slane %v1593, 4
    %v6183 = vsel %vm3469, %v6182, %v6181
    %v6184 = vrot.slane %v1594, 3
    %v6185 = vsel %vm3472, %v6184, %v6183
    %v6186 = vrot.slane %v1595, 2
    %v6187 = vsel %vm3475, %v6186, %v6185
    %v6188 = vrot.slane %v1596, 1
    %v6189 = vsel %vm3478, %v6188, %v6187
    %v6190 = vsel %vm3481, %v1597, %v6189
    %v6191 = vrot.slane %v1598, 7
    %v6192 = vsel %vm3484, %v6191, %v6190
    %v6193 = vrot.slane %v1599, 6
    %v6194 = vsel %vm3487, %v6193, %v6192
    %v6195 = vrot.slane %v2904, 5
    %v6196 = vrot.slane %v2905, 4
    %v6197 = vsel %vm3469, %v6196, %v6195
    %v6198 = vrot.slane %v2906, 3
    %v6199 = vsel %vm3472, %v6198, %v6197
    %v6200 = vrot.slane %v2907, 2
    %v6201 = vsel %vm3475, %v6200, %v6199
    %v6202 = vrot.slane %v2908, 1
    %v6203 = vsel %vm3478, %v6202, %v6201
    %v6204 = vsel %vm3481, %v2909, %v6203
    %v6205 = vrot.slane %v2910, 7
    %v6206 = vsel %vm3484, %v6205, %v6204
    %v6207 = vrot.slane %v2911, 6
    %v6208 = vsel %vm3487, %v6207, %v6206
    %v6209 = vsel %vm826, %v6194, 0
    %v6211 = vsel %vm826, %v6208, 0
    %6213 = vmatpush.xpose.msra.mxu0 0.0
    %6214 = vmatpush.xpose.msra.mxu0 0.0
    %6215 = vmatpush.xpose.msra.mxu0 0.0
    %6216 = vmatpush.xpose.msra.mxu0 0.0
    %6217 = vmatpush.xpose.msra.mxu0 0.0
    %6218 = vmatpush.xpose.msra.mxu0 0.0
    %6219 = vmatpush.xpose.msra.mxu0 0.0
    %6220 = vmatpush.xpose.msra.mxu0 0.0
    %6221 = vmatpush.xpose.msra.mxu0 0.0
    %6222 = vmatpush.xpose.msra.mxu0 0.0
    %6223 = vmatpush.xpose.msra.mxu0 0.0
    %6224 = vmatpush.xpose.msra.mxu0 0.0
    %6225 = vmatpush.xpose.msra.mxu0 0.0
    %6226 = vmatpush.xpose.msra.mxu0 0.0
    %6227 = vmatpush.xpose.msra.mxu0 0.0
    %6228 = vmatpush.xpose.msra.mxu0 %v6211
    %6229 = vmatmul.f32.gmra.mxu0 %v6209
    %v6230 = vpop.f32.mrf.mxu0
    %v6231 = vadd.f32 0.0, %v6230
    %6232 = vdwg.mxu0
    %v6233 = vrot.slane %v1600, 5
    %v6234 = vrot.slane %v1601, 4
    %v6235 = vsel %vm3469, %v6234, %v6233
    %v6236 = vrot.slane %v1602, 3
    %v6237 = vsel %vm3472, %v6236, %v6235
    %v6238 = vrot.slane %v1603, 2
    %v6239 = vsel %vm3475, %v6238, %v6237
    %v6240 = vrot.slane %v1604, 1
    %v6241 = vsel %vm3478, %v6240, %v6239
    %v6242 = vsel %vm3481, %v1605, %v6241
    %v6243 = vrot.slane %v1606, 7
    %v6244 = vsel %vm3484, %v6243, %v6242
    %v6245 = vrot.slane %v1607, 6
    %v6246 = vsel %vm3487, %v6245, %v6244
    %v6247 = vrot.slane %v2912, 5
    %v6248 = vrot.slane %v2913, 4
    %v6249 = vsel %vm3469, %v6248, %v6247
    %v6250 = vrot.slane %v2914, 3
    %v6251 = vsel %vm3472, %v6250, %v6249
    %v6252 = vrot.slane %v2915, 2
    %v6253 = vsel %vm3475, %v6252, %v6251
    %v6254 = vrot.slane %v2916, 1
    %v6255 = vsel %vm3478, %v6254, %v6253
    %v6256 = vsel %vm3481, %v2917, %v6255
    %v6257 = vrot.slane %v2918, 7
    %v6258 = vsel %vm3484, %v6257, %v6256
    %v6259 = vrot.slane %v2919, 6
    %v6260 = vsel %vm3487, %v6259, %v6258
    %v6261 = vsel %vm826, %v6246, 0
    %v6263 = vsel %vm826, %v6260, 0
    %6265 = vmatpush.xpose.msra.mxu0 0.0
    %6266 = vmatpush.xpose.msra.mxu0 0.0
    %6267 = vmatpush.xpose.msra.mxu0 0.0
    %6268 = vmatpush.xpose.msra.mxu0 0.0
    %6269 = vmatpush.xpose.msra.mxu0 0.0
    %6270 = vmatpush.xpose.msra.mxu0 0.0
    %6271 = vmatpush.xpose.msra.mxu0 0.0
    %6272 = vmatpush.xpose.msra.mxu0 0.0
    %6273 = vmatpush.xpose.msra.mxu0 0.0
    %6274 = vmatpush.xpose.msra.mxu0 0.0
    %6275 = vmatpush.xpose.msra.mxu0 0.0
    %6276 = vmatpush.xpose.msra.mxu0 0.0
    %6277 = vmatpush.xpose.msra.mxu0 0.0
    %6278 = vmatpush.xpose.msra.mxu0 0.0
    %6279 = vmatpush.xpose.msra.mxu0 0.0
    %6280 = vmatpush.xpose.msra.mxu0 %v6263
    %6281 = vmatmul.f32.gmra.mxu0 %v6261
    %v6282 = vpop.f32.mrf.mxu0
    %v6283 = vadd.f32 0.0, %v6282
    %6284 = vdwg.mxu0
    %v6285 = vsel %vm3739, %v6127, -inf
    %6286 = vmax.xlane.f32.xlu0 %v6285
    %v6287 = vpop.xlane.xlu0 %6286
    %v6288 = vsel %vm3739, %v6179, -inf
    %6289 = vmax.xlane.f32.xlu0 %v6288
    %v6290 = vpop.xlane.xlu0 %6289
    %v6291 = vsel %vm3739, %v6231, -inf
    %6292 = vmax.xlane.f32.xlu0 %v6291
    %v6293 = vpop.xlane.xlu0 %6292
    %v6294 = vsel %vm3739, %v6283, -inf
    %6295 = vmax.xlane.f32.xlu0 %v6294
    %v6296 = vpop.xlane.xlu0 %6295
    %v6297 = vsub.f32 %v6127, %v6287
    %v6298 = vsub.f32 %v6179, %v6290
    %v6299 = vsub.f32 %v6231, %v6293
    %v6300 = vsub.f32 %v6283, %v6296
    %v6301 = vmul.f32 %v6297, 1.442695
    %v6302 = vpow.pop %v6301
    %v6303 = vmul.f32 %v6298, 1.442695
    %v6304 = vpow.pop %v6303
    %v6305 = vmul.f32 %v6299, 1.442695
    %v6306 = vpow.pop %v6305
    %v6307 = vmul.f32 %v6300, 1.442695
    %v6308 = vpow.pop %v6307
    %v6309 = vsel %vm3739, %v6302, 0.0
    %6310 = vadd.xlane.f32.xlu0 %v6309
    %v6311 = vpop.xlane.xlu0 %6310
    %v6312 = vsel %vm3739, %v6304, 0.0
    %6313 = vadd.xlane.f32.xlu0 %v6312
    %v6314 = vpop.xlane.xlu0 %6313
    %v6315 = vsel %vm3739, %v6306, 0.0
    %6316 = vadd.xlane.f32.xlu0 %v6315
    %v6317 = vpop.xlane.xlu0 %6316
    %v6318 = vsel %vm3739, %v6308, 0.0
    %6319 = vadd.xlane.f32.xlu0 %v6318
    %v6320 = vpop.xlane.xlu0 %6319
    %v6321 = vrcp.pop %v6311
    %v6322 = vmul.f32 %v6311, %v6321
    %v6323 = vsub.f32 1.0, %v6322
    %v6324 = vmul.f32 %v6321, %v6323
    %v6325 = vadd.f32 %v6321, %v6324
    %vm6326 = vweird.f32 %v6311
    %vm6327 = vweird.f32 %v6321
    %vm6328 = vmor %vm6326, %vm6327
    %v6329 = vsel %vm6328, %v6321, %v6325
    %v6330 = vand.u32 2147483647, %v6311
    %vm6331 = vcmp.eq.f32.partialorder %v6330, 8.507059e+37
    %v6332 = vand.u32 %v6311, 2147483648
    %v6333 = vor.u32 1.1754944e-38, %v6332
    %v6334 = vsel %vm6331, %v6333, %v6329
    %v6335 = vrcp.pop %v6314
    %v6336 = vmul.f32 %v6314, %v6335
    %v6337 = vsub.f32 1.0, %v6336
    %v6338 = vmul.f32 %v6335, %v6337
    %v6339 = vadd.f32 %v6335, %v6338
    %vm6340 = vweird.f32 %v6314
    %vm6341 = vweird.f32 %v6335
    %vm6342 = vmor %vm6340, %vm6341
    %v6343 = vsel %vm6342, %v6335, %v6339
    %v6344 = vand.u32 2147483647, %v6314
    %vm6345 = vcmp.eq.f32.partialorder %v6344, 8.507059e+37
    %v6346 = vand.u32 %v6314, 2147483648
    %v6347 = vor.u32 1.1754944e-38, %v6346
    %v6348 = vsel %vm6345, %v6347, %v6343
    %v6349 = vrcp.pop %v6317
    %v6350 = vmul.f32 %v6317, %v6349
    %v6351 = vsub.f32 1.0, %v6350
    %v6352 = vmul.f32 %v6349, %v6351
    %v6353 = vadd.f32 %v6349, %v6352
    %vm6354 = vweird.f32 %v6317
    %vm6355 = vweird.f32 %v6349
    %vm6356 = vmor %vm6354, %vm6355
    %v6357 = vsel %vm6356, %v6349, %v6353
    %v6358 = vand.u32 2147483647, %v6317
    %vm6359 = vcmp.eq.f32.partialorder %v6358, 8.507059e+37
    %v6360 = vand.u32 %v6317, 2147483648
    %v6361 = vor.u32 1.1754944e-38, %v6360
    %v6362 = vsel %vm6359, %v6361, %v6357
    %v6363 = vrcp.pop %v6320
    %v6364 = vmul.f32 %v6320, %v6363
    %v6365 = vsub.f32 1.0, %v6364
    %v6366 = vmul.f32 %v6363, %v6365
    %v6367 = vadd.f32 %v6363, %v6366
    %vm6368 = vweird.f32 %v6320
    %vm6369 = vweird.f32 %v6363
    %vm6370 = vmor %vm6368, %vm6369
    %v6371 = vsel %vm6370, %v6363, %v6367
    %v6372 = vand.u32 2147483647, %v6320
    %vm6373 = vcmp.eq.f32.partialorder %v6372, 8.507059e+37
    %v6374 = vand.u32 %v6320, 2147483648
    %v6375 = vor.u32 1.1754944e-38, %v6374
    %v6376 = vsel %vm6373, %v6375, %v6371
    %v6377 = vmul.f32 %v6302, %v6334
    %v6378 = vmul.f32 %v6304, %v6348
    %v6379 = vmul.f32 %v6306, %v6362
    %v6380 = vmul.f32 %v6308, %v6376
    %v6381 = vrot.slane %v3105, 5
    %v6382 = vrot.slane %v3107, 4
    %v6383 = vsel %vm3469, %v6382, %v6381
    %v6384 = vrot.slane %v3109, 3
    %v6385 = vsel %vm3472, %v6384, %v6383
    %v6386 = vrot.slane %v3111, 2
    %v6387 = vsel %vm3475, %v6386, %v6385
    %v6388 = vrot.slane %v3113, 1
    %v6389 = vsel %vm3478, %v6388, %v6387
    %v6390 = vsel %vm3481, %v3115, %v6389
    %v6391 = vrot.slane %v3117, 7
    %v6392 = vsel %vm3484, %v6391, %v6390
    %v6393 = vrot.slane %v3119, 6
    %v6394 = vsel %vm3487, %v6393, %v6392
    %v6397 = vsel %vm3739, %v6377, 0
    %6399 = vmatpush.msra.mxu0 0.0
    %6400 = vmatpush.msra.mxu0 0.0
    %6401 = vmatpush.msra.mxu0 0.0
    %6402 = vmatpush.msra.mxu0 0.0
    %6403 = vmatpush.msra.mxu0 0.0
    %6404 = vmatpush.msra.mxu0 0.0
    %6405 = vmatpush.msra.mxu0 0.0
    %6406 = vmatpush.msra.mxu0 0.0
    %6407 = vmatpush.msra.mxu0 0.0
    %6408 = vmatpush.msra.mxu0 0.0
    %6409 = vmatpush.msra.mxu0 0.0
    %6410 = vmatpush.msra.mxu0 0.0
    %6411 = vmatpush.msra.mxu0 0.0
    %6412 = vmatpush.msra.mxu0 0.0
    %6413 = vmatpush.msra.mxu0 0.0
    %6414 = vmatpush.msra.mxu0 %v6394
    %6415 = vmatmul.f32.gmra.mxu0 %v6397
    %v6416 = vpop.f32.mrf.mxu0
    %v6417 = vadd.f32 0.0, %v6416
    %6418 = vdwg.mxu0
    %v6419 = vrot.slane %v3217, 5
    %v6420 = vrot.slane %v3219, 4
    %v6421 = vsel %vm3469, %v6420, %v6419
    %v6422 = vrot.slane %v3221, 3
    %v6423 = vsel %vm3472, %v6422, %v6421
    %v6424 = vrot.slane %v3223, 2
    %v6425 = vsel %vm3475, %v6424, %v6423
    %v6426 = vrot.slane %v3225, 1
    %v6427 = vsel %vm3478, %v6426, %v6425
    %v6428 = vsel %vm3481, %v3227, %v6427
    %v6429 = vrot.slane %v3229, 7
    %v6430 = vsel %vm3484, %v6429, %v6428
    %v6431 = vrot.slane %v3231, 6
    %v6432 = vsel %vm3487, %v6431, %v6430
    %v6435 = vsel %vm3739, %v6378, 0
    %6437 = vmatpush.msra.mxu0 0.0
    %6438 = vmatpush.msra.mxu0 0.0
    %6439 = vmatpush.msra.mxu0 0.0
    %6440 = vmatpush.msra.mxu0 0.0
    %6441 = vmatpush.msra.mxu0 0.0
    %6442 = vmatpush.msra.mxu0 0.0
    %6443 = vmatpush.msra.mxu0 0.0
    %6444 = vmatpush.msra.mxu0 0.0
    %6445 = vmatpush.msra.mxu0 0.0
    %6446 = vmatpush.msra.mxu0 0.0
    %6447 = vmatpush.msra.mxu0 0.0
    %6448 = vmatpush.msra.mxu0 0.0
    %6449 = vmatpush.msra.mxu0 0.0
    %6450 = vmatpush.msra.mxu0 0.0
    %6451 = vmatpush.msra.mxu0 0.0
    %6452 = vmatpush.msra.mxu0 %v6432
    %6453 = vmatmul.f32.gmra.mxu0 %v6435
    %v6454 = vpop.f32.mrf.mxu0
    %v6455 = vadd.f32 0.0, %v6454
    %6456 = vdwg.mxu0
    %v6457 = vrot.slane %v3329, 5
    %v6458 = vrot.slane %v3331, 4
    %v6459 = vsel %vm3469, %v6458, %v6457
    %v6460 = vrot.slane %v3333, 3
    %v6461 = vsel %vm3472, %v6460, %v6459
    %v6462 = vrot.slane %v3335, 2
    %v6463 = vsel %vm3475, %v6462, %v6461
    %v6464 = vrot.slane %v3337, 1
    %v6465 = vsel %vm3478, %v6464, %v6463
    %v6466 = vsel %vm3481, %v3339, %v6465
    %v6467 = vrot.slane %v3341, 7
    %v6468 = vsel %vm3484, %v6467, %v6466
    %v6469 = vrot.slane %v3343, 6
    %v6470 = vsel %vm3487, %v6469, %v6468
    %v6473 = vsel %vm3739, %v6379, 0
    %6475 = vmatpush.msra.mxu0 0.0
    %6476 = vmatpush.msra.mxu0 0.0
    %6477 = vmatpush.msra.mxu0 0.0
    %6478 = vmatpush.msra.mxu0 0.0
    %6479 = vmatpush.msra.mxu0 0.0
    %6480 = vmatpush.msra.mxu0 0.0
    %6481 = vmatpush.msra.mxu0 0.0
    %6482 = vmatpush.msra.mxu0 0.0
    %6483 = vmatpush.msra.mxu0 0.0
    %6484 = vmatpush.msra.mxu0 0.0
    %6485 = vmatpush.msra.mxu0 0.0
    %6486 = vmatpush.msra.mxu0 0.0
    %6487 = vmatpush.msra.mxu0 0.0
    %6488 = vmatpush.msra.mxu0 0.0
    %6489 = vmatpush.msra.mxu0 0.0
    %6490 = vmatpush.msra.mxu0 %v6470
    %6491 = vmatmul.f32.gmra.mxu0 %v6473
    %v6492 = vpop.f32.mrf.mxu0
    %v6493 = vadd.f32 0.0, %v6492
    %6494 = vdwg.mxu0
    %v6495 = vrot.slane %v3441, 5
    %v6496 = vrot.slane %v3443, 4
    %v6497 = vsel %vm3469, %v6496, %v6495
    %v6498 = vrot.slane %v3445, 3
    %v6499 = vsel %vm3472, %v6498, %v6497
    %v6500 = vrot.slane %v3447, 2
    %v6501 = vsel %vm3475, %v6500, %v6499
    %v6502 = vrot.slane %v3449, 1
    %v6503 = vsel %vm3478, %v6502, %v6501
    %v6504 = vsel %vm3481, %v3451, %v6503
    %v6505 = vrot.slane %v3453, 7
    %v6506 = vsel %vm3484, %v6505, %v6504
    %v6507 = vrot.slane %v3455, 6
    %v6508 = vsel %vm3487, %v6507, %v6506
    %v6511 = vsel %vm3739, %v6380, 0
    %6513 = vmatpush.msra.mxu0 0.0
    %6514 = vmatpush.msra.mxu0 0.0
    %6515 = vmatpush.msra.mxu0 0.0
    %6516 = vmatpush.msra.mxu0 0.0
    %6517 = vmatpush.msra.mxu0 0.0
    %6518 = vmatpush.msra.mxu0 0.0
    %6519 = vmatpush.msra.mxu0 0.0
    %6520 = vmatpush.msra.mxu0 0.0
    %6521 = vmatpush.msra.mxu0 0.0
    %6522 = vmatpush.msra.mxu0 0.0
    %6523 = vmatpush.msra.mxu0 0.0
    %6524 = vmatpush.msra.mxu0 0.0
    %6525 = vmatpush.msra.mxu0 0.0
    %6526 = vmatpush.msra.mxu0 0.0
    %6527 = vmatpush.msra.mxu0 0.0
    %6528 = vmatpush.msra.mxu0 %v6508
    %6529 = vmatmul.f32.gmra.mxu0 %v6511
    %v6530 = vpop.f32.mrf.mxu0
    %v6531 = vadd.f32 0.0, %v6530
    %6532 = vdwg.mxu0
    %v6533 = vrot.slane %v3458, 4
    %v6535 = vsel %vm826, %v6417, 0
    %v6538 = vsel %vm826, %v6455, 0
    %v6541 = vsel %vm826, %v6493, 0
    %v6544 = vsel %vm826, %v6531, 0
    %v6546 = vsel %vm4490, %v6533, 0
    %6548 = vmatpush.msra.mxu0 0.0
    %6549 = vmatpush.msra.mxu0 0.0
    %6550 = vmatpush.msra.mxu0 0.0
    %6551 = vmatpush.msra.mxu0 0.0
    %6552 = vmatpush.msra.mxu0 0.0
    %6553 = vmatpush.msra.mxu0 0.0
    %6554 = vmatpush.msra.mxu0 0.0
    %6555 = vmatpush.msra.mxu0 0.0
    %6556 = vmatpush.msra.mxu0 0.0
    %6557 = vmatpush.msra.mxu0 0.0
    %6558 = vmatpush.msra.mxu0 0.0
    %6559 = vmatpush.msra.mxu0 0.0
    %6560 = vmatpush.msra.mxu0 0.0
    %6561 = vmatpush.msra.mxu0 0.0
    %6562 = vmatpush.msra.mxu0 0.0
    %6563 = vmatpush.msra.mxu0 %v6546
    %6564 = vmatmul.f32.gmra.mxu0 %v6535
    %v6565 = vpop.f32.mrf.mxu0
    %v6566 = vadd.f32 0.0, %v6565
    %6567 = vmatmul.f32.gmra.mxu0 %v6538
    %v6568 = vpop.f32.mrf.mxu0
    %v6569 = vadd.f32 0.0, %v6568
    %6570 = vmatmul.f32.gmra.mxu0 %v6541
    %v6571 = vpop.f32.mrf.mxu0
    %v6572 = vadd.f32 0.0, %v6571
    %6573 = vmatmul.f32.gmra.mxu0 %v6544
    %v6574 = vpop.f32.mrf.mxu0
    %v6575 = vadd.f32 0.0, %v6574
    %6576 = vdwg.mxu0
    %v6577 = vadd.f32 %v6073, %v6566
    %v6578 = vadd.f32 %v6074, %v6569
    %v6579 = vadd.f32 %v6075, %v6572
    %v6580 = vadd.f32 %v6076, %v6575
    %v6581 = vrot.slane %v1576, 6
    %v6582 = vrot.slane %v1577, 5
    %v6583 = vsel %vm3469, %v6582, %v6581
    %v6584 = vrot.slane %v1578, 4
    %v6585 = vsel %vm3472, %v6584, %v6583
    %v6586 = vrot.slane %v1579, 3
    %v6587 = vsel %vm3475, %v6586, %v6585
    %v6588 = vrot.slane %v1580, 2
    %v6589 = vsel %vm3478, %v6588, %v6587
    %v6590 = vrot.slane %v1581, 1
    %v6591 = vsel %vm3481, %v6590, %v6589
    %v6592 = vsel %vm3484, %v1582, %v6591
    %v6593 = vrot.slane %v1583, 7
    %v6594 = vsel %vm3487, %v6593, %v6592
    %v6595 = vrot.slane %v2888, 6
    %v6596 = vrot.slane %v2889, 5
    %v6597 = vsel %vm3469, %v6596, %v6595
    %v6598 = vrot.slane %v2890, 4
    %v6599 = vsel %vm3472, %v6598, %v6597
    %v6600 = vrot.slane %v2891, 3
    %v6601 = vsel %vm3475, %v6600, %v6599
    %v6602 = vrot.slane %v2892, 2
    %v6603 = vsel %vm3478, %v6602, %v6601
    %v6604 = vrot.slane %v2893, 1
    %v6605 = vsel %vm3481, %v6604, %v6603
    %v6606 = vsel %vm3484, %v2894, %v6605
    %v6607 = vrot.slane %v2895, 7
    %v6608 = vsel %vm3487, %v6607, %v6606
    %v6609 = vsel %vm826, %v6594, 0
    %v6611 = vsel %vm826, %v6608, 0
    %6613 = vmatpush.xpose.msra.mxu0 0.0
    %6614 = vmatpush.xpose.msra.mxu0 0.0
    %6615 = vmatpush.xpose.msra.mxu0 0.0
    %6616 = vmatpush.xpose.msra.mxu0 0.0
    %6617 = vmatpush.xpose.msra.mxu0 0.0
    %6618 = vmatpush.xpose.msra.mxu0 0.0
    %6619 = vmatpush.xpose.msra.mxu0 0.0
    %6620 = vmatpush.xpose.msra.mxu0 0.0
    %6621 = vmatpush.xpose.msra.mxu0 0.0
    %6622 = vmatpush.xpose.msra.mxu0 0.0
    %6623 = vmatpush.xpose.msra.mxu0 0.0
    %6624 = vmatpush.xpose.msra.mxu0 0.0
    %6625 = vmatpush.xpose.msra.mxu0 0.0
    %6626 = vmatpush.xpose.msra.mxu0 0.0
    %6627 = vmatpush.xpose.msra.mxu0 0.0
    %6628 = vmatpush.xpose.msra.mxu0 %v6611
    %6629 = vmatmul.f32.gmra.mxu0 %v6609
    %v6630 = vpop.f32.mrf.mxu0
    %v6631 = vadd.f32 0.0, %v6630
    %6632 = vdwg.mxu0
    %v6633 = vrot.slane %v1584, 6
    %v6634 = vrot.slane %v1585, 5
    %v6635 = vsel %vm3469, %v6634, %v6633
    %v6636 = vrot.slane %v1586, 4
    %v6637 = vsel %vm3472, %v6636, %v6635
    %v6638 = vrot.slane %v1587, 3
    %v6639 = vsel %vm3475, %v6638, %v6637
    %v6640 = vrot.slane %v1588, 2
    %v6641 = vsel %vm3478, %v6640, %v6639
    %v6642 = vrot.slane %v1589, 1
    %v6643 = vsel %vm3481, %v6642, %v6641
    %v6644 = vsel %vm3484, %v1590, %v6643
    %v6645 = vrot.slane %v1591, 7
    %v6646 = vsel %vm3487, %v6645, %v6644
    %v6647 = vrot.slane %v2896, 6
    %v6648 = vrot.slane %v2897, 5
    %v6649 = vsel %vm3469, %v6648, %v6647
    %v6650 = vrot.slane %v2898, 4
    %v6651 = vsel %vm3472, %v6650, %v6649
    %v6652 = vrot.slane %v2899, 3
    %v6653 = vsel %vm3475, %v6652, %v6651
    %v6654 = vrot.slane %v2900, 2
    %v6655 = vsel %vm3478, %v6654, %v6653
    %v6656 = vrot.slane %v2901, 1
    %v6657 = vsel %vm3481, %v6656, %v6655
    %v6658 = vsel %vm3484, %v2902, %v6657
    %v6659 = vrot.slane %v2903, 7
    %v6660 = vsel %vm3487, %v6659, %v6658
    %v6661 = vsel %vm826, %v6646, 0
    %v6663 = vsel %vm826, %v6660, 0
    %6665 = vmatpush.xpose.msra.mxu0 0.0
    %6666 = vmatpush.xpose.msra.mxu0 0.0
    %6667 = vmatpush.xpose.msra.mxu0 0.0
    %6668 = vmatpush.xpose.msra.mxu0 0.0
    %6669 = vmatpush.xpose.msra.mxu0 0.0
    %6670 = vmatpush.xpose.msra.mxu0 0.0
    %6671 = vmatpush.xpose.msra.mxu0 0.0
    %6672 = vmatpush.xpose.msra.mxu0 0.0
    %6673 = vmatpush.xpose.msra.mxu0 0.0
    %6674 = vmatpush.xpose.msra.mxu0 0.0
    %6675 = vmatpush.xpose.msra.mxu0 0.0
    %6676 = vmatpush.xpose.msra.mxu0 0.0
    %6677 = vmatpush.xpose.msra.mxu0 0.0
    %6678 = vmatpush.xpose.msra.mxu0 0.0
    %6679 = vmatpush.xpose.msra.mxu0 0.0
    %6680 = vmatpush.xpose.msra.mxu0 %v6663
    %6681 = vmatmul.f32.gmra.mxu0 %v6661
    %v6682 = vpop.f32.mrf.mxu0
    %v6683 = vadd.f32 0.0, %v6682
    %6684 = vdwg.mxu0
    %v6685 = vrot.slane %v1592, 6
    %v6686 = vrot.slane %v1593, 5
    %v6687 = vsel %vm3469, %v6686, %v6685
    %v6688 = vrot.slane %v1594, 4
    %v6689 = vsel %vm3472, %v6688, %v6687
    %v6690 = vrot.slane %v1595, 3
    %v6691 = vsel %vm3475, %v6690, %v6689
    %v6692 = vrot.slane %v1596, 2
    %v6693 = vsel %vm3478, %v6692, %v6691
    %v6694 = vrot.slane %v1597, 1
    %v6695 = vsel %vm3481, %v6694, %v6693
    %v6696 = vsel %vm3484, %v1598, %v6695
    %v6697 = vrot.slane %v1599, 7
    %v6698 = vsel %vm3487, %v6697, %v6696
    %v6699 = vrot.slane %v2904, 6
    %v6700 = vrot.slane %v2905, 5
    %v6701 = vsel %vm3469, %v6700, %v6699
    %v6702 = vrot.slane %v2906, 4
    %v6703 = vsel %vm3472, %v6702, %v6701
    %v6704 = vrot.slane %v2907, 3
    %v6705 = vsel %vm3475, %v6704, %v6703
    %v6706 = vrot.slane %v2908, 2
    %v6707 = vsel %vm3478, %v6706, %v6705
    %v6708 = vrot.slane %v2909, 1
    %v6709 = vsel %vm3481, %v6708, %v6707
    %v6710 = vsel %vm3484, %v2910, %v6709
    %v6711 = vrot.slane %v2911, 7
    %v6712 = vsel %vm3487, %v6711, %v6710
    %v6713 = vsel %vm826, %v6698, 0
    %v6715 = vsel %vm826, %v6712, 0
    %6717 = vmatpush.xpose.msra.mxu0 0.0
    %6718 = vmatpush.xpose.msra.mxu0 0.0
    %6719 = vmatpush.xpose.msra.mxu0 0.0
    %6720 = vmatpush.xpose.msra.mxu0 0.0
    %6721 = vmatpush.xpose.msra.mxu0 0.0
    %6722 = vmatpush.xpose.msra.mxu0 0.0
    %6723 = vmatpush.xpose.msra.mxu0 0.0
    %6724 = vmatpush.xpose.msra.mxu0 0.0
    %6725 = vmatpush.xpose.msra.mxu0 0.0
    %6726 = vmatpush.xpose.msra.mxu0 0.0
    %6727 = vmatpush.xpose.msra.mxu0 0.0
    %6728 = vmatpush.xpose.msra.mxu0 0.0
    %6729 = vmatpush.xpose.msra.mxu0 0.0
    %6730 = vmatpush.xpose.msra.mxu0 0.0
    %6731 = vmatpush.xpose.msra.mxu0 0.0
    %6732 = vmatpush.xpose.msra.mxu0 %v6715
    %6733 = vmatmul.f32.gmra.mxu0 %v6713
    %v6734 = vpop.f32.mrf.mxu0
    %v6735 = vadd.f32 0.0, %v6734
    %6736 = vdwg.mxu0
    %v6737 = vrot.slane %v1600, 6
    %v6738 = vrot.slane %v1601, 5
    %v6739 = vsel %vm3469, %v6738, %v6737
    %v6740 = vrot.slane %v1602, 4
    %v6741 = vsel %vm3472, %v6740, %v6739
    %v6742 = vrot.slane %v1603, 3
    %v6743 = vsel %vm3475, %v6742, %v6741
    %v6744 = vrot.slane %v1604, 2
    %v6745 = vsel %vm3478, %v6744, %v6743
    %v6746 = vrot.slane %v1605, 1
    %v6747 = vsel %vm3481, %v6746, %v6745
    %v6748 = vsel %vm3484, %v1606, %v6747
    %v6749 = vrot.slane %v1607, 7
    %v6750 = vsel %vm3487, %v6749, %v6748
    %v6751 = vrot.slane %v2912, 6
    %v6752 = vrot.slane %v2913, 5
    %v6753 = vsel %vm3469, %v6752, %v6751
    %v6754 = vrot.slane %v2914, 4
    %v6755 = vsel %vm3472, %v6754, %v6753
    %v6756 = vrot.slane %v2915, 3
    %v6757 = vsel %vm3475, %v6756, %v6755
    %v6758 = vrot.slane %v2916, 2
    %v6759 = vsel %vm3478, %v6758, %v6757
    %v6760 = vrot.slane %v2917, 1
    %v6761 = vsel %vm3481, %v6760, %v6759
    %v6762 = vsel %vm3484, %v2918, %v6761
    %v6763 = vrot.slane %v2919, 7
    %v6764 = vsel %vm3487, %v6763, %v6762
    %v6765 = vsel %vm826, %v6750, 0
    %v6767 = vsel %vm826, %v6764, 0
    %6769 = vmatpush.xpose.msra.mxu0 0.0
    %6770 = vmatpush.xpose.msra.mxu0 0.0
    %6771 = vmatpush.xpose.msra.mxu0 0.0
    %6772 = vmatpush.xpose.msra.mxu0 0.0
    %6773 = vmatpush.xpose.msra.mxu0 0.0
    %6774 = vmatpush.xpose.msra.mxu0 0.0
    %6775 = vmatpush.xpose.msra.mxu0 0.0
    %6776 = vmatpush.xpose.msra.mxu0 0.0
    %6777 = vmatpush.xpose.msra.mxu0 0.0
    %6778 = vmatpush.xpose.msra.mxu0 0.0
    %6779 = vmatpush.xpose.msra.mxu0 0.0
    %6780 = vmatpush.xpose.msra.mxu0 0.0
    %6781 = vmatpush.xpose.msra.mxu0 0.0
    %6782 = vmatpush.xpose.msra.mxu0 0.0
    %6783 = vmatpush.xpose.msra.mxu0 0.0
    %6784 = vmatpush.xpose.msra.mxu0 %v6767
    %6785 = vmatmul.f32.gmra.mxu0 %v6765
    %v6786 = vpop.f32.mrf.mxu0
    %v6787 = vadd.f32 0.0, %v6786
    %6788 = vdwg.mxu0
    %v6789 = vsel %vm3739, %v6631, -inf
    %6790 = vmax.xlane.f32.xlu0 %v6789
    %v6791 = vpop.xlane.xlu0 %6790
    %v6792 = vsel %vm3739, %v6683, -inf
    %6793 = vmax.xlane.f32.xlu0 %v6792
    %v6794 = vpop.xlane.xlu0 %6793
    %v6795 = vsel %vm3739, %v6735, -inf
    %6796 = vmax.xlane.f32.xlu0 %v6795
    %v6797 = vpop.xlane.xlu0 %6796
    %v6798 = vsel %vm3739, %v6787, -inf
    %6799 = vmax.xlane.f32.xlu0 %v6798
    %v6800 = vpop.xlane.xlu0 %6799
    %v6801 = vsub.f32 %v6631, %v6791
    %v6802 = vsub.f32 %v6683, %v6794
    %v6803 = vsub.f32 %v6735, %v6797
    %v6804 = vsub.f32 %v6787, %v6800
    %v6805 = vmul.f32 %v6801, 1.442695
    %v6806 = vpow.pop %v6805
    %v6807 = vmul.f32 %v6802, 1.442695
    %v6808 = vpow.pop %v6807
    %v6809 = vmul.f32 %v6803, 1.442695
    %v6810 = vpow.pop %v6809
    %v6811 = vmul.f32 %v6804, 1.442695
    %v6812 = vpow.pop %v6811
    %v6813 = vsel %vm3739, %v6806, 0.0
    %6814 = vadd.xlane.f32.xlu0 %v6813
    %v6815 = vpop.xlane.xlu0 %6814
    %v6816 = vsel %vm3739, %v6808, 0.0
    %6817 = vadd.xlane.f32.xlu0 %v6816
    %v6818 = vpop.xlane.xlu0 %6817
    %v6819 = vsel %vm3739, %v6810, 0.0
    %6820 = vadd.xlane.f32.xlu0 %v6819
    %v6821 = vpop.xlane.xlu0 %6820
    %v6822 = vsel %vm3739, %v6812, 0.0
    %6823 = vadd.xlane.f32.xlu0 %v6822
    %v6824 = vpop.xlane.xlu0 %6823
    %v6825 = vrcp.pop %v6815
    %v6826 = vmul.f32 %v6815, %v6825
    %v6827 = vsub.f32 1.0, %v6826
    %v6828 = vmul.f32 %v6825, %v6827
    %v6829 = vadd.f32 %v6825, %v6828
    %vm6830 = vweird.f32 %v6815
    %vm6831 = vweird.f32 %v6825
    %vm6832 = vmor %vm6830, %vm6831
    %v6833 = vsel %vm6832, %v6825, %v6829
    %v6834 = vand.u32 2147483647, %v6815
    %vm6835 = vcmp.eq.f32.partialorder %v6834, 8.507059e+37
    %v6836 = vand.u32 %v6815, 2147483648
    %v6837 = vor.u32 1.1754944e-38, %v6836
    %v6838 = vsel %vm6835, %v6837, %v6833
    %v6839 = vrcp.pop %v6818
    %v6840 = vmul.f32 %v6818, %v6839
    %v6841 = vsub.f32 1.0, %v6840
    %v6842 = vmul.f32 %v6839, %v6841
    %v6843 = vadd.f32 %v6839, %v6842
    %vm6844 = vweird.f32 %v6818
    %vm6845 = vweird.f32 %v6839
    %vm6846 = vmor %vm6844, %vm6845
    %v6847 = vsel %vm6846, %v6839, %v6843
    %v6848 = vand.u32 2147483647, %v6818
    %vm6849 = vcmp.eq.f32.partialorder %v6848, 8.507059e+37
    %v6850 = vand.u32 %v6818, 2147483648
    %v6851 = vor.u32 1.1754944e-38, %v6850
    %v6852 = vsel %vm6849, %v6851, %v6847
    %v6853 = vrcp.pop %v6821
    %v6854 = vmul.f32 %v6821, %v6853
    %v6855 = vsub.f32 1.0, %v6854
    %v6856 = vmul.f32 %v6853, %v6855
    %v6857 = vadd.f32 %v6853, %v6856
    %vm6858 = vweird.f32 %v6821
    %vm6859 = vweird.f32 %v6853
    %vm6860 = vmor %vm6858, %vm6859
    %v6861 = vsel %vm6860, %v6853, %v6857
    %v6862 = vand.u32 2147483647, %v6821
    %vm6863 = vcmp.eq.f32.partialorder %v6862, 8.507059e+37
    %v6864 = vand.u32 %v6821, 2147483648
    %v6865 = vor.u32 1.1754944e-38, %v6864
    %v6866 = vsel %vm6863, %v6865, %v6861
    %v6867 = vrcp.pop %v6824
    %v6868 = vmul.f32 %v6824, %v6867
    %v6869 = vsub.f32 1.0, %v6868
    %v6870 = vmul.f32 %v6867, %v6869
    %v6871 = vadd.f32 %v6867, %v6870
    %vm6872 = vweird.f32 %v6824
    %vm6873 = vweird.f32 %v6867
    %vm6874 = vmor %vm6872, %vm6873
    %v6875 = vsel %vm6874, %v6867, %v6871
    %v6876 = vand.u32 2147483647, %v6824
    %vm6877 = vcmp.eq.f32.partialorder %v6876, 8.507059e+37
    %v6878 = vand.u32 %v6824, 2147483648
    %v6879 = vor.u32 1.1754944e-38, %v6878
    %v6880 = vsel %vm6877, %v6879, %v6875
    %v6881 = vmul.f32 %v6806, %v6838
    %v6882 = vmul.f32 %v6808, %v6852
    %v6883 = vmul.f32 %v6810, %v6866
    %v6884 = vmul.f32 %v6812, %v6880
    %v6885 = vrot.slane %v3105, 6
    %v6886 = vrot.slane %v3107, 5
    %v6887 = vsel %vm3469, %v6886, %v6885
    %v6888 = vrot.slane %v3109, 4
    %v6889 = vsel %vm3472, %v6888, %v6887
    %v6890 = vrot.slane %v3111, 3
    %v6891 = vsel %vm3475, %v6890, %v6889
    %v6892 = vrot.slane %v3113, 2
    %v6893 = vsel %vm3478, %v6892, %v6891
    %v6894 = vrot.slane %v3115, 1
    %v6895 = vsel %vm3481, %v6894, %v6893
    %v6896 = vsel %vm3484, %v3117, %v6895
    %v6897 = vrot.slane %v3119, 7
    %v6898 = vsel %vm3487, %v6897, %v6896
    %v6901 = vsel %vm3739, %v6881, 0
    %6903 = vmatpush.msra.mxu0 0.0
    %6904 = vmatpush.msra.mxu0 0.0
    %6905 = vmatpush.msra.mxu0 0.0
    %6906 = vmatpush.msra.mxu0 0.0
    %6907 = vmatpush.msra.mxu0 0.0
    %6908 = vmatpush.msra.mxu0 0.0
    %6909 = vmatpush.msra.mxu0 0.0
    %6910 = vmatpush.msra.mxu0 0.0
    %6911 = vmatpush.msra.mxu0 0.0
    %6912 = vmatpush.msra.mxu0 0.0
    %6913 = vmatpush.msra.mxu0 0.0
    %6914 = vmatpush.msra.mxu0 0.0
    %6915 = vmatpush.msra.mxu0 0.0
    %6916 = vmatpush.msra.mxu0 0.0
    %6917 = vmatpush.msra.mxu0 0.0
    %6918 = vmatpush.msra.mxu0 %v6898
    %6919 = vmatmul.f32.gmra.mxu0 %v6901
    %v6920 = vpop.f32.mrf.mxu0
    %v6921 = vadd.f32 0.0, %v6920
    %6922 = vdwg.mxu0
    %v6923 = vrot.slane %v3217, 6
    %v6924 = vrot.slane %v3219, 5
    %v6925 = vsel %vm3469, %v6924, %v6923
    %v6926 = vrot.slane %v3221, 4
    %v6927 = vsel %vm3472, %v6926, %v6925
    %v6928 = vrot.slane %v3223, 3
    %v6929 = vsel %vm3475, %v6928, %v6927
    %v6930 = vrot.slane %v3225, 2
    %v6931 = vsel %vm3478, %v6930, %v6929
    %v6932 = vrot.slane %v3227, 1
    %v6933 = vsel %vm3481, %v6932, %v6931
    %v6934 = vsel %vm3484, %v3229, %v6933
    %v6935 = vrot.slane %v3231, 7
    %v6936 = vsel %vm3487, %v6935, %v6934
    %v6939 = vsel %vm3739, %v6882, 0
    %6941 = vmatpush.msra.mxu0 0.0
    %6942 = vmatpush.msra.mxu0 0.0
    %6943 = vmatpush.msra.mxu0 0.0
    %6944 = vmatpush.msra.mxu0 0.0
    %6945 = vmatpush.msra.mxu0 0.0
    %6946 = vmatpush.msra.mxu0 0.0
    %6947 = vmatpush.msra.mxu0 0.0
    %6948 = vmatpush.msra.mxu0 0.0
    %6949 = vmatpush.msra.mxu0 0.0
    %6950 = vmatpush.msra.mxu0 0.0
    %6951 = vmatpush.msra.mxu0 0.0
    %6952 = vmatpush.msra.mxu0 0.0
    %6953 = vmatpush.msra.mxu0 0.0
    %6954 = vmatpush.msra.mxu0 0.0
    %6955 = vmatpush.msra.mxu0 0.0
    %6956 = vmatpush.msra.mxu0 %v6936
    %6957 = vmatmul.f32.gmra.mxu0 %v6939
    %v6958 = vpop.f32.mrf.mxu0
    %v6959 = vadd.f32 0.0, %v6958
    %6960 = vdwg.mxu0
    %v6961 = vrot.slane %v3329, 6
    %v6962 = vrot.slane %v3331, 5
    %v6963 = vsel %vm3469, %v6962, %v6961
    %v6964 = vrot.slane %v3333, 4
    %v6965 = vsel %vm3472, %v6964, %v6963
    %v6966 = vrot.slane %v3335, 3
    %v6967 = vsel %vm3475, %v6966, %v6965
    %v6968 = vrot.slane %v3337, 2
    %v6969 = vsel %vm3478, %v6968, %v6967
    %v6970 = vrot.slane %v3339, 1
    %v6971 = vsel %vm3481, %v6970, %v6969
    %v6972 = vsel %vm3484, %v3341, %v6971
    %v6973 = vrot.slane %v3343, 7
    %v6974 = vsel %vm3487, %v6973, %v6972
    %v6977 = vsel %vm3739, %v6883, 0
    %6979 = vmatpush.msra.mxu0 0.0
    %6980 = vmatpush.msra.mxu0 0.0
    %6981 = vmatpush.msra.mxu0 0.0
    %6982 = vmatpush.msra.mxu0 0.0
    %6983 = vmatpush.msra.mxu0 0.0
    %6984 = vmatpush.msra.mxu0 0.0
    %6985 = vmatpush.msra.mxu0 0.0
    %6986 = vmatpush.msra.mxu0 0.0
    %6987 = vmatpush.msra.mxu0 0.0
    %6988 = vmatpush.msra.mxu0 0.0
    %6989 = vmatpush.msra.mxu0 0.0
    %6990 = vmatpush.msra.mxu0 0.0
    %6991 = vmatpush.msra.mxu0 0.0
    %6992 = vmatpush.msra.mxu0 0.0
    %6993 = vmatpush.msra.mxu0 0.0
    %6994 = vmatpush.msra.mxu0 %v6974
    %6995 = vmatmul.f32.gmra.mxu0 %v6977
    %v6996 = vpop.f32.mrf.mxu0
    %v6997 = vadd.f32 0.0, %v6996
    %6998 = vdwg.mxu0
    %v6999 = vrot.slane %v3441, 6
    %v7000 = vrot.slane %v3443, 5
    %v7001 = vsel %vm3469, %v7000, %v6999
    %v7002 = vrot.slane %v3445, 4
    %v7003 = vsel %vm3472, %v7002, %v7001
    %v7004 = vrot.slane %v3447, 3
    %v7005 = vsel %vm3475, %v7004, %v7003
    %v7006 = vrot.slane %v3449, 2
    %v7007 = vsel %vm3478, %v7006, %v7005
    %v7008 = vrot.slane %v3451, 1
    %v7009 = vsel %vm3481, %v7008, %v7007
    %v7010 = vsel %vm3484, %v3453, %v7009
    %v7011 = vrot.slane %v3455, 7
    %v7012 = vsel %vm3487, %v7011, %v7010
    %v7015 = vsel %vm3739, %v6884, 0
    %7017 = vmatpush.msra.mxu0 0.0
    %7018 = vmatpush.msra.mxu0 0.0
    %7019 = vmatpush.msra.mxu0 0.0
    %7020 = vmatpush.msra.mxu0 0.0
    %7021 = vmatpush.msra.mxu0 0.0
    %7022 = vmatpush.msra.mxu0 0.0
    %7023 = vmatpush.msra.mxu0 0.0
    %7024 = vmatpush.msra.mxu0 0.0
    %7025 = vmatpush.msra.mxu0 0.0
    %7026 = vmatpush.msra.mxu0 0.0
    %7027 = vmatpush.msra.mxu0 0.0
    %7028 = vmatpush.msra.mxu0 0.0
    %7029 = vmatpush.msra.mxu0 0.0
    %7030 = vmatpush.msra.mxu0 0.0
    %7031 = vmatpush.msra.mxu0 0.0
    %7032 = vmatpush.msra.mxu0 %v7012
    %7033 = vmatmul.f32.gmra.mxu0 %v7015
    %v7034 = vpop.f32.mrf.mxu0
    %v7035 = vadd.f32 0.0, %v7034
    %7036 = vdwg.mxu0
    %v7038 = vsel %vm826, %v6921, 0
    %v7041 = vsel %vm826, %v6959, 0
    %v7044 = vsel %vm826, %v6997, 0
    %v7047 = vsel %vm826, %v7035, 0
    %v7050 = vsel %vm4490, %v3459, 0
    %7052 = vmatpush.msra.mxu0 0.0
    %7053 = vmatpush.msra.mxu0 0.0
    %7054 = vmatpush.msra.mxu0 0.0
    %7055 = vmatpush.msra.mxu0 0.0
    %7056 = vmatpush.msra.mxu0 0.0
    %7057 = vmatpush.msra.mxu0 0.0
    %7058 = vmatpush.msra.mxu0 0.0
    %7059 = vmatpush.msra.mxu0 0.0
    %7060 = vmatpush.msra.mxu0 0.0
    %7061 = vmatpush.msra.mxu0 0.0
    %7062 = vmatpush.msra.mxu0 0.0
    %7063 = vmatpush.msra.mxu0 0.0
    %7064 = vmatpush.msra.mxu0 0.0
    %7065 = vmatpush.msra.mxu0 0.0
    %7066 = vmatpush.msra.mxu0 0.0
    %7067 = vmatpush.msra.mxu0 %v7050
    %7068 = vmatmul.f32.gmra.mxu0 %v7038
    %v7069 = vpop.f32.mrf.mxu0
    %v7070 = vadd.f32 0.0, %v7069
    %7071 = vmatmul.f32.gmra.mxu0 %v7041
    %v7072 = vpop.f32.mrf.mxu0
    %v7073 = vadd.f32 0.0, %v7072
    %7074 = vmatmul.f32.gmra.mxu0 %v7044
    %v7075 = vpop.f32.mrf.mxu0
    %v7076 = vadd.f32 0.0, %v7075
    %7077 = vmatmul.f32.gmra.mxu0 %v7047
    %v7078 = vpop.f32.mrf.mxu0
    %v7079 = vadd.f32 0.0, %v7078
    %7080 = vdwg.mxu0
    %v7081 = vadd.f32 %v6577, %v7070
    %v7082 = vadd.f32 %v6578, %v7073
    %v7083 = vadd.f32 %v6579, %v7076
    %v7084 = vadd.f32 %v6580, %v7079
    %v7085 = vrot.slane %v1576, 7
    %v7086 = vrot.slane %v1577, 6
    %v7087 = vsel %vm3469, %v7086, %v7085
    %v7088 = vrot.slane %v1578, 5
    %v7089 = vsel %vm3472, %v7088, %v7087
    %v7090 = vrot.slane %v1579, 4
    %v7091 = vsel %vm3475, %v7090, %v7089
    %v7092 = vrot.slane %v1580, 3
    %v7093 = vsel %vm3478, %v7092, %v7091
    %v7094 = vrot.slane %v1581, 2
    %v7095 = vsel %vm3481, %v7094, %v7093
    %v7096 = vrot.slane %v1582, 1
    %v7097 = vsel %vm3484, %v7096, %v7095
    %v7098 = vsel %vm3487, %v1583, %v7097
    %v7099 = vrot.slane %v2888, 7
    %v7100 = vrot.slane %v2889, 6
    %v7101 = vsel %vm3469, %v7100, %v7099
    %v7102 = vrot.slane %v2890, 5
    %v7103 = vsel %vm3472, %v7102, %v7101
    %v7104 = vrot.slane %v2891, 4
    %v7105 = vsel %vm3475, %v7104, %v7103
    %v7106 = vrot.slane %v2892, 3
    %v7107 = vsel %vm3478, %v7106, %v7105
    %v7108 = vrot.slane %v2893, 2
    %v7109 = vsel %vm3481, %v7108, %v7107
    %v7110 = vrot.slane %v2894, 1
    %v7111 = vsel %vm3484, %v7110, %v7109
    %v7112 = vsel %vm3487, %v2895, %v7111
    %v7113 = vsel %vm826, %v7098, 0
    %v7115 = vsel %vm826, %v7112, 0
    %7117 = vmatpush.xpose.msra.mxu0 0.0
    %7118 = vmatpush.xpose.msra.mxu0 0.0
    %7119 = vmatpush.xpose.msra.mxu0 0.0
    %7120 = vmatpush.xpose.msra.mxu0 0.0
    %7121 = vmatpush.xpose.msra.mxu0 0.0
    %7122 = vmatpush.xpose.msra.mxu0 0.0
    %7123 = vmatpush.xpose.msra.mxu0 0.0
    %7124 = vmatpush.xpose.msra.mxu0 0.0
    %7125 = vmatpush.xpose.msra.mxu0 0.0
    %7126 = vmatpush.xpose.msra.mxu0 0.0
    %7127 = vmatpush.xpose.msra.mxu0 0.0
    %7128 = vmatpush.xpose.msra.mxu0 0.0
    %7129 = vmatpush.xpose.msra.mxu0 0.0
    %7130 = vmatpush.xpose.msra.mxu0 0.0
    %7131 = vmatpush.xpose.msra.mxu0 0.0
    %7132 = vmatpush.xpose.msra.mxu0 %v7115
    %7133 = vmatmul.f32.gmra.mxu0 %v7113
    %v7134 = vpop.f32.mrf.mxu0
    %v7135 = vadd.f32 0.0, %v7134
    %7136 = vdwg.mxu0
    %v7137 = vrot.slane %v1584, 7
    %v7138 = vrot.slane %v1585, 6
    %v7139 = vsel %vm3469, %v7138, %v7137
    %v7140 = vrot.slane %v1586, 5
    %v7141 = vsel %vm3472, %v7140, %v7139
    %v7142 = vrot.slane %v1587, 4
    %v7143 = vsel %vm3475, %v7142, %v7141
    %v7144 = vrot.slane %v1588, 3
    %v7145 = vsel %vm3478, %v7144, %v7143
    %v7146 = vrot.slane %v1589, 2
    %v7147 = vsel %vm3481, %v7146, %v7145
    %v7148 = vrot.slane %v1590, 1
    %v7149 = vsel %vm3484, %v7148, %v7147
    %v7150 = vsel %vm3487, %v1591, %v7149
    %v7151 = vrot.slane %v2896, 7
    %v7152 = vrot.slane %v2897, 6
    %v7153 = vsel %vm3469, %v7152, %v7151
    %v7154 = vrot.slane %v2898, 5
    %v7155 = vsel %vm3472, %v7154, %v7153
    %v7156 = vrot.slane %v2899, 4
    %v7157 = vsel %vm3475, %v7156, %v7155
    %v7158 = vrot.slane %v2900, 3
    %v7159 = vsel %vm3478, %v7158, %v7157
    %v7160 = vrot.slane %v2901, 2
    %v7161 = vsel %vm3481, %v7160, %v7159
    %v7162 = vrot.slane %v2902, 1
    %v7163 = vsel %vm3484, %v7162, %v7161
    %v7164 = vsel %vm3487, %v2903, %v7163
    %v7165 = vsel %vm826, %v7150, 0
    %v7167 = vsel %vm826, %v7164, 0
    %7169 = vmatpush.xpose.msra.mxu0 0.0
    %7170 = vmatpush.xpose.msra.mxu0 0.0
    %7171 = vmatpush.xpose.msra.mxu0 0.0
    %7172 = vmatpush.xpose.msra.mxu0 0.0
    %7173 = vmatpush.xpose.msra.mxu0 0.0
    %7174 = vmatpush.xpose.msra.mxu0 0.0
    %7175 = vmatpush.xpose.msra.mxu0 0.0
    %7176 = vmatpush.xpose.msra.mxu0 0.0
    %7177 = vmatpush.xpose.msra.mxu0 0.0
    %7178 = vmatpush.xpose.msra.mxu0 0.0
    %7179 = vmatpush.xpose.msra.mxu0 0.0
    %7180 = vmatpush.xpose.msra.mxu0 0.0
    %7181 = vmatpush.xpose.msra.mxu0 0.0
    %7182 = vmatpush.xpose.msra.mxu0 0.0
    %7183 = vmatpush.xpose.msra.mxu0 0.0
    %7184 = vmatpush.xpose.msra.mxu0 %v7167
    %7185 = vmatmul.f32.gmra.mxu0 %v7165
    %v7186 = vpop.f32.mrf.mxu0
    %v7187 = vadd.f32 0.0, %v7186
    %7188 = vdwg.mxu0
    %v7189 = vrot.slane %v1592, 7
    %v7190 = vrot.slane %v1593, 6
    %v7191 = vsel %vm3469, %v7190, %v7189
    %v7192 = vrot.slane %v1594, 5
    %v7193 = vsel %vm3472, %v7192, %v7191
    %v7194 = vrot.slane %v1595, 4
    %v7195 = vsel %vm3475, %v7194, %v7193
    %v7196 = vrot.slane %v1596, 3
    %v7197 = vsel %vm3478, %v7196, %v7195
    %v7198 = vrot.slane %v1597, 2
    %v7199 = vsel %vm3481, %v7198, %v7197
    %v7200 = vrot.slane %v1598, 1
    %v7201 = vsel %vm3484, %v7200, %v7199
    %v7202 = vsel %vm3487, %v1599, %v7201
    %v7203 = vrot.slane %v2904, 7
    %v7204 = vrot.slane %v2905, 6
    %v7205 = vsel %vm3469, %v7204, %v7203
    %v7206 = vrot.slane %v2906, 5
    %v7207 = vsel %vm3472, %v7206, %v7205
    %v7208 = vrot.slane %v2907, 4
    %v7209 = vsel %vm3475, %v7208, %v7207
    %v7210 = vrot.slane %v2908, 3
    %v7211 = vsel %vm3478, %v7210, %v7209
    %v7212 = vrot.slane %v2909, 2
    %v7213 = vsel %vm3481, %v7212, %v7211
    %v7214 = vrot.slane %v2910, 1
    %v7215 = vsel %vm3484, %v7214, %v7213
    %v7216 = vsel %vm3487, %v2911, %v7215
    %v7217 = vsel %vm826, %v7202, 0
    %v7219 = vsel %vm826, %v7216, 0
    %7221 = vmatpush.xpose.msra.mxu0 0.0
    %7222 = vmatpush.xpose.msra.mxu0 0.0
    %7223 = vmatpush.xpose.msra.mxu0 0.0
    %7224 = vmatpush.xpose.msra.mxu0 0.0
    %7225 = vmatpush.xpose.msra.mxu0 0.0
    %7226 = vmatpush.xpose.msra.mxu0 0.0
    %7227 = vmatpush.xpose.msra.mxu0 0.0
    %7228 = vmatpush.xpose.msra.mxu0 0.0
    %7229 = vmatpush.xpose.msra.mxu0 0.0
    %7230 = vmatpush.xpose.msra.mxu0 0.0
    %7231 = vmatpush.xpose.msra.mxu0 0.0
    %7232 = vmatpush.xpose.msra.mxu0 0.0
    %7233 = vmatpush.xpose.msra.mxu0 0.0
    %7234 = vmatpush.xpose.msra.mxu0 0.0
    %7235 = vmatpush.xpose.msra.mxu0 0.0
    %7236 = vmatpush.xpose.msra.mxu0 %v7219
    %7237 = vmatmul.f32.gmra.mxu0 %v7217
    %v7238 = vpop.f32.mrf.mxu0
    %v7239 = vadd.f32 0.0, %v7238
    %7240 = vdwg.mxu0
    %v7241 = vrot.slane %v1600, 7
    %v7242 = vrot.slane %v1601, 6
    %v7243 = vsel %vm3469, %v7242, %v7241
    %v7244 = vrot.slane %v1602, 5
    %v7245 = vsel %vm3472, %v7244, %v7243
    %v7246 = vrot.slane %v1603, 4
    %v7247 = vsel %vm3475, %v7246, %v7245
    %v7248 = vrot.slane %v1604, 3
    %v7249 = vsel %vm3478, %v7248, %v7247
    %v7250 = vrot.slane %v1605, 2
    %v7251 = vsel %vm3481, %v7250, %v7249
    %v7252 = vrot.slane %v1606, 1
    %v7253 = vsel %vm3484, %v7252, %v7251
    %v7254 = vsel %vm3487, %v1607, %v7253
    %v7255 = vrot.slane %v2912, 7
    %v7256 = vrot.slane %v2913, 6
    %v7257 = vsel %vm3469, %v7256, %v7255
    %v7258 = vrot.slane %v2914, 5
    %v7259 = vsel %vm3472, %v7258, %v7257
    %v7260 = vrot.slane %v2915, 4
    %v7261 = vsel %vm3475, %v7260, %v7259
    %v7262 = vrot.slane %v2916, 3
    %v7263 = vsel %vm3478, %v7262, %v7261
    %v7264 = vrot.slane %v2917, 2
    %v7265 = vsel %vm3481, %v7264, %v7263
    %v7266 = vrot.slane %v2918, 1
    %v7267 = vsel %vm3484, %v7266, %v7265
    %v7268 = vsel %vm3487, %v2919, %v7267
    %v7269 = vsel %vm826, %v7254, 0
    %v7271 = vsel %vm826, %v7268, 0
    %7273 = vmatpush.xpose.msra.mxu0 0.0
    %7274 = vmatpush.xpose.msra.mxu0 0.0
    %7275 = vmatpush.xpose.msra.mxu0 0.0
    %7276 = vmatpush.xpose.msra.mxu0 0.0
    %7277 = vmatpush.xpose.msra.mxu0 0.0
    %7278 = vmatpush.xpose.msra.mxu0 0.0
    %7279 = vmatpush.xpose.msra.mxu0 0.0
    %7280 = vmatpush.xpose.msra.mxu0 0.0
    %7281 = vmatpush.xpose.msra.mxu0 0.0
    %7282 = vmatpush.xpose.msra.mxu0 0.0
    %7283 = vmatpush.xpose.msra.mxu0 0.0
    %7284 = vmatpush.xpose.msra.mxu0 0.0
    %7285 = vmatpush.xpose.msra.mxu0 0.0
    %7286 = vmatpush.xpose.msra.mxu0 0.0
    %7287 = vmatpush.xpose.msra.mxu0 0.0
    %7288 = vmatpush.xpose.msra.mxu0 %v7271
    %7289 = vmatmul.f32.gmra.mxu0 %v7269
    %v7290 = vpop.f32.mrf.mxu0
    %v7291 = vadd.f32 0.0, %v7290
    %7292 = vdwg.mxu0
    %v7293 = vsel %vm3739, %v7135, -inf
    %7294 = vmax.xlane.f32.xlu0 %v7293
    %v7295 = vpop.xlane.xlu0 %7294
    %v7296 = vsel %vm3739, %v7187, -inf
    %7297 = vmax.xlane.f32.xlu0 %v7296
    %v7298 = vpop.xlane.xlu0 %7297
    %v7299 = vsel %vm3739, %v7239, -inf
    %7300 = vmax.xlane.f32.xlu0 %v7299
    %v7301 = vpop.xlane.xlu0 %7300
    %v7302 = vsel %vm3739, %v7291, -inf
    %7303 = vmax.xlane.f32.xlu0 %v7302
    %v7304 = vpop.xlane.xlu0 %7303
    %v7305 = vsub.f32 %v7135, %v7295
    %v7306 = vsub.f32 %v7187, %v7298
    %v7307 = vsub.f32 %v7239, %v7301
    %v7308 = vsub.f32 %v7291, %v7304
    %v7309 = vmul.f32 %v7305, 1.442695
    %v7310 = vpow.pop %v7309
    %v7311 = vmul.f32 %v7306, 1.442695
    %v7312 = vpow.pop %v7311
    %v7313 = vmul.f32 %v7307, 1.442695
    %v7314 = vpow.pop %v7313
    %v7315 = vmul.f32 %v7308, 1.442695
    %v7316 = vpow.pop %v7315
    %v7317 = vsel %vm3739, %v7310, 0.0
    %7318 = vadd.xlane.f32.xlu0 %v7317
    %v7319 = vpop.xlane.xlu0 %7318
    %v7320 = vsel %vm3739, %v7312, 0.0
    %7321 = vadd.xlane.f32.xlu0 %v7320
    %v7322 = vpop.xlane.xlu0 %7321
    %v7323 = vsel %vm3739, %v7314, 0.0
    %7324 = vadd.xlane.f32.xlu0 %v7323
    %v7325 = vpop.xlane.xlu0 %7324
    %v7326 = vsel %vm3739, %v7316, 0.0
    %7327 = vadd.xlane.f32.xlu0 %v7326
    %v7328 = vpop.xlane.xlu0 %7327
    %v7329 = vrcp.pop %v7319
    %v7330 = vmul.f32 %v7319, %v7329
    %v7331 = vsub.f32 1.0, %v7330
    %v7332 = vmul.f32 %v7329, %v7331
    %v7333 = vadd.f32 %v7329, %v7332
    %vm7334 = vweird.f32 %v7319
    %vm7335 = vweird.f32 %v7329
    %vm7336 = vmor %vm7334, %vm7335
    %v7337 = vsel %vm7336, %v7329, %v7333
    %v7338 = vand.u32 2147483647, %v7319
    %vm7339 = vcmp.eq.f32.partialorder %v7338, 8.507059e+37
    %v7340 = vand.u32 %v7319, 2147483648
    %v7341 = vor.u32 1.1754944e-38, %v7340
    %v7342 = vsel %vm7339, %v7341, %v7337
    %v7343 = vrcp.pop %v7322
    %v7344 = vmul.f32 %v7322, %v7343
    %v7345 = vsub.f32 1.0, %v7344
    %v7346 = vmul.f32 %v7343, %v7345
    %v7347 = vadd.f32 %v7343, %v7346
    %vm7348 = vweird.f32 %v7322
    %vm7349 = vweird.f32 %v7343
    %vm7350 = vmor %vm7348, %vm7349
    %v7351 = vsel %vm7350, %v7343, %v7347
    %v7352 = vand.u32 2147483647, %v7322
    %vm7353 = vcmp.eq.f32.partialorder %v7352, 8.507059e+37
    %v7354 = vand.u32 %v7322, 2147483648
    %v7355 = vor.u32 1.1754944e-38, %v7354
    %v7356 = vsel %vm7353, %v7355, %v7351
    %v7357 = vrcp.pop %v7325
    %v7358 = vmul.f32 %v7325, %v7357
    %v7359 = vsub.f32 1.0, %v7358
    %v7360 = vmul.f32 %v7357, %v7359
    %v7361 = vadd.f32 %v7357, %v7360
    %vm7362 = vweird.f32 %v7325
    %vm7363 = vweird.f32 %v7357
    %vm7364 = vmor %vm7362, %vm7363
    %v7365 = vsel %vm7364, %v7357, %v7361
    %v7366 = vand.u32 2147483647, %v7325
    %vm7367 = vcmp.eq.f32.partialorder %v7366, 8.507059e+37
    %v7368 = vand.u32 %v7325, 2147483648
    %v7369 = vor.u32 1.1754944e-38, %v7368
    %v7370 = vsel %vm7367, %v7369, %v7365
    %v7371 = vrcp.pop %v7328
    %v7372 = vmul.f32 %v7328, %v7371
    %v7373 = vsub.f32 1.0, %v7372
    %v7374 = vmul.f32 %v7371, %v7373
    %v7375 = vadd.f32 %v7371, %v7374
    %vm7376 = vweird.f32 %v7328
    %vm7377 = vweird.f32 %v7371
    %vm7378 = vmor %vm7376, %vm7377
    %v7379 = vsel %vm7378, %v7371, %v7375
    %v7380 = vand.u32 2147483647, %v7328
    %vm7381 = vcmp.eq.f32.partialorder %v7380, 8.507059e+37
    %v7382 = vand.u32 %v7328, 2147483648
    %v7383 = vor.u32 1.1754944e-38, %v7382
    %v7384 = vsel %vm7381, %v7383, %v7379
    %v7385 = vmul.f32 %v7310, %v7342
    %v7386 = vmul.f32 %v7312, %v7356
    %v7387 = vmul.f32 %v7314, %v7370
    %v7388 = vmul.f32 %v7316, %v7384
    %v7389 = vrot.slane %v3105, 7
    %v7390 = vrot.slane %v3107, 6
    %v7391 = vsel %vm3469, %v7390, %v7389
    %v7392 = vrot.slane %v3109, 5
    %v7393 = vsel %vm3472, %v7392, %v7391
    %v7394 = vrot.slane %v3111, 4
    %v7395 = vsel %vm3475, %v7394, %v7393
    %v7396 = vrot.slane %v3113, 3
    %v7397 = vsel %vm3478, %v7396, %v7395
    %v7398 = vrot.slane %v3115, 2
    %v7399 = vsel %vm3481, %v7398, %v7397
    %v7400 = vrot.slane %v3117, 1
    %v7401 = vsel %vm3484, %v7400, %v7399
    %v7402 = vsel %vm3487, %v3119, %v7401
    %v7405 = vsel %vm3739, %v7385, 0
    %7407 = vmatpush.msra.mxu0 0.0
    %7408 = vmatpush.msra.mxu0 0.0
    %7409 = vmatpush.msra.mxu0 0.0
    %7410 = vmatpush.msra.mxu0 0.0
    %7411 = vmatpush.msra.mxu0 0.0
    %7412 = vmatpush.msra.mxu0 0.0
    %7413 = vmatpush.msra.mxu0 0.0
    %7414 = vmatpush.msra.mxu0 0.0
    %7415 = vmatpush.msra.mxu0 0.0
    %7416 = vmatpush.msra.mxu0 0.0
    %7417 = vmatpush.msra.mxu0 0.0
    %7418 = vmatpush.msra.mxu0 0.0
    %7419 = vmatpush.msra.mxu0 0.0
    %7420 = vmatpush.msra.mxu0 0.0
    %7421 = vmatpush.msra.mxu0 0.0
    %7422 = vmatpush.msra.mxu0 %v7402
    %7423 = vmatmul.f32.gmra.mxu0 %v7405
    %v7424 = vpop.f32.mrf.mxu0
    %v7425 = vadd.f32 0.0, %v7424
    %7426 = vdwg.mxu0
    %v7427 = vrot.slane %v3217, 7
    %v7428 = vrot.slane %v3219, 6
    %v7429 = vsel %vm3469, %v7428, %v7427
    %v7430 = vrot.slane %v3221, 5
    %v7431 = vsel %vm3472, %v7430, %v7429
    %v7432 = vrot.slane %v3223, 4
    %v7433 = vsel %vm3475, %v7432, %v7431
    %v7434 = vrot.slane %v3225, 3
    %v7435 = vsel %vm3478, %v7434, %v7433
    %v7436 = vrot.slane %v3227, 2
    %v7437 = vsel %vm3481, %v7436, %v7435
    %v7438 = vrot.slane %v3229, 1
    %v7439 = vsel %vm3484, %v7438, %v7437
    %v7440 = vsel %vm3487, %v3231, %v7439
    %v7443 = vsel %vm3739, %v7386, 0
    %7445 = vmatpush.msra.mxu0 0.0
    %7446 = vmatpush.msra.mxu0 0.0
    %7447 = vmatpush.msra.mxu0 0.0
    %7448 = vmatpush.msra.mxu0 0.0
    %7449 = vmatpush.msra.mxu0 0.0
    %7450 = vmatpush.msra.mxu0 0.0
    %7451 = vmatpush.msra.mxu0 0.0
    %7452 = vmatpush.msra.mxu0 0.0
    %7453 = vmatpush.msra.mxu0 0.0
    %7454 = vmatpush.msra.mxu0 0.0
    %7455 = vmatpush.msra.mxu0 0.0
    %7456 = vmatpush.msra.mxu0 0.0
    %7457 = vmatpush.msra.mxu0 0.0
    %7458 = vmatpush.msra.mxu0 0.0
    %7459 = vmatpush.msra.mxu0 0.0
    %7460 = vmatpush.msra.mxu0 %v7440
    %7461 = vmatmul.f32.gmra.mxu0 %v7443
    %v7462 = vpop.f32.mrf.mxu0
    %v7463 = vadd.f32 0.0, %v7462
    %7464 = vdwg.mxu0
    %v7465 = vrot.slane %v3329, 7
    %v7466 = vrot.slane %v3331, 6
    %v7467 = vsel %vm3469, %v7466, %v7465
    %v7468 = vrot.slane %v3333, 5
    %v7469 = vsel %vm3472, %v7468, %v7467
    %v7470 = vrot.slane %v3335, 4
    %v7471 = vsel %vm3475, %v7470, %v7469
    %v7472 = vrot.slane %v3337, 3
    %v7473 = vsel %vm3478, %v7472, %v7471
    %v7474 = vrot.slane %v3339, 2
    %v7475 = vsel %vm3481, %v7474, %v7473
    %v7476 = vrot.slane %v3341, 1
    %v7477 = vsel %vm3484, %v7476, %v7475
    %v7478 = vsel %vm3487, %v3343, %v7477
    %v7481 = vsel %vm3739, %v7387, 0
    %7483 = vmatpush.msra.mxu0 0.0
    %7484 = vmatpush.msra.mxu0 0.0
    %7485 = vmatpush.msra.mxu0 0.0
    %7486 = vmatpush.msra.mxu0 0.0
    %7487 = vmatpush.msra.mxu0 0.0
    %7488 = vmatpush.msra.mxu0 0.0
    %7489 = vmatpush.msra.mxu0 0.0
    %7490 = vmatpush.msra.mxu0 0.0
    %7491 = vmatpush.msra.mxu0 0.0
    %7492 = vmatpush.msra.mxu0 0.0
    %7493 = vmatpush.msra.mxu0 0.0
    %7494 = vmatpush.msra.mxu0 0.0
    %7495 = vmatpush.msra.mxu0 0.0
    %7496 = vmatpush.msra.mxu0 0.0
    %7497 = vmatpush.msra.mxu0 0.0
    %7498 = vmatpush.msra.mxu0 %v7478
    %7499 = vmatmul.f32.gmra.mxu0 %v7481
    %v7500 = vpop.f32.mrf.mxu0
    %v7501 = vadd.f32 0.0, %v7500
    %7502 = vdwg.mxu0
    %v7503 = vrot.slane %v3441, 7
    %v7504 = vrot.slane %v3443, 6
    %v7505 = vsel %vm3469, %v7504, %v7503
    %v7506 = vrot.slane %v3445, 5
    %v7507 = vsel %vm3472, %v7506, %v7505
    %v7508 = vrot.slane %v3447, 4
    %v7509 = vsel %vm3475, %v7508, %v7507
    %v7510 = vrot.slane %v3449, 3
    %v7511 = vsel %vm3478, %v7510, %v7509
    %v7512 = vrot.slane %v3451, 2
    %v7513 = vsel %vm3481, %v7512, %v7511
    %v7514 = vrot.slane %v3453, 1
    %v7515 = vsel %vm3484, %v7514, %v7513
    %v7516 = vsel %vm3487, %v3455, %v7515
    %v7519 = vsel %vm3739, %v7388, 0
    %7521 = vmatpush.msra.mxu0 0.0
    %7522 = vmatpush.msra.mxu0 0.0
    %7523 = vmatpush.msra.mxu0 0.0
    %7524 = vmatpush.msra.mxu0 0.0
    %7525 = vmatpush.msra.mxu0 0.0
    %7526 = vmatpush.msra.mxu0 0.0
    %7527 = vmatpush.msra.mxu0 0.0
    %7528 = vmatpush.msra.mxu0 0.0
    %7529 = vmatpush.msra.mxu0 0.0
    %7530 = vmatpush.msra.mxu0 0.0
    %7531 = vmatpush.msra.mxu0 0.0
    %7532 = vmatpush.msra.mxu0 0.0
    %7533 = vmatpush.msra.mxu0 0.0
    %7534 = vmatpush.msra.mxu0 0.0
    %7535 = vmatpush.msra.mxu0 0.0
    %7536 = vmatpush.msra.mxu0 %v7516
    %7537 = vmatmul.f32.gmra.mxu0 %v7519
    %v7538 = vpop.f32.mrf.mxu0
    %v7539 = vadd.f32 0.0, %v7538
    %7540 = vdwg.mxu0
    %v7541 = vrot.slane %v3459, 4
    %v7543 = vsel %vm826, %v7425, 0
    %v7546 = vsel %vm826, %v7463, 0
    %v7549 = vsel %vm826, %v7501, 0
    %v7552 = vsel %vm826, %v7539, 0
    %v7554 = vsel %vm4490, %v7541, 0
    %7556 = vmatpush.msra.mxu0 0.0
    %7557 = vmatpush.msra.mxu0 0.0
    %7558 = vmatpush.msra.mxu0 0.0
    %7559 = vmatpush.msra.mxu0 0.0
    %7560 = vmatpush.msra.mxu0 0.0
    %7561 = vmatpush.msra.mxu0 0.0
    %7562 = vmatpush.msra.mxu0 0.0
    %7563 = vmatpush.msra.mxu0 0.0
    %7564 = vmatpush.msra.mxu0 0.0
    %7565 = vmatpush.msra.mxu0 0.0
    %7566 = vmatpush.msra.mxu0 0.0
    %7567 = vmatpush.msra.mxu0 0.0
    %7568 = vmatpush.msra.mxu0 0.0
    %7569 = vmatpush.msra.mxu0 0.0
    %7570 = vmatpush.msra.mxu0 0.0
    %7571 = vmatpush.msra.mxu0 %v7554
    %7572 = vmatmul.f32.gmra.mxu0 %v7543
    %v7573 = vpop.f32.mrf.mxu0
    %v7574 = vadd.f32 0.0, %v7573
    %7575 = vmatmul.f32.gmra.mxu0 %v7546
    %v7576 = vpop.f32.mrf.mxu0
    %v7577 = vadd.f32 0.0, %v7576
    %7578 = vmatmul.f32.gmra.mxu0 %v7549
    %v7579 = vpop.f32.mrf.mxu0
    %v7580 = vadd.f32 0.0, %v7579
    %7581 = vmatmul.f32.gmra.mxu0 %v7552
    %v7582 = vpop.f32.mrf.mxu0
    %v7583 = vadd.f32 0.0, %v7582
    %7584 = vdwg.mxu0
    %v7585 = vadd.f32 %v7081, %v7574
    %v7586 = vadd.f32 %v7082, %v7577
    %v7587 = vadd.f32 %v7083, %v7580
    %v7588 = vadd.f32 %v7084, %v7583
    %v7589 = vld [vmem:[%s5] sm:$0x1]
    %v7591 = vperm.slane %v7589, 0
    %v7593 = vadd.f32 %v7585, %v7591
    %v7594 = vadd.f32 %v7586, %v7591
    %v7595 = vadd.f32 %v7587, %v7591
    %v7596 = vadd.f32 %v7588, %v7591
    %v7597 = vadd.f32 %v169, %v7593
    %v7598 = vadd.f32 %v170, %v7594
    %v7599 = vadd.f32 %v171, %v7595
    %v7600 = vadd.f32 %v172, %v7596
    %v7601 = vld [vmem:[%s14] sm:$0x1]
    %v7602 = vld [vmem:[%s15] sm:$0x1]
    %v7603 = vsel %vm177, %v7597, 0.0
    %7604 = vadd.xlane.f32.xlu0 %v7603
    %v7605 = vpop.xlane.xlu0 %7604
    %v7606 = vsel %vm177, %v7598, 0.0
    %7607 = vadd.xlane.f32.xlu0 %v7606
    %v7608 = vpop.xlane.xlu0 %7607
    %v7609 = vsel %vm177, %v7599, 0.0
    %7610 = vadd.xlane.f32.xlu0 %v7609
    %v7611 = vpop.xlane.xlu0 %7610
    %v7612 = vsel %vm177, %v7600, 0.0
    %7613 = vadd.xlane.f32.xlu0 %v7612
    %v7614 = vpop.xlane.xlu0 %7613
    %v7615 = vrcp.pop 32.0
    %v7616 = vmul.f32 32.0, %v7615
    %v7617 = vsub.f32 1.0, %v7616
    %v7618 = vmul.f32 %v7615, %v7617
    %v7619 = vadd.f32 %v7615, %v7618
    %vm7620 = vweird.f32 %v7615
    %v7621 = vsel %vm7620, %v7615, %v7619
    %v7622 = vmul.f32 %v7605, %v7621
    %v7623 = vmul.f32 %v7608, %v7621
    %v7624 = vmul.f32 %v7611, %v7621
    %v7625 = vmul.f32 %v7614, %v7621
    %v7626 = vsub.f32 %v7597, %v7622
    %v7627 = vsub.f32 %v7598, %v7623
    %v7628 = vsub.f32 %v7599, %v7624
    %v7629 = vsub.f32 %v7600, %v7625
    %v7630 = vmul.f32 %v7626, %v7626
    %v7631 = vmul.f32 %v7627, %v7627
    %v7632 = vmul.f32 %v7628, %v7628
    %v7633 = vmul.f32 %v7629, %v7629
    %v7634 = vsel %vm177, %v7630, 0.0
    %7635 = vadd.xlane.f32.xlu0 %v7634
    %v7636 = vpop.xlane.xlu0 %7635
    %v7637 = vsel %vm177, %v7631, 0.0
    %7638 = vadd.xlane.f32.xlu0 %v7637
    %v7639 = vpop.xlane.xlu0 %7638
    %v7640 = vsel %vm177, %v7632, 0.0
    %7641 = vadd.xlane.f32.xlu0 %v7640
    %v7642 = vpop.xlane.xlu0 %7641
    %v7643 = vsel %vm177, %v7633, 0.0
    %7644 = vadd.xlane.f32.xlu0 %v7643
    %v7645 = vpop.xlane.xlu0 %7644
    %v7646 = vmul.f32 %v7636, %v7621
    %v7647 = vmul.f32 %v7639, %v7621
    %v7648 = vmul.f32 %v7642, %v7621
    %v7649 = vmul.f32 %v7645, %v7621
    %v7650 = vadd.f32 %v7646, 1e-05
    %v7651 = vadd.f32 %v7647, 1e-05
    %v7652 = vadd.f32 %v7648, 1e-05
    %v7653 = vadd.f32 %v7649, 1e-05
    %v7654 = vrsqrt.pop %v7650
    %v7655 = vmul.f32 %v7654, %v7650
    %v7656 = vmul.f32 %v7655, %v7654
    %v7657 = vmul.f32 0.5, %v7656
    %v7658 = vsub.f32 1.5, %v7657
    %v7659 = vmul.f32 %v7654, %v7658
    %vm7660 = vweird.f32 %v7650
    %vm7661 = vweird.f32 %v7654
    %vm7662 = vmor %vm7660, %vm7661
    %v7663 = vsel %vm7662, %v7654, %v7659
    %v7664 = vrsqrt.pop %v7651
    %v7665 = vmul.f32 %v7664, %v7651
    %v7666 = vmul.f32 %v7665, %v7664
    %v7667 = vmul.f32 0.5, %v7666
    %v7668 = vsub.f32 1.5, %v7667
    %v7669 = vmul.f32 %v7664, %v7668
    %vm7670 = vweird.f32 %v7651
    %vm7671 = vweird.f32 %v7664
    %vm7672 = vmor %vm7670, %vm7671
    %v7673 = vsel %vm7672, %v7664, %v7669
    %v7674 = vrsqrt.pop %v7652
    %v7675 = vmul.f32 %v7674, %v7652
    %v7676 = vmul.f32 %v7675, %v7674
    %v7677 = vmul.f32 0.5, %v7676
    %v7678 = vsub.f32 1.5, %v7677
    %v7679 = vmul.f32 %v7674, %v7678
    %vm7680 = vweird.f32 %v7652
    %vm7681 = vweird.f32 %v7674
    %vm7682 = vmor %vm7680, %vm7681
    %v7683 = vsel %vm7682, %v7674, %v7679
    %v7684 = vrsqrt.pop %v7653
    %v7685 = vmul.f32 %v7684, %v7653
    %v7686 = vmul.f32 %v7685, %v7684
    %v7687 = vmul.f32 0.5, %v7686
    %v7688 = vsub.f32 1.5, %v7687
    %v7689 = vmul.f32 %v7684, %v7688
    %vm7690 = vweird.f32 %v7653
    %vm7691 = vweird.f32 %v7684
    %vm7692 = vmor %vm7690, %vm7691
    %v7693 = vsel %vm7692, %v7684, %v7689
    %v7694 = vmul.f32 %v7626, %v7663
    %v7695 = vmul.f32 %v7627, %v7673
    %v7696 = vmul.f32 %v7628, %v7683
    %v7697 = vmul.f32 %v7629, %v7693
    %v7699 = vperm.slane %v7601, 0
    %v7701 = vmul.f32 %v7694, %v7699
    %v7702 = vmul.f32 %v7695, %v7699
    %v7703 = vmul.f32 %v7696, %v7699
    %v7704 = vmul.f32 %v7697, %v7699
    %v7706 = vperm.slane %v7602, 0
    %v7708 = vadd.f32 %v7701, %v7706
    %v7709 = vadd.f32 %v7702, %v7706
    %v7710 = vadd.f32 %v7703, %v7706
    %v7711 = vadd.f32 %v7704, %v7706
    %v7712 = vld [vmem:[#allocation11] sm:$0xff]
    %v7713 = vld [vmem:[#allocation11 + $0x8] sm:$0xff]
    %v7714 = vld [vmem:[#allocation11 + $0x10] sm:$0xff]
    %v7715 = vld [vmem:[#allocation11 + $0x18] sm:$0xff]
    %v7716 = vld [vmem:[%s11] sm:$0x1]
    %v7718 = vperm.slane %v7716, 0
    %v7721 = vsel %vm177, %v7708, 0
    %v7724 = vsel %vm177, %v7709, 0
    %v7727 = vsel %vm177, %v7710, 0
    %v7730 = vsel %vm177, %v7711, 0
    %7732 = vmatpush.msra.mxu0 0.0
    %7733 = vmatpush.msra.mxu0 0.0
    %7734 = vmatpush.msra.mxu0 0.0
    %7735 = vmatpush.msra.mxu0 0.0
    %7736 = vmatpush.msra.mxu0 0.0
    %7737 = vmatpush.msra.mxu0 0.0
    %7738 = vmatpush.msra.mxu0 0.0
    %7739 = vmatpush.msra.mxu0 0.0
    %7740 = vmatpush.msra.mxu0 0.0
    %7741 = vmatpush.msra.mxu0 0.0
    %7742 = vmatpush.msra.mxu0 0.0
    %7743 = vmatpush.msra.mxu0 0.0
    %7744 = vmatpush.msra.mxu0 %v7715
    %7745 = vmatpush.msra.mxu0 %v7714
    %7746 = vmatpush.msra.mxu0 %v7713
    %7747 = vmatpush.msra.mxu0 %v7712
    %7748 = vmatmul.f32.gmra.mxu0 %v7721
    %v7749 = vpop.f32.mrf.mxu0
    %v7750 = vadd.f32 %v7718, %v7749
    %7751 = vmatmul.f32.gmra.mxu0 %v7724
    %v7752 = vpop.f32.mrf.mxu0
    %v7753 = vadd.f32 %v7718, %v7752
    %7754 = vmatmul.f32.gmra.mxu0 %v7727
    %v7755 = vpop.f32.mrf.mxu0
    %v7756 = vadd.f32 %v7718, %v7755
    %7757 = vmatmul.f32.gmra.mxu0 %v7730
    %v7758 = vpop.f32.mrf.mxu0
    %v7759 = vadd.f32 %v7718, %v7758
    %7760 = vdwg.mxu0
    %v7761 = vmax.f32 %v7750, 0.0
    %v7762 = vmax.f32 %v7753, 0.0
    %v7763 = vmax.f32 %v7756, 0.0
    %v7764 = vmax.f32 %v7759, 0.0
    %v7765 = vld [vmem:[#allocation13] sm:$0xff]
    %v7766 = vld [vmem:[#allocation13 + $0x8] sm:$0xff]
    %v7767 = vld [vmem:[#allocation13 + $0x10] sm:$0xff]
    %v7768 = vld [vmem:[#allocation13 + $0x18] sm:$0xff]
    %v7769 = vld [vmem:[%s13] sm:$0x1]
    %v7771 = vperm.slane %v7769, 0
    %v7774 = vsel %vm177, %v7761, 0
    %v7777 = vsel %vm177, %v7762, 0
    %v7780 = vsel %vm177, %v7763, 0
    %v7783 = vsel %vm177, %v7764, 0
    %7785 = vmatpush.msra.mxu0 0.0
    %7786 = vmatpush.msra.mxu0 0.0
    %7787 = vmatpush.msra.mxu0 0.0
    %7788 = vmatpush.msra.mxu0 0.0
    %7789 = vmatpush.msra.mxu0 0.0
    %7790 = vmatpush.msra.mxu0 0.0
    %7791 = vmatpush.msra.mxu0 0.0
    %7792 = vmatpush.msra.mxu0 0.0
    %7793 = vmatpush.msra.mxu0 0.0
    %7794 = vmatpush.msra.mxu0 0.0
    %7795 = vmatpush.msra.mxu0 0.0
    %7796 = vmatpush.msra.mxu0 0.0
    %7797 = vmatpush.msra.mxu0 %v7768
    %7798 = vmatpush.msra.mxu0 %v7767
    %7799 = vmatpush.msra.mxu0 %v7766
    %7800 = vmatpush.msra.mxu0 %v7765
    %7801 = vmatmul.f32.gmra.mxu0 %v7774
    %v7802 = vpop.f32.mrf.mxu0
    %v7803 = vadd.f32 %v7771, %v7802
    %7804 = vmatmul.f32.gmra.mxu0 %v7777
    %v7805 = vpop.f32.mrf.mxu0
    %v7806 = vadd.f32 %v7771, %v7805
    %7807 = vmatmul.f32.gmra.mxu0 %v7780
    %v7808 = vpop.f32.mrf.mxu0
    %v7809 = vadd.f32 %v7771, %v7808
    %7810 = vmatmul.f32.gmra.mxu0 %v7783
    %v7811 = vpop.f32.mrf.mxu0
    %v7812 = vadd.f32 %v7771, %v7811
    %7813 = vdwg.mxu0
    %v7814 = vadd.f32 %v7708, %v7803
    %v7815 = vadd.f32 %v7709, %v7806
    %v7816 = vadd.f32 %v7710, %v7809
    %v7817 = vadd.f32 %v7711, %v7812
    %v7818 = vld [vmem:[%s16] sm:$0x1]
    %v7819 = vld [vmem:[%s17] sm:$0x1]
    %v7820 = vsel %vm177, %v7814, 0.0
    %7821 = vadd.xlane.f32.xlu0 %v7820
    %v7822 = vpop.xlane.xlu0 %7821
    %v7823 = vsel %vm177, %v7815, 0.0
    %7824 = vadd.xlane.f32.xlu0 %v7823
    %v7825 = vpop.xlane.xlu0 %7824
    %v7826 = vsel %vm177, %v7816, 0.0
    %7827 = vadd.xlane.f32.xlu0 %v7826
    %v7828 = vpop.xlane.xlu0 %7827
    %v7829 = vsel %vm177, %v7817, 0.0
    %7830 = vadd.xlane.f32.xlu0 %v7829
    %v7831 = vpop.xlane.xlu0 %7830
    %v7832 = vmul.f32 %v7822, %v7621
    %v7833 = vmul.f32 %v7825, %v7621
    %v7834 = vmul.f32 %v7828, %v7621
    %v7835 = vmul.f32 %v7831, %v7621
    %v7836 = vsub.f32 %v7814, %v7832
    %v7837 = vsub.f32 %v7815, %v7833
    %v7838 = vsub.f32 %v7816, %v7834
    %v7839 = vsub.f32 %v7817, %v7835
    %v7840 = vmul.f32 %v7836, %v7836
    %v7841 = vmul.f32 %v7837, %v7837
    %v7842 = vmul.f32 %v7838, %v7838
    %v7843 = vmul.f32 %v7839, %v7839
    %v7844 = vsel %vm177, %v7840, 0.0
    %7845 = vadd.xlane.f32.xlu0 %v7844
    %v7846 = vpop.xlane.xlu0 %7845
    %v7847 = vsel %vm177, %v7841, 0.0
    %7848 = vadd.xlane.f32.xlu0 %v7847
    %v7849 = vpop.xlane.xlu0 %7848
    %v7850 = vsel %vm177, %v7842, 0.0
    %7851 = vadd.xlane.f32.xlu0 %v7850
    %v7852 = vpop.xlane.xlu0 %7851
    %v7853 = vsel %vm177, %v7843, 0.0
    %7854 = vadd.xlane.f32.xlu0 %v7853
    %v7855 = vpop.xlane.xlu0 %7854
    %v7856 = vmul.f32 %v7846, %v7621
    %v7857 = vmul.f32 %v7849, %v7621
    %v7858 = vmul.f32 %v7852, %v7621
    %v7859 = vmul.f32 %v7855, %v7621
    %v7860 = vadd.f32 %v7856, 1e-05
    %v7861 = vadd.f32 %v7857, 1e-05
    %v7862 = vadd.f32 %v7858, 1e-05
    %v7863 = vadd.f32 %v7859, 1e-05
    %v7864 = vrsqrt.pop %v7860
    %v7865 = vmul.f32 %v7864, %v7860
    %v7866 = vmul.f32 %v7865, %v7864
    %v7867 = vmul.f32 0.5, %v7866
    %v7868 = vsub.f32 1.5, %v7867
    %v7869 = vmul.f32 %v7864, %v7868
    %vm7870 = vweird.f32 %v7860
    %vm7871 = vweird.f32 %v7864
    %vm7872 = vmor %vm7870, %vm7871
    %v7873 = vsel %vm7872, %v7864, %v7869
    %v7874 = vrsqrt.pop %v7861
    %v7875 = vmul.f32 %v7874, %v7861
    %v7876 = vmul.f32 %v7875, %v7874
    %v7877 = vmul.f32 0.5, %v7876
    %v7878 = vsub.f32 1.5, %v7877
    %v7879 = vmul.f32 %v7874, %v7878
    %vm7880 = vweird.f32 %v7861
    %vm7881 = vweird.f32 %v7874
    %vm7882 = vmor %vm7880, %vm7881
    %v7883 = vsel %vm7882, %v7874, %v7879
    %v7884 = vrsqrt.pop %v7862
    %v7885 = vmul.f32 %v7884, %v7862
    %v7886 = vmul.f32 %v7885, %v7884
    %v7887 = vmul.f32 0.5, %v7886
    %v7888 = vsub.f32 1.5, %v7887
    %v7889 = vmul.f32 %v7884, %v7888
    %vm7890 = vweird.f32 %v7862
    %vm7891 = vweird.f32 %v7884
    %vm7892 = vmor %vm7890, %vm7891
    %v7893 = vsel %vm7892, %v7884, %v7889
    %v7894 = vrsqrt.pop %v7863
    %v7895 = vmul.f32 %v7894, %v7863
    %v7896 = vmul.f32 %v7895, %v7894
    %v7897 = vmul.f32 0.5, %v7896
    %v7898 = vsub.f32 1.5, %v7897
    %v7899 = vmul.f32 %v7894, %v7898
    %vm7900 = vweird.f32 %v7863
    %vm7901 = vweird.f32 %v7894
    %vm7902 = vmor %vm7900, %vm7901
    %v7903 = vsel %vm7902, %v7894, %v7899
    %v7904 = vmul.f32 %v7836, %v7873
    %v7905 = vmul.f32 %v7837, %v7883
    %v7906 = vmul.f32 %v7838, %v7893
    %v7907 = vmul.f32 %v7839, %v7903
    %v7909 = vperm.slane %v7818, 0
    %v7911 = vmul.f32 %v7904, %v7909
    %v7912 = vmul.f32 %v7905, %v7909
    %v7913 = vmul.f32 %v7906, %v7909
    %v7914 = vmul.f32 %v7907, %v7909
    %v7916 = vperm.slane %v7819, 0
    %v7918 = vadd.f32 %v7911, %v7916
    %v7919 = vadd.f32 %v7912, %v7916
    %v7920 = vadd.f32 %v7913, %v7916
    %v7921 = vadd.f32 %v7914, %v7916
    %7922 = vst.msk [vmem:[#allocation14] sm:$0xff] %vm177, %v7918
    %7923 = vst.msk [vmem:[#allocation14 + $0x8] sm:$0xff] %vm177, %v7919
    %7924 = vst.msk [vmem:[#allocation14 + $0x10] sm:$0xff] %vm177, %v7920
    %7925 = vst.msk [vmem:[#allocation14 + $0x18] sm:$0xff] %vm177, %v7921
    // Predicated region
    $region102: #{tpu_custom_call.1} parent=1 // pred_check
      _
    $region103: #{tpu_custom_call.1} parent=1 // pred_check_branch
      %7927 = sbr.rel (0) target = $region105
    $region104: #{tpu_custom_call.1} parent=1 // pred_region
      %7929 = vsyncadd [#allocation4], 0
      %s7930 = sshll.u32 [#allocation14], 4
      %s7931 = int_to_ptr.vmem [resolvable:$true] %s7930
      %s7932 = sshll.u32 %s18, 4
      %s7933 = int_to_ptr.hbm [resolvable:$true] %s7932
      %7938 = dma.vmem_to_hbm [thread:$0]  %s7931, 512, %s7933, [#allocation4], 128, 128, 8
    $region105: #{tpu_custom_call.1} parent=1 // pred_fallthru
      _
    // Predicated region
    $region106: #{tpu_custom_call.1} parent=1 // pred_check
      _
    $region107: #{tpu_custom_call.1} parent=1 // pred_check_branch
      %7940 = sbr.rel (0) target = $region109
    $region108: #{tpu_custom_call.1} parent=1 // pred_region
      %7942 = dma.done [#allocation4], 512
    $region109: #{tpu_custom_call.1} parent=1 // pred_fallthru
      _
    %7943 = vsyncpa [#allocation3], 1
    %7944 = vsyncpa [#allocation6], 1
    %7945 = vsyncpa [#allocation9], 1
    %7946 = vsyncpa [#allocation12], 1
    %7947 = vsyncpa [#allocation4], 1

</llo_original>
